<compile_context>
chip_gen: v7x
topology: tpu7x:2x2x1
jax: 0.10.0
libtpu: 0.0.40
codegen_flags: <defaults>
</compile_context>

<pallas_src>
import functools

import jax
import jax.numpy as jnp
from jax import lax
from jax.experimental import pallas as pl
from jax.experimental.pallas import tpu as pltpu

IN_FEATS = 15
HIDDEN = 64
NUM_LAYERS = 3
CONTRASTIVE = 8
BN_EPS = 1e-5
# raise the scoped VMEM limit (defaults: 16 MiB v5e / 32 MiB v6e,v7x); 48 MiB stays
# below v7x's 64 MiB physical VMEM with headroom for double buffering.
VMEM_LIMIT_BYTES = 48 * 1024 * 1024


def _elu(x):
    # ELU(alpha=1): x if x > 0 else exp(x) - 1  (clamp arg to keep dead branch finite)
    return jnp.where(x > 0, x, jnp.exp(jnp.minimum(x, 0.0)) - 1.0)


def _round_up(a, b):
    return (a + b - 1) // b * b


# --------------------------------------------------------------------------- kernels

def _encode_kernel(x_ref, w1_ref, b1_ref, w2_ref, b2_ref, h_ref):
    f32 = jnp.float32
    h = _elu(jnp.dot(x_ref[...], w1_ref[...], preferred_element_type=f32) + b1_ref[...])
    h = _elu(jnp.dot(h, w2_ref[...], preferred_element_type=f32) + b2_ref[...])
    h_ref[...] = h


def _make_conv_kernel(block_n, k_nbr, with_head):
    """One CustomStaticEdgeConv layer (+ optional output head) for a block of nodes."""

    def kernel(col_ref,              # (N_pad*K,) int32 in SMEM (scalar prefetch)
               h_full_ref,           # (N_pad, H)   resident node table (neighbor source)
               h_blk_ref,            # (B, H)       this block's nodes
               wd_ref, wb_ref,       # (H, H)       Wa - Wb, Wb
               bias_ref, scale_ref, shift_ref,   # (1, H) conv bias, folded BN scale/shift
               *rest):
        if with_head:
            (ow1_ref, ob1_ref, ow2_ref, ob2_ref, ow3_ref, ob3_ref,
             out_ref, nbr_ref) = rest
        else:
            out_ref, nbr_ref = rest

        f32 = jnp.float32
        base = pl.program_id(0) * block_n          # first global node id of this block

        h_blk = h_blk_ref[...]                                                # (B, H)
        # factored edge MLP: [x_i, x_j - x_i] @ W == x_i @ (Wa - Wb) + x_j @ Wb
        ta = jnp.dot(h_blk, wd_ref[...], preferred_element_type=f32) + bias_ref[...]

        def gather(k):
            # nbr_ref[i, :] = h_full[col[(base + i) * K + k], :]
            if block_n <= 64:
                # small blocks: fully static destination indices (unrolled)
                for i in range(block_n):
                    src = col_ref[(base + i) * k_nbr + k]
                    nbr_ref[pl.ds(i, 1), :] = h_full_ref[pl.ds(src, 1), :]
            else:
                def body(i, carry):
                    src = col_ref[(base + i) * k_nbr + k]
                    nbr_ref[pl.ds(i, 1), :] = h_full_ref[pl.ds(src, 1), :]
                    return carry
                lax.fori_loop(0, block_n, body, 0)

        acc = jnp.zeros((block_n, HIDDEN), f32)
        for k in range(k_nbr):                      # static fixed-K neighbor loop
            gather(k)
            pre = ta + jnp.dot(nbr_ref[...], wb_ref[...], preferred_element_type=f32)
            acc = acc + (_elu(pre) * scale_ref[...] + shift_ref[...])   # ELU + folded BN

        h_new = acc * (1.0 / k_nbr) + h_blk         # exact mean over K edges + residual

        if with_head:
            o = _elu(jnp.dot(h_new, ow1_ref[...], preferred_element_type=f32) + ob1_ref[...])
            o = _elu(jnp.dot(o, ow2_ref[...], preferred_element_type=f32) + ob2_ref[...])
            out_ref[...] = jnp.dot(o, ow3_ref[...], preferred_element_type=f32) + ob3_ref[...]
        else:
            out_ref[...] = h_new

    return kernel


# --------------------------------------------------------------------------- wrapper

def init_params(key):
    """Deterministic synthetic parameters (weights stored as (in, out))."""
    ks = iter(jax.random.split(key, 32))

    def lin(k, fin, fout):
        kw, kb = jax.random.split(k)
        bound = 1.0 / jnp.sqrt(fin)
        w = jax.random.uniform(kw, (fin, fout), jnp.float32, -bound, bound)
        b = jax.random.uniform(kb, (1, fout), jnp.float32, -bound, bound)
        return w, b

    p = {}
    p["lcW1"], p["lcb1"] = lin(next(ks), IN_FEATS, HIDDEN)
    p["lcW2"], p["lcb2"] = lin(next(ks), HIDDEN, HIDDEN)

    convW, convb, gamma, beta, rmean, rvar = [], [], [], [], [], []
    for _ in range(NUM_LAYERS):
        w, b = lin(next(ks), 2 * HIDDEN, HIDDEN)
        convW.append(w)
        convb.append(b)
        gamma.append(jax.random.uniform(next(ks), (1, HIDDEN), jnp.float32, 0.8, 1.2))
        beta.append(jax.random.uniform(next(ks), (1, HIDDEN), jnp.float32, -0.1, 0.1))
        rmean.append(jax.random.uniform(next(ks), (1, HIDDEN), jnp.float32, -0.1, 0.1))
        rvar.append(jax.random.uniform(next(ks), (1, HIDDEN), jnp.float32, 0.5, 1.5))
    p["convW"] = jnp.stack(convW)      # (3, 128, 64)
    p["convb"] = jnp.stack(convb)      # (3, 1, 64)
    p["gamma"] = jnp.stack(gamma)
    p["beta"] = jnp.stack(beta)
    p["rmean"] = jnp.stack(rmean)
    p["rvar"] = jnp.stack(rvar)

    p["oW1"], p["ob1"] = lin(next(ks), HIDDEN, 32)
    p["oW2"], p["ob2"] = lin(next(ks), 32, 16)
    p["oW3"], p["ob3"] = lin(next(ks), 16, CONTRASTIVE)
    return p


@functools.partial(jax.jit, static_argnames=("block_nodes",))
def net_forward(x, edge_index, batch, params, *, block_nodes=256):
    n = x.shape[0]
    e = edge_index.shape[1]
    if e % n:
        raise ValueError("StaticEdge model expects a fixed number of edges per center node")
    if block_nodes % 8:
        raise ValueError("block_nodes must be a multiple of 8")
    k_nbr = e // n
    f32 = jnp.float32
    h_dim = HIDDEN

    # group edges per center node (node-major, neighbor-minor); for the StaticEdge kNN
    # graph (row == repeat(arange(N), K)) the sort is the identity.
    row = edge_index[0].astype(jnp.int32)
    col = edge_index[1].astype(jnp.int32)
    col = col[jnp.argsort(row)]                         # (N*K,)

    blk = min(block_nodes, _round_up(n, 8))
    n_pad = _round_up(n, blk)
    nblocks = n_pad // blk
    x_pad = jnp.pad(x.astype(f32), ((0, n_pad - n), (0, 0)))
    col_pad = jnp.pad(col, (0, (n_pad - n) * k_nbr))    # padded nodes gather node 0

    # hoisted per-layer constants: Wd = Wa - Wb, Wb, bias, folded eval-mode BatchNorm
    wd, wb, bias, scale, shift = [], [], [], [], []
    for l in range(NUM_LAYERS):
        w = params["convW"][l]
        wa_l, wb_l = w[:h_dim], w[h_dim:]
        s = params["gamma"][l] * lax.rsqrt(params["rvar"][l] + BN_EPS)
        wd.append(wa_l - wb_l)
        wb.append(wb_l)
        bias.append(params["convb"][l])
        scale.append(s)
        shift.append(params["beta"][l] - params["rmean"][l] * s)

    cparams = pltpu.CompilerParams(dimension_semantics=("parallel",),
                                   vmem_limit_bytes=VMEM_LIMIT_BYTES)

    # ---- lc_encode: grid over node blocks -----------------------------------------
    h = pl.pallas_call(
        _encode_kernel,
        out_shape=jax.ShapeDtypeStruct((n_pad, h_dim), f32),
        grid=(nblocks,),
        in_specs=[
            pl.BlockSpec((blk, IN_FEATS), lambda i: (i, 0)),
            pl.BlockSpec((IN_FEATS, h_dim), lambda i: (0, 0)),
            pl.BlockSpec((1, h_dim), lambda i: (0, 0)),
            pl.BlockSpec((h_dim, h_dim), lambda i: (0, 0)),
            pl.BlockSpec((1, h_dim), lambda i: (0, 0)),
        ],
        out_specs=pl.BlockSpec((blk, h_dim), lambda i: (i, 0)),
        compiler_params=cparams,
    )(x_pad, params["lcW1"], params["lcb1"], params["lcW2"], params["lcb2"])

    # ---- 3 x CustomStaticEdgeConv (output head fused into the last layer) ----------
    def conv_call(h_in, layer, with_head):
        kernel = _make_conv_kernel(blk, k_nbr, with_head)
        in_specs = [
            pl.BlockSpec((n_pad, h_dim), lambda i, c: (0, 0)),   # full node table
            pl.BlockSpec((blk, h_dim), lambda i, c: (i, 0)),     # this block's nodes
            pl.BlockSpec((h_dim, h_dim), lambda i, c: (0, 0)),   # Wa - Wb
            pl.BlockSpec((h_dim, h_dim), lambda i, c: (0, 0)),   # Wb
            pl.BlockSpec((1, h_dim), lambda i, c: (0, 0)),       # conv bias
            pl.BlockSpec((1, h_dim), lambda i, c: (0, 0)),       # BN scale
            pl.BlockSpec((1, h_dim), lambda i, c: (0, 0)),       # BN shift
        ]
        args = [col_pad, h_in, h_in, wd[layer], wb[layer], bias[layer],
                scale[layer], shift[layer]]
        if with_head:
            in_specs += [
                pl.BlockSpec((h_dim, 32), lambda i, c: (0, 0)),
                pl.BlockSpec((1, 32), lambda i, c: (0, 0)),
                pl.BlockSpec((32, 16), lambda i, c: (0, 0)),
                pl.BlockSpec((1, 16), lambda i, c: (0, 0)),
                pl.BlockSpec((16, CONTRASTIVE), lambda i, c: (0, 0)),
                pl.BlockSpec((1, CONTRASTIVE), lambda i, c: (0, 0)),
            ]
            args += [params["oW1"], params["ob1"], params["oW2"], params["ob2"],
                     params["oW3"], params["ob3"]]
            out_dim = CONTRASTIVE
        else:
            out_dim = h_dim
        return pl.pallas_call(
            kernel,
            out_shape=jax.ShapeDtypeStruct((n_pad, out_dim), f32),
            grid_spec=pltpu.PrefetchScalarGridSpec(
                num_scalar_prefetch=1,
                grid=(nblocks,),
                in_specs=in_specs,
                out_specs=pl.BlockSpec((blk, out_dim), lambda i, c: (i, 0)),
                scratch_shapes=[pltpu.VMEM((blk, h_dim), f32)],   # gathered neighbors
            ),
            compiler_params=cparams,
        )(*args)

    for layer in range(NUM_LAYERS - 1):
        h = conv_call(h, layer, with_head=False)
    out = conv_call(h, NUM_LAYERS - 1, with_head=True)
    return out[:n], batch


# --------------------------------------------------------------------------- reference

def ref_forward(x, edge_index, params):
    """Pure-JAX f32 reference (general scatter-mean semantics) for correctness check."""
    row = edge_index[0].astype(jnp.int32)
    col = edge_index[1].astype(jnp.int32)
    n = x.shape[0]
    h = _elu(x @ params["lcW1"] + params["lcb1"])
    h = _elu(h @ params["lcW2"] + params["lcb2"])
    for l in range(NUM_LAYERS):
        x_i = h[row]
        x_j = h[col]
        ef = jnp.concatenate([x_i, x_j - x_i], axis=-1)
        m = _elu(ef @ params["convW"][l] + params["convb"][l])
        m = ((m - params["rmean"][l]) / jnp.sqrt(params["rvar"][l] + BN_EPS)
             * params["gamma"][l] + params["beta"][l])
        seg = jax.ops.segment_sum(m, row, num_segments=n)
        cnt = jax.ops.segment_sum(jnp.ones((row.shape[0],), jnp.float32), row, num_segments=n)
        h = seg / jnp.maximum(cnt, 1.0)[:, None] + h
    o = _elu(h @ params["oW1"] + params["ob1"])
    o = _elu(o @ params["oW2"] + params["ob2"])
    return o @ params["oW3"] + params["ob3"]


if __name__ == "__main__":
    key = jax.random.PRNGKey(0)
    k_x, k_p = jax.random.split(key)

    N = 32            # nodes (tracksters)
    K = 4             # neighbors per node (static kNN graph)
    E = N * K

    x = jax.random.normal(k_x, (N, IN_FEATS), jnp.float32)
    # static ring-style kNN edge_index: row = center node, col = neighbor
    rows = jnp.repeat(jnp.arange(N, dtype=jnp.int32), K)
    cols = (rows + jnp.tile(jnp.arange(1, K + 1, dtype=jnp.int32), N)) % N
    edge_index = jnp.stack([rows, cols])          # (2, E)
    batch = jnp.zeros((N,), jnp.int32)

    params = init_params(k_p)

    # block_nodes=16 -> 2 node blocks, so the parallel grid and cross-block neighbor
    # gathers are actually exercised at this toy size.
    out, batch_out = net_forward(x, edge_index, batch, params, block_nodes=16)
    out = jax.block_until_ready(out)

    ref = ref_forward(x, edge_index, params)
    assert out.shape == (N, CONTRASTIVE)
    err = jnp.max(jnp.abs(out - ref))
    # everything is f32 now (exact gather + exact 1/K mean) -> tight tolerance
    assert jnp.allclose(out, ref, atol=2e-3, rtol=2e-3), f"max abs err {err}"

    print("KERNEL_OK")
</pallas_src>

<mosaic_0001>
module attributes {stable_mosaic.version = 11 : i64} {
  func.func @_encode_kernel(%arg0: i32, %arg1: memref<16x15xf32, #tpu.memory_space<vmem>>, %arg2: memref<15x64xf32, #tpu.memory_space<vmem>>, %arg3: memref<1x64xf32, #tpu.memory_space<vmem>>, %arg4: memref<64x64xf32, #tpu.memory_space<vmem>>, %arg5: memref<1x64xf32, #tpu.memory_space<vmem>>, %arg6: memref<16x64xf32, #tpu.memory_space<vmem>>) attributes {dimension_semantics = [#tpu.dimension_semantics<parallel>], iteration_bounds = array<i64: 2>, scalar_prefetch = 0 : i64, scratch_operands = 0 : i64, tpu.core_type = #tpu.core_type<tc>, window_params = [{transform_indices = @transform_0, window_bounds = array<i64: 16, 15>}, {pipeline_mode = #tpu.pipeline_mode<synchronous>, transform_indices = @transform_1, window_bounds = array<i64: 15, 64>}, {pipeline_mode = #tpu.pipeline_mode<synchronous>, transform_indices = @transform_2, window_bounds = array<i64: 1, 64>}, {pipeline_mode = #tpu.pipeline_mode<synchronous>, transform_indices = @transform_3, window_bounds = array<i64: 64, 64>}, {pipeline_mode = #tpu.pipeline_mode<synchronous>, transform_indices = @transform_4, window_bounds = array<i64: 1, 64>}, {transform_indices = @transform_5, window_bounds = array<i64: 16, 64>}]} {
    %c0 = arith.constant 0 : index
    %c0_0 = arith.constant 0 : index
    %0 = vector.load %arg1[%c0, %c0_0] : memref<16x15xf32, #tpu.memory_space<vmem>>, vector<16x15xf32>
    %c0_1 = arith.constant 0 : index
    %c0_2 = arith.constant 0 : index
    %1 = vector.load %arg2[%c0_1, %c0_2] : memref<15x64xf32, #tpu.memory_space<vmem>>, vector<15x64xf32>
    %cst = arith.constant dense<0.000000e+00> : vector<16x64xf32>
    %2 = tpu.matmul %0, %1, %cst {dimension_numbers = #tpu.dot_dimension_numbers<[1], [0], [0], [1], [0, 0, 1, 1], [], []>} : vector<16x15xf32>, vector<15x64xf32>, vector<16x64xf32> -> vector<16x64xf32>
    %c0_3 = arith.constant 0 : index
    %c0_4 = arith.constant 0 : index
    %3 = vector.load %arg3[%c0_3, %c0_4] : memref<1x64xf32, #tpu.memory_space<vmem>>, vector<1x64xf32>
    %4 = vector.broadcast %3 : vector<1x64xf32> to vector<16x64xf32>
    %5 = arith.addf %2, %4 : vector<16x64xf32>
    %cst_5 = arith.constant 0.000000e+00 : f32
    %6 = vector.broadcast %cst_5 : f32 to vector<16x64xf32>
    %7 = arith.cmpf ogt, %5, %6 : vector<16x64xf32>
    %cst_6 = arith.constant 0.000000e+00 : f32
    %8 = vector.broadcast %cst_6 : f32 to vector<16x64xf32>
    %9 = arith.minimumf %5, %8 : vector<16x64xf32>
    %10 = math.exp %9 : vector<16x64xf32>
    %cst_7 = arith.constant 1.000000e+00 : f32
    %11 = vector.broadcast %cst_7 : f32 to vector<16x64xf32>
    %12 = arith.subf %10, %11 : vector<16x64xf32>
    %13 = arith.select %7, %5, %12 : vector<16x64xi1>, vector<16x64xf32>
    %c0_8 = arith.constant 0 : index
    %c0_9 = arith.constant 0 : index
    %14 = vector.load %arg4[%c0_8, %c0_9] : memref<64x64xf32, #tpu.memory_space<vmem>>, vector<64x64xf32>
    %cst_10 = arith.constant dense<0.000000e+00> : vector<16x64xf32>
    %15 = tpu.matmul %13, %14, %cst_10 {dimension_numbers = #tpu.dot_dimension_numbers<[1], [0], [0], [1], [0, 0, 1, 1], [], []>} : vector<16x64xf32>, vector<64x64xf32>, vector<16x64xf32> -> vector<16x64xf32>
    %c0_11 = arith.constant 0 : index
    %c0_12 = arith.constant 0 : index
    %16 = vector.load %arg5[%c0_11, %c0_12] : memref<1x64xf32, #tpu.memory_space<vmem>>, vector<1x64xf32>
    %17 = vector.broadcast %16 : vector<1x64xf32> to vector<16x64xf32>
    %18 = arith.addf %15, %17 : vector<16x64xf32>
    %cst_13 = arith.constant 0.000000e+00 : f32
    %19 = vector.broadcast %cst_13 : f32 to vector<16x64xf32>
    %20 = arith.cmpf ogt, %18, %19 : vector<16x64xf32>
    %cst_14 = arith.constant 0.000000e+00 : f32
    %21 = vector.broadcast %cst_14 : f32 to vector<16x64xf32>
    %22 = arith.minimumf %18, %21 : vector<16x64xf32>
    %23 = math.exp %22 : vector<16x64xf32>
    %cst_15 = arith.constant 1.000000e+00 : f32
    %24 = vector.broadcast %cst_15 : f32 to vector<16x64xf32>
    %25 = arith.subf %23, %24 : vector<16x64xf32>
    %26 = arith.select %20, %18, %25 : vector<16x64xi1>, vector<16x64xf32>
    %c0_16 = arith.constant 0 : index
    %c0_17 = arith.constant 0 : index
    %27 = vector.load %arg6[%c0_16, %c0_17] : memref<16x64xf32, #tpu.memory_space<vmem>>, vector<16x64xf32>
    tpu.vector_store %arg6[%c0_16, %c0_17], %26 {strides = array<i32>} : memref<16x64xf32, #tpu.memory_space<vmem>>, vector<16x64xf32>,
    return
  }
  func.func @transform_0(%arg0: i32) -> (i32, i32) {
    %c0_i32 = arith.constant 0 : i32
    %c0_i32_0 = arith.constant 0 : i32
    return %arg0, %c0_i32 : i32, i32
  }
  func.func @transform_1(%arg0: i32) -> (i32, i32) {
    %c0_i32 = arith.constant 0 : i32
    %c0_i32_0 = arith.constant 0 : i32
    %c0_i32_1 = arith.constant 0 : i32
    return %c0_i32, %c0_i32_0 : i32, i32
  }
  func.func @transform_2(%arg0: i32) -> (i32, i32) {
    %c0_i32 = arith.constant 0 : i32
    %c0_i32_0 = arith.constant 0 : i32
    %c0_i32_1 = arith.constant 0 : i32
    return %c0_i32, %c0_i32_0 : i32, i32
  }
  func.func @transform_3(%arg0: i32) -> (i32, i32) {
    %c0_i32 = arith.constant 0 : i32
    %c0_i32_0 = arith.constant 0 : i32
    %c0_i32_1 = arith.constant 0 : i32
    return %c0_i32, %c0_i32_0 : i32, i32
  }
  func.func @transform_4(%arg0: i32) -> (i32, i32) {
    %c0_i32 = arith.constant 0 : i32
    %c0_i32_0 = arith.constant 0 : i32
    %c0_i32_1 = arith.constant 0 : i32
    return %c0_i32, %c0_i32_0 : i32, i32
  }
  func.func @transform_5(%arg0: i32) -> (i32, i32) {
    %c0_i32 = arith.constant 0 : i32
    %c0_i32_0 = arith.constant 0 : i32
    return %arg0, %c0_i32 : i32, i32
  }
}

module attributes {stable_mosaic.version = 11 : i64} {
  func.func @kernel(%arg0: i32, %arg1: memref<128xi32, #tpu.memory_space<smem>>, %arg2: memref<32x64xf32, #tpu.memory_space<vmem>>, %arg3: memref<16x64xf32, #tpu.memory_space<vmem>>, %arg4: memref<64x64xf32, #tpu.memory_space<vmem>>, %arg5: memref<64x64xf32, #tpu.memory_space<vmem>>, %arg6: memref<1x64xf32, #tpu.memory_space<vmem>>, %arg7: memref<1x64xf32, #tpu.memory_space<vmem>>, %arg8: memref<1x64xf32, #tpu.memory_space<vmem>>, %arg9: memref<16x64xf32, #tpu.memory_space<vmem>>, %arg10: memref<16x64xf32, #tpu.memory_space<vmem>>) attributes {dimension_semantics = [#tpu.dimension_semantics<parallel>], iteration_bounds = array<i64: 2>, scalar_prefetch = 1 : i64, scratch_operands = 1 : i64, tpu.core_type = #tpu.core_type<tc>, window_params = [{pipeline_mode = #tpu.pipeline_mode<synchronous>, transform_indices = @transform_0, window_bounds = array<i64: 32, 64>}, {transform_indices = @transform_1, window_bounds = array<i64: 16, 64>}, {pipeline_mode = #tpu.pipeline_mode<synchronous>, transform_indices = @transform_2, window_bounds = array<i64: 64, 64>}, {pipeline_mode = #tpu.pipeline_mode<synchronous>, transform_indices = @transform_3, window_bounds = array<i64: 64, 64>}, {pipeline_mode = #tpu.pipeline_mode<synchronous>, transform_indices = @transform_4, window_bounds = array<i64: 1, 64>}, {pipeline_mode = #tpu.pipeline_mode<synchronous>, transform_indices = @transform_5, window_bounds = array<i64: 1, 64>}, {pipeline_mode = #tpu.pipeline_mode<synchronous>, transform_indices = @transform_6, window_bounds = array<i64: 1, 64>}, {transform_indices = @transform_7, window_bounds = array<i64: 16, 64>}]} {
    %c16_i32 = arith.constant 16 : i32
    %0 = arith.muli %arg0, %c16_i32 : i32
    %c0 = arith.constant 0 : index
    %c0_0 = arith.constant 0 : index
    %1 = vector.load %arg3[%c0, %c0_0] : memref<16x64xf32, #tpu.memory_space<vmem>>, vector<16x64xf32>
    %c0_1 = arith.constant 0 : index
    %c0_2 = arith.constant 0 : index
    %2 = vector.load %arg4[%c0_1, %c0_2] : memref<64x64xf32, #tpu.memory_space<vmem>>, vector<64x64xf32>
    %cst = arith.constant dense<0.000000e+00> : vector<16x64xf32>
    %3 = tpu.matmul %1, %2, %cst {dimension_numbers = #tpu.dot_dimension_numbers<[1], [0], [0], [1], [0, 0, 1, 1], [], []>} : vector<16x64xf32>, vector<64x64xf32>, vector<16x64xf32> -> vector<16x64xf32>
    %c0_3 = arith.constant 0 : index
    %c0_4 = arith.constant 0 : index
    %4 = vector.load %arg6[%c0_3, %c0_4] : memref<1x64xf32, #tpu.memory_space<vmem>>, vector<1x64xf32>
    %5 = vector.broadcast %4 : vector<1x64xf32> to vector<16x64xf32>
    %6 = arith.addf %3, %5 : vector<16x64xf32>
    %cst_5 = arith.constant 0.000000e+00 : f32
    %7 = vector.broadcast %cst_5 : f32 to vector<16x64xf32>
    %c0_i32 = arith.constant 0 : i32
    %8 = arith.addi %0, %c0_i32 : i32
    %c4_i32 = arith.constant 4 : i32
    %9 = arith.muli %8, %c4_i32 : i32
    %c0_i32_6 = arith.constant 0 : i32
    %10 = arith.addi %9, %c0_i32_6 : i32
    %11 = arith.index_cast %10 : i32 to index
    %12 = memref.load %arg1[%11] : memref<128xi32, #tpu.memory_space<smem>>
    %13 = arith.index_cast %12 : i32 to index
    %c0_7 = arith.constant 0 : index
    %14 = vector.load %arg2[%13, %c0_7] : memref<32x64xf32, #tpu.memory_space<vmem>>, vector<1x64xf32>
    %c0_8 = arith.constant 0 : index
    %c0_9 = arith.constant 0 : index
    %15 = vector.load %arg10[%c0_8, %c0_9] : memref<16x64xf32, #tpu.memory_space<vmem>>, vector<1x64xf32>
    tpu.vector_store %arg10[%c0_8, %c0_9], %14 {strides = array<i32>} : memref<16x64xf32, #tpu.memory_space<vmem>>, vector<1x64xf32>,
    %c1_i32 = arith.constant 1 : i32
    %16 = arith.addi %0, %c1_i32 : i32
    %c4_i32_10 = arith.constant 4 : i32
    %17 = arith.muli %16, %c4_i32_10 : i32
    %c0_i32_11 = arith.constant 0 : i32
    %18 = arith.addi %17, %c0_i32_11 : i32
    %19 = arith.index_cast %18 : i32 to index
    %20 = memref.load %arg1[%19] : memref<128xi32, #tpu.memory_space<smem>>
    %21 = arith.index_cast %20 : i32 to index
    %c0_12 = arith.constant 0 : index
    %22 = vector.load %arg2[%21, %c0_12] : memref<32x64xf32, #tpu.memory_space<vmem>>, vector<1x64xf32>
    %c1 = arith.constant 1 : index
    %c0_13 = arith.constant 0 : index
    %23 = vector.load %arg10[%c1, %c0_13] : memref<16x64xf32, #tpu.memory_space<vmem>>, vector<1x64xf32>
    tpu.vector_store %arg10[%c1, %c0_13], %22 {strides = array<i32>} : memref<16x64xf32, #tpu.memory_space<vmem>>, vector<1x64xf32>,
    %c2_i32 = arith.constant 2 : i32
    %24 = arith.addi %0, %c2_i32 : i32
    %c4_i32_14 = arith.constant 4 : i32
    %25 = arith.muli %24, %c4_i32_14 : i32
    %c0_i32_15 = arith.constant 0 : i32
    %26 = arith.addi %25, %c0_i32_15 : i32
    %27 = arith.index_cast %26 : i32 to index
    %28 = memref.load %arg1[%27] : memref<128xi32, #tpu.memory_space<smem>>
    %29 = arith.index_cast %28 : i32 to index
    %c0_16 = arith.constant 0 : index
    %30 = vector.load %arg2[%29, %c0_16] : memref<32x64xf32, #tpu.memory_space<vmem>>, vector<1x64xf32>
    %c2 = arith.constant 2 : index
    %c0_17 = arith.constant 0 : index
    %31 = vector.load %arg10[%c2, %c0_17] : memref<16x64xf32, #tpu.memory_space<vmem>>, vector<1x64xf32>
    tpu.vector_store %arg10[%c2, %c0_17], %30 {strides = array<i32>} : memref<16x64xf32, #tpu.memory_space<vmem>>, vector<1x64xf32>,
    %c3_i32 = arith.constant 3 : i32
    %32 = arith.addi %0, %c3_i32 : i32
    %c4_i32_18 = arith.constant 4 : i32
    %33 = arith.muli %32, %c4_i32_18 : i32
    %c0_i32_19 = arith.constant 0 : i32
    %34 = arith.addi %33, %c0_i32_19 : i32
    %35 = arith.index_cast %34 : i32 to index
    %36 = memref.load %arg1[%35] : memref<128xi32, #tpu.memory_space<smem>>
    %37 = arith.index_cast %36 : i32 to index
    %c0_20 = arith.constant 0 : index
    %38 = vector.load %arg2[%37, %c0_20] : memref<32x64xf32, #tpu.memory_space<vmem>>, vector<1x64xf32>
    %c3 = arith.constant 3 : index
    %c0_21 = arith.constant 0 : index
    %39 = vector.load %arg10[%c3, %c0_21] : memref<16x64xf32, #tpu.memory_space<vmem>>, vector<1x64xf32>
    tpu.vector_store %arg10[%c3, %c0_21], %38 {strides = array<i32>} : memref<16x64xf32, #tpu.memory_space<vmem>>, vector<1x64xf32>,
    %c4_i32_22 = arith.constant 4 : i32
    %40 = arith.addi %0, %c4_i32_22 : i32
    %c4_i32_23 = arith.constant 4 : i32
    %41 = arith.muli %40, %c4_i32_23 : i32
    %c0_i32_24 = arith.constant 0 : i32
    %42 = arith.addi %41, %c0_i32_24 : i32
    %43 = arith.index_cast %42 : i32 to index
    %44 = memref.load %arg1[%43] : memref<128xi32, #tpu.memory_space<smem>>
    %45 = arith.index_cast %44 : i32 to index
    %c0_25 = arith.constant 0 : index
    %46 = vector.load %arg2[%45, %c0_25] : memref<32x64xf32, #tpu.memory_space<vmem>>, vector<1x64xf32>
    %c4 = arith.constant 4 : index
    %c0_26 = arith.constant 0 : index
    %47 = vector.load %arg10[%c4, %c0_26] : memref<16x64xf32, #tpu.memory_space<vmem>>, vector<1x64xf32>
    tpu.vector_store %arg10[%c4, %c0_26], %46 {strides = array<i32>} : memref<16x64xf32, #tpu.memory_space<vmem>>, vector<1x64xf32>,
    %c5_i32 = arith.constant 5 : i32
    %48 = arith.addi %0, %c5_i32 : i32
    %c4_i32_27 = arith.constant 4 : i32
    %49 = arith.muli %48, %c4_i32_27 : i32
    %c0_i32_28 = arith.constant 0 : i32
    %50 = arith.addi %49, %c0_i32_28 : i32
    %51 = arith.index_cast %50 : i32 to index
    %52 = memref.load %arg1[%51] : memref<128xi32, #tpu.memory_space<smem>>
    %53 = arith.index_cast %52 : i32 to index
    %c0_29 = arith.constant 0 : index
    %54 = vector.load %arg2[%53, %c0_29] : memref<32x64xf32, #tpu.memory_space<vmem>>, vector<1x64xf32>
    %c5 = arith.constant 5 : index
    %c0_30 = arith.constant 0 : index
    %55 = vector.load %arg10[%c5, %c0_30] : memref<16x64xf32, #tpu.memory_space<vmem>>, vector<1x64xf32>
    tpu.vector_store %arg10[%c5, %c0_30], %54 {strides = array<i32>} : memref<16x64xf32, #tpu.memory_space<vmem>>, vector<1x64xf32>,
    %c6_i32 = arith.constant 6 : i32
    %56 = arith.addi %0, %c6_i32 : i32
    %c4_i32_31 = arith.constant 4 : i32
    %57 = arith.muli %56, %c4_i32_31 : i32
    %c0_i32_32 = arith.constant 0 : i32
    %58 = arith.addi %57, %c0_i32_32 : i32
    %59 = arith.index_cast %58 : i32 to index
    %60 = memref.load %arg1[%59] : memref<128xi32, #tpu.memory_space<smem>>
    %61 = arith.index_cast %60 : i32 to index
    %c0_33 = arith.constant 0 : index
    %62 = vector.load %arg2[%61, %c0_33] : memref<32x64xf32, #tpu.memory_space<vmem>>, vector<1x64xf32>
    %c6 = arith.constant 6 : index
    %c0_34 = arith.constant 0 : index
    %63 = vector.load %arg10[%c6, %c0_34] : memref<16x64xf32, #tpu.memory_space<vmem>>, vector<1x64xf32>
    tpu.vector_store %arg10[%c6, %c0_34], %62 {strides = array<i32>} : memref<16x64xf32, #tpu.memory_space<vmem>>, vector<1x64xf32>,
    %c7_i32 = arith.constant 7 : i32
    %64 = arith.addi %0, %c7_i32 : i32
    %c4_i32_35 = arith.constant 4 : i32
    %65 = arith.muli %64, %c4_i32_35 : i32
    %c0_i32_36 = arith.constant 0 : i32
    %66 = arith.addi %65, %c0_i32_36 : i32
    %67 = arith.index_cast %66 : i32 to index
    %68 = memref.load %arg1[%67] : memref<128xi32, #tpu.memory_space<smem>>
    %69 = arith.index_cast %68 : i32 to index
    %c0_37 = arith.constant 0 : index
    %70 = vector.load %arg2[%69, %c0_37] : memref<32x64xf32, #tpu.memory_space<vmem>>, vector<1x64xf32>
    %c7 = arith.constant 7 : index
    %c0_38 = arith.constant 0 : index
    %71 = vector.load %arg10[%c7, %c0_38] : memref<16x64xf32, #tpu.memory_space<vmem>>, vector<1x64xf32>
    tpu.vector_store %arg10[%c7, %c0_38], %70 {strides = array<i32>} : memref<16x64xf32, #tpu.memory_space<vmem>>, vector<1x64xf32>,
    %c8_i32 = arith.constant 8 : i32
    %72 = arith.addi %0, %c8_i32 : i32
    %c4_i32_39 = arith.constant 4 : i32
    %73 = arith.muli %72, %c4_i32_39 : i32
    %c0_i32_40 = arith.constant 0 : i32
    %74 = arith.addi %73, %c0_i32_40 : i32
    %75 = arith.index_cast %74 : i32 to index
    %76 = memref.load %arg1[%75] : memref<128xi32, #tpu.memory_space<smem>>
    %77 = arith.index_cast %76 : i32 to index
    %c0_41 = arith.constant 0 : index
    %78 = vector.load %arg2[%77, %c0_41] : memref<32x64xf32, #tpu.memory_space<vmem>>, vector<1x64xf32>
    %c8 = arith.constant 8 : index
    %c0_42 = arith.constant 0 : index
    %79 = vector.load %arg10[%c8, %c0_42] : memref<16x64xf32, #tpu.memory_space<vmem>>, vector<1x64xf32>
    tpu.vector_store %arg10[%c8, %c0_42], %78 {strides = array<i32>} : memref<16x64xf32, #tpu.memory_space<vmem>>, vector<1x64xf32>,
    %c9_i32 = arith.constant 9 : i32
    %80 = arith.addi %0, %c9_i32 : i32
    %c4_i32_43 = arith.constant 4 : i32
    %81 = arith.muli %80, %c4_i32_43 : i32
    %c0_i32_44 = arith.constant 0 : i32
    %82 = arith.addi %81, %c0_i32_44 : i32
    %83 = arith.index_cast %82 : i32 to index
    %84 = memref.load %arg1[%83] : memref<128xi32, #tpu.memory_space<smem>>
    %85 = arith.index_cast %84 : i32 to index
    %c0_45 = arith.constant 0 : index
    %86 = vector.load %arg2[%85, %c0_45] : memref<32x64xf32, #tpu.memory_space<vmem>>, vector<1x64xf32>
    %c9 = arith.constant 9 : index
    %c0_46 = arith.constant 0 : index
    %87 = vector.load %arg10[%c9, %c0_46] : memref<16x64xf32, #tpu.memory_space<vmem>>, vector<1x64xf32>
    tpu.vector_store %arg10[%c9, %c0_46], %86 {strides = array<i32>} : memref<16x64xf32, #tpu.memory_space<vmem>>, vector<1x64xf32>,
    %c10_i32 = arith.constant 10 : i32
    %88 = arith.addi %0, %c10_i32 : i32
    %c4_i32_47 = arith.constant 4 : i32
    %89 = arith.muli %88, %c4_i32_47 : i32
    %c0_i32_48 = arith.constant 0 : i32
    %90 = arith.addi %89, %c0_i32_48 : i32
    %91 = arith.index_cast %90 : i32 to index
    %92 = memref.load %arg1[%91] : memref<128xi32, #tpu.memory_space<smem>>
    %93 = arith.index_cast %92 : i32 to index
    %c0_49 = arith.constant 0 : index
    %94 = vector.load %arg2[%93, %c0_49] : memref<32x64xf32, #tpu.memory_space<vmem>>, vector<1x64xf32>
    %c10 = arith.constant 10 : index
    %c0_50 = arith.constant 0 : index
    %95 = vector.load %arg10[%c10, %c0_50] : memref<16x64xf32, #tpu.memory_space<vmem>>, vector<1x64xf32>
    tpu.vector_store %arg10[%c10, %c0_50], %94 {strides = array<i32>} : memref<16x64xf32, #tpu.memory_space<vmem>>, vector<1x64xf32>,
    %c11_i32 = arith.constant 11 : i32
    %96 = arith.addi %0, %c11_i32 : i32
    %c4_i32_51 = arith.constant 4 : i32
    %97 = arith.muli %96, %c4_i32_51 : i32
    %c0_i32_52 = arith.constant 0 : i32
    %98 = arith.addi %97, %c0_i32_52 : i32
    %99 = arith.index_cast %98 : i32 to index
    %100 = memref.load %arg1[%99] : memref<128xi32, #tpu.memory_space<smem>>
    %101 = arith.index_cast %100 : i32 to index
    %c0_53 = arith.constant 0 : index
    %102 = vector.load %arg2[%101, %c0_53] : memref<32x64xf32, #tpu.memory_space<vmem>>, vector<1x64xf32>
    %c11 = arith.constant 11 : index
    %c0_54 = arith.constant 0 : index
    %103 = vector.load %arg10[%c11, %c0_54] : memref<16x64xf32, #tpu.memory_space<vmem>>, vector<1x64xf32>
    tpu.vector_store %arg10[%c11, %c0_54], %102 {strides = array<i32>} : memref<16x64xf32, #tpu.memory_space<vmem>>, vector<1x64xf32>,
    %c12_i32 = arith.constant 12 : i32
    %104 = arith.addi %0, %c12_i32 : i32
    %c4_i32_55 = arith.constant 4 : i32
    %105 = arith.muli %104, %c4_i32_55 : i32
    %c0_i32_56 = arith.constant 0 : i32
    %106 = arith.addi %105, %c0_i32_56 : i32
    %107 = arith.index_cast %106 : i32 to index
    %108 = memref.load %arg1[%107] : memref<128xi32, #tpu.memory_space<smem>>
    %109 = arith.index_cast %108 : i32 to index
    %c0_57 = arith.constant 0 : index
    %110 = vector.load %arg2[%109, %c0_57] : memref<32x64xf32, #tpu.memory_space<vmem>>, vector<1x64xf32>
    %c12 = arith.constant 12 : index
    %c0_58 = arith.constant 0 : index
    %111 = vector.load %arg10[%c12, %c0_58] : memref<16x64xf32, #tpu.memory_space<vmem>>, vector<1x64xf32>
    tpu.vector_store %arg10[%c12, %c0_58], %110 {strides = array<i32>} : memref<16x64xf32, #tpu.memory_space<vmem>>, vector<1x64xf32>,
    %c13_i32 = arith.constant 13 : i32
    %112 = arith.addi %0, %c13_i32 : i32
    %c4_i32_59 = arith.constant 4 : i32
    %113 = arith.muli %112, %c4_i32_59 : i32
    %c0_i32_60 = arith.constant 0 : i32
    %114 = arith.addi %113, %c0_i32_60 : i32
    %115 = arith.index_cast %114 : i32 to index
    %116 = memref.load %arg1[%115] : memref<128xi32, #tpu.memory_space<smem>>
    %117 = arith.index_cast %116 : i32 to index
    %c0_61 = arith.constant 0 : index
    %118 = vector.load %arg2[%117, %c0_61] : memref<32x64xf32, #tpu.memory_space<vmem>>, vector<1x64xf32>
    %c13 = arith.constant 13 : index
    %c0_62 = arith.constant 0 : index
    %119 = vector.load %arg10[%c13, %c0_62] : memref<16x64xf32, #tpu.memory_space<vmem>>, vector<1x64xf32>
    tpu.vector_store %arg10[%c13, %c0_62], %118 {strides = array<i32>} : memref<16x64xf32, #tpu.memory_space<vmem>>, vector<1x64xf32>,
    %c14_i32 = arith.constant 14 : i32
    %120 = arith.addi %0, %c14_i32 : i32
    %c4_i32_63 = arith.constant 4 : i32
    %121 = arith.muli %120, %c4_i32_63 : i32
    %c0_i32_64 = arith.constant 0 : i32
    %122 = arith.addi %121, %c0_i32_64 : i32
    %123 = arith.index_cast %122 : i32 to index
    %124 = memref.load %arg1[%123] : memref<128xi32, #tpu.memory_space<smem>>
    %125 = arith.index_cast %124 : i32 to index
    %c0_65 = arith.constant 0 : index
    %126 = vector.load %arg2[%125, %c0_65] : memref<32x64xf32, #tpu.memory_space<vmem>>, vector<1x64xf32>
    %c14 = arith.constant 14 : index
    %c0_66 = arith.constant 0 : index
    %127 = vector.load %arg10[%c14, %c0_66] : memref<16x64xf32, #tpu.memory_space<vmem>>, vector<1x64xf32>
    tpu.vector_store %arg10[%c14, %c0_66], %126 {strides = array<i32>} : memref<16x64xf32, #tpu.memory_space<vmem>>, vector<1x64xf32>,
    %c15_i32 = arith.constant 15 : i32
    %128 = arith.addi %0, %c15_i32 : i32
    %c4_i32_67 = arith.constant 4 : i32
    %129 = arith.muli %128, %c4_i32_67 : i32
    %c0_i32_68 = arith.constant 0 : i32
    %130 = arith.addi %129, %c0_i32_68 : i32
    %131 = arith.index_cast %130 : i32 to index
    %132 = memref.load %arg1[%131] : memref<128xi32, #tpu.memory_space<smem>>
    %133 = arith.index_cast %132 : i32 to index
    %c0_69 = arith.constant 0 : index
    %134 = vector.load %arg2[%133, %c0_69] : memref<32x64xf32, #tpu.memory_space<vmem>>, vector<1x64xf32>
    %c15 = arith.constant 15 : index
    %c0_70 = arith.constant 0 : index
    %135 = vector.load %arg10[%c15, %c0_70] : memref<16x64xf32, #tpu.memory_space<vmem>>, vector<1x64xf32>
    tpu.vector_store %arg10[%c15, %c0_70], %134 {strides = array<i32>} : memref<16x64xf32, #tpu.memory_space<vmem>>, vector<1x64xf32>,
    %c0_71 = arith.constant 0 : index
    %c0_72 = arith.constant 0 : index
    %136 = vector.load %arg10[%c0_71, %c0_72] : memref<16x64xf32, #tpu.memory_space<vmem>>, vector<16x64xf32>
    %c0_73 = arith.constant 0 : index
    %c0_74 = arith.constant 0 : index
    %137 = vector.load %arg5[%c0_73, %c0_74] : memref<64x64xf32, #tpu.memory_space<vmem>>, vector<64x64xf32>
    %cst_75 = arith.constant dense<0.000000e+00> : vector<16x64xf32>
    %138 = tpu.matmul %136, %137, %cst_75 {dimension_numbers = #tpu.dot_dimension_numbers<[1], [0], [0], [1], [0, 0, 1, 1], [], []>} : vector<16x64xf32>, vector<64x64xf32>, vector<16x64xf32> -> vector<16x64xf32>
    %139 = arith.addf %6, %138 : vector<16x64xf32>
    %cst_76 = arith.constant 0.000000e+00 : f32
    %140 = vector.broadcast %cst_76 : f32 to vector<16x64xf32>
    %141 = arith.cmpf ogt, %139, %140 : vector<16x64xf32>
    %cst_77 = arith.constant 0.000000e+00 : f32
    %142 = vector.broadcast %cst_77 : f32 to vector<16x64xf32>
    %143 = arith.minimumf %139, %142 : vector<16x64xf32>
    %144 = math.exp %143 : vector<16x64xf32>
    %cst_78 = arith.constant 1.000000e+00 : f32
    %145 = vector.broadcast %cst_78 : f32 to vector<16x64xf32>
    %146 = arith.subf %144, %145 : vector<16x64xf32>
    %147 = arith.select %141, %139, %146 : vector<16x64xi1>, vector<16x64xf32>
    %c0_79 = arith.constant 0 : index
    %c0_80 = arith.constant 0 : index
    %148 = vector.load %arg7[%c0_79, %c0_80] : memref<1x64xf32, #tpu.memory_space<vmem>>, vector<1x64xf32>
    %149 = vector.broadcast %148 : vector<1x64xf32> to vector<16x64xf32>
    %150 = arith.mulf %147, %149 : vector<16x64xf32>
    %c0_81 = arith.constant 0 : index
    %c0_82 = arith.constant 0 : index
    %151 = vector.load %arg8[%c0_81, %c0_82] : memref<1x64xf32, #tpu.memory_space<vmem>>, vector<1x64xf32>
    %152 = vector.broadcast %151 : vector<1x64xf32> to vector<16x64xf32>
    %153 = arith.addf %150, %152 : vector<16x64xf32>
    %154 = arith.addf %7, %153 : vector<16x64xf32>
    %c0_i32_83 = arith.constant 0 : i32
    %155 = arith.addi %0, %c0_i32_83 : i32
    %c4_i32_84 = arith.constant 4 : i32
    %156 = arith.muli %155, %c4_i32_84 : i32
    %c1_i32_85 = arith.constant 1 : i32
    %157 = arith.addi %156, %c1_i32_85 : i32
    %158 = arith.index_cast %157 : i32 to index
    %159 = memref.load %arg1[%158] : memref<128xi32, #tpu.memory_space<smem>>
    %160 = arith.index_cast %159 : i32 to index
    %c0_86 = arith.constant 0 : index
    %161 = vector.load %arg2[%160, %c0_86] : memref<32x64xf32, #tpu.memory_space<vmem>>, vector<1x64xf32>
    %c0_87 = arith.constant 0 : index
    %c0_88 = arith.constant 0 : index
    %162 = vector.load %arg10[%c0_87, %c0_88] : memref<16x64xf32, #tpu.memory_space<vmem>>, vector<1x64xf32>
    tpu.vector_store %arg10[%c0_87, %c0_88], %161 {strides = array<i32>} : memref<16x64xf32, #tpu.memory_space<vmem>>, vector<1x64xf32>,
    %c1_i32_89 = arith.constant 1 : i32
    %163 = arith.addi %0, %c1_i32_89 : i32
    %c4_i32_90 = arith.constant 4 : i32
    %164 = arith.muli %163, %c4_i32_90 : i32
    %c1_i32_91 = arith.constant 1 : i32
    %165 = arith.addi %164, %c1_i32_91 : i32
    %166 = arith.index_cast %165 : i32 to index
    %167 = memref.load %arg1[%166] : memref<128xi32, #tpu.memory_space<smem>>
    %168 = arith.index_cast %167 : i32 to index
    %c0_92 = arith.constant 0 : index
    %169 = vector.load %arg2[%168, %c0_92] : memref<32x64xf32, #tpu.memory_space<vmem>>, vector<1x64xf32>
    %c1_93 = arith.constant 1 : index
    %c0_94 = arith.constant 0 : index
    %170 = vector.load %arg10[%c1_93, %c0_94] : memref<16x64xf32, #tpu.memory_space<vmem>>, vector<1x64xf32>
    tpu.vector_store %arg10[%c1_93, %c0_94], %169 {strides = array<i32>} : memref<16x64xf32, #tpu.memory_space<vmem>>, vector<1x64xf32>,
    %c2_i32_95 = arith.constant 2 : i32
    %171 = arith.addi %0, %c2_i32_95 : i32
    %c4_i32_96 = arith.constant 4 : i32
    %172 = arith.muli %171, %c4_i32_96 : i32
    %c1_i32_97 = arith.constant 1 : i32
    %173 = arith.addi %172, %c1_i32_97 : i32
    %174 = arith.index_cast %173 : i32 to index
    %175 = memref.load %arg1[%174] : memref<128xi32, #tpu.memory_space<smem>>
    %176 = arith.index_cast %175 : i32 to index
    %c0_98 = arith.constant 0 : index
    %177 = vector.load %arg2[%176, %c0_98] : memref<32x64xf32, #tpu.memory_space<vmem>>, vector<1x64xf32>
    %c2_99 = arith.constant 2 : index
    %c0_100 = arith.constant 0 : index
    %178 = vector.load %arg10[%c2_99, %c0_100] : memref<16x64xf32, #tpu.memory_space<vmem>>, vector<1x64xf32>
    tpu.vector_store %arg10[%c2_99, %c0_100], %177 {strides = array<i32>} : memref<16x64xf32, #tpu.memory_space<vmem>>, vector<1x64xf32>,
    %c3_i32_101 = arith.constant 3 : i32
    %179 = arith.addi %0, %c3_i32_101 : i32
    %c4_i32_102 = arith.constant 4 : i32
    %180 = arith.muli %179, %c4_i32_102 : i32
    %c1_i32_103 = arith.constant 1 : i32
    %181 = arith.addi %180, %c1_i32_103 : i32
    %182 = arith.index_cast %181 : i32 to index
    %183 = memref.load %arg1[%182] : memref<128xi32, #tpu.memory_space<smem>>
    %184 = arith.index_cast %183 : i32 to index
    %c0_104 = arith.constant 0 : index
    %185 = vector.load %arg2[%184, %c0_104] : memref<32x64xf32, #tpu.memory_space<vmem>>, vector<1x64xf32>
    %c3_105 = arith.constant 3 : index
    %c0_106 = arith.constant 0 : index
    %186 = vector.load %arg10[%c3_105, %c0_106] : memref<16x64xf32, #tpu.memory_space<vmem>>, vector<1x64xf32>
    tpu.vector_store %arg10[%c3_105, %c0_106], %185 {strides = array<i32>} : memref<16x64xf32, #tpu.memory_space<vmem>>, vector<1x64xf32>,
    %c4_i32_107 = arith.constant 4 : i32
    %187 = arith.addi %0, %c4_i32_107 : i32
    %c4_i32_108 = arith.constant 4 : i32
    %188 = arith.muli %187, %c4_i32_108 : i32
    %c1_i32_109 = arith.constant 1 : i32
    %189 = arith.addi %188, %c1_i32_109 : i32
    %190 = arith.index_cast %189 : i32 to index
    %191 = memref.load %arg1[%190] : memref<128xi32, #tpu.memory_space<smem>>
    %192 = arith.index_cast %191 : i32 to index
    %c0_110 = arith.constant 0 : index
    %193 = vector.load %arg2[%192, %c0_110] : memref<32x64xf32, #tpu.memory_space<vmem>>, vector<1x64xf32>
    %c4_111 = arith.constant 4 : index
    %c0_112 = arith.constant 0 : index
    %194 = vector.load %arg10[%c4_111, %c0_112] : memref<16x64xf32, #tpu.memory_space<vmem>>, vector<1x64xf32>
    tpu.vector_store %arg10[%c4_111, %c0_112], %193 {strides = array<i32>} : memref<16x64xf32, #tpu.memory_space<vmem>>, vector<1x64xf32>,
    %c5_i32_113 = arith.constant 5 : i32
    %195 = arith.addi %0, %c5_i32_113 : i32
    %c4_i32_114 = arith.constant 4 : i32
    %196 = arith.muli %195, %c4_i32_114 : i32
    %c1_i32_115 = arith.constant 1 : i32
    %197 = arith.addi %196, %c1_i32_115 : i32
    %198 = arith.index_cast %197 : i32 to index
    %199 = memref.load %arg1[%198] : memref<128xi32, #tpu.memory_space<smem>>
    %200 = arith.index_cast %199 : i32 to index
    %c0_116 = arith.constant 0 : index
    %201 = vector.load %arg2[%200, %c0_116] : memref<32x64xf32, #tpu.memory_space<vmem>>, vector<1x64xf32>
    %c5_117 = arith.constant 5 : index
    %c0_118 = arith.constant 0 : index
    %202 = vector.load %arg10[%c5_117, %c0_118] : memref<16x64xf32, #tpu.memory_space<vmem>>, vector<1x64xf32>
    tpu.vector_store %arg10[%c5_117, %c0_118], %201 {strides = array<i32>} : memref<16x64xf32, #tpu.memory_space<vmem>>, vector<1x64xf32>,
    %c6_i32_119 = arith.constant 6 : i32
    %203 = arith.addi %0, %c6_i32_119 : i32
    %c4_i32_120 = arith.constant 4 : i32
    %204 = arith.muli %203, %c4_i32_120 : i32
    %c1_i32_121 = arith.constant 1 : i32
    %205 = arith.addi %204, %c1_i32_121 : i32
    %206 = arith.index_cast %205 : i32 to index
    %207 = memref.load %arg1[%206] : memref<128xi32, #tpu.memory_space<smem>>
    %208 = arith.index_cast %207 : i32 to index
    %c0_122 = arith.constant 0 : index
    %209 = vector.load %arg2[%208, %c0_122] : memref<32x64xf32, #tpu.memory_space<vmem>>, vector<1x64xf32>
    %c6_123 = arith.constant 6 : index
    %c0_124 = arith.constant 0 : index
    %210 = vector.load %arg10[%c6_123, %c0_124] : memref<16x64xf32, #tpu.memory_space<vmem>>, vector<1x64xf32>
    tpu.vector_store %arg10[%c6_123, %c0_124], %209 {strides = array<i32>} : memref<16x64xf32, #tpu.memory_space<vmem>>, vector<1x64xf32>,
    %c7_i32_125 = arith.constant 7 : i32
    %211 = arith.addi %0, %c7_i32_125 : i32
    %c4_i32_126 = arith.constant 4 : i32
    %212 = arith.muli %211, %c4_i32_126 : i32
    %c1_i32_127 = arith.constant 1 : i32
    %213 = arith.addi %212, %c1_i32_127 : i32
    %214 = arith.index_cast %213 : i32 to index
    %215 = memref.load %arg1[%214] : memref<128xi32, #tpu.memory_space<smem>>
    %216 = arith.index_cast %215 : i32 to index
    %c0_128 = arith.constant 0 : index
    %217 = vector.load %arg2[%216, %c0_128] : memref<32x64xf32, #tpu.memory_space<vmem>>, vector<1x64xf32>
    %c7_129 = arith.constant 7 : index
    %c0_130 = arith.constant 0 : index
    %218 = vector.load %arg10[%c7_129, %c0_130] : memref<16x64xf32, #tpu.memory_space<vmem>>, vector<1x64xf32>
    tpu.vector_store %arg10[%c7_129, %c0_130], %217 {strides = array<i32>} : memref<16x64xf32, #tpu.memory_space<vmem>>, vector<1x64xf32>,
    %c8_i32_131 = arith.constant 8 : i32
    %219 = arith.addi %0, %c8_i32_131 : i32
    %c4_i32_132 = arith.constant 4 : i32
    %220 = arith.muli %219, %c4_i32_132 : i32
    %c1_i32_133 = arith.constant 1 : i32
    %221 = arith.addi %220, %c1_i32_133 : i32
    %222 = arith.index_cast %221 : i32 to index
    %223 = memref.load %arg1[%222] : memref<128xi32, #tpu.memory_space<smem>>
    %224 = arith.index_cast %223 : i32 to index
    %c0_134 = arith.constant 0 : index
    %225 = vector.load %arg2[%224, %c0_134] : memref<32x64xf32, #tpu.memory_space<vmem>>, vector<1x64xf32>
    %c8_135 = arith.constant 8 : index
    %c0_136 = arith.constant 0 : index
    %226 = vector.load %arg10[%c8_135, %c0_136] : memref<16x64xf32, #tpu.memory_space<vmem>>, vector<1x64xf32>
    tpu.vector_store %arg10[%c8_135, %c0_136], %225 {strides = array<i32>} : memref<16x64xf32, #tpu.memory_space<vmem>>, vector<1x64xf32>,
    %c9_i32_137 = arith.constant 9 : i32
    %227 = arith.addi %0, %c9_i32_137 : i32
    %c4_i32_138 = arith.constant 4 : i32
    %228 = arith.muli %227, %c4_i32_138 : i32
    %c1_i32_139 = arith.constant 1 : i32
    %229 = arith.addi %228, %c1_i32_139 : i32
    %230 = arith.index_cast %229 : i32 to index
    %231 = memref.load %arg1[%230] : memref<128xi32, #tpu.memory_space<smem>>
    %232 = arith.index_cast %231 : i32 to index
    %c0_140 = arith.constant 0 : index
    %233 = vector.load %arg2[%232, %c0_140] : memref<32x64xf32, #tpu.memory_space<vmem>>, vector<1x64xf32>
    %c9_141 = arith.constant 9 : index
    %c0_142 = arith.constant 0 : index
    %234 = vector.load %arg10[%c9_141, %c0_142] : memref<16x64xf32, #tpu.memory_space<vmem>>, vector<1x64xf32>
    tpu.vector_store %arg10[%c9_141, %c0_142], %233 {strides = array<i32>} : memref<16x64xf32, #tpu.memory_space<vmem>>, vector<1x64xf32>,
    %c10_i32_143 = arith.constant 10 : i32
    %235 = arith.addi %0, %c10_i32_143 : i32
    %c4_i32_144 = arith.constant 4 : i32
    %236 = arith.muli %235, %c4_i32_144 : i32
    %c1_i32_145 = arith.constant 1 : i32
    %237 = arith.addi %236, %c1_i32_145 : i32
    %238 = arith.index_cast %237 : i32 to index
    %239 = memref.load %arg1[%238] : memref<128xi32, #tpu.memory_space<smem>>
    %240 = arith.index_cast %239 : i32 to index
    %c0_146 = arith.constant 0 : index
    %241 = vector.load %arg2[%240, %c0_146] : memref<32x64xf32, #tpu.memory_space<vmem>>, vector<1x64xf32>
    %c10_147 = arith.constant 10 : index
    %c0_148 = arith.constant 0 : index
    %242 = vector.load %arg10[%c10_147, %c0_148] : memref<16x64xf32, #tpu.memory_space<vmem>>, vector<1x64xf32>
    tpu.vector_store %arg10[%c10_147, %c0_148], %241 {strides = array<i32>} : memref<16x64xf32, #tpu.memory_space<vmem>>, vector<1x64xf32>,
    %c11_i32_149 = arith.constant 11 : i32
    %243 = arith.addi %0, %c11_i32_149 : i32
    %c4_i32_150 = arith.constant 4 : i32
    %244 = arith.muli %243, %c4_i32_150 : i32
    %c1_i32_151 = arith.constant 1 : i32
    %245 = arith.addi %244, %c1_i32_151 : i32
    %246 = arith.index_cast %245 : i32 to index
    %247 = memref.load %arg1[%246] : memref<128xi32, #tpu.memory_space<smem>>
    %248 = arith.index_cast %247 : i32 to index
    %c0_152 = arith.constant 0 : index
    %249 = vector.load %arg2[%248, %c0_152] : memref<32x64xf32, #tpu.memory_space<vmem>>, vector<1x64xf32>
    %c11_153 = arith.constant 11 : index
    %c0_154 = arith.constant 0 : index
    %250 = vector.load %arg10[%c11_153, %c0_154] : memref<16x64xf32, #tpu.memory_space<vmem>>, vector<1x64xf32>
    tpu.vector_store %arg10[%c11_153, %c0_154], %249 {strides = array<i32>} : memref<16x64xf32, #tpu.memory_space<vmem>>, vector<1x64xf32>,
    %c12_i32_155 = arith.constant 12 : i32
    %251 = arith.addi %0, %c12_i32_155 : i32
    %c4_i32_156 = arith.constant 4 : i32
    %252 = arith.muli %251, %c4_i32_156 : i32
    %c1_i32_157 = arith.constant 1 : i32
    %253 = arith.addi %252, %c1_i32_157 : i32
    %254 = arith.index_cast %253 : i32 to index
    %255 = memref.load %arg1[%254] : memref<128xi32, #tpu.memory_space<smem>>
    %256 = arith.index_cast %255 : i32 to index
    %c0_158 = arith.constant 0 : index
    %257 = vector.load %arg2[%256, %c0_158] : memref<32x64xf32, #tpu.memory_space<vmem>>, vector<1x64xf32>
    %c12_159 = arith.constant 12 : index
    %c0_160 = arith.constant 0 : index
    %258 = vector.load %arg10[%c12_159, %c0_160] : memref<16x64xf32, #tpu.memory_space<vmem>>, vector<1x64xf32>
    tpu.vector_store %arg10[%c12_159, %c0_160], %257 {strides = array<i32>} : memref<16x64xf32, #tpu.memory_space<vmem>>, vector<1x64xf32>,
    %c13_i32_161 = arith.constant 13 : i32
    %259 = arith.addi %0, %c13_i32_161 : i32
    %c4_i32_162 = arith.constant 4 : i32
    %260 = arith.muli %259, %c4_i32_162 : i32
    %c1_i32_163 = arith.constant 1 : i32
    %261 = arith.addi %260, %c1_i32_163 : i32
    %262 = arith.index_cast %261 : i32 to index
    %263 = memref.load %arg1[%262] : memref<128xi32, #tpu.memory_space<smem>>
    %264 = arith.index_cast %263 : i32 to index
    %c0_164 = arith.constant 0 : index
    %265 = vector.load %arg2[%264, %c0_164] : memref<32x64xf32, #tpu.memory_space<vmem>>, vector<1x64xf32>
    %c13_165 = arith.constant 13 : index
    %c0_166 = arith.constant 0 : index
    %266 = vector.load %arg10[%c13_165, %c0_166] : memref<16x64xf32, #tpu.memory_space<vmem>>, vector<1x64xf32>
    tpu.vector_store %arg10[%c13_165, %c0_166], %265 {strides = array<i32>} : memref<16x64xf32, #tpu.memory_space<vmem>>, vector<1x64xf32>,
    %c14_i32_167 = arith.constant 14 : i32
    %267 = arith.addi %0, %c14_i32_167 : i32
    %c4_i32_168 = arith.constant 4 : i32
    %268 = arith.muli %267, %c4_i32_168 : i32
    %c1_i32_169 = arith.constant 1 : i32
    %269 = arith.addi %268, %c1_i32_169 : i32
    %270 = arith.index_cast %269 : i32 to index
    %271 = memref.load %arg1[%270] : memref<128xi32, #tpu.memory_space<smem>>
    %272 = arith.index_cast %271 : i32 to index
    %c0_170 = arith.constant 0 : index
    %273 = vector.load %arg2[%272, %c0_170] : memref<32x64xf32, #tpu.memory_space<vmem>>, vector<1x64xf32>
    %c14_171 = arith.constant 14 : index
    %c0_172 = arith.constant 0 : index
    %274 = vector.load %arg10[%c14_171, %c0_172] : memref<16x64xf32, #tpu.memory_space<vmem>>, vector<1x64xf32>
    tpu.vector_store %arg10[%c14_171, %c0_172], %273 {strides = array<i32>} : memref<16x64xf32, #tpu.memory_space<vmem>>, vector<1x64xf32>,
    %c15_i32_173 = arith.constant 15 : i32
    %275 = arith.addi %0, %c15_i32_173 : i32
    %c4_i32_174 = arith.constant 4 : i32
    %276 = arith.muli %275, %c4_i32_174 : i32
    %c1_i32_175 = arith.constant 1 : i32
    %277 = arith.addi %276, %c1_i32_175 : i32
    %278 = arith.index_cast %277 : i32 to index
    %279 = memref.load %arg1[%278] : memref<128xi32, #tpu.memory_space<smem>>
    %280 = arith.index_cast %279 : i32 to index
    %c0_176 = arith.constant 0 : index
    %281 = vector.load %arg2[%280, %c0_176] : memref<32x64xf32, #tpu.memory_space<vmem>>, vector<1x64xf32>
    %c15_177 = arith.constant 15 : index
    %c0_178 = arith.constant 0 : index
    %282 = vector.load %arg10[%c15_177, %c0_178] : memref<16x64xf32, #tpu.memory_space<vmem>>, vector<1x64xf32>
    tpu.vector_store %arg10[%c15_177, %c0_178], %281 {strides = array<i32>} : memref<16x64xf32, #tpu.memory_space<vmem>>, vector<1x64xf32>,
    %c0_179 = arith.constant 0 : index
    %c0_180 = arith.constant 0 : index
    %283 = vector.load %arg10[%c0_179, %c0_180] : memref<16x64xf32, #tpu.memory_space<vmem>>, vector<16x64xf32>
    %c0_181 = arith.constant 0 : index
    %c0_182 = arith.constant 0 : index
    %284 = vector.load %arg5[%c0_181, %c0_182] : memref<64x64xf32, #tpu.memory_space<vmem>>, vector<64x64xf32>
    %cst_183 = arith.constant dense<0.000000e+00> : vector<16x64xf32>
    %285 = tpu.matmul %283, %284, %cst_183 {dimension_numbers = #tpu.dot_dimension_numbers<[1], [0], [0], [1], [0, 0, 1, 1], [], []>} : vector<16x64xf32>, vector<64x64xf32>, vector<16x64xf32> -> vector<16x64xf32>
    %286 = arith.addf %6, %285 : vector<16x64xf32>
    %cst_184 = arith.constant 0.000000e+00 : f32
    %287 = vector.broadcast %cst_184 : f32 to vector<16x64xf32>
    %288 = arith.cmpf ogt, %286, %287 : vector<16x64xf32>
    %cst_185 = arith.constant 0.000000e+00 : f32
    %289 = vector.broadcast %cst_185 : f32 to vector<16x64xf32>
    %290 = arith.minimumf %286, %289 : vector<16x64xf32>
    %291 = math.exp %290 : vector<16x64xf32>
    %cst_186 = arith.constant 1.000000e+00 : f32
    %292 = vector.broadcast %cst_186 : f32 to vector<16x64xf32>
    %293 = arith.subf %291, %292 : vector<16x64xf32>
    %294 = arith.select %288, %286, %293 : vector<16x64xi1>, vector<16x64xf32>
    %c0_187 = arith.constant 0 : index
    %c0_188 = arith.constant 0 : index
    %295 = vector.load %arg7[%c0_187, %c0_188] : memref<1x64xf32, #tpu.memory_space<vmem>>, vector<1x64xf32>
    %296 = vector.broadcast %295 : vector<1x64xf32> to vector<16x64xf32>
    %297 = arith.mulf %294, %296 : vector<16x64xf32>
    %c0_189 = arith.constant 0 : index
    %c0_190 = arith.constant 0 : index
    %298 = vector.load %arg8[%c0_189, %c0_190] : memref<1x64xf32, #tpu.memory_space<vmem>>, vector<1x64xf32>
    %299 = vector.broadcast %298 : vector<1x64xf32> to vector<16x64xf32>
    %300 = arith.addf %297, %299 : vector<16x64xf32>
    %301 = arith.addf %154, %300 : vector<16x64xf32>
    %c0_i32_191 = arith.constant 0 : i32
    %302 = arith.addi %0, %c0_i32_191 : i32
    %c4_i32_192 = arith.constant 4 : i32
    %303 = arith.muli %302, %c4_i32_192 : i32
    %c2_i32_193 = arith.constant 2 : i32
    %304 = arith.addi %303, %c2_i32_193 : i32
    %305 = arith.index_cast %304 : i32 to index
    %306 = memref.load %arg1[%305] : memref<128xi32, #tpu.memory_space<smem>>
    %307 = arith.index_cast %306 : i32 to index
    %c0_194 = arith.constant 0 : index
    %308 = vector.load %arg2[%307, %c0_194] : memref<32x64xf32, #tpu.memory_space<vmem>>, vector<1x64xf32>
    %c0_195 = arith.constant 0 : index
    %c0_196 = arith.constant 0 : index
    %309 = vector.load %arg10[%c0_195, %c0_196] : memref<16x64xf32, #tpu.memory_space<vmem>>, vector<1x64xf32>
    tpu.vector_store %arg10[%c0_195, %c0_196], %308 {strides = array<i32>} : memref<16x64xf32, #tpu.memory_space<vmem>>, vector<1x64xf32>,
    %c1_i32_197 = arith.constant 1 : i32
    %310 = arith.addi %0, %c1_i32_197 : i32
    %c4_i32_198 = arith.constant 4 : i32
    %311 = arith.muli %310, %c4_i32_198 : i32
    %c2_i32_199 = arith.constant 2 : i32
    %312 = arith.addi %311, %c2_i32_199 : i32
    %313 = arith.index_cast %312 : i32 to index
    %314 = memref.load %arg1[%313] : memref<128xi32, #tpu.memory_space<smem>>
    %315 = arith.index_cast %314 : i32 to index
    %c0_200 = arith.constant 0 : index
    %316 = vector.load %arg2[%315, %c0_200] : memref<32x64xf32, #tpu.memory_space<vmem>>, vector<1x64xf32>
    %c1_201 = arith.constant 1 : index
    %c0_202 = arith.constant 0 : index
    %317 = vector.load %arg10[%c1_201, %c0_202] : memref<16x64xf32, #tpu.memory_space<vmem>>, vector<1x64xf32>
    tpu.vector_store %arg10[%c1_201, %c0_202], %316 {strides = array<i32>} : memref<16x64xf32, #tpu.memory_space<vmem>>, vector<1x64xf32>,
    %c2_i32_203 = arith.constant 2 : i32
    %318 = arith.addi %0, %c2_i32_203 : i32
    %c4_i32_204 = arith.constant 4 : i32
    %319 = arith.muli %318, %c4_i32_204 : i32
    %c2_i32_205 = arith.constant 2 : i32
    %320 = arith.addi %319, %c2_i32_205 : i32
    %321 = arith.index_cast %320 : i32 to index
    %322 = memref.load %arg1[%321] : memref<128xi32, #tpu.memory_space<smem>>
    %323 = arith.index_cast %322 : i32 to index
    %c0_206 = arith.constant 0 : index
    %324 = vector.load %arg2[%323, %c0_206] : memref<32x64xf32, #tpu.memory_space<vmem>>, vector<1x64xf32>
    %c2_207 = arith.constant 2 : index
    %c0_208 = arith.constant 0 : index
    %325 = vector.load %arg10[%c2_207, %c0_208] : memref<16x64xf32, #tpu.memory_space<vmem>>, vector<1x64xf32>
    tpu.vector_store %arg10[%c2_207, %c0_208], %324 {strides = array<i32>} : memref<16x64xf32, #tpu.memory_space<vmem>>, vector<1x64xf32>,
    %c3_i32_209 = arith.constant 3 : i32
    %326 = arith.addi %0, %c3_i32_209 : i32
    %c4_i32_210 = arith.constant 4 : i32
    %327 = arith.muli %326, %c4_i32_210 : i32
    %c2_i32_211 = arith.constant 2 : i32
    %328 = arith.addi %327, %c2_i32_211 : i32
    %329 = arith.index_cast %328 : i32 to index
    %330 = memref.load %arg1[%329] : memref<128xi32, #tpu.memory_space<smem>>
    %331 = arith.index_cast %330 : i32 to index
    %c0_212 = arith.constant 0 : index
    %332 = vector.load %arg2[%331, %c0_212] : memref<32x64xf32, #tpu.memory_space<vmem>>, vector<1x64xf32>
    %c3_213 = arith.constant 3 : index
    %c0_214 = arith.constant 0 : index
    %333 = vector.load %arg10[%c3_213, %c0_214] : memref<16x64xf32, #tpu.memory_space<vmem>>, vector<1x64xf32>
    tpu.vector_store %arg10[%c3_213, %c0_214], %332 {strides = array<i32>} : memref<16x64xf32, #tpu.memory_space<vmem>>, vector<1x64xf32>,
    %c4_i32_215 = arith.constant 4 : i32
    %334 = arith.addi %0, %c4_i32_215 : i32
    %c4_i32_216 = arith.constant 4 : i32
    %335 = arith.muli %334, %c4_i32_216 : i32
    %c2_i32_217 = arith.constant 2 : i32
    %336 = arith.addi %335, %c2_i32_217 : i32
    %337 = arith.index_cast %336 : i32 to index
    %338 = memref.load %arg1[%337] : memref<128xi32, #tpu.memory_space<smem>>
    %339 = arith.index_cast %338 : i32 to index
    %c0_218 = arith.constant 0 : index
    %340 = vector.load %arg2[%339, %c0_218] : memref<32x64xf32, #tpu.memory_space<vmem>>, vector<1x64xf32>
    %c4_219 = arith.constant 4 : index
    %c0_220 = arith.constant 0 : index
    %341 = vector.load %arg10[%c4_219, %c0_220] : memref<16x64xf32, #tpu.memory_space<vmem>>, vector<1x64xf32>
    tpu.vector_store %arg10[%c4_219, %c0_220], %340 {strides = array<i32>} : memref<16x64xf32, #tpu.memory_space<vmem>>, vector<1x64xf32>,
    %c5_i32_221 = arith.constant 5 : i32
    %342 = arith.addi %0, %c5_i32_221 : i32
    %c4_i32_222 = arith.constant 4 : i32
    %343 = arith.muli %342, %c4_i32_222 : i32
    %c2_i32_223 = arith.constant 2 : i32
    %344 = arith.addi %343, %c2_i32_223 : i32
    %345 = arith.index_cast %344 : i32 to index
    %346 = memref.load %arg1[%345] : memref<128xi32, #tpu.memory_space<smem>>
    %347 = arith.index_cast %346 : i32 to index
    %c0_224 = arith.constant 0 : index
    %348 = vector.load %arg2[%347, %c0_224] : memref<32x64xf32, #tpu.memory_space<vmem>>, vector<1x64xf32>
    %c5_225 = arith.constant 5 : index
    %c0_226 = arith.constant 0 : index
    %349 = vector.load %arg10[%c5_225, %c0_226] : memref<16x64xf32, #tpu.memory_space<vmem>>, vector<1x64xf32>
    tpu.vector_store %arg10[%c5_225, %c0_226], %348 {strides = array<i32>} : memref<16x64xf32, #tpu.memory_space<vmem>>, vector<1x64xf32>,
    %c6_i32_227 = arith.constant 6 : i32
    %350 = arith.addi %0, %c6_i32_227 : i32
    %c4_i32_228 = arith.constant 4 : i32
    %351 = arith.muli %350, %c4_i32_228 : i32
    %c2_i32_229 = arith.constant 2 : i32
    %352 = arith.addi %351, %c2_i32_229 : i32
    %353 = arith.index_cast %352 : i32 to index
    %354 = memref.load %arg1[%353] : memref<128xi32, #tpu.memory_space<smem>>
    %355 = arith.index_cast %354 : i32 to index
    %c0_230 = arith.constant 0 : index
    %356 = vector.load %arg2[%355, %c0_230] : memref<32x64xf32, #tpu.memory_space<vmem>>, vector<1x64xf32>
    %c6_231 = arith.constant 6 : index
    %c0_232 = arith.constant 0 : index
    %357 = vector.load %arg10[%c6_231, %c0_232] : memref<16x64xf32, #tpu.memory_space<vmem>>, vector<1x64xf32>
    tpu.vector_store %arg10[%c6_231, %c0_232], %356 {strides = array<i32>} : memref<16x64xf32, #tpu.memory_space<vmem>>, vector<1x64xf32>,
    %c7_i32_233 = arith.constant 7 : i32
    %358 = arith.addi %0, %c7_i32_233 : i32
    %c4_i32_234 = arith.constant 4 : i32
    %359 = arith.muli %358, %c4_i32_234 : i32
    %c2_i32_235 = arith.constant 2 : i32
    %360 = arith.addi %359, %c2_i32_235 : i32
    %361 = arith.index_cast %360 : i32 to index
    %362 = memref.load %arg1[%361] : memref<128xi32, #tpu.memory_space<smem>>
    %363 = arith.index_cast %362 : i32 to index
    %c0_236 = arith.constant 0 : index
    %364 = vector.load %arg2[%363, %c0_236] : memref<32x64xf32, #tpu.memory_space<vmem>>, vector<1x64xf32>
    %c7_237 = arith.constant 7 : index
    %c0_238 = arith.constant 0 : index
    %365 = vector.load %arg10[%c7_237, %c0_238] : memref<16x64xf32, #tpu.memory_space<vmem>>, vector<1x64xf32>
    tpu.vector_store %arg10[%c7_237, %c0_238], %364 {strides = array<i32>} : memref<16x64xf32, #tpu.memory_space<vmem>>, vector<1x64xf32>,
    %c8_i32_239 = arith.constant 8 : i32
    %366 = arith.addi %0, %c8_i32_239 : i32
    %c4_i32_240 = arith.constant 4 : i32
    %367 = arith.muli %366, %c4_i32_240 : i32
    %c2_i32_241 = arith.constant 2 : i32
    %368 = arith.addi %367, %c2_i32_241 : i32
    %369 = arith.index_cast %368 : i32 to index
    %370 = memref.load %arg1[%369] : memref<128xi32, #tpu.memory_space<smem>>
    %371 = arith.index_cast %370 : i32 to index
    %c0_242 = arith.constant 0 : index
    %372 = vector.load %arg2[%371, %c0_242] : memref<32x64xf32, #tpu.memory_space<vmem>>, vector<1x64xf32>
    %c8_243 = arith.constant 8 : index
    %c0_244 = arith.constant 0 : index
    %373 = vector.load %arg10[%c8_243, %c0_244] : memref<16x64xf32, #tpu.memory_space<vmem>>, vector<1x64xf32>
    tpu.vector_store %arg10[%c8_243, %c0_244], %372 {strides = array<i32>} : memref<16x64xf32, #tpu.memory_space<vmem>>, vector<1x64xf32>,
    %c9_i32_245 = arith.constant 9 : i32
    %374 = arith.addi %0, %c9_i32_245 : i32
    %c4_i32_246 = arith.constant 4 : i32
    %375 = arith.muli %374, %c4_i32_246 : i32
    %c2_i32_247 = arith.constant 2 : i32
    %376 = arith.addi %375, %c2_i32_247 : i32
    %377 = arith.index_cast %376 : i32 to index
    %378 = memref.load %arg1[%377] : memref<128xi32, #tpu.memory_space<smem>>
    %379 = arith.index_cast %378 : i32 to index
    %c0_248 = arith.constant 0 : index
    %380 = vector.load %arg2[%379, %c0_248] : memref<32x64xf32, #tpu.memory_space<vmem>>, vector<1x64xf32>
    %c9_249 = arith.constant 9 : index
    %c0_250 = arith.constant 0 : index
    %381 = vector.load %arg10[%c9_249, %c0_250] : memref<16x64xf32, #tpu.memory_space<vmem>>, vector<1x64xf32>
    tpu.vector_store %arg10[%c9_249, %c0_250], %380 {strides = array<i32>} : memref<16x64xf32, #tpu.memory_space<vmem>>, vector<1x64xf32>,
    %c10_i32_251 = arith.constant 10 : i32
    %382 = arith.addi %0, %c10_i32_251 : i32
    %c4_i32_252 = arith.constant 4 : i32
    %383 = arith.muli %382, %c4_i32_252 : i32
    %c2_i32_253 = arith.constant 2 : i32
    %384 = arith.addi %383, %c2_i32_253 : i32
    %385 = arith.index_cast %384 : i32 to index
    %386 = memref.load %arg1[%385] : memref<128xi32, #tpu.memory_space<smem>>
    %387 = arith.index_cast %386 : i32 to index
    %c0_254 = arith.constant 0 : index
    %388 = vector.load %arg2[%387, %c0_254] : memref<32x64xf32, #tpu.memory_space<vmem>>, vector<1x64xf32>
    %c10_255 = arith.constant 10 : index
    %c0_256 = arith.constant 0 : index
    %389 = vector.load %arg10[%c10_255, %c0_256] : memref<16x64xf32, #tpu.memory_space<vmem>>, vector<1x64xf32>
    tpu.vector_store %arg10[%c10_255, %c0_256], %388 {strides = array<i32>} : memref<16x64xf32, #tpu.memory_space<vmem>>, vector<1x64xf32>,
    %c11_i32_257 = arith.constant 11 : i32
    %390 = arith.addi %0, %c11_i32_257 : i32
    %c4_i32_258 = arith.constant 4 : i32
    %391 = arith.muli %390, %c4_i32_258 : i32
    %c2_i32_259 = arith.constant 2 : i32
    %392 = arith.addi %391, %c2_i32_259 : i32
    %393 = arith.index_cast %392 : i32 to index
    %394 = memref.load %arg1[%393] : memref<128xi32, #tpu.memory_space<smem>>
    %395 = arith.index_cast %394 : i32 to index
    %c0_260 = arith.constant 0 : index
    %396 = vector.load %arg2[%395, %c0_260] : memref<32x64xf32, #tpu.memory_space<vmem>>, vector<1x64xf32>
    %c11_261 = arith.constant 11 : index
    %c0_262 = arith.constant 0 : index
    %397 = vector.load %arg10[%c11_261, %c0_262] : memref<16x64xf32, #tpu.memory_space<vmem>>, vector<1x64xf32>
    tpu.vector_store %arg10[%c11_261, %c0_262], %396 {strides = array<i32>} : memref<16x64xf32, #tpu.memory_space<vmem>>, vector<1x64xf32>,
    %c12_i32_263 = arith.constant 12 : i32
    %398 = arith.addi %0, %c12_i32_263 : i32
    %c4_i32_264 = arith.constant 4 : i32
    %399 = arith.muli %398, %c4_i32_264 : i32
    %c2_i32_265 = arith.constant 2 : i32
    %400 = arith.addi %399, %c2_i32_265 : i32
    %401 = arith.index_cast %400 : i32 to index
    %402 = memref.load %arg1[%401] : memref<128xi32, #tpu.memory_space<smem>>
    %403 = arith.index_cast %402 : i32 to index
    %c0_266 = arith.constant 0 : index
    %404 = vector.load %arg2[%403, %c0_266] : memref<32x64xf32, #tpu.memory_space<vmem>>, vector<1x64xf32>
    %c12_267 = arith.constant 12 : index
    %c0_268 = arith.constant 0 : index
    %405 = vector.load %arg10[%c12_267, %c0_268] : memref<16x64xf32, #tpu.memory_space<vmem>>, vector<1x64xf32>
    tpu.vector_store %arg10[%c12_267, %c0_268], %404 {strides = array<i32>} : memref<16x64xf32, #tpu.memory_space<vmem>>, vector<1x64xf32>,
    %c13_i32_269 = arith.constant 13 : i32
    %406 = arith.addi %0, %c13_i32_269 : i32
    %c4_i32_270 = arith.constant 4 : i32
    %407 = arith.muli %406, %c4_i32_270 : i32
    %c2_i32_271 = arith.constant 2 : i32
    %408 = arith.addi %407, %c2_i32_271 : i32
    %409 = arith.index_cast %408 : i32 to index
    %410 = memref.load %arg1[%409] : memref<128xi32, #tpu.memory_space<smem>>
    %411 = arith.index_cast %410 : i32 to index
    %c0_272 = arith.constant 0 : index
    %412 = vector.load %arg2[%411, %c0_272] : memref<32x64xf32, #tpu.memory_space<vmem>>, vector<1x64xf32>
    %c13_273 = arith.constant 13 : index
    %c0_274 = arith.constant 0 : index
    %413 = vector.load %arg10[%c13_273, %c0_274] : memref<16x64xf32, #tpu.memory_space<vmem>>, vector<1x64xf32>
    tpu.vector_store %arg10[%c13_273, %c0_274], %412 {strides = array<i32>} : memref<16x64xf32, #tpu.memory_space<vmem>>, vector<1x64xf32>,
    %c14_i32_275 = arith.constant 14 : i32
    %414 = arith.addi %0, %c14_i32_275 : i32
    %c4_i32_276 = arith.constant 4 : i32
    %415 = arith.muli %414, %c4_i32_276 : i32
    %c2_i32_277 = arith.constant 2 : i32
    %416 = arith.addi %415, %c2_i32_277 : i32
    %417 = arith.index_cast %416 : i32 to index
    %418 = memref.load %arg1[%417] : memref<128xi32, #tpu.memory_space<smem>>
    %419 = arith.index_cast %418 : i32 to index
    %c0_278 = arith.constant 0 : index
    %420 = vector.load %arg2[%419, %c0_278] : memref<32x64xf32, #tpu.memory_space<vmem>>, vector<1x64xf32>
    %c14_279 = arith.constant 14 : index
    %c0_280 = arith.constant 0 : index
    %421 = vector.load %arg10[%c14_279, %c0_280] : memref<16x64xf32, #tpu.memory_space<vmem>>, vector<1x64xf32>
    tpu.vector_store %arg10[%c14_279, %c0_280], %420 {strides = array<i32>} : memref<16x64xf32, #tpu.memory_space<vmem>>, vector<1x64xf32>,
    %c15_i32_281 = arith.constant 15 : i32
    %422 = arith.addi %0, %c15_i32_281 : i32
    %c4_i32_282 = arith.constant 4 : i32
    %423 = arith.muli %422, %c4_i32_282 : i32
    %c2_i32_283 = arith.constant 2 : i32
    %424 = arith.addi %423, %c2_i32_283 : i32
    %425 = arith.index_cast %424 : i32 to index
    %426 = memref.load %arg1[%425] : memref<128xi32, #tpu.memory_space<smem>>
    %427 = arith.index_cast %426 : i32 to index
    %c0_284 = arith.constant 0 : index
    %428 = vector.load %arg2[%427, %c0_284] : memref<32x64xf32, #tpu.memory_space<vmem>>, vector<1x64xf32>
    %c15_285 = arith.constant 15 : index
    %c0_286 = arith.constant 0 : index
    %429 = vector.load %arg10[%c15_285, %c0_286] : memref<16x64xf32, #tpu.memory_space<vmem>>, vector<1x64xf32>
    tpu.vector_store %arg10[%c15_285, %c0_286], %428 {strides = array<i32>} : memref<16x64xf32, #tpu.memory_space<vmem>>, vector<1x64xf32>,
    %c0_287 = arith.constant 0 : index
    %c0_288 = arith.constant 0 : index
    %430 = vector.load %arg10[%c0_287, %c0_288] : memref<16x64xf32, #tpu.memory_space<vmem>>, vector<16x64xf32>
    %c0_289 = arith.constant 0 : index
    %c0_290 = arith.constant 0 : index
    %431 = vector.load %arg5[%c0_289, %c0_290] : memref<64x64xf32, #tpu.memory_space<vmem>>, vector<64x64xf32>
    %cst_291 = arith.constant dense<0.000000e+00> : vector<16x64xf32>
    %432 = tpu.matmul %430, %431, %cst_291 {dimension_numbers = #tpu.dot_dimension_numbers<[1], [0], [0], [1], [0, 0, 1, 1], [], []>} : vector<16x64xf32>, vector<64x64xf32>, vector<16x64xf32> -> vector<16x64xf32>
    %433 = arith.addf %6, %432 : vector<16x64xf32>
    %cst_292 = arith.constant 0.000000e+00 : f32
    %434 = vector.broadcast %cst_292 : f32 to vector<16x64xf32>
    %435 = arith.cmpf ogt, %433, %434 : vector<16x64xf32>
    %cst_293 = arith.constant 0.000000e+00 : f32
    %436 = vector.broadcast %cst_293 : f32 to vector<16x64xf32>
    %437 = arith.minimumf %433, %436 : vector<16x64xf32>
    %438 = math.exp %437 : vector<16x64xf32>
    %cst_294 = arith.constant 1.000000e+00 : f32
    %439 = vector.broadcast %cst_294 : f32 to vector<16x64xf32>
    %440 = arith.subf %438, %439 : vector<16x64xf32>
    %441 = arith.select %435, %433, %440 : vector<16x64xi1>, vector<16x64xf32>
    %c0_295 = arith.constant 0 : index
    %c0_296 = arith.constant 0 : index
    %442 = vector.load %arg7[%c0_295, %c0_296] : memref<1x64xf32, #tpu.memory_space<vmem>>, vector<1x64xf32>
    %443 = vector.broadcast %442 : vector<1x64xf32> to vector<16x64xf32>
    %444 = arith.mulf %441, %443 : vector<16x64xf32>
    %c0_297 = arith.constant 0 : index
    %c0_298 = arith.constant 0 : index
    %445 = vector.load %arg8[%c0_297, %c0_298] : memref<1x64xf32, #tpu.memory_space<vmem>>, vector<1x64xf32>
    %446 = vector.broadcast %445 : vector<1x64xf32> to vector<16x64xf32>
    %447 = arith.addf %444, %446 : vector<16x64xf32>
    %448 = arith.addf %301, %447 : vector<16x64xf32>
    %c0_i32_299 = arith.constant 0 : i32
    %449 = arith.addi %0, %c0_i32_299 : i32
    %c4_i32_300 = arith.constant 4 : i32
    %450 = arith.muli %449, %c4_i32_300 : i32
    %c3_i32_301 = arith.constant 3 : i32
    %451 = arith.addi %450, %c3_i32_301 : i32
    %452 = arith.index_cast %451 : i32 to index
    %453 = memref.load %arg1[%452] : memref<128xi32, #tpu.memory_space<smem>>
    %454 = arith.index_cast %453 : i32 to index
    %c0_302 = arith.constant 0 : index
    %455 = vector.load %arg2[%454, %c0_302] : memref<32x64xf32, #tpu.memory_space<vmem>>, vector<1x64xf32>
    %c0_303 = arith.constant 0 : index
    %c0_304 = arith.constant 0 : index
    %456 = vector.load %arg10[%c0_303, %c0_304] : memref<16x64xf32, #tpu.memory_space<vmem>>, vector<1x64xf32>
    tpu.vector_store %arg10[%c0_303, %c0_304], %455 {strides = array<i32>} : memref<16x64xf32, #tpu.memory_space<vmem>>, vector<1x64xf32>,
    %c1_i32_305 = arith.constant 1 : i32
    %457 = arith.addi %0, %c1_i32_305 : i32
    %c4_i32_306 = arith.constant 4 : i32
    %458 = arith.muli %457, %c4_i32_306 : i32
    %c3_i32_307 = arith.constant 3 : i32
    %459 = arith.addi %458, %c3_i32_307 : i32
    %460 = arith.index_cast %459 : i32 to index
    %461 = memref.load %arg1[%460] : memref<128xi32, #tpu.memory_space<smem>>
    %462 = arith.index_cast %461 : i32 to index
    %c0_308 = arith.constant 0 : index
    %463 = vector.load %arg2[%462, %c0_308] : memref<32x64xf32, #tpu.memory_space<vmem>>, vector<1x64xf32>
    %c1_309 = arith.constant 1 : index
    %c0_310 = arith.constant 0 : index
    %464 = vector.load %arg10[%c1_309, %c0_310] : memref<16x64xf32, #tpu.memory_space<vmem>>, vector<1x64xf32>
    tpu.vector_store %arg10[%c1_309, %c0_310], %463 {strides = array<i32>} : memref<16x64xf32, #tpu.memory_space<vmem>>, vector<1x64xf32>,
    %c2_i32_311 = arith.constant 2 : i32
    %465 = arith.addi %0, %c2_i32_311 : i32
    %c4_i32_312 = arith.constant 4 : i32
    %466 = arith.muli %465, %c4_i32_312 : i32
    %c3_i32_313 = arith.constant 3 : i32
    %467 = arith.addi %466, %c3_i32_313 : i32
    %468 = arith.index_cast %467 : i32 to index
    %469 = memref.load %arg1[%468] : memref<128xi32, #tpu.memory_space<smem>>
    %470 = arith.index_cast %469 : i32 to index
    %c0_314 = arith.constant 0 : index
    %471 = vector.load %arg2[%470, %c0_314] : memref<32x64xf32, #tpu.memory_space<vmem>>, vector<1x64xf32>
    %c2_315 = arith.constant 2 : index
    %c0_316 = arith.constant 0 : index
    %472 = vector.load %arg10[%c2_315, %c0_316] : memref<16x64xf32, #tpu.memory_space<vmem>>, vector<1x64xf32>
    tpu.vector_store %arg10[%c2_315, %c0_316], %471 {strides = array<i32>} : memref<16x64xf32, #tpu.memory_space<vmem>>, vector<1x64xf32>,
    %c3_i32_317 = arith.constant 3 : i32
    %473 = arith.addi %0, %c3_i32_317 : i32
    %c4_i32_318 = arith.constant 4 : i32
    %474 = arith.muli %473, %c4_i32_318 : i32
    %c3_i32_319 = arith.constant 3 : i32
    %475 = arith.addi %474, %c3_i32_319 : i32
    %476 = arith.index_cast %475 : i32 to index
    %477 = memref.load %arg1[%476] : memref<128xi32, #tpu.memory_space<smem>>
    %478 = arith.index_cast %477 : i32 to index
    %c0_320 = arith.constant 0 : index
    %479 = vector.load %arg2[%478, %c0_320] : memref<32x64xf32, #tpu.memory_space<vmem>>, vector<1x64xf32>
    %c3_321 = arith.constant 3 : index
    %c0_322 = arith.constant 0 : index
    %480 = vector.load %arg10[%c3_321, %c0_322] : memref<16x64xf32, #tpu.memory_space<vmem>>, vector<1x64xf32>
    tpu.vector_store %arg10[%c3_321, %c0_322], %479 {strides = array<i32>} : memref<16x64xf32, #tpu.memory_space<vmem>>, vector<1x64xf32>,
    %c4_i32_323 = arith.constant 4 : i32
    %481 = arith.addi %0, %c4_i32_323 : i32
    %c4_i32_324 = arith.constant 4 : i32
    %482 = arith.muli %481, %c4_i32_324 : i32
    %c3_i32_325 = arith.constant 3 : i32
    %483 = arith.addi %482, %c3_i32_325 : i32
    %484 = arith.index_cast %483 : i32 to index
    %485 = memref.load %arg1[%484] : memref<128xi32, #tpu.memory_space<smem>>
    %486 = arith.index_cast %485 : i32 to index
    %c0_326 = arith.constant 0 : index
    %487 = vector.load %arg2[%486, %c0_326] : memref<32x64xf32, #tpu.memory_space<vmem>>, vector<1x64xf32>
    %c4_327 = arith.constant 4 : index
    %c0_328 = arith.constant 0 : index
    %488 = vector.load %arg10[%c4_327, %c0_328] : memref<16x64xf32, #tpu.memory_space<vmem>>, vector<1x64xf32>
    tpu.vector_store %arg10[%c4_327, %c0_328], %487 {strides = array<i32>} : memref<16x64xf32, #tpu.memory_space<vmem>>, vector<1x64xf32>,
    %c5_i32_329 = arith.constant 5 : i32
    %489 = arith.addi %0, %c5_i32_329 : i32
    %c4_i32_330 = arith.constant 4 : i32
    %490 = arith.muli %489, %c4_i32_330 : i32
    %c3_i32_331 = arith.constant 3 : i32
    %491 = arith.addi %490, %c3_i32_331 : i32
    %492 = arith.index_cast %491 : i32 to index
    %493 = memref.load %arg1[%492] : memref<128xi32, #tpu.memory_space<smem>>
    %494 = arith.index_cast %493 : i32 to index
    %c0_332 = arith.constant 0 : index
    %495 = vector.load %arg2[%494, %c0_332] : memref<32x64xf32, #tpu.memory_space<vmem>>, vector<1x64xf32>
    %c5_333 = arith.constant 5 : index
    %c0_334 = arith.constant 0 : index
    %496 = vector.load %arg10[%c5_333, %c0_334] : memref<16x64xf32, #tpu.memory_space<vmem>>, vector<1x64xf32>
    tpu.vector_store %arg10[%c5_333, %c0_334], %495 {strides = array<i32>} : memref<16x64xf32, #tpu.memory_space<vmem>>, vector<1x64xf32>,
    %c6_i32_335 = arith.constant 6 : i32
    %497 = arith.addi %0, %c6_i32_335 : i32
    %c4_i32_336 = arith.constant 4 : i32
    %498 = arith.muli %497, %c4_i32_336 : i32
    %c3_i32_337 = arith.constant 3 : i32
    %499 = arith.addi %498, %c3_i32_337 : i32
    %500 = arith.index_cast %499 : i32 to index
    %501 = memref.load %arg1[%500] : memref<128xi32, #tpu.memory_space<smem>>
    %502 = arith.index_cast %501 : i32 to index
    %c0_338 = arith.constant 0 : index
    %503 = vector.load %arg2[%502, %c0_338] : memref<32x64xf32, #tpu.memory_space<vmem>>, vector<1x64xf32>
    %c6_339 = arith.constant 6 : index
    %c0_340 = arith.constant 0 : index
    %504 = vector.load %arg10[%c6_339, %c0_340] : memref<16x64xf32, #tpu.memory_space<vmem>>, vector<1x64xf32>
    tpu.vector_store %arg10[%c6_339, %c0_340], %503 {strides = array<i32>} : memref<16x64xf32, #tpu.memory_space<vmem>>, vector<1x64xf32>,
    %c7_i32_341 = arith.constant 7 : i32
    %505 = arith.addi %0, %c7_i32_341 : i32
    %c4_i32_342 = arith.constant 4 : i32
    %506 = arith.muli %505, %c4_i32_342 : i32
    %c3_i32_343 = arith.constant 3 : i32
    %507 = arith.addi %506, %c3_i32_343 : i32
    %508 = arith.index_cast %507 : i32 to index
    %509 = memref.load %arg1[%508] : memref<128xi32, #tpu.memory_space<smem>>
    %510 = arith.index_cast %509 : i32 to index
    %c0_344 = arith.constant 0 : index
    %511 = vector.load %arg2[%510, %c0_344] : memref<32x64xf32, #tpu.memory_space<vmem>>, vector<1x64xf32>
    %c7_345 = arith.constant 7 : index
    %c0_346 = arith.constant 0 : index
    %512 = vector.load %arg10[%c7_345, %c0_346] : memref<16x64xf32, #tpu.memory_space<vmem>>, vector<1x64xf32>
    tpu.vector_store %arg10[%c7_345, %c0_346], %511 {strides = array<i32>} : memref<16x64xf32, #tpu.memory_space<vmem>>, vector<1x64xf32>,
    %c8_i32_347 = arith.constant 8 : i32
    %513 = arith.addi %0, %c8_i32_347 : i32
    %c4_i32_348 = arith.constant 4 : i32
    %514 = arith.muli %513, %c4_i32_348 : i32
    %c3_i32_349 = arith.constant 3 : i32
    %515 = arith.addi %514, %c3_i32_349 : i32
    %516 = arith.index_cast %515 : i32 to index
    %517 = memref.load %arg1[%516] : memref<128xi32, #tpu.memory_space<smem>>
    %518 = arith.index_cast %517 : i32 to index
    %c0_350 = arith.constant 0 : index
    %519 = vector.load %arg2[%518, %c0_350] : memref<32x64xf32, #tpu.memory_space<vmem>>, vector<1x64xf32>
    %c8_351 = arith.constant 8 : index
    %c0_352 = arith.constant 0 : index
    %520 = vector.load %arg10[%c8_351, %c0_352] : memref<16x64xf32, #tpu.memory_space<vmem>>, vector<1x64xf32>
    tpu.vector_store %arg10[%c8_351, %c0_352], %519 {strides = array<i32>} : memref<16x64xf32, #tpu.memory_space<vmem>>, vector<1x64xf32>,
    %c9_i32_353 = arith.constant 9 : i32
    %521 = arith.addi %0, %c9_i32_353 : i32
    %c4_i32_354 = arith.constant 4 : i32
    %522 = arith.muli %521, %c4_i32_354 : i32
    %c3_i32_355 = arith.constant 3 : i32
    %523 = arith.addi %522, %c3_i32_355 : i32
    %524 = arith.index_cast %523 : i32 to index
    %525 = memref.load %arg1[%524] : memref<128xi32, #tpu.memory_space<smem>>
    %526 = arith.index_cast %525 : i32 to index
    %c0_356 = arith.constant 0 : index
    %527 = vector.load %arg2[%526, %c0_356] : memref<32x64xf32, #tpu.memory_space<vmem>>, vector<1x64xf32>
    %c9_357 = arith.constant 9 : index
    %c0_358 = arith.constant 0 : index
    %528 = vector.load %arg10[%c9_357, %c0_358] : memref<16x64xf32, #tpu.memory_space<vmem>>, vector<1x64xf32>
    tpu.vector_store %arg10[%c9_357, %c0_358], %527 {strides = array<i32>} : memref<16x64xf32, #tpu.memory_space<vmem>>, vector<1x64xf32>,
    %c10_i32_359 = arith.constant 10 : i32
    %529 = arith.addi %0, %c10_i32_359 : i32
    %c4_i32_360 = arith.constant 4 : i32
    %530 = arith.muli %529, %c4_i32_360 : i32
    %c3_i32_361 = arith.constant 3 : i32
    %531 = arith.addi %530, %c3_i32_361 : i32
    %532 = arith.index_cast %531 : i32 to index
    %533 = memref.load %arg1[%532] : memref<128xi32, #tpu.memory_space<smem>>
    %534 = arith.index_cast %533 : i32 to index
    %c0_362 = arith.constant 0 : index
    %535 = vector.load %arg2[%534, %c0_362] : memref<32x64xf32, #tpu.memory_space<vmem>>, vector<1x64xf32>
    %c10_363 = arith.constant 10 : index
    %c0_364 = arith.constant 0 : index
    %536 = vector.load %arg10[%c10_363, %c0_364] : memref<16x64xf32, #tpu.memory_space<vmem>>, vector<1x64xf32>
    tpu.vector_store %arg10[%c10_363, %c0_364], %535 {strides = array<i32>} : memref<16x64xf32, #tpu.memory_space<vmem>>, vector<1x64xf32>,
    %c11_i32_365 = arith.constant 11 : i32
    %537 = arith.addi %0, %c11_i32_365 : i32
    %c4_i32_366 = arith.constant 4 : i32
    %538 = arith.muli %537, %c4_i32_366 : i32
    %c3_i32_367 = arith.constant 3 : i32
    %539 = arith.addi %538, %c3_i32_367 : i32
    %540 = arith.index_cast %539 : i32 to index
    %541 = memref.load %arg1[%540] : memref<128xi32, #tpu.memory_space<smem>>
    %542 = arith.index_cast %541 : i32 to index
    %c0_368 = arith.constant 0 : index
    %543 = vector.load %arg2[%542, %c0_368] : memref<32x64xf32, #tpu.memory_space<vmem>>, vector<1x64xf32>
    %c11_369 = arith.constant 11 : index
    %c0_370 = arith.constant 0 : index
    %544 = vector.load %arg10[%c11_369, %c0_370] : memref<16x64xf32, #tpu.memory_space<vmem>>, vector<1x64xf32>
    tpu.vector_store %arg10[%c11_369, %c0_370], %543 {strides = array<i32>} : memref<16x64xf32, #tpu.memory_space<vmem>>, vector<1x64xf32>,
    %c12_i32_371 = arith.constant 12 : i32
    %545 = arith.addi %0, %c12_i32_371 : i32
    %c4_i32_372 = arith.constant 4 : i32
    %546 = arith.muli %545, %c4_i32_372 : i32
    %c3_i32_373 = arith.constant 3 : i32
    %547 = arith.addi %546, %c3_i32_373 : i32
    %548 = arith.index_cast %547 : i32 to index
    %549 = memref.load %arg1[%548] : memref<128xi32, #tpu.memory_space<smem>>
    %550 = arith.index_cast %549 : i32 to index
    %c0_374 = arith.constant 0 : index
    %551 = vector.load %arg2[%550, %c0_374] : memref<32x64xf32, #tpu.memory_space<vmem>>, vector<1x64xf32>
    %c12_375 = arith.constant 12 : index
    %c0_376 = arith.constant 0 : index
    %552 = vector.load %arg10[%c12_375, %c0_376] : memref<16x64xf32, #tpu.memory_space<vmem>>, vector<1x64xf32>
    tpu.vector_store %arg10[%c12_375, %c0_376], %551 {strides = array<i32>} : memref<16x64xf32, #tpu.memory_space<vmem>>, vector<1x64xf32>,
    %c13_i32_377 = arith.constant 13 : i32
    %553 = arith.addi %0, %c13_i32_377 : i32
    %c4_i32_378 = arith.constant 4 : i32
    %554 = arith.muli %553, %c4_i32_378 : i32
    %c3_i32_379 = arith.constant 3 : i32
    %555 = arith.addi %554, %c3_i32_379 : i32
    %556 = arith.index_cast %555 : i32 to index
    %557 = memref.load %arg1[%556] : memref<128xi32, #tpu.memory_space<smem>>
    %558 = arith.index_cast %557 : i32 to index
    %c0_380 = arith.constant 0 : index
    %559 = vector.load %arg2[%558, %c0_380] : memref<32x64xf32, #tpu.memory_space<vmem>>, vector<1x64xf32>
    %c13_381 = arith.constant 13 : index
    %c0_382 = arith.constant 0 : index
    %560 = vector.load %arg10[%c13_381, %c0_382] : memref<16x64xf32, #tpu.memory_space<vmem>>, vector<1x64xf32>
    tpu.vector_store %arg10[%c13_381, %c0_382], %559 {strides = array<i32>} : memref<16x64xf32, #tpu.memory_space<vmem>>, vector<1x64xf32>,
    %c14_i32_383 = arith.constant 14 : i32
    %561 = arith.addi %0, %c14_i32_383 : i32
    %c4_i32_384 = arith.constant 4 : i32
    %562 = arith.muli %561, %c4_i32_384 : i32
    %c3_i32_385 = arith.constant 3 : i32
    %563 = arith.addi %562, %c3_i32_385 : i32
    %564 = arith.index_cast %563 : i32 to index
    %565 = memref.load %arg1[%564] : memref<128xi32, #tpu.memory_space<smem>>
    %566 = arith.index_cast %565 : i32 to index
    %c0_386 = arith.constant 0 : index
    %567 = vector.load %arg2[%566, %c0_386] : memref<32x64xf32, #tpu.memory_space<vmem>>, vector<1x64xf32>
    %c14_387 = arith.constant 14 : index
    %c0_388 = arith.constant 0 : index
    %568 = vector.load %arg10[%c14_387, %c0_388] : memref<16x64xf32, #tpu.memory_space<vmem>>, vector<1x64xf32>
    tpu.vector_store %arg10[%c14_387, %c0_388], %567 {strides = array<i32>} : memref<16x64xf32, #tpu.memory_space<vmem>>, vector<1x64xf32>,
    %c15_i32_389 = arith.constant 15 : i32
    %569 = arith.addi %0, %c15_i32_389 : i32
    %c4_i32_390 = arith.constant 4 : i32
    %570 = arith.muli %569, %c4_i32_390 : i32
    %c3_i32_391 = arith.constant 3 : i32
    %571 = arith.addi %570, %c3_i32_391 : i32
    %572 = arith.index_cast %571 : i32 to index
    %573 = memref.load %arg1[%572] : memref<128xi32, #tpu.memory_space<smem>>
    %574 = arith.index_cast %573 : i32 to index
    %c0_392 = arith.constant 0 : index
    %575 = vector.load %arg2[%574, %c0_392] : memref<32x64xf32, #tpu.memory_space<vmem>>, vector<1x64xf32>
    %c15_393 = arith.constant 15 : index
    %c0_394 = arith.constant 0 : index
    %576 = vector.load %arg10[%c15_393, %c0_394] : memref<16x64xf32, #tpu.memory_space<vmem>>, vector<1x64xf32>
    tpu.vector_store %arg10[%c15_393, %c0_394], %575 {strides = array<i32>} : memref<16x64xf32, #tpu.memory_space<vmem>>, vector<1x64xf32>,
    %c0_395 = arith.constant 0 : index
    %c0_396 = arith.constant 0 : index
    %577 = vector.load %arg10[%c0_395, %c0_396] : memref<16x64xf32, #tpu.memory_space<vmem>>, vector<16x64xf32>
    %c0_397 = arith.constant 0 : index
    %c0_398 = arith.constant 0 : index
    %578 = vector.load %arg5[%c0_397, %c0_398] : memref<64x64xf32, #tpu.memory_space<vmem>>, vector<64x64xf32>
    %cst_399 = arith.constant dense<0.000000e+00> : vector<16x64xf32>
    %579 = tpu.matmul %577, %578, %cst_399 {dimension_numbers = #tpu.dot_dimension_numbers<[1], [0], [0], [1], [0, 0, 1, 1], [], []>} : vector<16x64xf32>, vector<64x64xf32>, vector<16x64xf32> -> vector<16x64xf32>
    %580 = arith.addf %6, %579 : vector<16x64xf32>
    %cst_400 = arith.constant 0.000000e+00 : f32
    %581 = vector.broadcast %cst_400 : f32 to vector<16x64xf32>
    %582 = arith.cmpf ogt, %580, %581 : vector<16x64xf32>
    %cst_401 = arith.constant 0.000000e+00 : f32
    %583 = vector.broadcast %cst_401 : f32 to vector<16x64xf32>
    %584 = arith.minimumf %580, %583 : vector<16x64xf32>
    %585 = math.exp %584 : vector<16x64xf32>
    %cst_402 = arith.constant 1.000000e+00 : f32
    %586 = vector.broadcast %cst_402 : f32 to vector<16x64xf32>
    %587 = arith.subf %585, %586 : vector<16x64xf32>
    %588 = arith.select %582, %580, %587 : vector<16x64xi1>, vector<16x64xf32>
    %c0_403 = arith.constant 0 : index
    %c0_404 = arith.constant 0 : index
    %589 = vector.load %arg7[%c0_403, %c0_404] : memref<1x64xf32, #tpu.memory_space<vmem>>, vector<1x64xf32>
    %590 = vector.broadcast %589 : vector<1x64xf32> to vector<16x64xf32>
    %591 = arith.mulf %588, %590 : vector<16x64xf32>
    %c0_405 = arith.constant 0 : index
    %c0_406 = arith.constant 0 : index
    %592 = vector.load %arg8[%c0_405, %c0_406] : memref<1x64xf32, #tpu.memory_space<vmem>>, vector<1x64xf32>
    %593 = vector.broadcast %592 : vector<1x64xf32> to vector<16x64xf32>
    %594 = arith.addf %591, %593 : vector<16x64xf32>
    %595 = arith.addf %448, %594 : vector<16x64xf32>
    %cst_407 = arith.constant 2.500000e-01 : f32
    %596 = vector.broadcast %cst_407 : f32 to vector<16x64xf32>
    %597 = arith.mulf %595, %596 : vector<16x64xf32>
    %598 = arith.addf %597, %1 : vector<16x64xf32>
    %c0_408 = arith.constant 0 : index
    %c0_409 = arith.constant 0 : index
    %599 = vector.load %arg9[%c0_408, %c0_409] : memref<16x64xf32, #tpu.memory_space<vmem>>, vector<16x64xf32>
    tpu.vector_store %arg9[%c0_408, %c0_409], %598 {strides = array<i32>} : memref<16x64xf32, #tpu.memory_space<vmem>>, vector<16x64xf32>,
    return
  }
  func.func @transform_0(%arg0: i32, %arg1: memref<128xi32, #tpu.memory_space<smem>>) -> (i32, i32) {
    %c0_i32 = arith.constant 0 : i32
    %c0_i32_0 = arith.constant 0 : i32
    %c0_i32_1 = arith.constant 0 : i32
    return %c0_i32, %c0_i32_0 : i32, i32
  }
  func.func @transform_1(%arg0: i32, %arg1: memref<128xi32, #tpu.memory_space<smem>>) -> (i32, i32) {
    %c0_i32 = arith.constant 0 : i32
    %c0_i32_0 = arith.constant 0 : i32
    return %arg0, %c0_i32 : i32, i32
  }
  func.func @transform_2(%arg0: i32, %arg1: memref<128xi32, #tpu.memory_space<smem>>) -> (i32, i32) {
    %c0_i32 = arith.constant 0 : i32
    %c0_i32_0 = arith.constant 0 : i32
    %c0_i32_1 = arith.constant 0 : i32
    return %c0_i32, %c0_i32_0 : i32, i32
  }
  func.func @transform_3(%arg0: i32, %arg1: memref<128xi32, #tpu.memory_space<smem>>) -> (i32, i32) {
    %c0_i32 = arith.constant 0 : i32
    %c0_i32_0 = arith.constant 0 : i32
    %c0_i32_1 = arith.constant 0 : i32
    return %c0_i32, %c0_i32_0 : i32, i32
  }
  func.func @transform_4(%arg0: i32, %arg1: memref<128xi32, #tpu.memory_space<smem>>) -> (i32, i32) {
    %c0_i32 = arith.constant 0 : i32
    %c0_i32_0 = arith.constant 0 : i32
    %c0_i32_1 = arith.constant 0 : i32
    return %c0_i32, %c0_i32_0 : i32, i32
  }
  func.func @transform_5(%arg0: i32, %arg1: memref<128xi32, #tpu.memory_space<smem>>) -> (i32, i32) {
    %c0_i32 = arith.constant 0 : i32
    %c0_i32_0 = arith.constant 0 : i32
    %c0_i32_1 = arith.constant 0 : i32
    return %c0_i32, %c0_i32_0 : i32, i32
  }
  func.func @transform_6(%arg0: i32, %arg1: memref<128xi32, #tpu.memory_space<smem>>) -> (i32, i32) {
    %c0_i32 = arith.constant 0 : i32
    %c0_i32_0 = arith.constant 0 : i32
    %c0_i32_1 = arith.constant 0 : i32
    return %c0_i32, %c0_i32_0 : i32, i32
  }
  func.func @transform_7(%arg0: i32, %arg1: memref<128xi32, #tpu.memory_space<smem>>) -> (i32, i32) {
    %c0_i32 = arith.constant 0 : i32
    %c0_i32_0 = arith.constant 0 : i32
    return %arg0, %c0_i32 : i32, i32
  }
}

module attributes {stable_mosaic.version = 11 : i64} {
  func.func @kernel(%arg0: i32, %arg1: memref<128xi32, #tpu.memory_space<smem>>, %arg2: memref<32x64xf32, #tpu.memory_space<vmem>>, %arg3: memref<16x64xf32, #tpu.memory_space<vmem>>, %arg4: memref<64x64xf32, #tpu.memory_space<vmem>>, %arg5: memref<64x64xf32, #tpu.memory_space<vmem>>, %arg6: memref<1x64xf32, #tpu.memory_space<vmem>>, %arg7: memref<1x64xf32, #tpu.memory_space<vmem>>, %arg8: memref<1x64xf32, #tpu.memory_space<vmem>>, %arg9: memref<64x32xf32, #tpu.memory_space<vmem>>, %arg10: memref<1x32xf32, #tpu.memory_space<vmem>>, %arg11: memref<32x16xf32, #tpu.memory_space<vmem>>, %arg12: memref<1x16xf32, #tpu.memory_space<vmem>>, %arg13: memref<16x8xf32, #tpu.memory_space<vmem>>, %arg14: memref<1x8xf32, #tpu.memory_space<vmem>>, %arg15: memref<16x8xf32, #tpu.memory_space<vmem>>, %arg16: memref<16x64xf32, #tpu.memory_space<vmem>>) attributes {dimension_semantics = [#tpu.dimension_semantics<parallel>], iteration_bounds = array<i64: 2>, scalar_prefetch = 1 : i64, scratch_operands = 1 : i64, tpu.core_type = #tpu.core_type<tc>, window_params = [{pipeline_mode = #tpu.pipeline_mode<synchronous>, transform_indices = @transform_0, window_bounds = array<i64: 32, 64>}, {transform_indices = @transform_1, window_bounds = array<i64: 16, 64>}, {pipeline_mode = #tpu.pipeline_mode<synchronous>, transform_indices = @transform_2, window_bounds = array<i64: 64, 64>}, {pipeline_mode = #tpu.pipeline_mode<synchronous>, transform_indices = @transform_3, window_bounds = array<i64: 64, 64>}, {pipeline_mode = #tpu.pipeline_mode<synchronous>, transform_indices = @transform_4, window_bounds = array<i64: 1, 64>}, {pipeline_mode = #tpu.pipeline_mode<synchronous>, transform_indices = @transform_5, window_bounds = array<i64: 1, 64>}, {pipeline_mode = #tpu.pipeline_mode<synchronous>, transform_indices = @transform_6, window_bounds = array<i64: 1, 64>}, {pipeline_mode = #tpu.pipeline_mode<synchronous>, transform_indices = @transform_7, window_bounds = array<i64: 64, 32>}, {pipeline_mode = #tpu.pipeline_mode<synchronous>, transform_indices = @transform_8, window_bounds = array<i64: 1, 32>}, {pipeline_mode = #tpu.pipeline_mode<synchronous>, transform_indices = @transform_9, window_bounds = array<i64: 32, 16>}, {pipeline_mode = #tpu.pipeline_mode<synchronous>, transform_indices = @transform_10, window_bounds = array<i64: 1, 16>}, {pipeline_mode = #tpu.pipeline_mode<synchronous>, transform_indices = @transform_11, window_bounds = array<i64: 16, 8>}, {pipeline_mode = #tpu.pipeline_mode<synchronous>, transform_indices = @transform_12, window_bounds = array<i64: 1, 8>}, {transform_indices = @transform_13, window_bounds = array<i64: 16, 8>}]} {
    %c16_i32 = arith.constant 16 : i32
    %0 = arith.muli %arg0, %c16_i32 : i32
    %c0 = arith.constant 0 : index
    %c0_0 = arith.constant 0 : index
    %1 = vector.load %arg3[%c0, %c0_0] : memref<16x64xf32, #tpu.memory_space<vmem>>, vector<16x64xf32>
    %c0_1 = arith.constant 0 : index
    %c0_2 = arith.constant 0 : index
    %2 = vector.load %arg4[%c0_1, %c0_2] : memref<64x64xf32, #tpu.memory_space<vmem>>, vector<64x64xf32>
    %cst = arith.constant dense<0.000000e+00> : vector<16x64xf32>
    %3 = tpu.matmul %1, %2, %cst {dimension_numbers = #tpu.dot_dimension_numbers<[1], [0], [0], [1], [0, 0, 1, 1], [], []>} : vector<16x64xf32>, vector<64x64xf32>, vector<16x64xf32> -> vector<16x64xf32>
    %c0_3 = arith.constant 0 : index
    %c0_4 = arith.constant 0 : index
    %4 = vector.load %arg6[%c0_3, %c0_4] : memref<1x64xf32, #tpu.memory_space<vmem>>, vector<1x64xf32>
    %5 = vector.broadcast %4 : vector<1x64xf32> to vector<16x64xf32>
    %6 = arith.addf %3, %5 : vector<16x64xf32>
    %cst_5 = arith.constant 0.000000e+00 : f32
    %7 = vector.broadcast %cst_5 : f32 to vector<16x64xf32>
    %c0_i32 = arith.constant 0 : i32
    %8 = arith.addi %0, %c0_i32 : i32
    %c4_i32 = arith.constant 4 : i32
    %9 = arith.muli %8, %c4_i32 : i32
    %c0_i32_6 = arith.constant 0 : i32
    %10 = arith.addi %9, %c0_i32_6 : i32
    %11 = arith.index_cast %10 : i32 to index
    %12 = memref.load %arg1[%11] : memref<128xi32, #tpu.memory_space<smem>>
    %13 = arith.index_cast %12 : i32 to index
    %c0_7 = arith.constant 0 : index
    %14 = vector.load %arg2[%13, %c0_7] : memref<32x64xf32, #tpu.memory_space<vmem>>, vector<1x64xf32>
    %c0_8 = arith.constant 0 : index
    %c0_9 = arith.constant 0 : index
    %15 = vector.load %arg16[%c0_8, %c0_9] : memref<16x64xf32, #tpu.memory_space<vmem>>, vector<1x64xf32>
    tpu.vector_store %arg16[%c0_8, %c0_9], %14 {strides = array<i32>} : memref<16x64xf32, #tpu.memory_space<vmem>>, vector<1x64xf32>,
    %c1_i32 = arith.constant 1 : i32
    %16 = arith.addi %0, %c1_i32 : i32
    %c4_i32_10 = arith.constant 4 : i32
    %17 = arith.muli %16, %c4_i32_10 : i32
    %c0_i32_11 = arith.constant 0 : i32
    %18 = arith.addi %17, %c0_i32_11 : i32
    %19 = arith.index_cast %18 : i32 to index
    %20 = memref.load %arg1[%19] : memref<128xi32, #tpu.memory_space<smem>>
    %21 = arith.index_cast %20 : i32 to index
    %c0_12 = arith.constant 0 : index
    %22 = vector.load %arg2[%21, %c0_12] : memref<32x64xf32, #tpu.memory_space<vmem>>, vector<1x64xf32>
    %c1 = arith.constant 1 : index
    %c0_13 = arith.constant 0 : index
    %23 = vector.load %arg16[%c1, %c0_13] : memref<16x64xf32, #tpu.memory_space<vmem>>, vector<1x64xf32>
    tpu.vector_store %arg16[%c1, %c0_13], %22 {strides = array<i32>} : memref<16x64xf32, #tpu.memory_space<vmem>>, vector<1x64xf32>,
    %c2_i32 = arith.constant 2 : i32
    %24 = arith.addi %0, %c2_i32 : i32
    %c4_i32_14 = arith.constant 4 : i32
    %25 = arith.muli %24, %c4_i32_14 : i32
    %c0_i32_15 = arith.constant 0 : i32
    %26 = arith.addi %25, %c0_i32_15 : i32
    %27 = arith.index_cast %26 : i32 to index
    %28 = memref.load %arg1[%27] : memref<128xi32, #tpu.memory_space<smem>>
    %29 = arith.index_cast %28 : i32 to index
    %c0_16 = arith.constant 0 : index
    %30 = vector.load %arg2[%29, %c0_16] : memref<32x64xf32, #tpu.memory_space<vmem>>, vector<1x64xf32>
    %c2 = arith.constant 2 : index
    %c0_17 = arith.constant 0 : index
    %31 = vector.load %arg16[%c2, %c0_17] : memref<16x64xf32, #tpu.memory_space<vmem>>, vector<1x64xf32>
    tpu.vector_store %arg16[%c2, %c0_17], %30 {strides = array<i32>} : memref<16x64xf32, #tpu.memory_space<vmem>>, vector<1x64xf32>,
    %c3_i32 = arith.constant 3 : i32
    %32 = arith.addi %0, %c3_i32 : i32
    %c4_i32_18 = arith.constant 4 : i32
    %33 = arith.muli %32, %c4_i32_18 : i32
    %c0_i32_19 = arith.constant 0 : i32
    %34 = arith.addi %33, %c0_i32_19 : i32
    %35 = arith.index_cast %34 : i32 to index
    %36 = memref.load %arg1[%35] : memref<128xi32, #tpu.memory_space<smem>>
    %37 = arith.index_cast %36 : i32 to index
    %c0_20 = arith.constant 0 : index
    %38 = vector.load %arg2[%37, %c0_20] : memref<32x64xf32, #tpu.memory_space<vmem>>, vector<1x64xf32>
    %c3 = arith.constant 3 : index
    %c0_21 = arith.constant 0 : index
    %39 = vector.load %arg16[%c3, %c0_21] : memref<16x64xf32, #tpu.memory_space<vmem>>, vector<1x64xf32>
    tpu.vector_store %arg16[%c3, %c0_21], %38 {strides = array<i32>} : memref<16x64xf32, #tpu.memory_space<vmem>>, vector<1x64xf32>,
    %c4_i32_22 = arith.constant 4 : i32
    %40 = arith.addi %0, %c4_i32_22 : i32
    %c4_i32_23 = arith.constant 4 : i32
    %41 = arith.muli %40, %c4_i32_23 : i32
    %c0_i32_24 = arith.constant 0 : i32
    %42 = arith.addi %41, %c0_i32_24 : i32
    %43 = arith.index_cast %42 : i32 to index
    %44 = memref.load %arg1[%43] : memref<128xi32, #tpu.memory_space<smem>>
    %45 = arith.index_cast %44 : i32 to index
    %c0_25 = arith.constant 0 : index
    %46 = vector.load %arg2[%45, %c0_25] : memref<32x64xf32, #tpu.memory_space<vmem>>, vector<1x64xf32>
    %c4 = arith.constant 4 : index
    %c0_26 = arith.constant 0 : index
    %47 = vector.load %arg16[%c4, %c0_26] : memref<16x64xf32, #tpu.memory_space<vmem>>, vector<1x64xf32>
    tpu.vector_store %arg16[%c4, %c0_26], %46 {strides = array<i32>} : memref<16x64xf32, #tpu.memory_space<vmem>>, vector<1x64xf32>,
    %c5_i32 = arith.constant 5 : i32
    %48 = arith.addi %0, %c5_i32 : i32
    %c4_i32_27 = arith.constant 4 : i32
    %49 = arith.muli %48, %c4_i32_27 : i32
    %c0_i32_28 = arith.constant 0 : i32
    %50 = arith.addi %49, %c0_i32_28 : i32
    %51 = arith.index_cast %50 : i32 to index
    %52 = memref.load %arg1[%51] : memref<128xi32, #tpu.memory_space<smem>>
    %53 = arith.index_cast %52 : i32 to index
    %c0_29 = arith.constant 0 : index
    %54 = vector.load %arg2[%53, %c0_29] : memref<32x64xf32, #tpu.memory_space<vmem>>, vector<1x64xf32>
    %c5 = arith.constant 5 : index
    %c0_30 = arith.constant 0 : index
    %55 = vector.load %arg16[%c5, %c0_30] : memref<16x64xf32, #tpu.memory_space<vmem>>, vector<1x64xf32>
    tpu.vector_store %arg16[%c5, %c0_30], %54 {strides = array<i32>} : memref<16x64xf32, #tpu.memory_space<vmem>>, vector<1x64xf32>,
    %c6_i32 = arith.constant 6 : i32
    %56 = arith.addi %0, %c6_i32 : i32
    %c4_i32_31 = arith.constant 4 : i32
    %57 = arith.muli %56, %c4_i32_31 : i32
    %c0_i32_32 = arith.constant 0 : i32
    %58 = arith.addi %57, %c0_i32_32 : i32
    %59 = arith.index_cast %58 : i32 to index
    %60 = memref.load %arg1[%59] : memref<128xi32, #tpu.memory_space<smem>>
    %61 = arith.index_cast %60 : i32 to index
    %c0_33 = arith.constant 0 : index
    %62 = vector.load %arg2[%61, %c0_33] : memref<32x64xf32, #tpu.memory_space<vmem>>, vector<1x64xf32>
    %c6 = arith.constant 6 : index
    %c0_34 = arith.constant 0 : index
    %63 = vector.load %arg16[%c6, %c0_34] : memref<16x64xf32, #tpu.memory_space<vmem>>, vector<1x64xf32>
    tpu.vector_store %arg16[%c6, %c0_34], %62 {strides = array<i32>} : memref<16x64xf32, #tpu.memory_space<vmem>>, vector<1x64xf32>,
    %c7_i32 = arith.constant 7 : i32
    %64 = arith.addi %0, %c7_i32 : i32
    %c4_i32_35 = arith.constant 4 : i32
    %65 = arith.muli %64, %c4_i32_35 : i32
    %c0_i32_36 = arith.constant 0 : i32
    %66 = arith.addi %65, %c0_i32_36 : i32
    %67 = arith.index_cast %66 : i32 to index
    %68 = memref.load %arg1[%67] : memref<128xi32, #tpu.memory_space<smem>>
    %69 = arith.index_cast %68 : i32 to index
    %c0_37 = arith.constant 0 : index
    %70 = vector.load %arg2[%69, %c0_37] : memref<32x64xf32, #tpu.memory_space<vmem>>, vector<1x64xf32>
    %c7 = arith.constant 7 : index
    %c0_38 = arith.constant 0 : index
    %71 = vector.load %arg16[%c7, %c0_38] : memref<16x64xf32, #tpu.memory_space<vmem>>, vector<1x64xf32>
    tpu.vector_store %arg16[%c7, %c0_38], %70 {strides = array<i32>} : memref<16x64xf32, #tpu.memory_space<vmem>>, vector<1x64xf32>,
    %c8_i32 = arith.constant 8 : i32
    %72 = arith.addi %0, %c8_i32 : i32
    %c4_i32_39 = arith.constant 4 : i32
    %73 = arith.muli %72, %c4_i32_39 : i32
    %c0_i32_40 = arith.constant 0 : i32
    %74 = arith.addi %73, %c0_i32_40 : i32
    %75 = arith.index_cast %74 : i32 to index
    %76 = memref.load %arg1[%75] : memref<128xi32, #tpu.memory_space<smem>>
    %77 = arith.index_cast %76 : i32 to index
    %c0_41 = arith.constant 0 : index
    %78 = vector.load %arg2[%77, %c0_41] : memref<32x64xf32, #tpu.memory_space<vmem>>, vector<1x64xf32>
    %c8 = arith.constant 8 : index
    %c0_42 = arith.constant 0 : index
    %79 = vector.load %arg16[%c8, %c0_42] : memref<16x64xf32, #tpu.memory_space<vmem>>, vector<1x64xf32>
    tpu.vector_store %arg16[%c8, %c0_42], %78 {strides = array<i32>} : memref<16x64xf32, #tpu.memory_space<vmem>>, vector<1x64xf32>,
    %c9_i32 = arith.constant 9 : i32
    %80 = arith.addi %0, %c9_i32 : i32
    %c4_i32_43 = arith.constant 4 : i32
    %81 = arith.muli %80, %c4_i32_43 : i32
    %c0_i32_44 = arith.constant 0 : i32
    %82 = arith.addi %81, %c0_i32_44 : i32
    %83 = arith.index_cast %82 : i32 to index
    %84 = memref.load %arg1[%83] : memref<128xi32, #tpu.memory_space<smem>>
    %85 = arith.index_cast %84 : i32 to index
    %c0_45 = arith.constant 0 : index
    %86 = vector.load %arg2[%85, %c0_45] : memref<32x64xf32, #tpu.memory_space<vmem>>, vector<1x64xf32>
    %c9 = arith.constant 9 : index
    %c0_46 = arith.constant 0 : index
    %87 = vector.load %arg16[%c9, %c0_46] : memref<16x64xf32, #tpu.memory_space<vmem>>, vector<1x64xf32>
    tpu.vector_store %arg16[%c9, %c0_46], %86 {strides = array<i32>} : memref<16x64xf32, #tpu.memory_space<vmem>>, vector<1x64xf32>,
    %c10_i32 = arith.constant 10 : i32
    %88 = arith.addi %0, %c10_i32 : i32
    %c4_i32_47 = arith.constant 4 : i32
    %89 = arith.muli %88, %c4_i32_47 : i32
    %c0_i32_48 = arith.constant 0 : i32
    %90 = arith.addi %89, %c0_i32_48 : i32
    %91 = arith.index_cast %90 : i32 to index
    %92 = memref.load %arg1[%91] : memref<128xi32, #tpu.memory_space<smem>>
    %93 = arith.index_cast %92 : i32 to index
    %c0_49 = arith.constant 0 : index
    %94 = vector.load %arg2[%93, %c0_49] : memref<32x64xf32, #tpu.memory_space<vmem>>, vector<1x64xf32>
    %c10 = arith.constant 10 : index
    %c0_50 = arith.constant 0 : index
    %95 = vector.load %arg16[%c10, %c0_50] : memref<16x64xf32, #tpu.memory_space<vmem>>, vector<1x64xf32>
    tpu.vector_store %arg16[%c10, %c0_50], %94 {strides = array<i32>} : memref<16x64xf32, #tpu.memory_space<vmem>>, vector<1x64xf32>,
    %c11_i32 = arith.constant 11 : i32
    %96 = arith.addi %0, %c11_i32 : i32
    %c4_i32_51 = arith.constant 4 : i32
    %97 = arith.muli %96, %c4_i32_51 : i32
    %c0_i32_52 = arith.constant 0 : i32
    %98 = arith.addi %97, %c0_i32_52 : i32
    %99 = arith.index_cast %98 : i32 to index
    %100 = memref.load %arg1[%99] : memref<128xi32, #tpu.memory_space<smem>>
    %101 = arith.index_cast %100 : i32 to index
    %c0_53 = arith.constant 0 : index
    %102 = vector.load %arg2[%101, %c0_53] : memref<32x64xf32, #tpu.memory_space<vmem>>, vector<1x64xf32>
    %c11 = arith.constant 11 : index
    %c0_54 = arith.constant 0 : index
    %103 = vector.load %arg16[%c11, %c0_54] : memref<16x64xf32, #tpu.memory_space<vmem>>, vector<1x64xf32>
    tpu.vector_store %arg16[%c11, %c0_54], %102 {strides = array<i32>} : memref<16x64xf32, #tpu.memory_space<vmem>>, vector<1x64xf32>,
    %c12_i32 = arith.constant 12 : i32
    %104 = arith.addi %0, %c12_i32 : i32
    %c4_i32_55 = arith.constant 4 : i32
    %105 = arith.muli %104, %c4_i32_55 : i32
    %c0_i32_56 = arith.constant 0 : i32
    %106 = arith.addi %105, %c0_i32_56 : i32
    %107 = arith.index_cast %106 : i32 to index
    %108 = memref.load %arg1[%107] : memref<128xi32, #tpu.memory_space<smem>>
    %109 = arith.index_cast %108 : i32 to index
    %c0_57 = arith.constant 0 : index
    %110 = vector.load %arg2[%109, %c0_57] : memref<32x64xf32, #tpu.memory_space<vmem>>, vector<1x64xf32>
    %c12 = arith.constant 12 : index
    %c0_58 = arith.constant 0 : index
    %111 = vector.load %arg16[%c12, %c0_58] : memref<16x64xf32, #tpu.memory_space<vmem>>, vector<1x64xf32>
    tpu.vector_store %arg16[%c12, %c0_58], %110 {strides = array<i32>} : memref<16x64xf32, #tpu.memory_space<vmem>>, vector<1x64xf32>,
    %c13_i32 = arith.constant 13 : i32
    %112 = arith.addi %0, %c13_i32 : i32
    %c4_i32_59 = arith.constant 4 : i32
    %113 = arith.muli %112, %c4_i32_59 : i32
    %c0_i32_60 = arith.constant 0 : i32
    %114 = arith.addi %113, %c0_i32_60 : i32
    %115 = arith.index_cast %114 : i32 to index
    %116 = memref.load %arg1[%115] : memref<128xi32, #tpu.memory_space<smem>>
    %117 = arith.index_cast %116 : i32 to index
    %c0_61 = arith.constant 0 : index
    %118 = vector.load %arg2[%117, %c0_61] : memref<32x64xf32, #tpu.memory_space<vmem>>, vector<1x64xf32>
    %c13 = arith.constant 13 : index
    %c0_62 = arith.constant 0 : index
    %119 = vector.load %arg16[%c13, %c0_62] : memref<16x64xf32, #tpu.memory_space<vmem>>, vector<1x64xf32>
    tpu.vector_store %arg16[%c13, %c0_62], %118 {strides = array<i32>} : memref<16x64xf32, #tpu.memory_space<vmem>>, vector<1x64xf32>,
    %c14_i32 = arith.constant 14 : i32
    %120 = arith.addi %0, %c14_i32 : i32
    %c4_i32_63 = arith.constant 4 : i32
    %121 = arith.muli %120, %c4_i32_63 : i32
    %c0_i32_64 = arith.constant 0 : i32
    %122 = arith.addi %121, %c0_i32_64 : i32
    %123 = arith.index_cast %122 : i32 to index
    %124 = memref.load %arg1[%123] : memref<128xi32, #tpu.memory_space<smem>>
    %125 = arith.index_cast %124 : i32 to index
    %c0_65 = arith.constant 0 : index
    %126 = vector.load %arg2[%125, %c0_65] : memref<32x64xf32, #tpu.memory_space<vmem>>, vector<1x64xf32>
    %c14 = arith.constant 14 : index
    %c0_66 = arith.constant 0 : index
    %127 = vector.load %arg16[%c14, %c0_66] : memref<16x64xf32, #tpu.memory_space<vmem>>, vector<1x64xf32>
    tpu.vector_store %arg16[%c14, %c0_66], %126 {strides = array<i32>} : memref<16x64xf32, #tpu.memory_space<vmem>>, vector<1x64xf32>,
    %c15_i32 = arith.constant 15 : i32
    %128 = arith.addi %0, %c15_i32 : i32
    %c4_i32_67 = arith.constant 4 : i32
    %129 = arith.muli %128, %c4_i32_67 : i32
    %c0_i32_68 = arith.constant 0 : i32
    %130 = arith.addi %129, %c0_i32_68 : i32
    %131 = arith.index_cast %130 : i32 to index
    %132 = memref.load %arg1[%131] : memref<128xi32, #tpu.memory_space<smem>>
    %133 = arith.index_cast %132 : i32 to index
    %c0_69 = arith.constant 0 : index
    %134 = vector.load %arg2[%133, %c0_69] : memref<32x64xf32, #tpu.memory_space<vmem>>, vector<1x64xf32>
    %c15 = arith.constant 15 : index
    %c0_70 = arith.constant 0 : index
    %135 = vector.load %arg16[%c15, %c0_70] : memref<16x64xf32, #tpu.memory_space<vmem>>, vector<1x64xf32>
    tpu.vector_store %arg16[%c15, %c0_70], %134 {strides = array<i32>} : memref<16x64xf32, #tpu.memory_space<vmem>>, vector<1x64xf32>,
    %c0_71 = arith.constant 0 : index
    %c0_72 = arith.constant 0 : index
    %136 = vector.load %arg16[%c0_71, %c0_72] : memref<16x64xf32, #tpu.memory_space<vmem>>, vector<16x64xf32>
    %c0_73 = arith.constant 0 : index
    %c0_74 = arith.constant 0 : index
    %137 = vector.load %arg5[%c0_73, %c0_74] : memref<64x64xf32, #tpu.memory_space<vmem>>, vector<64x64xf32>
    %cst_75 = arith.constant dense<0.000000e+00> : vector<16x64xf32>
    %138 = tpu.matmul %136, %137, %cst_75 {dimension_numbers = #tpu.dot_dimension_numbers<[1], [0], [0], [1], [0, 0, 1, 1], [], []>} : vector<16x64xf32>, vector<64x64xf32>, vector<16x64xf32> -> vector<16x64xf32>
    %139 = arith.addf %6, %138 : vector<16x64xf32>
    %cst_76 = arith.constant 0.000000e+00 : f32
    %140 = vector.broadcast %cst_76 : f32 to vector<16x64xf32>
    %141 = arith.cmpf ogt, %139, %140 : vector<16x64xf32>
    %cst_77 = arith.constant 0.000000e+00 : f32
    %142 = vector.broadcast %cst_77 : f32 to vector<16x64xf32>
    %143 = arith.minimumf %139, %142 : vector<16x64xf32>
    %144 = math.exp %143 : vector<16x64xf32>
    %cst_78 = arith.constant 1.000000e+00 : f32
    %145 = vector.broadcast %cst_78 : f32 to vector<16x64xf32>
    %146 = arith.subf %144, %145 : vector<16x64xf32>
    %147 = arith.select %141, %139, %146 : vector<16x64xi1>, vector<16x64xf32>
    %c0_79 = arith.constant 0 : index
    %c0_80 = arith.constant 0 : index
    %148 = vector.load %arg7[%c0_79, %c0_80] : memref<1x64xf32, #tpu.memory_space<vmem>>, vector<1x64xf32>
    %149 = vector.broadcast %148 : vector<1x64xf32> to vector<16x64xf32>
    %150 = arith.mulf %147, %149 : vector<16x64xf32>
    %c0_81 = arith.constant 0 : index
    %c0_82 = arith.constant 0 : index
    %151 = vector.load %arg8[%c0_81, %c0_82] : memref<1x64xf32, #tpu.memory_space<vmem>>, vector<1x64xf32>
    %152 = vector.broadcast %151 : vector<1x64xf32> to vector<16x64xf32>
    %153 = arith.addf %150, %152 : vector<16x64xf32>
    %154 = arith.addf %7, %153 : vector<16x64xf32>
    %c0_i32_83 = arith.constant 0 : i32
    %155 = arith.addi %0, %c0_i32_83 : i32
    %c4_i32_84 = arith.constant 4 : i32
    %156 = arith.muli %155, %c4_i32_84 : i32
    %c1_i32_85 = arith.constant 1 : i32
    %157 = arith.addi %156, %c1_i32_85 : i32
    %158 = arith.index_cast %157 : i32 to index
    %159 = memref.load %arg1[%158] : memref<128xi32, #tpu.memory_space<smem>>
    %160 = arith.index_cast %159 : i32 to index
    %c0_86 = arith.constant 0 : index
    %161 = vector.load %arg2[%160, %c0_86] : memref<32x64xf32, #tpu.memory_space<vmem>>, vector<1x64xf32>
    %c0_87 = arith.constant 0 : index
    %c0_88 = arith.constant 0 : index
    %162 = vector.load %arg16[%c0_87, %c0_88] : memref<16x64xf32, #tpu.memory_space<vmem>>, vector<1x64xf32>
    tpu.vector_store %arg16[%c0_87, %c0_88], %161 {strides = array<i32>} : memref<16x64xf32, #tpu.memory_space<vmem>>, vector<1x64xf32>,
    %c1_i32_89 = arith.constant 1 : i32
    %163 = arith.addi %0, %c1_i32_89 : i32
    %c4_i32_90 = arith.constant 4 : i32
    %164 = arith.muli %163, %c4_i32_90 : i32
    %c1_i32_91 = arith.constant 1 : i32
    %165 = arith.addi %164, %c1_i32_91 : i32
    %166 = arith.index_cast %165 : i32 to index
    %167 = memref.load %arg1[%166] : memref<128xi32, #tpu.memory_space<smem>>
    %168 = arith.index_cast %167 : i32 to index
    %c0_92 = arith.constant 0 : index
    %169 = vector.load %arg2[%168, %c0_92] : memref<32x64xf32, #tpu.memory_space<vmem>>, vector<1x64xf32>
    %c1_93 = arith.constant 1 : index
    %c0_94 = arith.constant 0 : index
    %170 = vector.load %arg16[%c1_93, %c0_94] : memref<16x64xf32, #tpu.memory_space<vmem>>, vector<1x64xf32>
    tpu.vector_store %arg16[%c1_93, %c0_94], %169 {strides = array<i32>} : memref<16x64xf32, #tpu.memory_space<vmem>>, vector<1x64xf32>,
    %c2_i32_95 = arith.constant 2 : i32
    %171 = arith.addi %0, %c2_i32_95 : i32
    %c4_i32_96 = arith.constant 4 : i32
    %172 = arith.muli %171, %c4_i32_96 : i32
    %c1_i32_97 = arith.constant 1 : i32
    %173 = arith.addi %172, %c1_i32_97 : i32
    %174 = arith.index_cast %173 : i32 to index
    %175 = memref.load %arg1[%174] : memref<128xi32, #tpu.memory_space<smem>>
    %176 = arith.index_cast %175 : i32 to index
    %c0_98 = arith.constant 0 : index
    %177 = vector.load %arg2[%176, %c0_98] : memref<32x64xf32, #tpu.memory_space<vmem>>, vector<1x64xf32>
    %c2_99 = arith.constant 2 : index
    %c0_100 = arith.constant 0 : index
    %178 = vector.load %arg16[%c2_99, %c0_100] : memref<16x64xf32, #tpu.memory_space<vmem>>, vector<1x64xf32>
    tpu.vector_store %arg16[%c2_99, %c0_100], %177 {strides = array<i32>} : memref<16x64xf32, #tpu.memory_space<vmem>>, vector<1x64xf32>,
    %c3_i32_101 = arith.constant 3 : i32
    %179 = arith.addi %0, %c3_i32_101 : i32
    %c4_i32_102 = arith.constant 4 : i32
    %180 = arith.muli %179, %c4_i32_102 : i32
    %c1_i32_103 = arith.constant 1 : i32
    %181 = arith.addi %180, %c1_i32_103 : i32
    %182 = arith.index_cast %181 : i32 to index
    %183 = memref.load %arg1[%182] : memref<128xi32, #tpu.memory_space<smem>>
    %184 = arith.index_cast %183 : i32 to index
    %c0_104 = arith.constant 0 : index
    %185 = vector.load %arg2[%184, %c0_104] : memref<32x64xf32, #tpu.memory_space<vmem>>, vector<1x64xf32>
    %c3_105 = arith.constant 3 : index
    %c0_106 = arith.constant 0 : index
    %186 = vector.load %arg16[%c3_105, %c0_106] : memref<16x64xf32, #tpu.memory_space<vmem>>, vector<1x64xf32>
    tpu.vector_store %arg16[%c3_105, %c0_106], %185 {strides = array<i32>} : memref<16x64xf32, #tpu.memory_space<vmem>>, vector<1x64xf32>,
    %c4_i32_107 = arith.constant 4 : i32
    %187 = arith.addi %0, %c4_i32_107 : i32
    %c4_i32_108 = arith.constant 4 : i32
    %188 = arith.muli %187, %c4_i32_108 : i32
    %c1_i32_109 = arith.constant 1 : i32
    %189 = arith.addi %188, %c1_i32_109 : i32
    %190 = arith.index_cast %189 : i32 to index
    %191 = memref.load %arg1[%190] : memref<128xi32, #tpu.memory_space<smem>>
    %192 = arith.index_cast %191 : i32 to index
    %c0_110 = arith.constant 0 : index
    %193 = vector.load %arg2[%192, %c0_110] : memref<32x64xf32, #tpu.memory_space<vmem>>, vector<1x64xf32>
    %c4_111 = arith.constant 4 : index
    %c0_112 = arith.constant 0 : index
    %194 = vector.load %arg16[%c4_111, %c0_112] : memref<16x64xf32, #tpu.memory_space<vmem>>, vector<1x64xf32>
    tpu.vector_store %arg16[%c4_111, %c0_112], %193 {strides = array<i32>} : memref<16x64xf32, #tpu.memory_space<vmem>>, vector<1x64xf32>,
    %c5_i32_113 = arith.constant 5 : i32
    %195 = arith.addi %0, %c5_i32_113 : i32
    %c4_i32_114 = arith.constant 4 : i32
    %196 = arith.muli %195, %c4_i32_114 : i32
    %c1_i32_115 = arith.constant 1 : i32
    %197 = arith.addi %196, %c1_i32_115 : i32
    %198 = arith.index_cast %197 : i32 to index
    %199 = memref.load %arg1[%198] : memref<128xi32, #tpu.memory_space<smem>>
    %200 = arith.index_cast %199 : i32 to index
    %c0_116 = arith.constant 0 : index
    %201 = vector.load %arg2[%200, %c0_116] : memref<32x64xf32, #tpu.memory_space<vmem>>, vector<1x64xf32>
    %c5_117 = arith.constant 5 : index
    %c0_118 = arith.constant 0 : index
    %202 = vector.load %arg16[%c5_117, %c0_118] : memref<16x64xf32, #tpu.memory_space<vmem>>, vector<1x64xf32>
    tpu.vector_store %arg16[%c5_117, %c0_118], %201 {strides = array<i32>} : memref<16x64xf32, #tpu.memory_space<vmem>>, vector<1x64xf32>,
    %c6_i32_119 = arith.constant 6 : i32
    %203 = arith.addi %0, %c6_i32_119 : i32
    %c4_i32_120 = arith.constant 4 : i32
    %204 = arith.muli %203, %c4_i32_120 : i32
    %c1_i32_121 = arith.constant 1 : i32
    %205 = arith.addi %204, %c1_i32_121 : i32
    %206 = arith.index_cast %205 : i32 to index
    %207 = memref.load %arg1[%206] : memref<128xi32, #tpu.memory_space<smem>>
    %208 = arith.index_cast %207 : i32 to index
    %c0_122 = arith.constant 0 : index
    %209 = vector.load %arg2[%208, %c0_122] : memref<32x64xf32, #tpu.memory_space<vmem>>, vector<1x64xf32>
    %c6_123 = arith.constant 6 : index
    %c0_124 = arith.constant 0 : index
    %210 = vector.load %arg16[%c6_123, %c0_124] : memref<16x64xf32, #tpu.memory_space<vmem>>, vector<1x64xf32>
    tpu.vector_store %arg16[%c6_123, %c0_124], %209 {strides = array<i32>} : memref<16x64xf32, #tpu.memory_space<vmem>>, vector<1x64xf32>,
    %c7_i32_125 = arith.constant 7 : i32
    %211 = arith.addi %0, %c7_i32_125 : i32
    %c4_i32_126 = arith.constant 4 : i32
    %212 = arith.muli %211, %c4_i32_126 : i32
    %c1_i32_127 = arith.constant 1 : i32
    %213 = arith.addi %212, %c1_i32_127 : i32
    %214 = arith.index_cast %213 : i32 to index
    %215 = memref.load %arg1[%214] : memref<128xi32, #tpu.memory_space<smem>>
    %216 = arith.index_cast %215 : i32 to index
    %c0_128 = arith.constant 0 : index
    %217 = vector.load %arg2[%216, %c0_128] : memref<32x64xf32, #tpu.memory_space<vmem>>, vector<1x64xf32>
    %c7_129 = arith.constant 7 : index
    %c0_130 = arith.constant 0 : index
    %218 = vector.load %arg16[%c7_129, %c0_130] : memref<16x64xf32, #tpu.memory_space<vmem>>, vector<1x64xf32>
    tpu.vector_store %arg16[%c7_129, %c0_130], %217 {strides = array<i32>} : memref<16x64xf32, #tpu.memory_space<vmem>>, vector<1x64xf32>,
    %c8_i32_131 = arith.constant 8 : i32
    %219 = arith.addi %0, %c8_i32_131 : i32
    %c4_i32_132 = arith.constant 4 : i32
    %220 = arith.muli %219, %c4_i32_132 : i32
    %c1_i32_133 = arith.constant 1 : i32
    %221 = arith.addi %220, %c1_i32_133 : i32
    %222 = arith.index_cast %221 : i32 to index
    %223 = memref.load %arg1[%222] : memref<128xi32, #tpu.memory_space<smem>>
    %224 = arith.index_cast %223 : i32 to index
    %c0_134 = arith.constant 0 : index
    %225 = vector.load %arg2[%224, %c0_134] : memref<32x64xf32, #tpu.memory_space<vmem>>, vector<1x64xf32>
    %c8_135 = arith.constant 8 : index
    %c0_136 = arith.constant 0 : index
    %226 = vector.load %arg16[%c8_135, %c0_136] : memref<16x64xf32, #tpu.memory_space<vmem>>, vector<1x64xf32>
    tpu.vector_store %arg16[%c8_135, %c0_136], %225 {strides = array<i32>} : memref<16x64xf32, #tpu.memory_space<vmem>>, vector<1x64xf32>,
    %c9_i32_137 = arith.constant 9 : i32
    %227 = arith.addi %0, %c9_i32_137 : i32
    %c4_i32_138 = arith.constant 4 : i32
    %228 = arith.muli %227, %c4_i32_138 : i32
    %c1_i32_139 = arith.constant 1 : i32
    %229 = arith.addi %228, %c1_i32_139 : i32
    %230 = arith.index_cast %229 : i32 to index
    %231 = memref.load %arg1[%230] : memref<128xi32, #tpu.memory_space<smem>>
    %232 = arith.index_cast %231 : i32 to index
    %c0_140 = arith.constant 0 : index
    %233 = vector.load %arg2[%232, %c0_140] : memref<32x64xf32, #tpu.memory_space<vmem>>, vector<1x64xf32>
    %c9_141 = arith.constant 9 : index
    %c0_142 = arith.constant 0 : index
    %234 = vector.load %arg16[%c9_141, %c0_142] : memref<16x64xf32, #tpu.memory_space<vmem>>, vector<1x64xf32>
    tpu.vector_store %arg16[%c9_141, %c0_142], %233 {strides = array<i32>} : memref<16x64xf32, #tpu.memory_space<vmem>>, vector<1x64xf32>,
    %c10_i32_143 = arith.constant 10 : i32
    %235 = arith.addi %0, %c10_i32_143 : i32
    %c4_i32_144 = arith.constant 4 : i32
    %236 = arith.muli %235, %c4_i32_144 : i32
    %c1_i32_145 = arith.constant 1 : i32
    %237 = arith.addi %236, %c1_i32_145 : i32
    %238 = arith.index_cast %237 : i32 to index
    %239 = memref.load %arg1[%238] : memref<128xi32, #tpu.memory_space<smem>>
    %240 = arith.index_cast %239 : i32 to index
    %c0_146 = arith.constant 0 : index
    %241 = vector.load %arg2[%240, %c0_146] : memref<32x64xf32, #tpu.memory_space<vmem>>, vector<1x64xf32>
    %c10_147 = arith.constant 10 : index
    %c0_148 = arith.constant 0 : index
    %242 = vector.load %arg16[%c10_147, %c0_148] : memref<16x64xf32, #tpu.memory_space<vmem>>, vector<1x64xf32>
    tpu.vector_store %arg16[%c10_147, %c0_148], %241 {strides = array<i32>} : memref<16x64xf32, #tpu.memory_space<vmem>>, vector<1x64xf32>,
    %c11_i32_149 = arith.constant 11 : i32
    %243 = arith.addi %0, %c11_i32_149 : i32
    %c4_i32_150 = arith.constant 4 : i32
    %244 = arith.muli %243, %c4_i32_150 : i32
    %c1_i32_151 = arith.constant 1 : i32
    %245 = arith.addi %244, %c1_i32_151 : i32
    %246 = arith.index_cast %245 : i32 to index
    %247 = memref.load %arg1[%246] : memref<128xi32, #tpu.memory_space<smem>>
    %248 = arith.index_cast %247 : i32 to index
    %c0_152 = arith.constant 0 : index
    %249 = vector.load %arg2[%248, %c0_152] : memref<32x64xf32, #tpu.memory_space<vmem>>, vector<1x64xf32>
    %c11_153 = arith.constant 11 : index
    %c0_154 = arith.constant 0 : index
    %250 = vector.load %arg16[%c11_153, %c0_154] : memref<16x64xf32, #tpu.memory_space<vmem>>, vector<1x64xf32>
    tpu.vector_store %arg16[%c11_153, %c0_154], %249 {strides = array<i32>} : memref<16x64xf32, #tpu.memory_space<vmem>>, vector<1x64xf32>,
    %c12_i32_155 = arith.constant 12 : i32
    %251 = arith.addi %0, %c12_i32_155 : i32
    %c4_i32_156 = arith.constant 4 : i32
    %252 = arith.muli %251, %c4_i32_156 : i32
    %c1_i32_157 = arith.constant 1 : i32
    %253 = arith.addi %252, %c1_i32_157 : i32
    %254 = arith.index_cast %253 : i32 to index
    %255 = memref.load %arg1[%254] : memref<128xi32, #tpu.memory_space<smem>>
    %256 = arith.index_cast %255 : i32 to index
    %c0_158 = arith.constant 0 : index
    %257 = vector.load %arg2[%256, %c0_158] : memref<32x64xf32, #tpu.memory_space<vmem>>, vector<1x64xf32>
    %c12_159 = arith.constant 12 : index
    %c0_160 = arith.constant 0 : index
    %258 = vector.load %arg16[%c12_159, %c0_160] : memref<16x64xf32, #tpu.memory_space<vmem>>, vector<1x64xf32>
    tpu.vector_store %arg16[%c12_159, %c0_160], %257 {strides = array<i32>} : memref<16x64xf32, #tpu.memory_space<vmem>>, vector<1x64xf32>,
    %c13_i32_161 = arith.constant 13 : i32
    %259 = arith.addi %0, %c13_i32_161 : i32
    %c4_i32_162 = arith.constant 4 : i32
    %260 = arith.muli %259, %c4_i32_162 : i32
    %c1_i32_163 = arith.constant 1 : i32
    %261 = arith.addi %260, %c1_i32_163 : i32
    %262 = arith.index_cast %261 : i32 to index
    %263 = memref.load %arg1[%262] : memref<128xi32, #tpu.memory_space<smem>>
    %264 = arith.index_cast %263 : i32 to index
    %c0_164 = arith.constant 0 : index
    %265 = vector.load %arg2[%264, %c0_164] : memref<32x64xf32, #tpu.memory_space<vmem>>, vector<1x64xf32>
    %c13_165 = arith.constant 13 : index
    %c0_166 = arith.constant 0 : index
    %266 = vector.load %arg16[%c13_165, %c0_166] : memref<16x64xf32, #tpu.memory_space<vmem>>, vector<1x64xf32>
    tpu.vector_store %arg16[%c13_165, %c0_166], %265 {strides = array<i32>} : memref<16x64xf32, #tpu.memory_space<vmem>>, vector<1x64xf32>,
    %c14_i32_167 = arith.constant 14 : i32
    %267 = arith.addi %0, %c14_i32_167 : i32
    %c4_i32_168 = arith.constant 4 : i32
    %268 = arith.muli %267, %c4_i32_168 : i32
    %c1_i32_169 = arith.constant 1 : i32
    %269 = arith.addi %268, %c1_i32_169 : i32
    %270 = arith.index_cast %269 : i32 to index
    %271 = memref.load %arg1[%270] : memref<128xi32, #tpu.memory_space<smem>>
    %272 = arith.index_cast %271 : i32 to index
    %c0_170 = arith.constant 0 : index
    %273 = vector.load %arg2[%272, %c0_170] : memref<32x64xf32, #tpu.memory_space<vmem>>, vector<1x64xf32>
    %c14_171 = arith.constant 14 : index
    %c0_172 = arith.constant 0 : index
    %274 = vector.load %arg16[%c14_171, %c0_172] : memref<16x64xf32, #tpu.memory_space<vmem>>, vector<1x64xf32>
    tpu.vector_store %arg16[%c14_171, %c0_172], %273 {strides = array<i32>} : memref<16x64xf32, #tpu.memory_space<vmem>>, vector<1x64xf32>,
    %c15_i32_173 = arith.constant 15 : i32
    %275 = arith.addi %0, %c15_i32_173 : i32
    %c4_i32_174 = arith.constant 4 : i32
    %276 = arith.muli %275, %c4_i32_174 : i32
    %c1_i32_175 = arith.constant 1 : i32
    %277 = arith.addi %276, %c1_i32_175 : i32
    %278 = arith.index_cast %277 : i32 to index
    %279 = memref.load %arg1[%278] : memref<128xi32, #tpu.memory_space<smem>>
    %280 = arith.index_cast %279 : i32 to index
    %c0_176 = arith.constant 0 : index
    %281 = vector.load %arg2[%280, %c0_176] : memref<32x64xf32, #tpu.memory_space<vmem>>, vector<1x64xf32>
    %c15_177 = arith.constant 15 : index
    %c0_178 = arith.constant 0 : index
    %282 = vector.load %arg16[%c15_177, %c0_178] : memref<16x64xf32, #tpu.memory_space<vmem>>, vector<1x64xf32>
    tpu.vector_store %arg16[%c15_177, %c0_178], %281 {strides = array<i32>} : memref<16x64xf32, #tpu.memory_space<vmem>>, vector<1x64xf32>,
    %c0_179 = arith.constant 0 : index
    %c0_180 = arith.constant 0 : index
    %283 = vector.load %arg16[%c0_179, %c0_180] : memref<16x64xf32, #tpu.memory_space<vmem>>, vector<16x64xf32>
    %c0_181 = arith.constant 0 : index
    %c0_182 = arith.constant 0 : index
    %284 = vector.load %arg5[%c0_181, %c0_182] : memref<64x64xf32, #tpu.memory_space<vmem>>, vector<64x64xf32>
    %cst_183 = arith.constant dense<0.000000e+00> : vector<16x64xf32>
    %285 = tpu.matmul %283, %284, %cst_183 {dimension_numbers = #tpu.dot_dimension_numbers<[1], [0], [0], [1], [0, 0, 1, 1], [], []>} : vector<16x64xf32>, vector<64x64xf32>, vector<16x64xf32> -> vector<16x64xf32>
    %286 = arith.addf %6, %285 : vector<16x64xf32>
    %cst_184 = arith.constant 0.000000e+00 : f32
    %287 = vector.broadcast %cst_184 : f32 to vector<16x64xf32>
    %288 = arith.cmpf ogt, %286, %287 : vector<16x64xf32>
    %cst_185 = arith.constant 0.000000e+00 : f32
    %289 = vector.broadcast %cst_185 : f32 to vector<16x64xf32>
    %290 = arith.minimumf %286, %289 : vector<16x64xf32>
    %291 = math.exp %290 : vector<16x64xf32>
    %cst_186 = arith.constant 1.000000e+00 : f32
    %292 = vector.broadcast %cst_186 : f32 to vector<16x64xf32>
    %293 = arith.subf %291, %292 : vector<16x64xf32>
    %294 = arith.select %288, %286, %293 : vector<16x64xi1>, vector<16x64xf32>
    %c0_187 = arith.constant 0 : index
    %c0_188 = arith.constant 0 : index
    %295 = vector.load %arg7[%c0_187, %c0_188] : memref<1x64xf32, #tpu.memory_space<vmem>>, vector<1x64xf32>
    %296 = vector.broadcast %295 : vector<1x64xf32> to vector<16x64xf32>
    %297 = arith.mulf %294, %296 : vector<16x64xf32>
    %c0_189 = arith.constant 0 : index
    %c0_190 = arith.constant 0 : index
    %298 = vector.load %arg8[%c0_189, %c0_190] : memref<1x64xf32, #tpu.memory_space<vmem>>, vector<1x64xf32>
    %299 = vector.broadcast %298 : vector<1x64xf32> to vector<16x64xf32>
    %300 = arith.addf %297, %299 : vector<16x64xf32>
    %301 = arith.addf %154, %300 : vector<16x64xf32>
    %c0_i32_191 = arith.constant 0 : i32
    %302 = arith.addi %0, %c0_i32_191 : i32
    %c4_i32_192 = arith.constant 4 : i32
    %303 = arith.muli %302, %c4_i32_192 : i32
    %c2_i32_193 = arith.constant 2 : i32
    %304 = arith.addi %303, %c2_i32_193 : i32
    %305 = arith.index_cast %304 : i32 to index
    %306 = memref.load %arg1[%305] : memref<128xi32, #tpu.memory_space<smem>>
    %307 = arith.index_cast %306 : i32 to index
    %c0_194 = arith.constant 0 : index
    %308 = vector.load %arg2[%307, %c0_194] : memref<32x64xf32, #tpu.memory_space<vmem>>, vector<1x64xf32>
    %c0_195 = arith.constant 0 : index
    %c0_196 = arith.constant 0 : index
    %309 = vector.load %arg16[%c0_195, %c0_196] : memref<16x64xf32, #tpu.memory_space<vmem>>, vector<1x64xf32>
    tpu.vector_store %arg16[%c0_195, %c0_196], %308 {strides = array<i32>} : memref<16x64xf32, #tpu.memory_space<vmem>>, vector<1x64xf32>,
    %c1_i32_197 = arith.constant 1 : i32
    %310 = arith.addi %0, %c1_i32_197 : i32
    %c4_i32_198 = arith.constant 4 : i32
    %311 = arith.muli %310, %c4_i32_198 : i32
    %c2_i32_199 = arith.constant 2 : i32
    %312 = arith.addi %311, %c2_i32_199 : i32
    %313 = arith.index_cast %312 : i32 to index
    %314 = memref.load %arg1[%313] : memref<128xi32, #tpu.memory_space<smem>>
    %315 = arith.index_cast %314 : i32 to index
    %c0_200 = arith.constant 0 : index
    %316 = vector.load %arg2[%315, %c0_200] : memref<32x64xf32, #tpu.memory_space<vmem>>, vector<1x64xf32>
    %c1_201 = arith.constant 1 : index
    %c0_202 = arith.constant 0 : index
    %317 = vector.load %arg16[%c1_201, %c0_202] : memref<16x64xf32, #tpu.memory_space<vmem>>, vector<1x64xf32>
    tpu.vector_store %arg16[%c1_201, %c0_202], %316 {strides = array<i32>} : memref<16x64xf32, #tpu.memory_space<vmem>>, vector<1x64xf32>,
    %c2_i32_203 = arith.constant 2 : i32
    %318 = arith.addi %0, %c2_i32_203 : i32
    %c4_i32_204 = arith.constant 4 : i32
    %319 = arith.muli %318, %c4_i32_204 : i32
    %c2_i32_205 = arith.constant 2 : i32
    %320 = arith.addi %319, %c2_i32_205 : i32
    %321 = arith.index_cast %320 : i32 to index
    %322 = memref.load %arg1[%321] : memref<128xi32, #tpu.memory_space<smem>>
    %323 = arith.index_cast %322 : i32 to index
    %c0_206 = arith.constant 0 : index
    %324 = vector.load %arg2[%323, %c0_206] : memref<32x64xf32, #tpu.memory_space<vmem>>, vector<1x64xf32>
    %c2_207 = arith.constant 2 : index
    %c0_208 = arith.constant 0 : index
    %325 = vector.load %arg16[%c2_207, %c0_208] : memref<16x64xf32, #tpu.memory_space<vmem>>, vector<1x64xf32>
    tpu.vector_store %arg16[%c2_207, %c0_208], %324 {strides = array<i32>} : memref<16x64xf32, #tpu.memory_space<vmem>>, vector<1x64xf32>,
    %c3_i32_209 = arith.constant 3 : i32
    %326 = arith.addi %0, %c3_i32_209 : i32
    %c4_i32_210 = arith.constant 4 : i32
    %327 = arith.muli %326, %c4_i32_210 : i32
    %c2_i32_211 = arith.constant 2 : i32
    %328 = arith.addi %327, %c2_i32_211 : i32
    %329 = arith.index_cast %328 : i32 to index
    %330 = memref.load %arg1[%329] : memref<128xi32, #tpu.memory_space<smem>>
    %331 = arith.index_cast %330 : i32 to index
    %c0_212 = arith.constant 0 : index
    %332 = vector.load %arg2[%331, %c0_212] : memref<32x64xf32, #tpu.memory_space<vmem>>, vector<1x64xf32>
    %c3_213 = arith.constant 3 : index
    %c0_214 = arith.constant 0 : index
    %333 = vector.load %arg16[%c3_213, %c0_214] : memref<16x64xf32, #tpu.memory_space<vmem>>, vector<1x64xf32>
    tpu.vector_store %arg16[%c3_213, %c0_214], %332 {strides = array<i32>} : memref<16x64xf32, #tpu.memory_space<vmem>>, vector<1x64xf32>,
    %c4_i32_215 = arith.constant 4 : i32
    %334 = arith.addi %0, %c4_i32_215 : i32
    %c4_i32_216 = arith.constant 4 : i32
    %335 = arith.muli %334, %c4_i32_216 : i32
    %c2_i32_217 = arith.constant 2 : i32
    %336 = arith.addi %335, %c2_i32_217 : i32
    %337 = arith.index_cast %336 : i32 to index
    %338 = memref.load %arg1[%337] : memref<128xi32, #tpu.memory_space<smem>>
    %339 = arith.index_cast %338 : i32 to index
    %c0_218 = arith.constant 0 : index
    %340 = vector.load %arg2[%339, %c0_218] : memref<32x64xf32, #tpu.memory_space<vmem>>, vector<1x64xf32>
    %c4_219 = arith.constant 4 : index
    %c0_220 = arith.constant 0 : index
    %341 = vector.load %arg16[%c4_219, %c0_220] : memref<16x64xf32, #tpu.memory_space<vmem>>, vector<1x64xf32>
    tpu.vector_store %arg16[%c4_219, %c0_220], %340 {strides = array<i32>} : memref<16x64xf32, #tpu.memory_space<vmem>>, vector<1x64xf32>,
    %c5_i32_221 = arith.constant 5 : i32
    %342 = arith.addi %0, %c5_i32_221 : i32
    %c4_i32_222 = arith.constant 4 : i32
    %343 = arith.muli %342, %c4_i32_222 : i32
    %c2_i32_223 = arith.constant 2 : i32
    %344 = arith.addi %343, %c2_i32_223 : i32
    %345 = arith.index_cast %344 : i32 to index
    %346 = memref.load %arg1[%345] : memref<128xi32, #tpu.memory_space<smem>>
    %347 = arith.index_cast %346 : i32 to index
    %c0_224 = arith.constant 0 : index
    %348 = vector.load %arg2[%347, %c0_224] : memref<32x64xf32, #tpu.memory_space<vmem>>, vector<1x64xf32>
    %c5_225 = arith.constant 5 : index
    %c0_226 = arith.constant 0 : index
    %349 = vector.load %arg16[%c5_225, %c0_226] : memref<16x64xf32, #tpu.memory_space<vmem>>, vector<1x64xf32>
    tpu.vector_store %arg16[%c5_225, %c0_226], %348 {strides = array<i32>} : memref<16x64xf32, #tpu.memory_space<vmem>>, vector<1x64xf32>,
    %c6_i32_227 = arith.constant 6 : i32
    %350 = arith.addi %0, %c6_i32_227 : i32
    %c4_i32_228 = arith.constant 4 : i32
    %351 = arith.muli %350, %c4_i32_228 : i32
    %c2_i32_229 = arith.constant 2 : i32
    %352 = arith.addi %351, %c2_i32_229 : i32
    %353 = arith.index_cast %352 : i32 to index
    %354 = memref.load %arg1[%353] : memref<128xi32, #tpu.memory_space<smem>>
    %355 = arith.index_cast %354 : i32 to index
    %c0_230 = arith.constant 0 : index
    %356 = vector.load %arg2[%355, %c0_230] : memref<32x64xf32, #tpu.memory_space<vmem>>, vector<1x64xf32>
    %c6_231 = arith.constant 6 : index
    %c0_232 = arith.constant 0 : index
    %357 = vector.load %arg16[%c6_231, %c0_232] : memref<16x64xf32, #tpu.memory_space<vmem>>, vector<1x64xf32>
    tpu.vector_store %arg16[%c6_231, %c0_232], %356 {strides = array<i32>} : memref<16x64xf32, #tpu.memory_space<vmem>>, vector<1x64xf32>,
    %c7_i32_233 = arith.constant 7 : i32
    %358 = arith.addi %0, %c7_i32_233 : i32
    %c4_i32_234 = arith.constant 4 : i32
    %359 = arith.muli %358, %c4_i32_234 : i32
    %c2_i32_235 = arith.constant 2 : i32
    %360 = arith.addi %359, %c2_i32_235 : i32
    %361 = arith.index_cast %360 : i32 to index
    %362 = memref.load %arg1[%361] : memref<128xi32, #tpu.memory_space<smem>>
    %363 = arith.index_cast %362 : i32 to index
    %c0_236 = arith.constant 0 : index
    %364 = vector.load %arg2[%363, %c0_236] : memref<32x64xf32, #tpu.memory_space<vmem>>, vector<1x64xf32>
    %c7_237 = arith.constant 7 : index
    %c0_238 = arith.constant 0 : index
    %365 = vector.load %arg16[%c7_237, %c0_238] : memref<16x64xf32, #tpu.memory_space<vmem>>, vector<1x64xf32>
    tpu.vector_store %arg16[%c7_237, %c0_238], %364 {strides = array<i32>} : memref<16x64xf32, #tpu.memory_space<vmem>>, vector<1x64xf32>,
    %c8_i32_239 = arith.constant 8 : i32
    %366 = arith.addi %0, %c8_i32_239 : i32
    %c4_i32_240 = arith.constant 4 : i32
    %367 = arith.muli %366, %c4_i32_240 : i32
    %c2_i32_241 = arith.constant 2 : i32
    %368 = arith.addi %367, %c2_i32_241 : i32
    %369 = arith.index_cast %368 : i32 to index
    %370 = memref.load %arg1[%369] : memref<128xi32, #tpu.memory_space<smem>>
    %371 = arith.index_cast %370 : i32 to index
    %c0_242 = arith.constant 0 : index
    %372 = vector.load %arg2[%371, %c0_242] : memref<32x64xf32, #tpu.memory_space<vmem>>, vector<1x64xf32>
    %c8_243 = arith.constant 8 : index
    %c0_244 = arith.constant 0 : index
    %373 = vector.load %arg16[%c8_243, %c0_244] : memref<16x64xf32, #tpu.memory_space<vmem>>, vector<1x64xf32>
    tpu.vector_store %arg16[%c8_243, %c0_244], %372 {strides = array<i32>} : memref<16x64xf32, #tpu.memory_space<vmem>>, vector<1x64xf32>,
    %c9_i32_245 = arith.constant 9 : i32
    %374 = arith.addi %0, %c9_i32_245 : i32
    %c4_i32_246 = arith.constant 4 : i32
    %375 = arith.muli %374, %c4_i32_246 : i32
    %c2_i32_247 = arith.constant 2 : i32
    %376 = arith.addi %375, %c2_i32_247 : i32
    %377 = arith.index_cast %376 : i32 to index
    %378 = memref.load %arg1[%377] : memref<128xi32, #tpu.memory_space<smem>>
    %379 = arith.index_cast %378 : i32 to index
    %c0_248 = arith.constant 0 : index
    %380 = vector.load %arg2[%379, %c0_248] : memref<32x64xf32, #tpu.memory_space<vmem>>, vector<1x64xf32>
    %c9_249 = arith.constant 9 : index
    %c0_250 = arith.constant 0 : index
    %381 = vector.load %arg16[%c9_249, %c0_250] : memref<16x64xf32, #tpu.memory_space<vmem>>, vector<1x64xf32>
    tpu.vector_store %arg16[%c9_249, %c0_250], %380 {strides = array<i32>} : memref<16x64xf32, #tpu.memory_space<vmem>>, vector<1x64xf32>,
    %c10_i32_251 = arith.constant 10 : i32
    %382 = arith.addi %0, %c10_i32_251 : i32
    %c4_i32_252 = arith.constant 4 : i32
    %383 = arith.muli %382, %c4_i32_252 : i32
    %c2_i32_253 = arith.constant 2 : i32
    %384 = arith.addi %383, %c2_i32_253 : i32
    %385 = arith.index_cast %384 : i32 to index
    %386 = memref.load %arg1[%385] : memref<128xi32, #tpu.memory_space<smem>>
    %387 = arith.index_cast %386 : i32 to index
    %c0_254 = arith.constant 0 : index
    %388 = vector.load %arg2[%387, %c0_254] : memref<32x64xf32, #tpu.memory_space<vmem>>, vector<1x64xf32>
    %c10_255 = arith.constant 10 : index
    %c0_256 = arith.constant 0 : index
    %389 = vector.load %arg16[%c10_255, %c0_256] : memref<16x64xf32, #tpu.memory_space<vmem>>, vector<1x64xf32>
    tpu.vector_store %arg16[%c10_255, %c0_256], %388 {strides = array<i32>} : memref<16x64xf32, #tpu.memory_space<vmem>>, vector<1x64xf32>,
    %c11_i32_257 = arith.constant 11 : i32
    %390 = arith.addi %0, %c11_i32_257 : i32
    %c4_i32_258 = arith.constant 4 : i32
    %391 = arith.muli %390, %c4_i32_258 : i32
    %c2_i32_259 = arith.constant 2 : i32
    %392 = arith.addi %391, %c2_i32_259 : i32
    %393 = arith.index_cast %392 : i32 to index
    %394 = memref.load %arg1[%393] : memref<128xi32, #tpu.memory_space<smem>>
    %395 = arith.index_cast %394 : i32 to index
    %c0_260 = arith.constant 0 : index
    %396 = vector.load %arg2[%395, %c0_260] : memref<32x64xf32, #tpu.memory_space<vmem>>, vector<1x64xf32>
    %c11_261 = arith.constant 11 : index
    %c0_262 = arith.constant 0 : index
    %397 = vector.load %arg16[%c11_261, %c0_262] : memref<16x64xf32, #tpu.memory_space<vmem>>, vector<1x64xf32>
    tpu.vector_store %arg16[%c11_261, %c0_262], %396 {strides = array<i32>} : memref<16x64xf32, #tpu.memory_space<vmem>>, vector<1x64xf32>,
    %c12_i32_263 = arith.constant 12 : i32
    %398 = arith.addi %0, %c12_i32_263 : i32
    %c4_i32_264 = arith.constant 4 : i32
    %399 = arith.muli %398, %c4_i32_264 : i32
    %c2_i32_265 = arith.constant 2 : i32
    %400 = arith.addi %399, %c2_i32_265 : i32
    %401 = arith.index_cast %400 : i32 to index
    %402 = memref.load %arg1[%401] : memref<128xi32, #tpu.memory_space<smem>>
    %403 = arith.index_cast %402 : i32 to index
    %c0_266 = arith.constant 0 : index
    %404 = vector.load %arg2[%403, %c0_266] : memref<32x64xf32, #tpu.memory_space<vmem>>, vector<1x64xf32>
    %c12_267 = arith.constant 12 : index
    %c0_268 = arith.constant 0 : index
    %405 = vector.load %arg16[%c12_267, %c0_268] : memref<16x64xf32, #tpu.memory_space<vmem>>, vector<1x64xf32>
    tpu.vector_store %arg16[%c12_267, %c0_268], %404 {strides = array<i32>} : memref<16x64xf32, #tpu.memory_space<vmem>>, vector<1x64xf32>,
    %c13_i32_269 = arith.constant 13 : i32
    %406 = arith.addi %0, %c13_i32_269 : i32
    %c4_i32_270 = arith.constant 4 : i32
    %407 = arith.muli %406, %c4_i32_270 : i32
    %c2_i32_271 = arith.constant 2 : i32
    %408 = arith.addi %407, %c2_i32_271 : i32
    %409 = arith.index_cast %408 : i32 to index
    %410 = memref.load %arg1[%409] : memref<128xi32, #tpu.memory_space<smem>>
    %411 = arith.index_cast %410 : i32 to index
    %c0_272 = arith.constant 0 : index
    %412 = vector.load %arg2[%411, %c0_272] : memref<32x64xf32, #tpu.memory_space<vmem>>, vector<1x64xf32>
    %c13_273 = arith.constant 13 : index
    %c0_274 = arith.constant 0 : index
    %413 = vector.load %arg16[%c13_273, %c0_274] : memref<16x64xf32, #tpu.memory_space<vmem>>, vector<1x64xf32>
    tpu.vector_store %arg16[%c13_273, %c0_274], %412 {strides = array<i32>} : memref<16x64xf32, #tpu.memory_space<vmem>>, vector<1x64xf32>,
    %c14_i32_275 = arith.constant 14 : i32
    %414 = arith.addi %0, %c14_i32_275 : i32
    %c4_i32_276 = arith.constant 4 : i32
    %415 = arith.muli %414, %c4_i32_276 : i32
    %c2_i32_277 = arith.constant 2 : i32
    %416 = arith.addi %415, %c2_i32_277 : i32
    %417 = arith.index_cast %416 : i32 to index
    %418 = memref.load %arg1[%417] : memref<128xi32, #tpu.memory_space<smem>>
    %419 = arith.index_cast %418 : i32 to index
    %c0_278 = arith.constant 0 : index
    %420 = vector.load %arg2[%419, %c0_278] : memref<32x64xf32, #tpu.memory_space<vmem>>, vector<1x64xf32>
    %c14_279 = arith.constant 14 : index
    %c0_280 = arith.constant 0 : index
    %421 = vector.load %arg16[%c14_279, %c0_280] : memref<16x64xf32, #tpu.memory_space<vmem>>, vector<1x64xf32>
    tpu.vector_store %arg16[%c14_279, %c0_280], %420 {strides = array<i32>} : memref<16x64xf32, #tpu.memory_space<vmem>>, vector<1x64xf32>,
    %c15_i32_281 = arith.constant 15 : i32
    %422 = arith.addi %0, %c15_i32_281 : i32
    %c4_i32_282 = arith.constant 4 : i32
    %423 = arith.muli %422, %c4_i32_282 : i32
    %c2_i32_283 = arith.constant 2 : i32
    %424 = arith.addi %423, %c2_i32_283 : i32
    %425 = arith.index_cast %424 : i32 to index
    %426 = memref.load %arg1[%425] : memref<128xi32, #tpu.memory_space<smem>>
    %427 = arith.index_cast %426 : i32 to index
    %c0_284 = arith.constant 0 : index
    %428 = vector.load %arg2[%427, %c0_284] : memref<32x64xf32, #tpu.memory_space<vmem>>, vector<1x64xf32>
    %c15_285 = arith.constant 15 : index
    %c0_286 = arith.constant 0 : index
    %429 = vector.load %arg16[%c15_285, %c0_286] : memref<16x64xf32, #tpu.memory_space<vmem>>, vector<1x64xf32>
    tpu.vector_store %arg16[%c15_285, %c0_286], %428 {strides = array<i32>} : memref<16x64xf32, #tpu.memory_space<vmem>>, vector<1x64xf32>,
    %c0_287 = arith.constant 0 : index
    %c0_288 = arith.constant 0 : index
    %430 = vector.load %arg16[%c0_287, %c0_288] : memref<16x64xf32, #tpu.memory_space<vmem>>, vector<16x64xf32>
    %c0_289 = arith.constant 0 : index
    %c0_290 = arith.constant 0 : index
    %431 = vector.load %arg5[%c0_289, %c0_290] : memref<64x64xf32, #tpu.memory_space<vmem>>, vector<64x64xf32>
    %cst_291 = arith.constant dense<0.000000e+00> : vector<16x64xf32>
    %432 = tpu.matmul %430, %431, %cst_291 {dimension_numbers = #tpu.dot_dimension_numbers<[1], [0], [0], [1], [0, 0, 1, 1], [], []>} : vector<16x64xf32>, vector<64x64xf32>, vector<16x64xf32> -> vector<16x64xf32>
    %433 = arith.addf %6, %432 : vector<16x64xf32>
    %cst_292 = arith.constant 0.000000e+00 : f32
    %434 = vector.broadcast %cst_292 : f32 to vector<16x64xf32>
    %435 = arith.cmpf ogt, %433, %434 : vector<16x64xf32>
    %cst_293 = arith.constant 0.000000e+00 : f32
    %436 = vector.broadcast %cst_293 : f32 to vector<16x64xf32>
    %437 = arith.minimumf %433, %436 : vector<16x64xf32>
    %438 = math.exp %437 : vector<16x64xf32>
    %cst_294 = arith.constant 1.000000e+00 : f32
    %439 = vector.broadcast %cst_294 : f32 to vector<16x64xf32>
    %440 = arith.subf %438, %439 : vector<16x64xf32>
    %441 = arith.select %435, %433, %440 : vector<16x64xi1>, vector<16x64xf32>
    %c0_295 = arith.constant 0 : index
    %c0_296 = arith.constant 0 : index
    %442 = vector.load %arg7[%c0_295, %c0_296] : memref<1x64xf32, #tpu.memory_space<vmem>>, vector<1x64xf32>
    %443 = vector.broadcast %442 : vector<1x64xf32> to vector<16x64xf32>
    %444 = arith.mulf %441, %443 : vector<16x64xf32>
    %c0_297 = arith.constant 0 : index
    %c0_298 = arith.constant 0 : index
    %445 = vector.load %arg8[%c0_297, %c0_298] : memref<1x64xf32, #tpu.memory_space<vmem>>, vector<1x64xf32>
    %446 = vector.broadcast %445 : vector<1x64xf32> to vector<16x64xf32>
    %447 = arith.addf %444, %446 : vector<16x64xf32>
    %448 = arith.addf %301, %447 : vector<16x64xf32>
    %c0_i32_299 = arith.constant 0 : i32
    %449 = arith.addi %0, %c0_i32_299 : i32
    %c4_i32_300 = arith.constant 4 : i32
    %450 = arith.muli %449, %c4_i32_300 : i32
    %c3_i32_301 = arith.constant 3 : i32
    %451 = arith.addi %450, %c3_i32_301 : i32
    %452 = arith.index_cast %451 : i32 to index
    %453 = memref.load %arg1[%452] : memref<128xi32, #tpu.memory_space<smem>>
    %454 = arith.index_cast %453 : i32 to index
    %c0_302 = arith.constant 0 : index
    %455 = vector.load %arg2[%454, %c0_302] : memref<32x64xf32, #tpu.memory_space<vmem>>, vector<1x64xf32>
    %c0_303 = arith.constant 0 : index
    %c0_304 = arith.constant 0 : index
    %456 = vector.load %arg16[%c0_303, %c0_304] : memref<16x64xf32, #tpu.memory_space<vmem>>, vector<1x64xf32>
    tpu.vector_store %arg16[%c0_303, %c0_304], %455 {strides = array<i32>} : memref<16x64xf32, #tpu.memory_space<vmem>>, vector<1x64xf32>,
    %c1_i32_305 = arith.constant 1 : i32
    %457 = arith.addi %0, %c1_i32_305 : i32
    %c4_i32_306 = arith.constant 4 : i32
    %458 = arith.muli %457, %c4_i32_306 : i32
    %c3_i32_307 = arith.constant 3 : i32
    %459 = arith.addi %458, %c3_i32_307 : i32
    %460 = arith.index_cast %459 : i32 to index
    %461 = memref.load %arg1[%460] : memref<128xi32, #tpu.memory_space<smem>>
    %462 = arith.index_cast %461 : i32 to index
    %c0_308 = arith.constant 0 : index
    %463 = vector.load %arg2[%462, %c0_308] : memref<32x64xf32, #tpu.memory_space<vmem>>, vector<1x64xf32>
    %c1_309 = arith.constant 1 : index
    %c0_310 = arith.constant 0 : index
    %464 = vector.load %arg16[%c1_309, %c0_310] : memref<16x64xf32, #tpu.memory_space<vmem>>, vector<1x64xf32>
    tpu.vector_store %arg16[%c1_309, %c0_310], %463 {strides = array<i32>} : memref<16x64xf32, #tpu.memory_space<vmem>>, vector<1x64xf32>,
    %c2_i32_311 = arith.constant 2 : i32
    %465 = arith.addi %0, %c2_i32_311 : i32
    %c4_i32_312 = arith.constant 4 : i32
    %466 = arith.muli %465, %c4_i32_312 : i32
    %c3_i32_313 = arith.constant 3 : i32
    %467 = arith.addi %466, %c3_i32_313 : i32
    %468 = arith.index_cast %467 : i32 to index
    %469 = memref.load %arg1[%468] : memref<128xi32, #tpu.memory_space<smem>>
    %470 = arith.index_cast %469 : i32 to index
    %c0_314 = arith.constant 0 : index
    %471 = vector.load %arg2[%470, %c0_314] : memref<32x64xf32, #tpu.memory_space<vmem>>, vector<1x64xf32>
    %c2_315 = arith.constant 2 : index
    %c0_316 = arith.constant 0 : index
    %472 = vector.load %arg16[%c2_315, %c0_316] : memref<16x64xf32, #tpu.memory_space<vmem>>, vector<1x64xf32>
    tpu.vector_store %arg16[%c2_315, %c0_316], %471 {strides = array<i32>} : memref<16x64xf32, #tpu.memory_space<vmem>>, vector<1x64xf32>,
    %c3_i32_317 = arith.constant 3 : i32
    %473 = arith.addi %0, %c3_i32_317 : i32
    %c4_i32_318 = arith.constant 4 : i32
    %474 = arith.muli %473, %c4_i32_318 : i32
    %c3_i32_319 = arith.constant 3 : i32
    %475 = arith.addi %474, %c3_i32_319 : i32
    %476 = arith.index_cast %475 : i32 to index
    %477 = memref.load %arg1[%476] : memref<128xi32, #tpu.memory_space<smem>>
    %478 = arith.index_cast %477 : i32 to index
    %c0_320 = arith.constant 0 : index
    %479 = vector.load %arg2[%478, %c0_320] : memref<32x64xf32, #tpu.memory_space<vmem>>, vector<1x64xf32>
    %c3_321 = arith.constant 3 : index
    %c0_322 = arith.constant 0 : index
    %480 = vector.load %arg16[%c3_321, %c0_322] : memref<16x64xf32, #tpu.memory_space<vmem>>, vector<1x64xf32>
    tpu.vector_store %arg16[%c3_321, %c0_322], %479 {strides = array<i32>} : memref<16x64xf32, #tpu.memory_space<vmem>>, vector<1x64xf32>,
    %c4_i32_323 = arith.constant 4 : i32
    %481 = arith.addi %0, %c4_i32_323 : i32
    %c4_i32_324 = arith.constant 4 : i32
    %482 = arith.muli %481, %c4_i32_324 : i32
    %c3_i32_325 = arith.constant 3 : i32
    %483 = arith.addi %482, %c3_i32_325 : i32
    %484 = arith.index_cast %483 : i32 to index
    %485 = memref.load %arg1[%484] : memref<128xi32, #tpu.memory_space<smem>>
    %486 = arith.index_cast %485 : i32 to index
    %c0_326 = arith.constant 0 : index
    %487 = vector.load %arg2[%486, %c0_326] : memref<32x64xf32, #tpu.memory_space<vmem>>, vector<1x64xf32>
    %c4_327 = arith.constant 4 : index
    %c0_328 = arith.constant 0 : index
    %488 = vector.load %arg16[%c4_327, %c0_328] : memref<16x64xf32, #tpu.memory_space<vmem>>, vector<1x64xf32>
    tpu.vector_store %arg16[%c4_327, %c0_328], %487 {strides = array<i32>} : memref<16x64xf32, #tpu.memory_space<vmem>>, vector<1x64xf32>,
    %c5_i32_329 = arith.constant 5 : i32
    %489 = arith.addi %0, %c5_i32_329 : i32
    %c4_i32_330 = arith.constant 4 : i32
    %490 = arith.muli %489, %c4_i32_330 : i32
    %c3_i32_331 = arith.constant 3 : i32
    %491 = arith.addi %490, %c3_i32_331 : i32
    %492 = arith.index_cast %491 : i32 to index
    %493 = memref.load %arg1[%492] : memref<128xi32, #tpu.memory_space<smem>>
    %494 = arith.index_cast %493 : i32 to index
    %c0_332 = arith.constant 0 : index
    %495 = vector.load %arg2[%494, %c0_332] : memref<32x64xf32, #tpu.memory_space<vmem>>, vector<1x64xf32>
    %c5_333 = arith.constant 5 : index
    %c0_334 = arith.constant 0 : index
    %496 = vector.load %arg16[%c5_333, %c0_334] : memref<16x64xf32, #tpu.memory_space<vmem>>, vector<1x64xf32>
    tpu.vector_store %arg16[%c5_333, %c0_334], %495 {strides = array<i32>} : memref<16x64xf32, #tpu.memory_space<vmem>>, vector<1x64xf32>,
    %c6_i32_335 = arith.constant 6 : i32
    %497 = arith.addi %0, %c6_i32_335 : i32
    %c4_i32_336 = arith.constant 4 : i32
    %498 = arith.muli %497, %c4_i32_336 : i32
    %c3_i32_337 = arith.constant 3 : i32
    %499 = arith.addi %498, %c3_i32_337 : i32
    %500 = arith.index_cast %499 : i32 to index
    %501 = memref.load %arg1[%500] : memref<128xi32, #tpu.memory_space<smem>>
    %502 = arith.index_cast %501 : i32 to index
    %c0_338 = arith.constant 0 : index
    %503 = vector.load %arg2[%502, %c0_338] : memref<32x64xf32, #tpu.memory_space<vmem>>, vector<1x64xf32>
    %c6_339 = arith.constant 6 : index
    %c0_340 = arith.constant 0 : index
    %504 = vector.load %arg16[%c6_339, %c0_340] : memref<16x64xf32, #tpu.memory_space<vmem>>, vector<1x64xf32>
    tpu.vector_store %arg16[%c6_339, %c0_340], %503 {strides = array<i32>} : memref<16x64xf32, #tpu.memory_space<vmem>>, vector<1x64xf32>,
    %c7_i32_341 = arith.constant 7 : i32
    %505 = arith.addi %0, %c7_i32_341 : i32
    %c4_i32_342 = arith.constant 4 : i32
    %506 = arith.muli %505, %c4_i32_342 : i32
    %c3_i32_343 = arith.constant 3 : i32
    %507 = arith.addi %506, %c3_i32_343 : i32
    %508 = arith.index_cast %507 : i32 to index
    %509 = memref.load %arg1[%508] : memref<128xi32, #tpu.memory_space<smem>>
    %510 = arith.index_cast %509 : i32 to index
    %c0_344 = arith.constant 0 : index
    %511 = vector.load %arg2[%510, %c0_344] : memref<32x64xf32, #tpu.memory_space<vmem>>, vector<1x64xf32>
    %c7_345 = arith.constant 7 : index
    %c0_346 = arith.constant 0 : index
    %512 = vector.load %arg16[%c7_345, %c0_346] : memref<16x64xf32, #tpu.memory_space<vmem>>, vector<1x64xf32>
    tpu.vector_store %arg16[%c7_345, %c0_346], %511 {strides = array<i32>} : memref<16x64xf32, #tpu.memory_space<vmem>>, vector<1x64xf32>,
    %c8_i32_347 = arith.constant 8 : i32
    %513 = arith.addi %0, %c8_i32_347 : i32
    %c4_i32_348 = arith.constant 4 : i32
    %514 = arith.muli %513, %c4_i32_348 : i32
    %c3_i32_349 = arith.constant 3 : i32
    %515 = arith.addi %514, %c3_i32_349 : i32
    %516 = arith.index_cast %515 : i32 to index
    %517 = memref.load %arg1[%516] : memref<128xi32, #tpu.memory_space<smem>>
    %518 = arith.index_cast %517 : i32 to index
    %c0_350 = arith.constant 0 : index
    %519 = vector.load %arg2[%518, %c0_350] : memref<32x64xf32, #tpu.memory_space<vmem>>, vector<1x64xf32>
    %c8_351 = arith.constant 8 : index
    %c0_352 = arith.constant 0 : index
    %520 = vector.load %arg16[%c8_351, %c0_352] : memref<16x64xf32, #tpu.memory_space<vmem>>, vector<1x64xf32>
    tpu.vector_store %arg16[%c8_351, %c0_352], %519 {strides = array<i32>} : memref<16x64xf32, #tpu.memory_space<vmem>>, vector<1x64xf32>,
    %c9_i32_353 = arith.constant 9 : i32
    %521 = arith.addi %0, %c9_i32_353 : i32
    %c4_i32_354 = arith.constant 4 : i32
    %522 = arith.muli %521, %c4_i32_354 : i32
    %c3_i32_355 = arith.constant 3 : i32
    %523 = arith.addi %522, %c3_i32_355 : i32
    %524 = arith.index_cast %523 : i32 to index
    %525 = memref.load %arg1[%524] : memref<128xi32, #tpu.memory_space<smem>>
    %526 = arith.index_cast %525 : i32 to index
    %c0_356 = arith.constant 0 : index
    %527 = vector.load %arg2[%526, %c0_356] : memref<32x64xf32, #tpu.memory_space<vmem>>, vector<1x64xf32>
    %c9_357 = arith.constant 9 : index
    %c0_358 = arith.constant 0 : index
    %528 = vector.load %arg16[%c9_357, %c0_358] : memref<16x64xf32, #tpu.memory_space<vmem>>, vector<1x64xf32>
    tpu.vector_store %arg16[%c9_357, %c0_358], %527 {strides = array<i32>} : memref<16x64xf32, #tpu.memory_space<vmem>>, vector<1x64xf32>,
    %c10_i32_359 = arith.constant 10 : i32
    %529 = arith.addi %0, %c10_i32_359 : i32
    %c4_i32_360 = arith.constant 4 : i32
    %530 = arith.muli %529, %c4_i32_360 : i32
    %c3_i32_361 = arith.constant 3 : i32
    %531 = arith.addi %530, %c3_i32_361 : i32
    %532 = arith.index_cast %531 : i32 to index
    %533 = memref.load %arg1[%532] : memref<128xi32, #tpu.memory_space<smem>>
    %534 = arith.index_cast %533 : i32 to index
    %c0_362 = arith.constant 0 : index
    %535 = vector.load %arg2[%534, %c0_362] : memref<32x64xf32, #tpu.memory_space<vmem>>, vector<1x64xf32>
    %c10_363 = arith.constant 10 : index
    %c0_364 = arith.constant 0 : index
    %536 = vector.load %arg16[%c10_363, %c0_364] : memref<16x64xf32, #tpu.memory_space<vmem>>, vector<1x64xf32>
    tpu.vector_store %arg16[%c10_363, %c0_364], %535 {strides = array<i32>} : memref<16x64xf32, #tpu.memory_space<vmem>>, vector<1x64xf32>,
    %c11_i32_365 = arith.constant 11 : i32
    %537 = arith.addi %0, %c11_i32_365 : i32
    %c4_i32_366 = arith.constant 4 : i32
    %538 = arith.muli %537, %c4_i32_366 : i32
    %c3_i32_367 = arith.constant 3 : i32
    %539 = arith.addi %538, %c3_i32_367 : i32
    %540 = arith.index_cast %539 : i32 to index
    %541 = memref.load %arg1[%540] : memref<128xi32, #tpu.memory_space<smem>>
    %542 = arith.index_cast %541 : i32 to index
    %c0_368 = arith.constant 0 : index
    %543 = vector.load %arg2[%542, %c0_368] : memref<32x64xf32, #tpu.memory_space<vmem>>, vector<1x64xf32>
    %c11_369 = arith.constant 11 : index
    %c0_370 = arith.constant 0 : index
    %544 = vector.load %arg16[%c11_369, %c0_370] : memref<16x64xf32, #tpu.memory_space<vmem>>, vector<1x64xf32>
    tpu.vector_store %arg16[%c11_369, %c0_370], %543 {strides = array<i32>} : memref<16x64xf32, #tpu.memory_space<vmem>>, vector<1x64xf32>,
    %c12_i32_371 = arith.constant 12 : i32
    %545 = arith.addi %0, %c12_i32_371 : i32
    %c4_i32_372 = arith.constant 4 : i32
    %546 = arith.muli %545, %c4_i32_372 : i32
    %c3_i32_373 = arith.constant 3 : i32
    %547 = arith.addi %546, %c3_i32_373 : i32
    %548 = arith.index_cast %547 : i32 to index
    %549 = memref.load %arg1[%548] : memref<128xi32, #tpu.memory_space<smem>>
    %550 = arith.index_cast %549 : i32 to index
    %c0_374 = arith.constant 0 : index
    %551 = vector.load %arg2[%550, %c0_374] : memref<32x64xf32, #tpu.memory_space<vmem>>, vector<1x64xf32>
    %c12_375 = arith.constant 12 : index
    %c0_376 = arith.constant 0 : index
    %552 = vector.load %arg16[%c12_375, %c0_376] : memref<16x64xf32, #tpu.memory_space<vmem>>, vector<1x64xf32>
    tpu.vector_store %arg16[%c12_375, %c0_376], %551 {strides = array<i32>} : memref<16x64xf32, #tpu.memory_space<vmem>>, vector<1x64xf32>,
    %c13_i32_377 = arith.constant 13 : i32
    %553 = arith.addi %0, %c13_i32_377 : i32
    %c4_i32_378 = arith.constant 4 : i32
    %554 = arith.muli %553, %c4_i32_378 : i32
    %c3_i32_379 = arith.constant 3 : i32
    %555 = arith.addi %554, %c3_i32_379 : i32
    %556 = arith.index_cast %555 : i32 to index
    %557 = memref.load %arg1[%556] : memref<128xi32, #tpu.memory_space<smem>>
    %558 = arith.index_cast %557 : i32 to index
    %c0_380 = arith.constant 0 : index
    %559 = vector.load %arg2[%558, %c0_380] : memref<32x64xf32, #tpu.memory_space<vmem>>, vector<1x64xf32>
    %c13_381 = arith.constant 13 : index
    %c0_382 = arith.constant 0 : index
    %560 = vector.load %arg16[%c13_381, %c0_382] : memref<16x64xf32, #tpu.memory_space<vmem>>, vector<1x64xf32>
    tpu.vector_store %arg16[%c13_381, %c0_382], %559 {strides = array<i32>} : memref<16x64xf32, #tpu.memory_space<vmem>>, vector<1x64xf32>,
    %c14_i32_383 = arith.constant 14 : i32
    %561 = arith.addi %0, %c14_i32_383 : i32
    %c4_i32_384 = arith.constant 4 : i32
    %562 = arith.muli %561, %c4_i32_384 : i32
    %c3_i32_385 = arith.constant 3 : i32
    %563 = arith.addi %562, %c3_i32_385 : i32
    %564 = arith.index_cast %563 : i32 to index
    %565 = memref.load %arg1[%564] : memref<128xi32, #tpu.memory_space<smem>>
    %566 = arith.index_cast %565 : i32 to index
    %c0_386 = arith.constant 0 : index
    %567 = vector.load %arg2[%566, %c0_386] : memref<32x64xf32, #tpu.memory_space<vmem>>, vector<1x64xf32>
    %c14_387 = arith.constant 14 : index
    %c0_388 = arith.constant 0 : index
    %568 = vector.load %arg16[%c14_387, %c0_388] : memref<16x64xf32, #tpu.memory_space<vmem>>, vector<1x64xf32>
    tpu.vector_store %arg16[%c14_387, %c0_388], %567 {strides = array<i32>} : memref<16x64xf32, #tpu.memory_space<vmem>>, vector<1x64xf32>,
    %c15_i32_389 = arith.constant 15 : i32
    %569 = arith.addi %0, %c15_i32_389 : i32
    %c4_i32_390 = arith.constant 4 : i32
    %570 = arith.muli %569, %c4_i32_390 : i32
    %c3_i32_391 = arith.constant 3 : i32
    %571 = arith.addi %570, %c3_i32_391 : i32
    %572 = arith.index_cast %571 : i32 to index
    %573 = memref.load %arg1[%572] : memref<128xi32, #tpu.memory_space<smem>>
    %574 = arith.index_cast %573 : i32 to index
    %c0_392 = arith.constant 0 : index
    %575 = vector.load %arg2[%574, %c0_392] : memref<32x64xf32, #tpu.memory_space<vmem>>, vector<1x64xf32>
    %c15_393 = arith.constant 15 : index
    %c0_394 = arith.constant 0 : index
    %576 = vector.load %arg16[%c15_393, %c0_394] : memref<16x64xf32, #tpu.memory_space<vmem>>, vector<1x64xf32>
    tpu.vector_store %arg16[%c15_393, %c0_394], %575 {strides = array<i32>} : memref<16x64xf32, #tpu.memory_space<vmem>>, vector<1x64xf32>,
    %c0_395 = arith.constant 0 : index
    %c0_396 = arith.constant 0 : index
    %577 = vector.load %arg16[%c0_395, %c0_396] : memref<16x64xf32, #tpu.memory_space<vmem>>, vector<16x64xf32>
    %c0_397 = arith.constant 0 : index
    %c0_398 = arith.constant 0 : index
    %578 = vector.load %arg5[%c0_397, %c0_398] : memref<64x64xf32, #tpu.memory_space<vmem>>, vector<64x64xf32>
    %cst_399 = arith.constant dense<0.000000e+00> : vector<16x64xf32>
    %579 = tpu.matmul %577, %578, %cst_399 {dimension_numbers = #tpu.dot_dimension_numbers<[1], [0], [0], [1], [0, 0, 1, 1], [], []>} : vector<16x64xf32>, vector<64x64xf32>, vector<16x64xf32> -> vector<16x64xf32>
    %580 = arith.addf %6, %579 : vector<16x64xf32>
    %cst_400 = arith.constant 0.000000e+00 : f32
    %581 = vector.broadcast %cst_400 : f32 to vector<16x64xf32>
    %582 = arith.cmpf ogt, %580, %581 : vector<16x64xf32>
    %cst_401 = arith.constant 0.000000e+00 : f32
    %583 = vector.broadcast %cst_401 : f32 to vector<16x64xf32>
    %584 = arith.minimumf %580, %583 : vector<16x64xf32>
    %585 = math.exp %584 : vector<16x64xf32>
    %cst_402 = arith.constant 1.000000e+00 : f32
    %586 = vector.broadcast %cst_402 : f32 to vector<16x64xf32>
    %587 = arith.subf %585, %586 : vector<16x64xf32>
    %588 = arith.select %582, %580, %587 : vector<16x64xi1>, vector<16x64xf32>
    %c0_403 = arith.constant 0 : index
    %c0_404 = arith.constant 0 : index
    %589 = vector.load %arg7[%c0_403, %c0_404] : memref<1x64xf32, #tpu.memory_space<vmem>>, vector<1x64xf32>
    %590 = vector.broadcast %589 : vector<1x64xf32> to vector<16x64xf32>
    %591 = arith.mulf %588, %590 : vector<16x64xf32>
    %c0_405 = arith.constant 0 : index
    %c0_406 = arith.constant 0 : index
    %592 = vector.load %arg8[%c0_405, %c0_406] : memref<1x64xf32, #tpu.memory_space<vmem>>, vector<1x64xf32>
    %593 = vector.broadcast %592 : vector<1x64xf32> to vector<16x64xf32>
    %594 = arith.addf %591, %593 : vector<16x64xf32>
    %595 = arith.addf %448, %594 : vector<16x64xf32>
    %cst_407 = arith.constant 2.500000e-01 : f32
    %596 = vector.broadcast %cst_407 : f32 to vector<16x64xf32>
    %597 = arith.mulf %595, %596 : vector<16x64xf32>
    %598 = arith.addf %597, %1 : vector<16x64xf32>
    %c0_408 = arith.constant 0 : index
    %c0_409 = arith.constant 0 : index
    %599 = vector.load %arg9[%c0_408, %c0_409] : memref<64x32xf32, #tpu.memory_space<vmem>>, vector<64x32xf32>
    %cst_410 = arith.constant dense<0.000000e+00> : vector<16x32xf32>
    %600 = tpu.matmul %598, %599, %cst_410 {dimension_numbers = #tpu.dot_dimension_numbers<[1], [0], [0], [1], [0, 0, 1, 1], [], []>} : vector<16x64xf32>, vector<64x32xf32>, vector<16x32xf32> -> vector<16x32xf32>
    %c0_411 = arith.constant 0 : index
    %c0_412 = arith.constant 0 : index
    %601 = vector.load %arg10[%c0_411, %c0_412] : memref<1x32xf32, #tpu.memory_space<vmem>>, vector<1x32xf32>
    %602 = vector.broadcast %601 : vector<1x32xf32> to vector<16x32xf32>
    %603 = arith.addf %600, %602 : vector<16x32xf32>
    %cst_413 = arith.constant 0.000000e+00 : f32
    %604 = vector.broadcast %cst_413 : f32 to vector<16x32xf32>
    %605 = arith.cmpf ogt, %603, %604 : vector<16x32xf32>
    %cst_414 = arith.constant 0.000000e+00 : f32
    %606 = vector.broadcast %cst_414 : f32 to vector<16x32xf32>
    %607 = arith.minimumf %603, %606 : vector<16x32xf32>
    %608 = math.exp %607 : vector<16x32xf32>
    %cst_415 = arith.constant 1.000000e+00 : f32
    %609 = vector.broadcast %cst_415 : f32 to vector<16x32xf32>
    %610 = arith.subf %608, %609 : vector<16x32xf32>
    %611 = arith.select %605, %603, %610 : vector<16x32xi1>, vector<16x32xf32>
    %c0_416 = arith.constant 0 : index
    %c0_417 = arith.constant 0 : index
    %612 = vector.load %arg11[%c0_416, %c0_417] : memref<32x16xf32, #tpu.memory_space<vmem>>, vector<32x16xf32>
    %cst_418 = arith.constant dense<0.000000e+00> : vector<16x16xf32>
    %613 = tpu.matmul %611, %612, %cst_418 {dimension_numbers = #tpu.dot_dimension_numbers<[1], [0], [0], [1], [0, 0, 1, 1], [], []>} : vector<16x32xf32>, vector<32x16xf32>, vector<16x16xf32> -> vector<16x16xf32>
    %c0_419 = arith.constant 0 : index
    %c0_420 = arith.constant 0 : index
    %614 = vector.load %arg12[%c0_419, %c0_420] : memref<1x16xf32, #tpu.memory_space<vmem>>, vector<1x16xf32>
    %615 = vector.broadcast %614 : vector<1x16xf32> to vector<16x16xf32>
    %616 = arith.addf %613, %615 : vector<16x16xf32>
    %cst_421 = arith.constant 0.000000e+00 : f32
    %617 = vector.broadcast %cst_421 : f32 to vector<16x16xf32>
    %618 = arith.cmpf ogt, %616, %617 : vector<16x16xf32>
    %cst_422 = arith.constant 0.000000e+00 : f32
    %619 = vector.broadcast %cst_422 : f32 to vector<16x16xf32>
    %620 = arith.minimumf %616, %619 : vector<16x16xf32>
    %621 = math.exp %620 : vector<16x16xf32>
    %cst_423 = arith.constant 1.000000e+00 : f32
    %622 = vector.broadcast %cst_423 : f32 to vector<16x16xf32>
    %623 = arith.subf %621, %622 : vector<16x16xf32>
    %624 = arith.select %618, %616, %623 : vector<16x16xi1>, vector<16x16xf32>
    %c0_424 = arith.constant 0 : index
    %c0_425 = arith.constant 0 : index
    %625 = vector.load %arg13[%c0_424, %c0_425] : memref<16x8xf32, #tpu.memory_space<vmem>>, vector<16x8xf32>
    %cst_426 = arith.constant dense<0.000000e+00> : vector<16x8xf32>
    %626 = tpu.matmul %624, %625, %cst_426 {dimension_numbers = #tpu.dot_dimension_numbers<[1], [0], [0], [1], [0, 0, 1, 1], [], []>} : vector<16x16xf32>, vector<16x8xf32>, vector<16x8xf32> -> vector<16x8xf32>
    %c0_427 = arith.constant 0 : index
    %c0_428 = arith.constant 0 : index
    %627 = vector.load %arg14[%c0_427, %c0_428] : memref<1x8xf32, #tpu.memory_space<vmem>>, vector<1x8xf32>
    %628 = vector.broadcast %627 : vector<1x8xf32> to vector<16x8xf32>
    %629 = arith.addf %626, %628 : vector<16x8xf32>
    %c0_429 = arith.constant 0 : index
    %c0_430 = arith.constant 0 : index
    %630 = vector.load %arg15[%c0_429, %c0_430] : memref<16x8xf32, #tpu.memory_space<vmem>>, vector<16x8xf32>
    tpu.vector_store %arg15[%c0_429, %c0_430], %629 {strides = array<i32>} : memref<16x8xf32, #tpu.memory_space<vmem>>, vector<16x8xf32>,
    return
  }
  func.func @transform_0(%arg0: i32, %arg1: memref<128xi32, #tpu.memory_space<smem>>) -> (i32, i32) {
    %c0_i32 = arith.constant 0 : i32
    %c0_i32_0 = arith.constant 0 : i32
    %c0_i32_1 = arith.constant 0 : i32
    return %c0_i32, %c0_i32_0 : i32, i32
  }
  func.func @transform_1(%arg0: i32, %arg1: memref<128xi32, #tpu.memory_space<smem>>) -> (i32, i32) {
    %c0_i32 = arith.constant 0 : i32
    %c0_i32_0 = arith.constant 0 : i32
    return %arg0, %c0_i32 : i32, i32
  }
  func.func @transform_2(%arg0: i32, %arg1: memref<128xi32, #tpu.memory_space<smem>>) -> (i32, i32) {
    %c0_i32 = arith.constant 0 : i32
    %c0_i32_0 = arith.constant 0 : i32
    %c0_i32_1 = arith.constant 0 : i32
    return %c0_i32, %c0_i32_0 : i32, i32
  }
  func.func @transform_3(%arg0: i32, %arg1: memref<128xi32, #tpu.memory_space<smem>>) -> (i32, i32) {
    %c0_i32 = arith.constant 0 : i32
    %c0_i32_0 = arith.constant 0 : i32
    %c0_i32_1 = arith.constant 0 : i32
    return %c0_i32, %c0_i32_0 : i32, i32
  }
  func.func @transform_4(%arg0: i32, %arg1: memref<128xi32, #tpu.memory_space<smem>>) -> (i32, i32) {
    %c0_i32 = arith.constant 0 : i32
    %c0_i32_0 = arith.constant 0 : i32
    %c0_i32_1 = arith.constant 0 : i32
    return %c0_i32, %c0_i32_0 : i32, i32
  }
  func.func @transform_5(%arg0: i32, %arg1: memref<128xi32, #tpu.memory_space<smem>>) -> (i32, i32) {
    %c0_i32 = arith.constant 0 : i32
    %c0_i32_0 = arith.constant 0 : i32
    %c0_i32_1 = arith.constant 0 : i32
    return %c0_i32, %c0_i32_0 : i32, i32
  }
  func.func @transform_6(%arg0: i32, %arg1: memref<128xi32, #tpu.memory_space<smem>>) -> (i32, i32) {
    %c0_i32 = arith.constant 0 : i32
    %c0_i32_0 = arith.constant 0 : i32
    %c0_i32_1 = arith.constant 0 : i32
    return %c0_i32, %c0_i32_0 : i32, i32
  }
  func.func @transform_7(%arg0: i32, %arg1: memref<128xi32, #tpu.memory_space<smem>>) -> (i32, i32) {
    %c0_i32 = arith.constant 0 : i32
    %c0_i32_0 = arith.constant 0 : i32
    %c0_i32_1 = arith.constant 0 : i32
    return %c0_i32, %c0_i32_0 : i32, i32
  }
  func.func @transform_8(%arg0: i32, %arg1: memref<128xi32, #tpu.memory_space<smem>>) -> (i32, i32) {
    %c0_i32 = arith.constant 0 : i32
    %c0_i32_0 = arith.constant 0 : i32
    %c0_i32_1 = arith.constant 0 : i32
    return %c0_i32, %c0_i32_0 : i32, i32
  }
  func.func @transform_9(%arg0: i32, %arg1: memref<128xi32, #tpu.memory_space<smem>>) -> (i32, i32) {
    %c0_i32 = arith.constant 0 : i32
    %c0_i32_0 = arith.constant 0 : i32
    %c0_i32_1 = arith.constant 0 : i32
    return %c0_i32, %c0_i32_0 : i32, i32
  }
  func.func @transform_10(%arg0: i32, %arg1: memref<128xi32, #tpu.memory_space<smem>>) -> (i32, i32) {
    %c0_i32 = arith.constant 0 : i32
    %c0_i32_0 = arith.constant 0 : i32
    %c0_i32_1 = arith.constant 0 : i32
    return %c0_i32, %c0_i32_0 : i32, i32
  }
  func.func @transform_11(%arg0: i32, %arg1: memref<128xi32, #tpu.memory_space<smem>>) -> (i32, i32) {
    %c0_i32 = arith.constant 0 : i32
    %c0_i32_0 = arith.constant 0 : i32
    %c0_i32_1 = arith.constant 0 : i32
    return %c0_i32, %c0_i32_0 : i32, i32
  }
  func.func @transform_12(%arg0: i32, %arg1: memref<128xi32, #tpu.memory_space<smem>>) -> (i32, i32) {
    %c0_i32 = arith.constant 0 : i32
    %c0_i32_0 = arith.constant 0 : i32
    %c0_i32_1 = arith.constant 0 : i32
    return %c0_i32, %c0_i32_0 : i32, i32
  }
  func.func @transform_13(%arg0: i32, %arg1: memref<128xi32, #tpu.memory_space<smem>>) -> (i32, i32) {
    %c0_i32 = arith.constant 0 : i32
    %c0_i32_0 = arith.constant 0 : i32
    return %arg0, %c0_i32 : i32, i32
  }
}

</mosaic_0001>

<llo_original>
// kernel: net_forward.4
$region0: #{net_forward.4}
  #allocation0 [shape = 'u32[]', space=smem, size = 0x4, offset = 0x4, fixed_abs, tag = 'smem constant byte address 0x4 - core index']
  #allocation1 [shape = 'u32[144,128]{1,0:T(1,128)}', space=vmem, size = 0x12000, scoped, tag = 'internal scratch']
  %s0 = inlined_call_operand.vmem [shape: f32[32,15], index: 0, kind: input, shape index: {}]
  %s1 = inlined_call_operand.vmem [shape: f32[15,64], index: 1, kind: input, shape index: {}]
  %s2 = inlined_call_operand.vmem [shape: f32[1,64], index: 2, kind: input, shape index: {}]
  %s3 = inlined_call_operand.vmem [shape: f32[64,64], index: 3, kind: input, shape index: {}]
  %s4 = inlined_call_operand.vmem [shape: f32[1,64], index: 4, kind: input, shape index: {}]
  %s5 = inlined_call_operand.vmem [shape: f32[32,64], index: 5, kind: output, shape index: {}]
  %s6 = sld [smem:[#allocation0]]
  $region53: #{net_forward.4} parent=0
    _
  %s8 = ssub.s32 1, %s6
  %s9 = scalar_select 0, %s8, %s6
  loop: start=0, step=1, limit=4
  $region2: #{net_forward.4} parent=0 // loop_pre_header
    _
  $region3: #{net_forward.4} parent=0 // loop_header
    %s11 = sphi 0, %s15
    %p12 = scmp.ge.s32.totalorder %s11, 4
    %s21 = sphi 0, %s23
    %s24 = sphi 0, %s21
    %s25 = sphi 0, %s24
    %s41 = sphi 0, %s25
    %s45 = sphi 0, %s45
    %s47 = sphi 0, %s45
    %s48 = sphi 0, %s47
    %s62 = sphi 0, %s48
    %s66 = sphi 0, %s66
    %s68 = sphi 0, %s66
    %s69 = sphi 0, %s68
    %s83 = sphi 0, %s69
    %s87 = sphi 0, %s87
    %s89 = sphi 0, %s87
    %s90 = sphi 0, %s89
    %s104 = sphi 0, %s90
    %s108 = sphi 0, %s108
    %s110 = sphi 0, %s108
    %s111 = sphi 0, %s110
    %s125 = sphi 0, %s111
    %s131 = sphi 0, %s133
    %s134 = sphi 0, %s131
    %s135 = sphi 0, %s134
    %s151 = sphi 0, %s135
  $region4: #{net_forward.4} parent=0 // loop_header_branch
    %14 = sbr.rel (%p12) target = $region8
  $region5: #{net_forward.4} parent=0 // loop_body
    %s16 = ssub.s32 %s11, 1
    %s17 = ssub.s32 %s11, 2
    %s18 = sadd.s32 %s11, 1
    %s19 = ssub.s32 %s11, %s18
    %p20 = scmp.eq.s32.totalorder %s19, 0
    %s22 = sadd.s32 %s21, 1
    %s23 = scalar_select %p20, %s21, %s22
    %p26 = pneg %p20
    %p27 = scmp.eq.s32.totalorder %s11, 1
    %p28 = por %p26, %p27
    %p29 = scmp.ne.s32.totalorder %s21, %s24
    %p30 = scmp.eq.s32.totalorder %s11, 0
    %p31 = por %p29, %p30
    %p32 = scmp.ne.s32.totalorder %s21, %s24
    %p33 = scmp.eq.s32.totalorder %s16, 1
    %p34 = por %p32, %p33
    %p35 = scmp.ne.s32.totalorder %s24, %s25
    %p36 = scmp.eq.s32.totalorder %s16, 0
    %p37 = por %p35, %p36
    %p38 = scmp.ne.s32.totalorder %s24, %s25
    %p39 = scmp.eq.s32.totalorder %s17, 1
    %p40 = por %p38, %p39
    %p42 = scmp.ne.s32.totalorder %s25, %s41
    %p43 = scmp.eq.s32.totalorder %s17, 0
    %p44 = por %p42, %p43
    %s46 = sadd.s32 %s45, 1
    %p49 = scmp.eq.s32.totalorder %s11, 1
    %p50 = scmp.ne.s32.totalorder %s45, %s47
    %p51 = scmp.eq.s32.totalorder %s11, 0
    %p52 = por %p50, %p51
    %p53 = scmp.ne.s32.totalorder %s45, %s47
    %p54 = scmp.eq.s32.totalorder %s16, 1
    %p55 = por %p53, %p54
    %p56 = scmp.ne.s32.totalorder %s47, %s48
    %p57 = scmp.eq.s32.totalorder %s16, 0
    %p58 = por %p56, %p57
    %p59 = scmp.ne.s32.totalorder %s47, %s48
    %p60 = scmp.eq.s32.totalorder %s17, 1
    %p61 = por %p59, %p60
    %p63 = scmp.ne.s32.totalorder %s48, %s62
    %p64 = scmp.eq.s32.totalorder %s17, 0
    %p65 = por %p63, %p64
    %s67 = sadd.s32 %s66, 1
    %p70 = scmp.eq.s32.totalorder %s11, 1
    %p71 = scmp.ne.s32.totalorder %s66, %s68
    %p72 = scmp.eq.s32.totalorder %s11, 0
    %p73 = por %p71, %p72
    %p74 = scmp.ne.s32.totalorder %s66, %s68
    %p75 = scmp.eq.s32.totalorder %s16, 1
    %p76 = por %p74, %p75
    %p77 = scmp.ne.s32.totalorder %s68, %s69
    %p78 = scmp.eq.s32.totalorder %s16, 0
    %p79 = por %p77, %p78
    %p80 = scmp.ne.s32.totalorder %s68, %s69
    %p81 = scmp.eq.s32.totalorder %s17, 1
    %p82 = por %p80, %p81
    %p84 = scmp.ne.s32.totalorder %s69, %s83
    %p85 = scmp.eq.s32.totalorder %s17, 0
    %p86 = por %p84, %p85
    %s88 = sadd.s32 %s87, 1
    %p91 = scmp.eq.s32.totalorder %s11, 1
    %p92 = scmp.ne.s32.totalorder %s87, %s89
    %p93 = scmp.eq.s32.totalorder %s11, 0
    %p94 = por %p92, %p93
    %p95 = scmp.ne.s32.totalorder %s87, %s89
    %p96 = scmp.eq.s32.totalorder %s16, 1
    %p97 = por %p95, %p96
    %p98 = scmp.ne.s32.totalorder %s89, %s90
    %p99 = scmp.eq.s32.totalorder %s16, 0
    %p100 = por %p98, %p99
    %p101 = scmp.ne.s32.totalorder %s89, %s90
    %p102 = scmp.eq.s32.totalorder %s17, 1
    %p103 = por %p101, %p102
    %p105 = scmp.ne.s32.totalorder %s90, %s104
    %p106 = scmp.eq.s32.totalorder %s17, 0
    %p107 = por %p105, %p106
    %s109 = sadd.s32 %s108, 1
    %p112 = scmp.eq.s32.totalorder %s11, 1
    %p113 = scmp.ne.s32.totalorder %s108, %s110
    %p114 = scmp.eq.s32.totalorder %s11, 0
    %p115 = por %p113, %p114
    %p116 = scmp.ne.s32.totalorder %s108, %s110
    %p117 = scmp.eq.s32.totalorder %s16, 1
    %p118 = por %p116, %p117
    %p119 = scmp.ne.s32.totalorder %s110, %s111
    %p120 = scmp.eq.s32.totalorder %s16, 0
    %p121 = por %p119, %p120
    %p122 = scmp.ne.s32.totalorder %s110, %s111
    %p123 = scmp.eq.s32.totalorder %s17, 1
    %p124 = por %p122, %p123
    %p126 = scmp.ne.s32.totalorder %s111, %s125
    %p127 = scmp.eq.s32.totalorder %s17, 0
    %p128 = por %p126, %p127
    %s129 = ssub.s32 %s11, %s18
    %p130 = scmp.eq.s32.totalorder %s129, 0
    %s132 = sadd.s32 %s131, 1
    %s133 = scalar_select %p130, %s131, %s132
    %p136 = pneg %p130
    %p137 = scmp.eq.s32.totalorder %s11, 1
    %p138 = por %p136, %p137
    %p139 = scmp.ne.s32.totalorder %s131, %s134
    %p140 = scmp.eq.s32.totalorder %s11, 0
    %p141 = por %p139, %p140
    %p142 = scmp.ne.s32.totalorder %s131, %s134
    %p143 = scmp.eq.s32.totalorder %s16, 1
    %p144 = por %p142, %p143
    %p145 = scmp.ne.s32.totalorder %s134, %s135
    %p146 = scmp.eq.s32.totalorder %s16, 0
    %p147 = por %p145, %p146
    %p148 = scmp.ne.s32.totalorder %s134, %s135
    %p149 = scmp.eq.s32.totalorder %s17, 1
    %p150 = por %p148, %p149
    %p152 = scmp.ne.s32.totalorder %s135, %s151
    %p153 = scmp.eq.s32.totalorder %s17, 0
    %p154 = por %p152, %p153
    %p155 = scmp.le.s32.totalorder 1, %s11
    %p156 = scmp.lt.s32.totalorder %s11, 3
    %p157 = pnand %p155, %p156
    %p158 = pneg %p157
    // Predicated region
    $region9: #{net_forward.4} parent=5 // pred_check
      _
    $region10: #{net_forward.4} parent=5 // pred_check_branch
      %160 = sbr.rel (%p157) target = $region12
    $region11: #{net_forward.4} parent=5 // pred_region
      %s161 = ssub.s32 %s11, 1
      // Predicated region
      $region13: #{net_forward.4} parent=11 // pred_check
        %p162 = pneg %p58
      $region14: #{net_forward.4} parent=11 // pred_check_branch
        %164 = sbr.rel (%p162) target = $region16
      $region15: #{net_forward.4} parent=11 // pred_region
        _
      $region16: #{net_forward.4} parent=11 // pred_fallthru
        _
      // Predicated region
      $region17: #{net_forward.4} parent=11 // pred_check
        %p165 = pneg %p79
      $region18: #{net_forward.4} parent=11 // pred_check_branch
        %167 = sbr.rel (%p165) target = $region20
      $region19: #{net_forward.4} parent=11 // pred_region
        _
      $region20: #{net_forward.4} parent=11 // pred_fallthru
        _
      // Predicated region
      $region21: #{net_forward.4} parent=11 // pred_check
        %p168 = pneg %p100
      $region22: #{net_forward.4} parent=11 // pred_check_branch
        %170 = sbr.rel (%p168) target = $region24
      $region23: #{net_forward.4} parent=11 // pred_region
        _
      $region24: #{net_forward.4} parent=11 // pred_fallthru
        _
      // Predicated region
      $region25: #{net_forward.4} parent=11 // pred_check
        %p171 = pneg %p121
      $region26: #{net_forward.4} parent=11 // pred_check_branch
        %173 = sbr.rel (%p171) target = $region28
      $region27: #{net_forward.4} parent=11 // pred_region
        _
      $region28: #{net_forward.4} parent=11 // pred_fallthru
        _
    $region12: #{net_forward.4} parent=5 // pred_fallthru
      _
    %p174 = scmp.lt.s32.totalorder %s11, 2
    // Predicated region
    $region29: #{net_forward.4} parent=5 // pred_check
      %p175 = pneg %p174
    $region30: #{net_forward.4} parent=5 // pred_check_branch
      %177 = sbr.rel (%p175) target = $region32
    $region31: #{net_forward.4} parent=5 // pred_region
      // Predicated region
      $region33: #{net_forward.4} parent=31 // pred_check
        %p178 = pneg %p31
      $region34: #{net_forward.4} parent=31 // pred_check_branch
        %180 = sbr.rel (%p178) target = $region36
      $region35: #{net_forward.4} parent=31 // pred_region
        %s181 = smul.u32 2, %s11
        %p182 = scmp.lt.s32.totalorder %s181, 3
        %s183 = scalar_select %p182, %s181, 3
        %s184 = smul.addr %s183, 8
        %s185 = scalar_lea.vmem %s0, %s184
        %s186 = smul.u32 2, %s11
      $region36: #{net_forward.4} parent=31 // pred_fallthru
        _
    $region32: #{net_forward.4} parent=5 // pred_fallthru
      _
    %p187 = scmp.le.s32.totalorder 1, %s11
    %p188 = scmp.lt.s32.totalorder %s11, 3
    %p189 = pnand %p187, %p188
    %p190 = pneg %p189
    // Predicated region
    $region37: #{net_forward.4} parent=5 // pred_check
      _
    $region38: #{net_forward.4} parent=5 // pred_check_branch
      %192 = sbr.rel (%p189) target = $region40
    $region39: #{net_forward.4} parent=5 // pred_region
      %s193 = ssub.s32 %s11, 1
      %s194 = smul.u32 2, %s16
      %p195 = scmp.lt.s32.totalorder %s194, 3
      %s196 = scalar_select %p195, %s194, 3
      %s197 = smul.addr %s196, 8
      %s198 = scalar_lea.vmem %s0, %s197
      %p199 = pneg %p37
      %p200 = pneg %p34
      %p201 = pneg %p58
      %p202 = pneg %p55
      %p203 = pneg %p79
      %p204 = pneg %p76
      %p205 = pneg %p100
      %p206 = pneg %p97
      %p207 = pneg %p121
      %p208 = pneg %p118
      %p209 = pneg %p147
      %p210 = pneg %p144
      %s211 = smul.u32 2, %s16
      %p212 = scmp.lt.s32.totalorder %s211, 3
      %s213 = scalar_select %p212, %s211, 3
      %s214 = smul.addr %s213, 8
      %s215 = scalar_lea.vmem %s5, %s214
      %s216 = smul.u32 2, %s16
      %p217 = scmp.lt.s32.totalorder %s216, 3
      %s218 = scalar_select %p217, %s216, 3
      %s219 = smul.addr %s218, 8
      %s220 = scalar_lea.vmem %s0, %s219
      %s221 = smul.u32 2, %s16
      %s222 = smul.u32 2, %s16
      %p223 = scmp.lt.s32.totalorder %s222, 3
      %s224 = scalar_select %p223, %s222, 3
      %s225 = smul.addr %s224, 8
      %s226 = scalar_lea.vmem %s5, %s225
      %s227 = smul.u32 2, %s16
      %v228 = vld [vmem:[%s220] sm:$0xff]
      %v229 = vld [vmem:[%s220 + $0x8] sm:$0xff]
      %v230 = vld [vmem:[%s1] sm:$0xff]
      %v231 = vld [vmem:[%s1 + $0x8] sm:$0x7f]
      %v232 = vld [vmem:[%s2] sm:$0x1]
      %v234 = vlaneseq
      %v235 = vshrl.u32 %v234, 7
      %v236 = vsub.s32 0, %v235
      %v237 = vrot.slane %v232, %v236
      %vm239 = vcmask 121856
      %v241 = vsel %vm239, %v228, 0
      %v244 = vsel %vm239, %v229, 0
      %vm246 = vcmask 1046528
      %v248 = vsel %vm246, %v231, 0
      %250 = vmatprep.subr.mxu0 0.0
      %251 = vmatpush1.msra.mxu0 %v230
      %252 = vmatprep.subr.mxu0 0.0
      %253 = vmatpush1.msra.mxu0 %v248
      %254 = vmatprep.subr.mxu0 0.0
      %255 = vmatpush1.msra.mxu0 0.0
      %256 = vmatprep.subr.mxu0 0.0
      %257 = vmatpush1.msra.mxu0 0.0
      %258 = vmatprep.subr.mxu0 0.0
      %259 = vmatpush1.msra.mxu0 0.0
      %260 = vmatprep.subr.mxu0 0.0
      %261 = vmatpush1.msra.mxu0 0.0
      %262 = vmatprep.subr.mxu0 0.0
      %263 = vmatpush1.msra.mxu0 0.0
      %264 = vmatprep.subr.mxu0 0.0
      %265 = vmatpush1.msra.mxu0 0.0
      %266 = vmatprep.subr.mxu0 0.0
      %267 = vmatpush1.msra.mxu0 0.0
      %268 = vmatprep.subr.mxu0 0.0
      %269 = vmatpush1.msra.mxu0 0.0
      %270 = vmatprep.subr.mxu0 0.0
      %271 = vmatpush1.msra.mxu0 0.0
      %272 = vmatprep.subr.mxu0 0.0
      %273 = vmatpush1.msra.mxu0 0.0
      %274 = vmatprep.subr.mxu0 0.0
      %275 = vmatpush1.msra.mxu0 0.0
      %276 = vmatprep.subr.mxu0 0.0
      %277 = vmatpush1.msra.mxu0 0.0
      %278 = vmatprep.subr.mxu0 0.0
      %279 = vmatpush1.msra.mxu0 0.0
      %280 = vmatprep.subr.mxu0 0.0
      %281 = vmatpush1.msra.mxu0 0.0
      %282 = vmatprep.subr.mxu0 0.0
      %283 = vmatpush1.msra.mxu0 0.0
      %284 = vmatprep.subr.mxu0 0.0
      %285 = vmatpush1.msra.mxu0 0.0
      %286 = vmatprep.subr.mxu0 0.0
      %287 = vmatpush1.msra.mxu0 0.0
      %288 = vmatprep.subr.mxu0 0.0
      %289 = vmatpush1.msra.mxu0 0.0
      %290 = vmatprep.subr.mxu0 0.0
      %291 = vmatpush1.msra.mxu0 0.0
      %292 = vmatprep.subr.mxu0 0.0
      %293 = vmatpush1.msra.mxu0 0.0
      %294 = vmatprep.subr.mxu0 0.0
      %295 = vmatpush1.msra.mxu0 0.0
      %296 = vmatprep.subr.mxu0 0.0
      %297 = vmatpush1.msra.mxu0 0.0
      %298 = vmatprep.subr.mxu0 0.0
      %299 = vmatpush1.msra.mxu0 0.0
      %300 = vmatprep.subr.mxu0 0.0
      %301 = vmatpush1.msra.mxu0 0.0
      %302 = vmatprep.subr.mxu0 0.0
      %303 = vmatpush1.msra.mxu0 0.0
      %304 = vmatprep.subr.mxu0 0.0
      %305 = vmatpush1.msra.mxu0 0.0
      %306 = vmatprep.subr.mxu0 0.0
      %307 = vmatpush1.msra.mxu0 0.0
      %308 = vmatprep.subr.mxu0 0.0
      %309 = vmatpush1.msra.mxu0 0.0
      %310 = vmatprep.subr.mxu0 0.0
      %311 = vmatpush1.msra.mxu0 0.0
      %312 = vmatprep.subr.mxu0 0.0
      %313 = vmatpush1.msra.mxu0 0.0
      %314 = vmatprep.mubr.f32.mxu0 0.0
      %315 = vmatmul.mubr.f32.gmra.mrb[0].mxu0 %v241
      %v316 = vpop.f32.mrb[0].mxu0
      %v317 = vadd.f32 %v237, %v316
      %v318 = vpop.f32.mrb[0].mxu0
      %319 = vmatprep.mubr.f32.mxu0 0.0
      %320 = vmatmul.mubr.f32.gmra.mrb[0].mxu0 %v244
      %v321 = vpop.f32.mrb[0].mxu0
      %v322 = vadd.f32 %v237, %v321
      %v323 = vpop.f32.mrb[0].mxu0
      %324 = vdwg.mxu0
      %vm325 = vcmp.gt.f32.partialorder %v317, 0.0
      %vm326 = vcmp.gt.f32.partialorder %v322, 0.0
      %v327 = vmin.f32 %v317, 0.0
      %v328 = vmin.f32 %v322, 0.0
      %v329 = vmul.f32 %v327, 1.442695
      %v330 = vpow.pop %v329
      %v331 = vmul.f32 %v328, 1.442695
      %v332 = vpow.pop %v331
      %v333 = vsub.f32 %v330, 1.0
      %v334 = vsub.f32 %v332, 1.0
      %v335 = vsel %vm325, %v317, %v333
      %v336 = vsel %vm326, %v322, %v334
      %v337 = vld [vmem:[%s3] sm:$0xff]
      %v338 = vld [vmem:[%s3 + $0x8] sm:$0xff]
      %v339 = vld [vmem:[%s3 + $0x10] sm:$0xff]
      %v340 = vld [vmem:[%s3 + $0x18] sm:$0xff]
      %v341 = vld [vmem:[%s3 + $0x20] sm:$0xff]
      %v342 = vld [vmem:[%s3 + $0x28] sm:$0xff]
      %v343 = vld [vmem:[%s3 + $0x30] sm:$0xff]
      %v344 = vld [vmem:[%s3 + $0x38] sm:$0xff]
      %v345 = vld [vmem:[%s4] sm:$0x1]
      %v347 = vlaneseq
      %v348 = vshrl.u32 %v347, 7
      %v349 = vsub.s32 0, %v348
      %v350 = vrot.slane %v345, %v349
      %vm352 = vcmask 523264
      %v354 = vsel %vm352, %v335, 0
      %v357 = vsel %vm352, %v336, 0
      %359 = vmatprep.subr.mxu0 0.0
      %360 = vmatpush1.msra.mxu0 %v337
      %361 = vmatprep.subr.mxu0 0.0
      %362 = vmatpush1.msra.mxu0 %v338
      %363 = vmatprep.subr.mxu0 0.0
      %364 = vmatpush1.msra.mxu0 %v339
      %365 = vmatprep.subr.mxu0 0.0
      %366 = vmatpush1.msra.mxu0 %v340
      %367 = vmatprep.subr.mxu0 0.0
      %368 = vmatpush1.msra.mxu0 %v341
      %369 = vmatprep.subr.mxu0 0.0
      %370 = vmatpush1.msra.mxu0 %v342
      %371 = vmatprep.subr.mxu0 0.0
      %372 = vmatpush1.msra.mxu0 %v343
      %373 = vmatprep.subr.mxu0 0.0
      %374 = vmatpush1.msra.mxu0 %v344
      %375 = vmatprep.subr.mxu0 0.0
      %376 = vmatpush1.msra.mxu0 0.0
      %377 = vmatprep.subr.mxu0 0.0
      %378 = vmatpush1.msra.mxu0 0.0
      %379 = vmatprep.subr.mxu0 0.0
      %380 = vmatpush1.msra.mxu0 0.0
      %381 = vmatprep.subr.mxu0 0.0
      %382 = vmatpush1.msra.mxu0 0.0
      %383 = vmatprep.subr.mxu0 0.0
      %384 = vmatpush1.msra.mxu0 0.0
      %385 = vmatprep.subr.mxu0 0.0
      %386 = vmatpush1.msra.mxu0 0.0
      %387 = vmatprep.subr.mxu0 0.0
      %388 = vmatpush1.msra.mxu0 0.0
      %389 = vmatprep.subr.mxu0 0.0
      %390 = vmatpush1.msra.mxu0 0.0
      %391 = vmatprep.subr.mxu0 0.0
      %392 = vmatpush1.msra.mxu0 0.0
      %393 = vmatprep.subr.mxu0 0.0
      %394 = vmatpush1.msra.mxu0 0.0
      %395 = vmatprep.subr.mxu0 0.0
      %396 = vmatpush1.msra.mxu0 0.0
      %397 = vmatprep.subr.mxu0 0.0
      %398 = vmatpush1.msra.mxu0 0.0
      %399 = vmatprep.subr.mxu0 0.0
      %400 = vmatpush1.msra.mxu0 0.0
      %401 = vmatprep.subr.mxu0 0.0
      %402 = vmatpush1.msra.mxu0 0.0
      %403 = vmatprep.subr.mxu0 0.0
      %404 = vmatpush1.msra.mxu0 0.0
      %405 = vmatprep.subr.mxu0 0.0
      %406 = vmatpush1.msra.mxu0 0.0
      %407 = vmatprep.subr.mxu0 0.0
      %408 = vmatpush1.msra.mxu0 0.0
      %409 = vmatprep.subr.mxu0 0.0
      %410 = vmatpush1.msra.mxu0 0.0
      %411 = vmatprep.subr.mxu0 0.0
      %412 = vmatpush1.msra.mxu0 0.0
      %413 = vmatprep.subr.mxu0 0.0
      %414 = vmatpush1.msra.mxu0 0.0
      %415 = vmatprep.subr.mxu0 0.0
      %416 = vmatpush1.msra.mxu0 0.0
      %417 = vmatprep.subr.mxu0 0.0
      %418 = vmatpush1.msra.mxu0 0.0
      %419 = vmatprep.subr.mxu0 0.0
      %420 = vmatpush1.msra.mxu0 0.0
      %421 = vmatprep.subr.mxu0 0.0
      %422 = vmatpush1.msra.mxu0 0.0
      %423 = vmatprep.mubr.f32.mxu0 0.0
      %424 = vmatmul.mubr.f32.gmra.mrb[0].mxu0 %v354
      %v425 = vpop.f32.mrb[0].mxu0
      %v426 = vadd.f32 %v350, %v425
      %v427 = vpop.f32.mrb[0].mxu0
      %428 = vmatprep.mubr.f32.mxu0 0.0
      %429 = vmatmul.mubr.f32.gmra.mrb[0].mxu0 %v357
      %v430 = vpop.f32.mrb[0].mxu0
      %v431 = vadd.f32 %v350, %v430
      %v432 = vpop.f32.mrb[0].mxu0
      %433 = vdwg.mxu0
      %vm434 = vcmp.gt.f32.partialorder %v426, 0.0
      %vm435 = vcmp.gt.f32.partialorder %v431, 0.0
      %v436 = vmin.f32 %v426, 0.0
      %v437 = vmin.f32 %v431, 0.0
      %v438 = vmul.f32 %v436, 1.442695
      %v439 = vpow.pop %v438
      %v440 = vmul.f32 %v437, 1.442695
      %v441 = vpow.pop %v440
      %v442 = vsub.f32 %v439, 1.0
      %v443 = vsub.f32 %v441, 1.0
      %v444 = vsel %vm434, %v426, %v442
      %v445 = vsel %vm435, %v431, %v443
      %446 = vst.msk [vmem:[%s226] sm:$0xff] %vm352, %v444
      %447 = vst.msk [vmem:[%s226 + $0x8] sm:$0xff] %vm352, %v445
      %s448 = smul.u32 2, %s16
      %p449 = scmp.lt.s32.totalorder %s448, 3
      %s450 = scalar_select %p449, %s448, 3
      %s451 = smul.addr %s450, 8
      %s452 = scalar_lea.vmem %s5, %s451
      // Predicated region
      $region41: #{net_forward.4} parent=39 // pred_check
        %p453 = pneg %p144
      $region42: #{net_forward.4} parent=39 // pred_check_branch
        %455 = sbr.rel (%p453) target = $region44
      $region43: #{net_forward.4} parent=39 // pred_region
        %s456 = smul.u32 2, %s16
      $region44: #{net_forward.4} parent=39 // pred_fallthru
        _
    $region40: #{net_forward.4} parent=5 // pred_fallthru
      _
    %p457 = scmp.le.s32.totalorder 2, %s11
    // Predicated region
    $region45: #{net_forward.4} parent=5 // pred_check
      %p458 = pneg %p457
    $region46: #{net_forward.4} parent=5 // pred_check_branch
      %460 = sbr.rel (%p458) target = $region48
    $region47: #{net_forward.4} parent=5 // pred_region
      %s461 = ssub.s32 %s11, 2
      // Predicated region
      $region49: #{net_forward.4} parent=47 // pred_check
        %p462 = pneg %p150
      $region50: #{net_forward.4} parent=47 // pred_check_branch
        %464 = sbr.rel (%p462) target = $region52
      $region51: #{net_forward.4} parent=47 // pred_region
        %s465 = smul.u32 2, %s17
        %p466 = scmp.lt.s32.totalorder %s465, 3
        %s467 = scalar_select %p466, %s465, 3
        %s468 = smul.addr %s467, 8
        %s469 = scalar_lea.vmem %s5, %s468
      $region52: #{net_forward.4} parent=47 // pred_fallthru
        _
    $region48: #{net_forward.4} parent=5 // pred_fallthru
      _
  $region6: #{net_forward.4} parent=0 // loop_footer
    %s15 = sadd.s32 1, %s11
  $region7: #{net_forward.4} parent=0 // loop_footer_branch
    %10 = sbr.rel target = $region3
  $region8: #{net_forward.4} parent=0 // loop_exit
    _

// kernel: net_forward.5
$region0: #{net_forward.5}
  #allocation0 [shape = 'u32[]', space=smem, size = 0x4, offset = 0x4, fixed_abs, tag = 'smem constant byte address 0x4 - core index']
  #allocation1 [shape = 'u32[144,128]{1,0:T(1,128)}', space=vmem, size = 0x12000, scoped, tag = 'internal scratch']
  #allocation2 [shape = 'f32[16,64]{1,0:T(8,128)}', space=vmem, size = 0x2000, scoped, tag = 'scratch operand']
  #allocation3 [shape = 's32[1]{0}', space=sflag, size = 0x4, scoped, tag = 'scoped memory for net_forward.5']
  #allocation4 [shape = 'u8[512]{0}', space=smem, size = 0x200, scoped, tag = 'prefetched SMEM operand 0']
  %s0 = inlined_call_operand.vmem [shape: s32[128], index: 0, kind: input, shape index: {}]
  %s1 = inlined_call_operand.vmem [shape: f32[32,64], index: 1, kind: input, shape index: {}, may-alias: {1,2}]
  %s2 = inlined_call_operand.vmem [shape: f32[32,64], index: 2, kind: input, shape index: {}, may-alias: {1,2}]
  %s3 = inlined_call_operand.vmem [shape: f32[64,64], index: 3, kind: input, shape index: {}]
  %s4 = inlined_call_operand.vmem [shape: f32[64,64], index: 4, kind: input, shape index: {}]
  %s5 = inlined_call_operand.vmem [shape: f32[1,64], index: 5, kind: input, shape index: {}]
  %s6 = inlined_call_operand.vmem [shape: f32[1,64], index: 6, kind: input, shape index: {}]
  %s7 = inlined_call_operand.vmem [shape: f32[1,64], index: 7, kind: input, shape index: {}]
  %s8 = inlined_call_operand.vmem [shape: f32[32,64], index: 8, kind: output, shape index: {}]
  %s9 = sld [smem:[#allocation0]]
  $region61: #{net_forward.5} parent=0
    _
  %s11 = ssub.s32 1, %s9
  %s12 = scalar_select 0, %s11, %s9
  %s13 = sshll.u32 %s0, 4
  %s14 = int_to_ptr.vmem [resolvable:$true] %s13
  %16 = dma.vmem_to_smem %s14, 16, [#allocation4], [#allocation3]
  %17 = dma.done [#allocation3], 16
  %18 = sfence
  loop: start=0, step=1, limit=4
  $region2: #{net_forward.5} parent=0 // loop_pre_header
    _
  $region3: #{net_forward.5} parent=0 // loop_header
    %s20 = sphi 0, %s24
    %p21 = scmp.ge.s32.totalorder %s20, 4
    %s28 = sphi 0, %s28
    %s30 = sphi 0, %s28
    %s31 = sphi 0, %s30
    %s45 = sphi 0, %s31
    %s51 = sphi 0, %s53
    %s54 = sphi 0, %s51
    %s55 = sphi 0, %s54
    %s71 = sphi 0, %s55
    %s75 = sphi 0, %s75
    %s77 = sphi 0, %s75
    %s78 = sphi 0, %s77
    %s92 = sphi 0, %s78
    %s96 = sphi 0, %s96
    %s98 = sphi 0, %s96
    %s99 = sphi 0, %s98
    %s113 = sphi 0, %s99
    %s117 = sphi 0, %s117
    %s119 = sphi 0, %s117
    %s120 = sphi 0, %s119
    %s134 = sphi 0, %s120
    %s138 = sphi 0, %s138
    %s140 = sphi 0, %s138
    %s141 = sphi 0, %s140
    %s155 = sphi 0, %s141
    %s159 = sphi 0, %s159
    %s161 = sphi 0, %s159
    %s162 = sphi 0, %s161
    %s176 = sphi 0, %s162
    %s182 = sphi 0, %s184
    %s185 = sphi 0, %s182
    %s186 = sphi 0, %s185
    %s202 = sphi 0, %s186
  $region4: #{net_forward.5} parent=0 // loop_header_branch
    %23 = sbr.rel (%p21) target = $region8
  $region5: #{net_forward.5} parent=0 // loop_body
    %s25 = ssub.s32 %s20, 1
    %s26 = ssub.s32 %s20, 2
    %s27 = sadd.s32 %s20, 1
    %s29 = sadd.s32 %s28, 1
    %p32 = scmp.eq.s32.totalorder %s20, 1
    %p33 = scmp.ne.s32.totalorder %s28, %s30
    %p34 = scmp.eq.s32.totalorder %s20, 0
    %p35 = por %p33, %p34
    %p36 = scmp.ne.s32.totalorder %s28, %s30
    %p37 = scmp.eq.s32.totalorder %s25, 1
    %p38 = por %p36, %p37
    %p39 = scmp.ne.s32.totalorder %s30, %s31
    %p40 = scmp.eq.s32.totalorder %s25, 0
    %p41 = por %p39, %p40
    %p42 = scmp.ne.s32.totalorder %s30, %s31
    %p43 = scmp.eq.s32.totalorder %s26, 1
    %p44 = por %p42, %p43
    %p46 = scmp.ne.s32.totalorder %s31, %s45
    %p47 = scmp.eq.s32.totalorder %s26, 0
    %p48 = por %p46, %p47
    %s49 = ssub.s32 %s20, %s27
    %p50 = scmp.eq.s32.totalorder %s49, 0
    %s52 = sadd.s32 %s51, 1
    %s53 = scalar_select %p50, %s51, %s52
    %p56 = pneg %p50
    %p57 = scmp.eq.s32.totalorder %s20, 1
    %p58 = por %p56, %p57
    %p59 = scmp.ne.s32.totalorder %s51, %s54
    %p60 = scmp.eq.s32.totalorder %s20, 0
    %p61 = por %p59, %p60
    %p62 = scmp.ne.s32.totalorder %s51, %s54
    %p63 = scmp.eq.s32.totalorder %s25, 1
    %p64 = por %p62, %p63
    %p65 = scmp.ne.s32.totalorder %s54, %s55
    %p66 = scmp.eq.s32.totalorder %s25, 0
    %p67 = por %p65, %p66
    %p68 = scmp.ne.s32.totalorder %s54, %s55
    %p69 = scmp.eq.s32.totalorder %s26, 1
    %p70 = por %p68, %p69
    %p72 = scmp.ne.s32.totalorder %s55, %s71
    %p73 = scmp.eq.s32.totalorder %s26, 0
    %p74 = por %p72, %p73
    %s76 = sadd.s32 %s75, 1
    %p79 = scmp.eq.s32.totalorder %s20, 1
    %p80 = scmp.ne.s32.totalorder %s75, %s77
    %p81 = scmp.eq.s32.totalorder %s20, 0
    %p82 = por %p80, %p81
    %p83 = scmp.ne.s32.totalorder %s75, %s77
    %p84 = scmp.eq.s32.totalorder %s25, 1
    %p85 = por %p83, %p84
    %p86 = scmp.ne.s32.totalorder %s77, %s78
    %p87 = scmp.eq.s32.totalorder %s25, 0
    %p88 = por %p86, %p87
    %p89 = scmp.ne.s32.totalorder %s77, %s78
    %p90 = scmp.eq.s32.totalorder %s26, 1
    %p91 = por %p89, %p90
    %p93 = scmp.ne.s32.totalorder %s78, %s92
    %p94 = scmp.eq.s32.totalorder %s26, 0
    %p95 = por %p93, %p94
    %s97 = sadd.s32 %s96, 1
    %p100 = scmp.eq.s32.totalorder %s20, 1
    %p101 = scmp.ne.s32.totalorder %s96, %s98
    %p102 = scmp.eq.s32.totalorder %s20, 0
    %p103 = por %p101, %p102
    %p104 = scmp.ne.s32.totalorder %s96, %s98
    %p105 = scmp.eq.s32.totalorder %s25, 1
    %p106 = por %p104, %p105
    %p107 = scmp.ne.s32.totalorder %s98, %s99
    %p108 = scmp.eq.s32.totalorder %s25, 0
    %p109 = por %p107, %p108
    %p110 = scmp.ne.s32.totalorder %s98, %s99
    %p111 = scmp.eq.s32.totalorder %s26, 1
    %p112 = por %p110, %p111
    %p114 = scmp.ne.s32.totalorder %s99, %s113
    %p115 = scmp.eq.s32.totalorder %s26, 0
    %p116 = por %p114, %p115
    %s118 = sadd.s32 %s117, 1
    %p121 = scmp.eq.s32.totalorder %s20, 1
    %p122 = scmp.ne.s32.totalorder %s117, %s119
    %p123 = scmp.eq.s32.totalorder %s20, 0
    %p124 = por %p122, %p123
    %p125 = scmp.ne.s32.totalorder %s117, %s119
    %p126 = scmp.eq.s32.totalorder %s25, 1
    %p127 = por %p125, %p126
    %p128 = scmp.ne.s32.totalorder %s119, %s120
    %p129 = scmp.eq.s32.totalorder %s25, 0
    %p130 = por %p128, %p129
    %p131 = scmp.ne.s32.totalorder %s119, %s120
    %p132 = scmp.eq.s32.totalorder %s26, 1
    %p133 = por %p131, %p132
    %p135 = scmp.ne.s32.totalorder %s120, %s134
    %p136 = scmp.eq.s32.totalorder %s26, 0
    %p137 = por %p135, %p136
    %s139 = sadd.s32 %s138, 1
    %p142 = scmp.eq.s32.totalorder %s20, 1
    %p143 = scmp.ne.s32.totalorder %s138, %s140
    %p144 = scmp.eq.s32.totalorder %s20, 0
    %p145 = por %p143, %p144
    %p146 = scmp.ne.s32.totalorder %s138, %s140
    %p147 = scmp.eq.s32.totalorder %s25, 1
    %p148 = por %p146, %p147
    %p149 = scmp.ne.s32.totalorder %s140, %s141
    %p150 = scmp.eq.s32.totalorder %s25, 0
    %p151 = por %p149, %p150
    %p152 = scmp.ne.s32.totalorder %s140, %s141
    %p153 = scmp.eq.s32.totalorder %s26, 1
    %p154 = por %p152, %p153
    %p156 = scmp.ne.s32.totalorder %s141, %s155
    %p157 = scmp.eq.s32.totalorder %s26, 0
    %p158 = por %p156, %p157
    %s160 = sadd.s32 %s159, 1
    %p163 = scmp.eq.s32.totalorder %s20, 1
    %p164 = scmp.ne.s32.totalorder %s159, %s161
    %p165 = scmp.eq.s32.totalorder %s20, 0
    %p166 = por %p164, %p165
    %p167 = scmp.ne.s32.totalorder %s159, %s161
    %p168 = scmp.eq.s32.totalorder %s25, 1
    %p169 = por %p167, %p168
    %p170 = scmp.ne.s32.totalorder %s161, %s162
    %p171 = scmp.eq.s32.totalorder %s25, 0
    %p172 = por %p170, %p171
    %p173 = scmp.ne.s32.totalorder %s161, %s162
    %p174 = scmp.eq.s32.totalorder %s26, 1
    %p175 = por %p173, %p174
    %p177 = scmp.ne.s32.totalorder %s162, %s176
    %p178 = scmp.eq.s32.totalorder %s26, 0
    %p179 = por %p177, %p178
    %s180 = ssub.s32 %s20, %s27
    %p181 = scmp.eq.s32.totalorder %s180, 0
    %s183 = sadd.s32 %s182, 1
    %s184 = scalar_select %p181, %s182, %s183
    %p187 = pneg %p181
    %p188 = scmp.eq.s32.totalorder %s20, 1
    %p189 = por %p187, %p188
    %p190 = scmp.ne.s32.totalorder %s182, %s185
    %p191 = scmp.eq.s32.totalorder %s20, 0
    %p192 = por %p190, %p191
    %p193 = scmp.ne.s32.totalorder %s182, %s185
    %p194 = scmp.eq.s32.totalorder %s25, 1
    %p195 = por %p193, %p194
    %p196 = scmp.ne.s32.totalorder %s185, %s186
    %p197 = scmp.eq.s32.totalorder %s25, 0
    %p198 = por %p196, %p197
    %p199 = scmp.ne.s32.totalorder %s185, %s186
    %p200 = scmp.eq.s32.totalorder %s26, 1
    %p201 = por %p199, %p200
    %p203 = scmp.ne.s32.totalorder %s186, %s202
    %p204 = scmp.eq.s32.totalorder %s26, 0
    %p205 = por %p203, %p204
    %p206 = scmp.le.s32.totalorder 1, %s20
    %p207 = scmp.lt.s32.totalorder %s20, 3
    %p208 = pnand %p206, %p207
    %p209 = pneg %p208
    // Predicated region
    $region9: #{net_forward.5} parent=5 // pred_check
      _
    $region10: #{net_forward.5} parent=5 // pred_check_branch
      %211 = sbr.rel (%p208) target = $region12
    $region11: #{net_forward.5} parent=5 // pred_region
      %s212 = ssub.s32 %s20, 1
      // Predicated region
      $region13: #{net_forward.5} parent=11 // pred_check
        %p213 = pneg %p41
      $region14: #{net_forward.5} parent=11 // pred_check_branch
        %215 = sbr.rel (%p213) target = $region16
      $region15: #{net_forward.5} parent=11 // pred_region
        _
      $region16: #{net_forward.5} parent=11 // pred_fallthru
        _
      // Predicated region
      $region17: #{net_forward.5} parent=11 // pred_check
        %p216 = pneg %p88
      $region18: #{net_forward.5} parent=11 // pred_check_branch
        %218 = sbr.rel (%p216) target = $region20
      $region19: #{net_forward.5} parent=11 // pred_region
        _
      $region20: #{net_forward.5} parent=11 // pred_fallthru
        _
      // Predicated region
      $region21: #{net_forward.5} parent=11 // pred_check
        %p219 = pneg %p109
      $region22: #{net_forward.5} parent=11 // pred_check_branch
        %221 = sbr.rel (%p219) target = $region24
      $region23: #{net_forward.5} parent=11 // pred_region
        _
      $region24: #{net_forward.5} parent=11 // pred_fallthru
        _
      // Predicated region
      $region25: #{net_forward.5} parent=11 // pred_check
        %p222 = pneg %p130
      $region26: #{net_forward.5} parent=11 // pred_check_branch
        %224 = sbr.rel (%p222) target = $region28
      $region27: #{net_forward.5} parent=11 // pred_region
        _
      $region28: #{net_forward.5} parent=11 // pred_fallthru
        _
      // Predicated region
      $region29: #{net_forward.5} parent=11 // pred_check
        %p225 = pneg %p151
      $region30: #{net_forward.5} parent=11 // pred_check_branch
        %227 = sbr.rel (%p225) target = $region32
      $region31: #{net_forward.5} parent=11 // pred_region
        _
      $region32: #{net_forward.5} parent=11 // pred_fallthru
        _
      // Predicated region
      $region33: #{net_forward.5} parent=11 // pred_check
        %p228 = pneg %p172
      $region34: #{net_forward.5} parent=11 // pred_check_branch
        %230 = sbr.rel (%p228) target = $region36
      $region35: #{net_forward.5} parent=11 // pred_region
        _
      $region36: #{net_forward.5} parent=11 // pred_fallthru
        _
    $region12: #{net_forward.5} parent=5 // pred_fallthru
      _
    %p231 = scmp.lt.s32.totalorder %s20, 2
    // Predicated region
    $region37: #{net_forward.5} parent=5 // pred_check
      %p232 = pneg %p231
    $region38: #{net_forward.5} parent=5 // pred_check_branch
      %234 = sbr.rel (%p232) target = $region40
    $region39: #{net_forward.5} parent=5 // pred_region
      // Predicated region
      $region41: #{net_forward.5} parent=39 // pred_check
        %p235 = pneg %p61
      $region42: #{net_forward.5} parent=39 // pred_check_branch
        %237 = sbr.rel (%p235) target = $region44
      $region43: #{net_forward.5} parent=39 // pred_region
        %s238 = smul.u32 2, %s20
        %p239 = scmp.lt.s32.totalorder %s238, 3
        %s240 = scalar_select %p239, %s238, 3
        %s241 = smul.addr %s240, 8
        %s242 = scalar_lea.vmem %s2, %s241
        %s243 = smul.u32 2, %s20
      $region44: #{net_forward.5} parent=39 // pred_fallthru
        _
    $region40: #{net_forward.5} parent=5 // pred_fallthru
      _
    %p244 = scmp.le.s32.totalorder 1, %s20
    %p245 = scmp.lt.s32.totalorder %s20, 3
    %p246 = pnand %p244, %p245
    %p247 = pneg %p246
    // Predicated region
    $region45: #{net_forward.5} parent=5 // pred_check
      _
    $region46: #{net_forward.5} parent=5 // pred_check_branch
      %249 = sbr.rel (%p246) target = $region48
    $region47: #{net_forward.5} parent=5 // pred_region
      %s250 = ssub.s32 %s20, 1
      %p251 = pneg %p41
      %p252 = pneg %p38
      %s253 = smul.u32 2, %s25
      %p254 = scmp.lt.s32.totalorder %s253, 3
      %s255 = scalar_select %p254, %s253, 3
      %s256 = smul.addr %s255, 8
      %s257 = scalar_lea.vmem %s2, %s256
      %p258 = pneg %p67
      %p259 = pneg %p64
      %p260 = pneg %p88
      %p261 = pneg %p85
      %p262 = pneg %p109
      %p263 = pneg %p106
      %p264 = pneg %p130
      %p265 = pneg %p127
      %p266 = pneg %p151
      %p267 = pneg %p148
      %p268 = pneg %p172
      %p269 = pneg %p169
      %p270 = pneg %p198
      %p271 = pneg %p195
      %s272 = smul.u32 2, %s25
      %p273 = scmp.lt.s32.totalorder %s272, 3
      %s274 = scalar_select %p273, %s272, 3
      %s275 = smul.addr %s274, 8
      %s276 = scalar_lea.vmem %s8, %s275
      %s277 = smul.u32 2, %s25
      %p278 = scmp.lt.s32.totalorder %s277, 3
      %s279 = scalar_select %p278, %s277, 3
      %s280 = smul.addr %s279, 8
      %s281 = scalar_lea.vmem %s2, %s280
      %s282 = smul.u32 2, %s25
      %s283 = smul.u32 2, %s25
      %p284 = scmp.lt.s32.totalorder %s283, 3
      %s285 = scalar_select %p284, %s283, 3
      %s286 = smul.addr %s285, 8
      %s287 = scalar_lea.vmem %s8, %s286
      %s288 = smul.u32 2, %s25
      %s289 = smul.u32 %s25, 16
      %v290 = vld [vmem:[%s281] sm:$0xff]
      %v291 = vld [vmem:[%s281 + $0x8] sm:$0xff]
      %v292 = vld [vmem:[%s3] sm:$0xff]
      %v293 = vld [vmem:[%s3 + $0x8] sm:$0xff]
      %v294 = vld [vmem:[%s3 + $0x10] sm:$0xff]
      %v295 = vld [vmem:[%s3 + $0x18] sm:$0xff]
      %v296 = vld [vmem:[%s3 + $0x20] sm:$0xff]
      %v297 = vld [vmem:[%s3 + $0x28] sm:$0xff]
      %v298 = vld [vmem:[%s3 + $0x30] sm:$0xff]
      %v299 = vld [vmem:[%s3 + $0x38] sm:$0xff]
      %v300 = vld [vmem:[%s5] sm:$0x1]
      %v302 = vlaneseq
      %v303 = vshrl.u32 %v302, 7
      %v304 = vsub.s32 0, %v303
      %v305 = vrot.slane %v300, %v304
      %vm307 = vcmask 523264
      %v309 = vsel %vm307, %v290, 0
      %v312 = vsel %vm307, %v291, 0
      %314 = vmatprep.subr.mxu0 0.0
      %315 = vmatpush1.msra.mxu0 %v292
      %316 = vmatprep.subr.mxu0 0.0
      %317 = vmatpush1.msra.mxu0 %v293
      %318 = vmatprep.subr.mxu0 0.0
      %319 = vmatpush1.msra.mxu0 %v294
      %320 = vmatprep.subr.mxu0 0.0
      %321 = vmatpush1.msra.mxu0 %v295
      %322 = vmatprep.subr.mxu0 0.0
      %323 = vmatpush1.msra.mxu0 %v296
      %324 = vmatprep.subr.mxu0 0.0
      %325 = vmatpush1.msra.mxu0 %v297
      %326 = vmatprep.subr.mxu0 0.0
      %327 = vmatpush1.msra.mxu0 %v298
      %328 = vmatprep.subr.mxu0 0.0
      %329 = vmatpush1.msra.mxu0 %v299
      %330 = vmatprep.subr.mxu0 0.0
      %331 = vmatpush1.msra.mxu0 0.0
      %332 = vmatprep.subr.mxu0 0.0
      %333 = vmatpush1.msra.mxu0 0.0
      %334 = vmatprep.subr.mxu0 0.0
      %335 = vmatpush1.msra.mxu0 0.0
      %336 = vmatprep.subr.mxu0 0.0
      %337 = vmatpush1.msra.mxu0 0.0
      %338 = vmatprep.subr.mxu0 0.0
      %339 = vmatpush1.msra.mxu0 0.0
      %340 = vmatprep.subr.mxu0 0.0
      %341 = vmatpush1.msra.mxu0 0.0
      %342 = vmatprep.subr.mxu0 0.0
      %343 = vmatpush1.msra.mxu0 0.0
      %344 = vmatprep.subr.mxu0 0.0
      %345 = vmatpush1.msra.mxu0 0.0
      %346 = vmatprep.subr.mxu0 0.0
      %347 = vmatpush1.msra.mxu0 0.0
      %348 = vmatprep.subr.mxu0 0.0
      %349 = vmatpush1.msra.mxu0 0.0
      %350 = vmatprep.subr.mxu0 0.0
      %351 = vmatpush1.msra.mxu0 0.0
      %352 = vmatprep.subr.mxu0 0.0
      %353 = vmatpush1.msra.mxu0 0.0
      %354 = vmatprep.subr.mxu0 0.0
      %355 = vmatpush1.msra.mxu0 0.0
      %356 = vmatprep.subr.mxu0 0.0
      %357 = vmatpush1.msra.mxu0 0.0
      %358 = vmatprep.subr.mxu0 0.0
      %359 = vmatpush1.msra.mxu0 0.0
      %360 = vmatprep.subr.mxu0 0.0
      %361 = vmatpush1.msra.mxu0 0.0
      %362 = vmatprep.subr.mxu0 0.0
      %363 = vmatpush1.msra.mxu0 0.0
      %364 = vmatprep.subr.mxu0 0.0
      %365 = vmatpush1.msra.mxu0 0.0
      %366 = vmatprep.subr.mxu0 0.0
      %367 = vmatpush1.msra.mxu0 0.0
      %368 = vmatprep.subr.mxu0 0.0
      %369 = vmatpush1.msra.mxu0 0.0
      %370 = vmatprep.subr.mxu0 0.0
      %371 = vmatpush1.msra.mxu0 0.0
      %372 = vmatprep.subr.mxu0 0.0
      %373 = vmatpush1.msra.mxu0 0.0
      %374 = vmatprep.subr.mxu0 0.0
      %375 = vmatpush1.msra.mxu0 0.0
      %376 = vmatprep.subr.mxu0 0.0
      %377 = vmatpush1.msra.mxu0 0.0
      %378 = vmatprep.mubr.f32.mxu0 0.0
      %379 = vmatmul.mubr.f32.gmra.mrb[0].mxu0 %v309
      %v380 = vpop.f32.mrb[0].mxu0
      %v381 = vadd.f32 %v305, %v380
      %v382 = vpop.f32.mrb[0].mxu0
      %383 = vmatprep.mubr.f32.mxu0 0.0
      %384 = vmatmul.mubr.f32.gmra.mrb[0].mxu0 %v312
      %v385 = vpop.f32.mrb[0].mxu0
      %v386 = vadd.f32 %v305, %v385
      %v387 = vpop.f32.mrb[0].mxu0
      %388 = vdwg.mxu0
      %s389 = smul.u32 %s25, 64
      %s390 = sld [smem:[#allocation4 + %s389]]
      %s391 = scalar_lea.vmem %s1, %s390
      %v392 = vld [vmem:[%s391] sm:$0x1]
      %vm393 = vcmask 516096
      %394 = vst.msk [vmem:[#allocation2] sm:$0x1] %vm393, %v392
      %s395 = sadd.s32 %s289, 1
      %s396 = smul.u32 %s395, 4
      %s397 = sld [smem:[#allocation4 + %s396]]
      %s398 = scalar_lea.vmem %s1, %s397
      %v399 = vld [vmem:[%s398] sm:$0x1]
      %400 = vst.msk [vmem:[#allocation2 + $0x1] sm:$0x1] %vm393, %v399
      %s401 = sadd.s32 %s289, 2
      %s402 = smul.u32 %s401, 4
      %s403 = sld [smem:[#allocation4 + %s402]]
      %s404 = scalar_lea.vmem %s1, %s403
      %v405 = vld [vmem:[%s404] sm:$0x1]
      %406 = vst.msk [vmem:[#allocation2 + $0x2] sm:$0x1] %vm393, %v405
      %s407 = sadd.s32 %s289, 3
      %s408 = smul.u32 %s407, 4
      %s409 = sld [smem:[#allocation4 + %s408]]
      %s410 = scalar_lea.vmem %s1, %s409
      %v411 = vld [vmem:[%s410] sm:$0x1]
      %412 = vst.msk [vmem:[#allocation2 + $0x3] sm:$0x1] %vm393, %v411
      %s413 = sadd.s32 %s289, 4
      %s414 = smul.u32 %s413, 4
      %s415 = sld [smem:[#allocation4 + %s414]]
      %s416 = scalar_lea.vmem %s1, %s415
      %v417 = vld [vmem:[%s416] sm:$0x1]
      %418 = vst.msk [vmem:[#allocation2 + $0x4] sm:$0x1] %vm393, %v417
      %s419 = sadd.s32 %s289, 5
      %s420 = smul.u32 %s419, 4
      %s421 = sld [smem:[#allocation4 + %s420]]
      %s422 = scalar_lea.vmem %s1, %s421
      %v423 = vld [vmem:[%s422] sm:$0x1]
      %424 = vst.msk [vmem:[#allocation2 + $0x5] sm:$0x1] %vm393, %v423
      %s425 = sadd.s32 %s289, 6
      %s426 = smul.u32 %s425, 4
      %s427 = sld [smem:[#allocation4 + %s426]]
      %s428 = scalar_lea.vmem %s1, %s427
      %v429 = vld [vmem:[%s428] sm:$0x1]
      %430 = vst.msk [vmem:[#allocation2 + $0x6] sm:$0x1] %vm393, %v429
      %s431 = sadd.s32 %s289, 7
      %s432 = smul.u32 %s431, 4
      %s433 = sld [smem:[#allocation4 + %s432]]
      %s434 = scalar_lea.vmem %s1, %s433
      %v435 = vld [vmem:[%s434] sm:$0x1]
      %436 = vst.msk [vmem:[#allocation2 + $0x7] sm:$0x1] %vm393, %v435
      %s437 = sadd.s32 %s289, 8
      %s438 = smul.u32 %s437, 4
      %s439 = sld [smem:[#allocation4 + %s438]]
      %s440 = scalar_lea.vmem %s1, %s439
      %v441 = vld [vmem:[%s440] sm:$0x1]
      %442 = vst.msk [vmem:[#allocation2 + $0x8] sm:$0x1] %vm393, %v441
      %s443 = sadd.s32 %s289, 9
      %s444 = smul.u32 %s443, 4
      %s445 = sld [smem:[#allocation4 + %s444]]
      %s446 = scalar_lea.vmem %s1, %s445
      %v447 = vld [vmem:[%s446] sm:$0x1]
      %448 = vst.msk [vmem:[#allocation2 + $0x9] sm:$0x1] %vm393, %v447
      %s449 = sadd.s32 %s289, 10
      %s450 = smul.u32 %s449, 4
      %s451 = sld [smem:[#allocation4 + %s450]]
      %s452 = scalar_lea.vmem %s1, %s451
      %v453 = vld [vmem:[%s452] sm:$0x1]
      %454 = vst.msk [vmem:[#allocation2 + $0xa] sm:$0x1] %vm393, %v453
      %s455 = sadd.s32 %s289, 11
      %s456 = smul.u32 %s455, 4
      %s457 = sld [smem:[#allocation4 + %s456]]
      %s458 = scalar_lea.vmem %s1, %s457
      %v459 = vld [vmem:[%s458] sm:$0x1]
      %460 = vst.msk [vmem:[#allocation2 + $0xb] sm:$0x1] %vm393, %v459
      %s461 = sadd.s32 %s289, 12
      %s462 = smul.u32 %s461, 4
      %s463 = sld [smem:[#allocation4 + %s462]]
      %s464 = scalar_lea.vmem %s1, %s463
      %v465 = vld [vmem:[%s464] sm:$0x1]
      %466 = vst.msk [vmem:[#allocation2 + $0xc] sm:$0x1] %vm393, %v465
      %s467 = sadd.s32 %s289, 13
      %s468 = smul.u32 %s467, 4
      %s469 = sld [smem:[#allocation4 + %s468]]
      %s470 = scalar_lea.vmem %s1, %s469
      %v471 = vld [vmem:[%s470] sm:$0x1]
      %472 = vst.msk [vmem:[#allocation2 + $0xd] sm:$0x1] %vm393, %v471
      %s473 = sadd.s32 %s289, 14
      %s474 = smul.u32 %s473, 4
      %s475 = sld [smem:[#allocation4 + %s474]]
      %s476 = scalar_lea.vmem %s1, %s475
      %v477 = vld [vmem:[%s476] sm:$0x1]
      %478 = vst.msk [vmem:[#allocation2 + $0xe] sm:$0x1] %vm393, %v477
      %s479 = sadd.s32 %s289, 15
      %s480 = smul.u32 %s479, 4
      %s481 = sld [smem:[#allocation4 + %s480]]
      %s482 = scalar_lea.vmem %s1, %s481
      %v483 = vld [vmem:[%s482] sm:$0x1]
      %484 = vst.msk [vmem:[#allocation2 + $0xf] sm:$0x1] %vm393, %v483
      %v485 = vld [vmem:[#allocation2] sm:$0xff]
      %v486 = vld [vmem:[#allocation2 + $0x8] sm:$0xff]
      %v487 = vld [vmem:[%s4] sm:$0xff]
      %v488 = vld [vmem:[%s4 + $0x8] sm:$0xff]
      %v489 = vld [vmem:[%s4 + $0x10] sm:$0xff]
      %v490 = vld [vmem:[%s4 + $0x18] sm:$0xff]
      %v491 = vld [vmem:[%s4 + $0x20] sm:$0xff]
      %v492 = vld [vmem:[%s4 + $0x28] sm:$0xff]
      %v493 = vld [vmem:[%s4 + $0x30] sm:$0xff]
      %v494 = vld [vmem:[%s4 + $0x38] sm:$0xff]
      %v496 = vsel %vm307, %v485, 0
      %v499 = vsel %vm307, %v486, 0
      %501 = vmatprep.subr.mxu0 0.0
      %502 = vmatpush1.msra.mxu0 %v487
      %503 = vmatprep.subr.mxu0 0.0
      %504 = vmatpush1.msra.mxu0 %v488
      %505 = vmatprep.subr.mxu0 0.0
      %506 = vmatpush1.msra.mxu0 %v489
      %507 = vmatprep.subr.mxu0 0.0
      %508 = vmatpush1.msra.mxu0 %v490
      %509 = vmatprep.subr.mxu0 0.0
      %510 = vmatpush1.msra.mxu0 %v491
      %511 = vmatprep.subr.mxu0 0.0
      %512 = vmatpush1.msra.mxu0 %v492
      %513 = vmatprep.subr.mxu0 0.0
      %514 = vmatpush1.msra.mxu0 %v493
      %515 = vmatprep.subr.mxu0 0.0
      %516 = vmatpush1.msra.mxu0 %v494
      %517 = vmatprep.subr.mxu0 0.0
      %518 = vmatpush1.msra.mxu0 0.0
      %519 = vmatprep.subr.mxu0 0.0
      %520 = vmatpush1.msra.mxu0 0.0
      %521 = vmatprep.subr.mxu0 0.0
      %522 = vmatpush1.msra.mxu0 0.0
      %523 = vmatprep.subr.mxu0 0.0
      %524 = vmatpush1.msra.mxu0 0.0
      %525 = vmatprep.subr.mxu0 0.0
      %526 = vmatpush1.msra.mxu0 0.0
      %527 = vmatprep.subr.mxu0 0.0
      %528 = vmatpush1.msra.mxu0 0.0
      %529 = vmatprep.subr.mxu0 0.0
      %530 = vmatpush1.msra.mxu0 0.0
      %531 = vmatprep.subr.mxu0 0.0
      %532 = vmatpush1.msra.mxu0 0.0
      %533 = vmatprep.subr.mxu0 0.0
      %534 = vmatpush1.msra.mxu0 0.0
      %535 = vmatprep.subr.mxu0 0.0
      %536 = vmatpush1.msra.mxu0 0.0
      %537 = vmatprep.subr.mxu0 0.0
      %538 = vmatpush1.msra.mxu0 0.0
      %539 = vmatprep.subr.mxu0 0.0
      %540 = vmatpush1.msra.mxu0 0.0
      %541 = vmatprep.subr.mxu0 0.0
      %542 = vmatpush1.msra.mxu0 0.0
      %543 = vmatprep.subr.mxu0 0.0
      %544 = vmatpush1.msra.mxu0 0.0
      %545 = vmatprep.subr.mxu0 0.0
      %546 = vmatpush1.msra.mxu0 0.0
      %547 = vmatprep.subr.mxu0 0.0
      %548 = vmatpush1.msra.mxu0 0.0
      %549 = vmatprep.subr.mxu0 0.0
      %550 = vmatpush1.msra.mxu0 0.0
      %551 = vmatprep.subr.mxu0 0.0
      %552 = vmatpush1.msra.mxu0 0.0
      %553 = vmatprep.subr.mxu0 0.0
      %554 = vmatpush1.msra.mxu0 0.0
      %555 = vmatprep.subr.mxu0 0.0
      %556 = vmatpush1.msra.mxu0 0.0
      %557 = vmatprep.subr.mxu0 0.0
      %558 = vmatpush1.msra.mxu0 0.0
      %559 = vmatprep.subr.mxu0 0.0
      %560 = vmatpush1.msra.mxu0 0.0
      %561 = vmatprep.subr.mxu0 0.0
      %562 = vmatpush1.msra.mxu0 0.0
      %563 = vmatprep.subr.mxu0 0.0
      %564 = vmatpush1.msra.mxu0 0.0
      %565 = vmatprep.mubr.f32.mxu0 0.0
      %566 = vmatmul.mubr.f32.gmra.mrb[0].mxu0 %v496
      %v567 = vpop.f32.mrb[0].mxu0
      %v568 = vadd.f32 0.0, %v567
      %v569 = vpop.f32.mrb[0].mxu0
      %570 = vmatprep.mubr.f32.mxu0 0.0
      %571 = vmatmul.mubr.f32.gmra.mrb[0].mxu0 %v499
      %v572 = vpop.f32.mrb[0].mxu0
      %v573 = vadd.f32 0.0, %v572
      %v574 = vpop.f32.mrb[0].mxu0
      %575 = vdwg.mxu0
      %v576 = vadd.f32 %v381, %v568
      %v577 = vadd.f32 %v386, %v573
      %vm578 = vcmp.gt.f32.partialorder %v576, 0.0
      %vm579 = vcmp.gt.f32.partialorder %v577, 0.0
      %v580 = vmin.f32 %v576, 0.0
      %v581 = vmin.f32 %v577, 0.0
      %v582 = vmul.f32 %v580, 1.442695
      %v583 = vpow.pop %v582
      %v584 = vmul.f32 %v581, 1.442695
      %v585 = vpow.pop %v584
      %v586 = vsub.f32 %v583, 1.0
      %v587 = vsub.f32 %v585, 1.0
      %v588 = vsel %vm578, %v576, %v586
      %v589 = vsel %vm579, %v577, %v587
      %v590 = vld [vmem:[%s6] sm:$0x1]
      %v592 = vlaneseq
      %v593 = vshrl.u32 %v592, 7
      %v594 = vsub.s32 0, %v593
      %v595 = vrot.slane %v590, %v594
      %v597 = vmul.f32 %v588, %v595
      %v598 = vmul.f32 %v589, %v595
      %v599 = vld [vmem:[%s7] sm:$0x1]
      %v601 = vlaneseq
      %v602 = vshrl.u32 %v601, 7
      %v603 = vsub.s32 0, %v602
      %v604 = vrot.slane %v599, %v603
      %v606 = vadd.f32 %v597, %v604
      %v607 = vadd.f32 %v598, %v604
      %v608 = vadd.f32 %v606, 0.0
      %v609 = vadd.f32 %v607, 0.0
      %s610 = sadd.s32 %s389, 1
      %s611 = sld [smem:[#allocation4 + %s610]]
      %s612 = scalar_lea.vmem %s1, %s611
      %v613 = vld [vmem:[%s612] sm:$0x1]
      %614 = vst.msk [vmem:[#allocation2] sm:$0x1] %vm393, %v613
      %s615 = sadd.s32 %s396, 1
      %s616 = sld [smem:[#allocation4 + %s615]]
      %s617 = scalar_lea.vmem %s1, %s616
      %v618 = vld [vmem:[%s617] sm:$0x1]
      %619 = vst.msk [vmem:[#allocation2 + $0x1] sm:$0x1] %vm393, %v618
      %s620 = sadd.s32 %s402, 1
      %s621 = sld [smem:[#allocation4 + %s620]]
      %s622 = scalar_lea.vmem %s1, %s621
      %v623 = vld [vmem:[%s622] sm:$0x1]
      %624 = vst.msk [vmem:[#allocation2 + $0x2] sm:$0x1] %vm393, %v623
      %s625 = sadd.s32 %s408, 1
      %s626 = sld [smem:[#allocation4 + %s625]]
      %s627 = scalar_lea.vmem %s1, %s626
      %v628 = vld [vmem:[%s627] sm:$0x1]
      %629 = vst.msk [vmem:[#allocation2 + $0x3] sm:$0x1] %vm393, %v628
      %s630 = sadd.s32 %s414, 1
      %s631 = sld [smem:[#allocation4 + %s630]]
      %s632 = scalar_lea.vmem %s1, %s631
      %v633 = vld [vmem:[%s632] sm:$0x1]
      %634 = vst.msk [vmem:[#allocation2 + $0x4] sm:$0x1] %vm393, %v633
      %s635 = sadd.s32 %s420, 1
      %s636 = sld [smem:[#allocation4 + %s635]]
      %s637 = scalar_lea.vmem %s1, %s636
      %v638 = vld [vmem:[%s637] sm:$0x1]
      %639 = vst.msk [vmem:[#allocation2 + $0x5] sm:$0x1] %vm393, %v638
      %s640 = sadd.s32 %s426, 1
      %s641 = sld [smem:[#allocation4 + %s640]]
      %s642 = scalar_lea.vmem %s1, %s641
      %v643 = vld [vmem:[%s642] sm:$0x1]
      %644 = vst.msk [vmem:[#allocation2 + $0x6] sm:$0x1] %vm393, %v643
      %s645 = sadd.s32 %s432, 1
      %s646 = sld [smem:[#allocation4 + %s645]]
      %s647 = scalar_lea.vmem %s1, %s646
      %v648 = vld [vmem:[%s647] sm:$0x1]
      %649 = vst.msk [vmem:[#allocation2 + $0x7] sm:$0x1] %vm393, %v648
      %s650 = sadd.s32 %s438, 1
      %s651 = sld [smem:[#allocation4 + %s650]]
      %s652 = scalar_lea.vmem %s1, %s651
      %v653 = vld [vmem:[%s652] sm:$0x1]
      %654 = vst.msk [vmem:[#allocation2 + $0x8] sm:$0x1] %vm393, %v653
      %s655 = sadd.s32 %s444, 1
      %s656 = sld [smem:[#allocation4 + %s655]]
      %s657 = scalar_lea.vmem %s1, %s656
      %v658 = vld [vmem:[%s657] sm:$0x1]
      %659 = vst.msk [vmem:[#allocation2 + $0x9] sm:$0x1] %vm393, %v658
      %s660 = sadd.s32 %s450, 1
      %s661 = sld [smem:[#allocation4 + %s660]]
      %s662 = scalar_lea.vmem %s1, %s661
      %v663 = vld [vmem:[%s662] sm:$0x1]
      %664 = vst.msk [vmem:[#allocation2 + $0xa] sm:$0x1] %vm393, %v663
      %s665 = sadd.s32 %s456, 1
      %s666 = sld [smem:[#allocation4 + %s665]]
      %s667 = scalar_lea.vmem %s1, %s666
      %v668 = vld [vmem:[%s667] sm:$0x1]
      %669 = vst.msk [vmem:[#allocation2 + $0xb] sm:$0x1] %vm393, %v668
      %s670 = sadd.s32 %s462, 1
      %s671 = sld [smem:[#allocation4 + %s670]]
      %s672 = scalar_lea.vmem %s1, %s671
      %v673 = vld [vmem:[%s672] sm:$0x1]
      %674 = vst.msk [vmem:[#allocation2 + $0xc] sm:$0x1] %vm393, %v673
      %s675 = sadd.s32 %s468, 1
      %s676 = sld [smem:[#allocation4 + %s675]]
      %s677 = scalar_lea.vmem %s1, %s676
      %v678 = vld [vmem:[%s677] sm:$0x1]
      %679 = vst.msk [vmem:[#allocation2 + $0xd] sm:$0x1] %vm393, %v678
      %s680 = sadd.s32 %s474, 1
      %s681 = sld [smem:[#allocation4 + %s680]]
      %s682 = scalar_lea.vmem %s1, %s681
      %v683 = vld [vmem:[%s682] sm:$0x1]
      %684 = vst.msk [vmem:[#allocation2 + $0xe] sm:$0x1] %vm393, %v683
      %s685 = sadd.s32 %s480, 1
      %s686 = sld [smem:[#allocation4 + %s685]]
      %s687 = scalar_lea.vmem %s1, %s686
      %v688 = vld [vmem:[%s687] sm:$0x1]
      %689 = vst.msk [vmem:[#allocation2 + $0xf] sm:$0x1] %vm393, %v688
      %v690 = vld [vmem:[#allocation2] sm:$0xff]
      %v691 = vld [vmem:[#allocation2 + $0x8] sm:$0xff]
      %v692 = vld [vmem:[%s4] sm:$0xff]
      %v693 = vld [vmem:[%s4 + $0x8] sm:$0xff]
      %v694 = vld [vmem:[%s4 + $0x10] sm:$0xff]
      %v695 = vld [vmem:[%s4 + $0x18] sm:$0xff]
      %v696 = vld [vmem:[%s4 + $0x20] sm:$0xff]
      %v697 = vld [vmem:[%s4 + $0x28] sm:$0xff]
      %v698 = vld [vmem:[%s4 + $0x30] sm:$0xff]
      %v699 = vld [vmem:[%s4 + $0x38] sm:$0xff]
      %v701 = vsel %vm307, %v690, 0
      %v704 = vsel %vm307, %v691, 0
      %706 = vmatprep.subr.mxu0 0.0
      %707 = vmatpush1.msra.mxu0 %v692
      %708 = vmatprep.subr.mxu0 0.0
      %709 = vmatpush1.msra.mxu0 %v693
      %710 = vmatprep.subr.mxu0 0.0
      %711 = vmatpush1.msra.mxu0 %v694
      %712 = vmatprep.subr.mxu0 0.0
      %713 = vmatpush1.msra.mxu0 %v695
      %714 = vmatprep.subr.mxu0 0.0
      %715 = vmatpush1.msra.mxu0 %v696
      %716 = vmatprep.subr.mxu0 0.0
      %717 = vmatpush1.msra.mxu0 %v697
      %718 = vmatprep.subr.mxu0 0.0
      %719 = vmatpush1.msra.mxu0 %v698
      %720 = vmatprep.subr.mxu0 0.0
      %721 = vmatpush1.msra.mxu0 %v699
      %722 = vmatprep.subr.mxu0 0.0
      %723 = vmatpush1.msra.mxu0 0.0
      %724 = vmatprep.subr.mxu0 0.0
      %725 = vmatpush1.msra.mxu0 0.0
      %726 = vmatprep.subr.mxu0 0.0
      %727 = vmatpush1.msra.mxu0 0.0
      %728 = vmatprep.subr.mxu0 0.0
      %729 = vmatpush1.msra.mxu0 0.0
      %730 = vmatprep.subr.mxu0 0.0
      %731 = vmatpush1.msra.mxu0 0.0
      %732 = vmatprep.subr.mxu0 0.0
      %733 = vmatpush1.msra.mxu0 0.0
      %734 = vmatprep.subr.mxu0 0.0
      %735 = vmatpush1.msra.mxu0 0.0
      %736 = vmatprep.subr.mxu0 0.0
      %737 = vmatpush1.msra.mxu0 0.0
      %738 = vmatprep.subr.mxu0 0.0
      %739 = vmatpush1.msra.mxu0 0.0
      %740 = vmatprep.subr.mxu0 0.0
      %741 = vmatpush1.msra.mxu0 0.0
      %742 = vmatprep.subr.mxu0 0.0
      %743 = vmatpush1.msra.mxu0 0.0
      %744 = vmatprep.subr.mxu0 0.0
      %745 = vmatpush1.msra.mxu0 0.0
      %746 = vmatprep.subr.mxu0 0.0
      %747 = vmatpush1.msra.mxu0 0.0
      %748 = vmatprep.subr.mxu0 0.0
      %749 = vmatpush1.msra.mxu0 0.0
      %750 = vmatprep.subr.mxu0 0.0
      %751 = vmatpush1.msra.mxu0 0.0
      %752 = vmatprep.subr.mxu0 0.0
      %753 = vmatpush1.msra.mxu0 0.0
      %754 = vmatprep.subr.mxu0 0.0
      %755 = vmatpush1.msra.mxu0 0.0
      %756 = vmatprep.subr.mxu0 0.0
      %757 = vmatpush1.msra.mxu0 0.0
      %758 = vmatprep.subr.mxu0 0.0
      %759 = vmatpush1.msra.mxu0 0.0
      %760 = vmatprep.subr.mxu0 0.0
      %761 = vmatpush1.msra.mxu0 0.0
      %762 = vmatprep.subr.mxu0 0.0
      %763 = vmatpush1.msra.mxu0 0.0
      %764 = vmatprep.subr.mxu0 0.0
      %765 = vmatpush1.msra.mxu0 0.0
      %766 = vmatprep.subr.mxu0 0.0
      %767 = vmatpush1.msra.mxu0 0.0
      %768 = vmatprep.subr.mxu0 0.0
      %769 = vmatpush1.msra.mxu0 0.0
      %770 = vmatprep.mubr.f32.mxu0 0.0
      %771 = vmatmul.mubr.f32.gmra.mrb[0].mxu0 %v701
      %v772 = vpop.f32.mrb[0].mxu0
      %v773 = vadd.f32 0.0, %v772
      %v774 = vpop.f32.mrb[0].mxu0
      %775 = vmatprep.mubr.f32.mxu0 0.0
      %776 = vmatmul.mubr.f32.gmra.mrb[0].mxu0 %v704
      %v777 = vpop.f32.mrb[0].mxu0
      %v778 = vadd.f32 0.0, %v777
      %v779 = vpop.f32.mrb[0].mxu0
      %780 = vdwg.mxu0
      %v781 = vadd.f32 %v381, %v773
      %v782 = vadd.f32 %v386, %v778
      %vm783 = vcmp.gt.f32.partialorder %v781, 0.0
      %vm784 = vcmp.gt.f32.partialorder %v782, 0.0
      %v785 = vmin.f32 %v781, 0.0
      %v786 = vmin.f32 %v782, 0.0
      %v787 = vmul.f32 %v785, 1.442695
      %v788 = vpow.pop %v787
      %v789 = vmul.f32 %v786, 1.442695
      %v790 = vpow.pop %v789
      %v791 = vsub.f32 %v788, 1.0
      %v792 = vsub.f32 %v790, 1.0
      %v793 = vsel %vm783, %v781, %v791
      %v794 = vsel %vm784, %v782, %v792
      %v795 = vld [vmem:[%s6] sm:$0x1]
      %v797 = vlaneseq
      %v798 = vshrl.u32 %v797, 7
      %v799 = vsub.s32 0, %v798
      %v800 = vrot.slane %v795, %v799
      %v802 = vmul.f32 %v793, %v800
      %v803 = vmul.f32 %v794, %v800
      %v804 = vld [vmem:[%s7] sm:$0x1]
      %v806 = vlaneseq
      %v807 = vshrl.u32 %v806, 7
      %v808 = vsub.s32 0, %v807
      %v809 = vrot.slane %v804, %v808
      %v811 = vadd.f32 %v802, %v809
      %v812 = vadd.f32 %v803, %v809
      %v813 = vadd.f32 %v608, %v811
      %v814 = vadd.f32 %v609, %v812
      %s815 = sadd.s32 %s389, 2
      %s816 = sld [smem:[#allocation4 + %s815]]
      %s817 = scalar_lea.vmem %s1, %s816
      %v818 = vld [vmem:[%s817] sm:$0x1]
      %819 = vst.msk [vmem:[#allocation2] sm:$0x1] %vm393, %v818
      %s820 = sadd.s32 %s396, 2
      %s821 = sld [smem:[#allocation4 + %s820]]
      %s822 = scalar_lea.vmem %s1, %s821
      %v823 = vld [vmem:[%s822] sm:$0x1]
      %824 = vst.msk [vmem:[#allocation2 + $0x1] sm:$0x1] %vm393, %v823
      %s825 = sadd.s32 %s402, 2
      %s826 = sld [smem:[#allocation4 + %s825]]
      %s827 = scalar_lea.vmem %s1, %s826
      %v828 = vld [vmem:[%s827] sm:$0x1]
      %829 = vst.msk [vmem:[#allocation2 + $0x2] sm:$0x1] %vm393, %v828
      %s830 = sadd.s32 %s408, 2
      %s831 = sld [smem:[#allocation4 + %s830]]
      %s832 = scalar_lea.vmem %s1, %s831
      %v833 = vld [vmem:[%s832] sm:$0x1]
      %834 = vst.msk [vmem:[#allocation2 + $0x3] sm:$0x1] %vm393, %v833
      %s835 = sadd.s32 %s414, 2
      %s836 = sld [smem:[#allocation4 + %s835]]
      %s837 = scalar_lea.vmem %s1, %s836
      %v838 = vld [vmem:[%s837] sm:$0x1]
      %839 = vst.msk [vmem:[#allocation2 + $0x4] sm:$0x1] %vm393, %v838
      %s840 = sadd.s32 %s420, 2
      %s841 = sld [smem:[#allocation4 + %s840]]
      %s842 = scalar_lea.vmem %s1, %s841
      %v843 = vld [vmem:[%s842] sm:$0x1]
      %844 = vst.msk [vmem:[#allocation2 + $0x5] sm:$0x1] %vm393, %v843
      %s845 = sadd.s32 %s426, 2
      %s846 = sld [smem:[#allocation4 + %s845]]
      %s847 = scalar_lea.vmem %s1, %s846
      %v848 = vld [vmem:[%s847] sm:$0x1]
      %849 = vst.msk [vmem:[#allocation2 + $0x6] sm:$0x1] %vm393, %v848
      %s850 = sadd.s32 %s432, 2
      %s851 = sld [smem:[#allocation4 + %s850]]
      %s852 = scalar_lea.vmem %s1, %s851
      %v853 = vld [vmem:[%s852] sm:$0x1]
      %854 = vst.msk [vmem:[#allocation2 + $0x7] sm:$0x1] %vm393, %v853
      %s855 = sadd.s32 %s438, 2
      %s856 = sld [smem:[#allocation4 + %s855]]
      %s857 = scalar_lea.vmem %s1, %s856
      %v858 = vld [vmem:[%s857] sm:$0x1]
      %859 = vst.msk [vmem:[#allocation2 + $0x8] sm:$0x1] %vm393, %v858
      %s860 = sadd.s32 %s444, 2
      %s861 = sld [smem:[#allocation4 + %s860]]
      %s862 = scalar_lea.vmem %s1, %s861
      %v863 = vld [vmem:[%s862] sm:$0x1]
      %864 = vst.msk [vmem:[#allocation2 + $0x9] sm:$0x1] %vm393, %v863
      %s865 = sadd.s32 %s450, 2
      %s866 = sld [smem:[#allocation4 + %s865]]
      %s867 = scalar_lea.vmem %s1, %s866
      %v868 = vld [vmem:[%s867] sm:$0x1]
      %869 = vst.msk [vmem:[#allocation2 + $0xa] sm:$0x1] %vm393, %v868
      %s870 = sadd.s32 %s456, 2
      %s871 = sld [smem:[#allocation4 + %s870]]
      %s872 = scalar_lea.vmem %s1, %s871
      %v873 = vld [vmem:[%s872] sm:$0x1]
      %874 = vst.msk [vmem:[#allocation2 + $0xb] sm:$0x1] %vm393, %v873
      %s875 = sadd.s32 %s462, 2
      %s876 = sld [smem:[#allocation4 + %s875]]
      %s877 = scalar_lea.vmem %s1, %s876
      %v878 = vld [vmem:[%s877] sm:$0x1]
      %879 = vst.msk [vmem:[#allocation2 + $0xc] sm:$0x1] %vm393, %v878
      %s880 = sadd.s32 %s468, 2
      %s881 = sld [smem:[#allocation4 + %s880]]
      %s882 = scalar_lea.vmem %s1, %s881
      %v883 = vld [vmem:[%s882] sm:$0x1]
      %884 = vst.msk [vmem:[#allocation2 + $0xd] sm:$0x1] %vm393, %v883
      %s885 = sadd.s32 %s474, 2
      %s886 = sld [smem:[#allocation4 + %s885]]
      %s887 = scalar_lea.vmem %s1, %s886
      %v888 = vld [vmem:[%s887] sm:$0x1]
      %889 = vst.msk [vmem:[#allocation2 + $0xe] sm:$0x1] %vm393, %v888
      %s890 = sadd.s32 %s480, 2
      %s891 = sld [smem:[#allocation4 + %s890]]
      %s892 = scalar_lea.vmem %s1, %s891
      %v893 = vld [vmem:[%s892] sm:$0x1]
      %894 = vst.msk [vmem:[#allocation2 + $0xf] sm:$0x1] %vm393, %v893
      %v895 = vld [vmem:[#allocation2] sm:$0xff]
      %v896 = vld [vmem:[#allocation2 + $0x8] sm:$0xff]
      %v897 = vld [vmem:[%s4] sm:$0xff]
      %v898 = vld [vmem:[%s4 + $0x8] sm:$0xff]
      %v899 = vld [vmem:[%s4 + $0x10] sm:$0xff]
      %v900 = vld [vmem:[%s4 + $0x18] sm:$0xff]
      %v901 = vld [vmem:[%s4 + $0x20] sm:$0xff]
      %v902 = vld [vmem:[%s4 + $0x28] sm:$0xff]
      %v903 = vld [vmem:[%s4 + $0x30] sm:$0xff]
      %v904 = vld [vmem:[%s4 + $0x38] sm:$0xff]
      %v906 = vsel %vm307, %v895, 0
      %v909 = vsel %vm307, %v896, 0
      %911 = vmatprep.subr.mxu0 0.0
      %912 = vmatpush1.msra.mxu0 %v897
      %913 = vmatprep.subr.mxu0 0.0
      %914 = vmatpush1.msra.mxu0 %v898
      %915 = vmatprep.subr.mxu0 0.0
      %916 = vmatpush1.msra.mxu0 %v899
      %917 = vmatprep.subr.mxu0 0.0
      %918 = vmatpush1.msra.mxu0 %v900
      %919 = vmatprep.subr.mxu0 0.0
      %920 = vmatpush1.msra.mxu0 %v901
      %921 = vmatprep.subr.mxu0 0.0
      %922 = vmatpush1.msra.mxu0 %v902
      %923 = vmatprep.subr.mxu0 0.0
      %924 = vmatpush1.msra.mxu0 %v903
      %925 = vmatprep.subr.mxu0 0.0
      %926 = vmatpush1.msra.mxu0 %v904
      %927 = vmatprep.subr.mxu0 0.0
      %928 = vmatpush1.msra.mxu0 0.0
      %929 = vmatprep.subr.mxu0 0.0
      %930 = vmatpush1.msra.mxu0 0.0
      %931 = vmatprep.subr.mxu0 0.0
      %932 = vmatpush1.msra.mxu0 0.0
      %933 = vmatprep.subr.mxu0 0.0
      %934 = vmatpush1.msra.mxu0 0.0
      %935 = vmatprep.subr.mxu0 0.0
      %936 = vmatpush1.msra.mxu0 0.0
      %937 = vmatprep.subr.mxu0 0.0
      %938 = vmatpush1.msra.mxu0 0.0
      %939 = vmatprep.subr.mxu0 0.0
      %940 = vmatpush1.msra.mxu0 0.0
      %941 = vmatprep.subr.mxu0 0.0
      %942 = vmatpush1.msra.mxu0 0.0
      %943 = vmatprep.subr.mxu0 0.0
      %944 = vmatpush1.msra.mxu0 0.0
      %945 = vmatprep.subr.mxu0 0.0
      %946 = vmatpush1.msra.mxu0 0.0
      %947 = vmatprep.subr.mxu0 0.0
      %948 = vmatpush1.msra.mxu0 0.0
      %949 = vmatprep.subr.mxu0 0.0
      %950 = vmatpush1.msra.mxu0 0.0
      %951 = vmatprep.subr.mxu0 0.0
      %952 = vmatpush1.msra.mxu0 0.0
      %953 = vmatprep.subr.mxu0 0.0
      %954 = vmatpush1.msra.mxu0 0.0
      %955 = vmatprep.subr.mxu0 0.0
      %956 = vmatpush1.msra.mxu0 0.0
      %957 = vmatprep.subr.mxu0 0.0
      %958 = vmatpush1.msra.mxu0 0.0
      %959 = vmatprep.subr.mxu0 0.0
      %960 = vmatpush1.msra.mxu0 0.0
      %961 = vmatprep.subr.mxu0 0.0
      %962 = vmatpush1.msra.mxu0 0.0
      %963 = vmatprep.subr.mxu0 0.0
      %964 = vmatpush1.msra.mxu0 0.0
      %965 = vmatprep.subr.mxu0 0.0
      %966 = vmatpush1.msra.mxu0 0.0
      %967 = vmatprep.subr.mxu0 0.0
      %968 = vmatpush1.msra.mxu0 0.0
      %969 = vmatprep.subr.mxu0 0.0
      %970 = vmatpush1.msra.mxu0 0.0
      %971 = vmatprep.subr.mxu0 0.0
      %972 = vmatpush1.msra.mxu0 0.0
      %973 = vmatprep.subr.mxu0 0.0
      %974 = vmatpush1.msra.mxu0 0.0
      %975 = vmatprep.mubr.f32.mxu0 0.0
      %976 = vmatmul.mubr.f32.gmra.mrb[0].mxu0 %v906
      %v977 = vpop.f32.mrb[0].mxu0
      %v978 = vadd.f32 0.0, %v977
      %v979 = vpop.f32.mrb[0].mxu0
      %980 = vmatprep.mubr.f32.mxu0 0.0
      %981 = vmatmul.mubr.f32.gmra.mrb[0].mxu0 %v909
      %v982 = vpop.f32.mrb[0].mxu0
      %v983 = vadd.f32 0.0, %v982
      %v984 = vpop.f32.mrb[0].mxu0
      %985 = vdwg.mxu0
      %v986 = vadd.f32 %v381, %v978
      %v987 = vadd.f32 %v386, %v983
      %vm988 = vcmp.gt.f32.partialorder %v986, 0.0
      %vm989 = vcmp.gt.f32.partialorder %v987, 0.0
      %v990 = vmin.f32 %v986, 0.0
      %v991 = vmin.f32 %v987, 0.0
      %v992 = vmul.f32 %v990, 1.442695
      %v993 = vpow.pop %v992
      %v994 = vmul.f32 %v991, 1.442695
      %v995 = vpow.pop %v994
      %v996 = vsub.f32 %v993, 1.0
      %v997 = vsub.f32 %v995, 1.0
      %v998 = vsel %vm988, %v986, %v996
      %v999 = vsel %vm989, %v987, %v997
      %v1000 = vld [vmem:[%s6] sm:$0x1]
      %v1002 = vlaneseq
      %v1003 = vshrl.u32 %v1002, 7
      %v1004 = vsub.s32 0, %v1003
      %v1005 = vrot.slane %v1000, %v1004
      %v1007 = vmul.f32 %v998, %v1005
      %v1008 = vmul.f32 %v999, %v1005
      %v1009 = vld [vmem:[%s7] sm:$0x1]
      %v1011 = vlaneseq
      %v1012 = vshrl.u32 %v1011, 7
      %v1013 = vsub.s32 0, %v1012
      %v1014 = vrot.slane %v1009, %v1013
      %v1016 = vadd.f32 %v1007, %v1014
      %v1017 = vadd.f32 %v1008, %v1014
      %v1018 = vadd.f32 %v813, %v1016
      %v1019 = vadd.f32 %v814, %v1017
      %s1020 = sadd.s32 %s389, 3
      %s1021 = sld [smem:[#allocation4 + %s1020]]
      %s1022 = scalar_lea.vmem %s1, %s1021
      %v1023 = vld [vmem:[%s1022] sm:$0x1]
      %1024 = vst.msk [vmem:[#allocation2] sm:$0x1] %vm393, %v1023
      %s1025 = sadd.s32 %s396, 3
      %s1026 = sld [smem:[#allocation4 + %s1025]]
      %s1027 = scalar_lea.vmem %s1, %s1026
      %v1028 = vld [vmem:[%s1027] sm:$0x1]
      %1029 = vst.msk [vmem:[#allocation2 + $0x1] sm:$0x1] %vm393, %v1028
      %s1030 = sadd.s32 %s402, 3
      %s1031 = sld [smem:[#allocation4 + %s1030]]
      %s1032 = scalar_lea.vmem %s1, %s1031
      %v1033 = vld [vmem:[%s1032] sm:$0x1]
      %1034 = vst.msk [vmem:[#allocation2 + $0x2] sm:$0x1] %vm393, %v1033
      %s1035 = sadd.s32 %s408, 3
      %s1036 = sld [smem:[#allocation4 + %s1035]]
      %s1037 = scalar_lea.vmem %s1, %s1036
      %v1038 = vld [vmem:[%s1037] sm:$0x1]
      %1039 = vst.msk [vmem:[#allocation2 + $0x3] sm:$0x1] %vm393, %v1038
      %s1040 = sadd.s32 %s414, 3
      %s1041 = sld [smem:[#allocation4 + %s1040]]
      %s1042 = scalar_lea.vmem %s1, %s1041
      %v1043 = vld [vmem:[%s1042] sm:$0x1]
      %1044 = vst.msk [vmem:[#allocation2 + $0x4] sm:$0x1] %vm393, %v1043
      %s1045 = sadd.s32 %s420, 3
      %s1046 = sld [smem:[#allocation4 + %s1045]]
      %s1047 = scalar_lea.vmem %s1, %s1046
      %v1048 = vld [vmem:[%s1047] sm:$0x1]
      %1049 = vst.msk [vmem:[#allocation2 + $0x5] sm:$0x1] %vm393, %v1048
      %s1050 = sadd.s32 %s426, 3
      %s1051 = sld [smem:[#allocation4 + %s1050]]
      %s1052 = scalar_lea.vmem %s1, %s1051
      %v1053 = vld [vmem:[%s1052] sm:$0x1]
      %1054 = vst.msk [vmem:[#allocation2 + $0x6] sm:$0x1] %vm393, %v1053
      %s1055 = sadd.s32 %s432, 3
      %s1056 = sld [smem:[#allocation4 + %s1055]]
      %s1057 = scalar_lea.vmem %s1, %s1056
      %v1058 = vld [vmem:[%s1057] sm:$0x1]
      %1059 = vst.msk [vmem:[#allocation2 + $0x7] sm:$0x1] %vm393, %v1058
      %s1060 = sadd.s32 %s438, 3
      %s1061 = sld [smem:[#allocation4 + %s1060]]
      %s1062 = scalar_lea.vmem %s1, %s1061
      %v1063 = vld [vmem:[%s1062] sm:$0x1]
      %1064 = vst.msk [vmem:[#allocation2 + $0x8] sm:$0x1] %vm393, %v1063
      %s1065 = sadd.s32 %s444, 3
      %s1066 = sld [smem:[#allocation4 + %s1065]]
      %s1067 = scalar_lea.vmem %s1, %s1066
      %v1068 = vld [vmem:[%s1067] sm:$0x1]
      %1069 = vst.msk [vmem:[#allocation2 + $0x9] sm:$0x1] %vm393, %v1068
      %s1070 = sadd.s32 %s450, 3
      %s1071 = sld [smem:[#allocation4 + %s1070]]
      %s1072 = scalar_lea.vmem %s1, %s1071
      %v1073 = vld [vmem:[%s1072] sm:$0x1]
      %1074 = vst.msk [vmem:[#allocation2 + $0xa] sm:$0x1] %vm393, %v1073
      %s1075 = sadd.s32 %s456, 3
      %s1076 = sld [smem:[#allocation4 + %s1075]]
      %s1077 = scalar_lea.vmem %s1, %s1076
      %v1078 = vld [vmem:[%s1077] sm:$0x1]
      %1079 = vst.msk [vmem:[#allocation2 + $0xb] sm:$0x1] %vm393, %v1078
      %s1080 = sadd.s32 %s462, 3
      %s1081 = sld [smem:[#allocation4 + %s1080]]
      %s1082 = scalar_lea.vmem %s1, %s1081
      %v1083 = vld [vmem:[%s1082] sm:$0x1]
      %1084 = vst.msk [vmem:[#allocation2 + $0xc] sm:$0x1] %vm393, %v1083
      %s1085 = sadd.s32 %s468, 3
      %s1086 = sld [smem:[#allocation4 + %s1085]]
      %s1087 = scalar_lea.vmem %s1, %s1086
      %v1088 = vld [vmem:[%s1087] sm:$0x1]
      %1089 = vst.msk [vmem:[#allocation2 + $0xd] sm:$0x1] %vm393, %v1088
      %s1090 = sadd.s32 %s474, 3
      %s1091 = sld [smem:[#allocation4 + %s1090]]
      %s1092 = scalar_lea.vmem %s1, %s1091
      %v1093 = vld [vmem:[%s1092] sm:$0x1]
      %1094 = vst.msk [vmem:[#allocation2 + $0xe] sm:$0x1] %vm393, %v1093
      %s1095 = sadd.s32 %s480, 3
      %s1096 = sld [smem:[#allocation4 + %s1095]]
      %s1097 = scalar_lea.vmem %s1, %s1096
      %v1098 = vld [vmem:[%s1097] sm:$0x1]
      %1099 = vst.msk [vmem:[#allocation2 + $0xf] sm:$0x1] %vm393, %v1098
      %v1100 = vld [vmem:[#allocation2] sm:$0xff]
      %v1101 = vld [vmem:[#allocation2 + $0x8] sm:$0xff]
      %v1102 = vld [vmem:[%s4] sm:$0xff]
      %v1103 = vld [vmem:[%s4 + $0x8] sm:$0xff]
      %v1104 = vld [vmem:[%s4 + $0x10] sm:$0xff]
      %v1105 = vld [vmem:[%s4 + $0x18] sm:$0xff]
      %v1106 = vld [vmem:[%s4 + $0x20] sm:$0xff]
      %v1107 = vld [vmem:[%s4 + $0x28] sm:$0xff]
      %v1108 = vld [vmem:[%s4 + $0x30] sm:$0xff]
      %v1109 = vld [vmem:[%s4 + $0x38] sm:$0xff]
      %v1111 = vsel %vm307, %v1100, 0
      %v1114 = vsel %vm307, %v1101, 0
      %1116 = vmatprep.subr.mxu0 0.0
      %1117 = vmatpush1.msra.mxu0 %v1102
      %1118 = vmatprep.subr.mxu0 0.0
      %1119 = vmatpush1.msra.mxu0 %v1103
      %1120 = vmatprep.subr.mxu0 0.0
      %1121 = vmatpush1.msra.mxu0 %v1104
      %1122 = vmatprep.subr.mxu0 0.0
      %1123 = vmatpush1.msra.mxu0 %v1105
      %1124 = vmatprep.subr.mxu0 0.0
      %1125 = vmatpush1.msra.mxu0 %v1106
      %1126 = vmatprep.subr.mxu0 0.0
      %1127 = vmatpush1.msra.mxu0 %v1107
      %1128 = vmatprep.subr.mxu0 0.0
      %1129 = vmatpush1.msra.mxu0 %v1108
      %1130 = vmatprep.subr.mxu0 0.0
      %1131 = vmatpush1.msra.mxu0 %v1109
      %1132 = vmatprep.subr.mxu0 0.0
      %1133 = vmatpush1.msra.mxu0 0.0
      %1134 = vmatprep.subr.mxu0 0.0
      %1135 = vmatpush1.msra.mxu0 0.0
      %1136 = vmatprep.subr.mxu0 0.0
      %1137 = vmatpush1.msra.mxu0 0.0
      %1138 = vmatprep.subr.mxu0 0.0
      %1139 = vmatpush1.msra.mxu0 0.0
      %1140 = vmatprep.subr.mxu0 0.0
      %1141 = vmatpush1.msra.mxu0 0.0
      %1142 = vmatprep.subr.mxu0 0.0
      %1143 = vmatpush1.msra.mxu0 0.0
      %1144 = vmatprep.subr.mxu0 0.0
      %1145 = vmatpush1.msra.mxu0 0.0
      %1146 = vmatprep.subr.mxu0 0.0
      %1147 = vmatpush1.msra.mxu0 0.0
      %1148 = vmatprep.subr.mxu0 0.0
      %1149 = vmatpush1.msra.mxu0 0.0
      %1150 = vmatprep.subr.mxu0 0.0
      %1151 = vmatpush1.msra.mxu0 0.0
      %1152 = vmatprep.subr.mxu0 0.0
      %1153 = vmatpush1.msra.mxu0 0.0
      %1154 = vmatprep.subr.mxu0 0.0
      %1155 = vmatpush1.msra.mxu0 0.0
      %1156 = vmatprep.subr.mxu0 0.0
      %1157 = vmatpush1.msra.mxu0 0.0
      %1158 = vmatprep.subr.mxu0 0.0
      %1159 = vmatpush1.msra.mxu0 0.0
      %1160 = vmatprep.subr.mxu0 0.0
      %1161 = vmatpush1.msra.mxu0 0.0
      %1162 = vmatprep.subr.mxu0 0.0
      %1163 = vmatpush1.msra.mxu0 0.0
      %1164 = vmatprep.subr.mxu0 0.0
      %1165 = vmatpush1.msra.mxu0 0.0
      %1166 = vmatprep.subr.mxu0 0.0
      %1167 = vmatpush1.msra.mxu0 0.0
      %1168 = vmatprep.subr.mxu0 0.0
      %1169 = vmatpush1.msra.mxu0 0.0
      %1170 = vmatprep.subr.mxu0 0.0
      %1171 = vmatpush1.msra.mxu0 0.0
      %1172 = vmatprep.subr.mxu0 0.0
      %1173 = vmatpush1.msra.mxu0 0.0
      %1174 = vmatprep.subr.mxu0 0.0
      %1175 = vmatpush1.msra.mxu0 0.0
      %1176 = vmatprep.subr.mxu0 0.0
      %1177 = vmatpush1.msra.mxu0 0.0
      %1178 = vmatprep.subr.mxu0 0.0
      %1179 = vmatpush1.msra.mxu0 0.0
      %1180 = vmatprep.mubr.f32.mxu0 0.0
      %1181 = vmatmul.mubr.f32.gmra.mrb[0].mxu0 %v1111
      %v1182 = vpop.f32.mrb[0].mxu0
      %v1183 = vadd.f32 0.0, %v1182
      %v1184 = vpop.f32.mrb[0].mxu0
      %1185 = vmatprep.mubr.f32.mxu0 0.0
      %1186 = vmatmul.mubr.f32.gmra.mrb[0].mxu0 %v1114
      %v1187 = vpop.f32.mrb[0].mxu0
      %v1188 = vadd.f32 0.0, %v1187
      %v1189 = vpop.f32.mrb[0].mxu0
      %1190 = vdwg.mxu0
      %v1191 = vadd.f32 %v381, %v1183
      %v1192 = vadd.f32 %v386, %v1188
      %vm1193 = vcmp.gt.f32.partialorder %v1191, 0.0
      %vm1194 = vcmp.gt.f32.partialorder %v1192, 0.0
      %v1195 = vmin.f32 %v1191, 0.0
      %v1196 = vmin.f32 %v1192, 0.0
      %v1197 = vmul.f32 %v1195, 1.442695
      %v1198 = vpow.pop %v1197
      %v1199 = vmul.f32 %v1196, 1.442695
      %v1200 = vpow.pop %v1199
      %v1201 = vsub.f32 %v1198, 1.0
      %v1202 = vsub.f32 %v1200, 1.0
      %v1203 = vsel %vm1193, %v1191, %v1201
      %v1204 = vsel %vm1194, %v1192, %v1202
      %v1205 = vld [vmem:[%s6] sm:$0x1]
      %v1207 = vlaneseq
      %v1208 = vshrl.u32 %v1207, 7
      %v1209 = vsub.s32 0, %v1208
      %v1210 = vrot.slane %v1205, %v1209
      %v1212 = vmul.f32 %v1203, %v1210
      %v1213 = vmul.f32 %v1204, %v1210
      %v1214 = vld [vmem:[%s7] sm:$0x1]
      %v1216 = vlaneseq
      %v1217 = vshrl.u32 %v1216, 7
      %v1218 = vsub.s32 0, %v1217
      %v1219 = vrot.slane %v1214, %v1218
      %v1221 = vadd.f32 %v1212, %v1219
      %v1222 = vadd.f32 %v1213, %v1219
      %v1223 = vadd.f32 %v1018, %v1221
      %v1224 = vadd.f32 %v1019, %v1222
      %v1225 = vmul.f32 %v1223, 0.25
      %v1226 = vmul.f32 %v1224, 0.25
      %v1227 = vadd.f32 %v1225, %v290
      %v1228 = vadd.f32 %v1226, %v291
      %1229 = vst.msk [vmem:[%s287] sm:$0xff] %vm307, %v1227
      %1230 = vst.msk [vmem:[%s287 + $0x8] sm:$0xff] %vm307, %v1228
      %s1231 = smul.u32 2, %s25
      %p1232 = scmp.lt.s32.totalorder %s1231, 3
      %s1233 = scalar_select %p1232, %s1231, 3
      %s1234 = smul.addr %s1233, 8
      %s1235 = scalar_lea.vmem %s8, %s1234
      // Predicated region
      $region49: #{net_forward.5} parent=47 // pred_check
        %p1236 = pneg %p195
      $region50: #{net_forward.5} parent=47 // pred_check_branch
        %1238 = sbr.rel (%p1236) target = $region52
      $region51: #{net_forward.5} parent=47 // pred_region
        %s1239 = smul.u32 2, %s25
      $region52: #{net_forward.5} parent=47 // pred_fallthru
        _
    $region48: #{net_forward.5} parent=5 // pred_fallthru
      _
    %p1240 = scmp.le.s32.totalorder 2, %s20
    // Predicated region
    $region53: #{net_forward.5} parent=5 // pred_check
      %p1241 = pneg %p1240
    $region54: #{net_forward.5} parent=5 // pred_check_branch
      %1243 = sbr.rel (%p1241) target = $region56
    $region55: #{net_forward.5} parent=5 // pred_region
      %s1244 = ssub.s32 %s20, 2
      // Predicated region
      $region57: #{net_forward.5} parent=55 // pred_check
        %p1245 = pneg %p201
      $region58: #{net_forward.5} parent=55 // pred_check_branch
        %1247 = sbr.rel (%p1245) target = $region60
      $region59: #{net_forward.5} parent=55 // pred_region
        %s1248 = smul.u32 2, %s26
        %p1249 = scmp.lt.s32.totalorder %s1248, 3
        %s1250 = scalar_select %p1249, %s1248, 3
        %s1251 = smul.addr %s1250, 8
        %s1252 = scalar_lea.vmem %s8, %s1251
      $region60: #{net_forward.5} parent=55 // pred_fallthru
        _
    $region56: #{net_forward.5} parent=5 // pred_fallthru
      _
  $region6: #{net_forward.5} parent=0 // loop_footer
    %s24 = sadd.s32 1, %s20
  $region7: #{net_forward.5} parent=0 // loop_footer_branch
    %19 = sbr.rel target = $region3
  $region8: #{net_forward.5} parent=0 // loop_exit
    _

// kernel: net_forward.7
$region0: #{net_forward.7}
  #allocation0 [shape = 'u32[]', space=smem, size = 0x4, offset = 0x4, fixed_abs, tag = 'smem constant byte address 0x4 - core index']
  #allocation1 [shape = 'u32[144,128]{1,0:T(1,128)}', space=vmem, size = 0x12000, scoped, tag = 'internal scratch']
  #allocation2 [shape = 'f32[16,64]{1,0:T(8,128)}', space=vmem, size = 0x2000, scoped, tag = 'scratch operand']
  #allocation3 [shape = 's32[1]{0}', space=sflag, size = 0x4, scoped, tag = 'scoped memory for net_forward.7']
  #allocation4 [shape = 'u8[512]{0}', space=smem, size = 0x200, scoped, tag = 'prefetched SMEM operand 0']
  %s0 = inlined_call_operand.vmem [shape: s32[128], index: 0, kind: input, shape index: {}]
  %s1 = inlined_call_operand.vmem [shape: f32[32,64], index: 1, kind: input, shape index: {}, may-alias: {1,2}]
  %s2 = inlined_call_operand.vmem [shape: f32[32,64], index: 2, kind: input, shape index: {}, may-alias: {1,2}]
  %s3 = inlined_call_operand.vmem [shape: f32[64,64], index: 3, kind: input, shape index: {}]
  %s4 = inlined_call_operand.vmem [shape: f32[64,64], index: 4, kind: input, shape index: {}]
  %s5 = inlined_call_operand.vmem [shape: f32[1,64], index: 5, kind: input, shape index: {}]
  %s6 = inlined_call_operand.vmem [shape: f32[1,64], index: 6, kind: input, shape index: {}]
  %s7 = inlined_call_operand.vmem [shape: f32[1,64], index: 7, kind: input, shape index: {}]
  %s8 = inlined_call_operand.vmem [shape: f32[64,32], index: 8, kind: input, shape index: {}]
  %s9 = inlined_call_operand.vmem [shape: f32[1,32], index: 9, kind: input, shape index: {}]
  %s10 = inlined_call_operand.vmem [shape: f32[32,16], index: 10, kind: input, shape index: {}]
  %s11 = inlined_call_operand.vmem [shape: f32[1,16], index: 11, kind: input, shape index: {}]
  %s12 = inlined_call_operand.vmem [shape: f32[16,8], index: 12, kind: input, shape index: {}]
  %s13 = inlined_call_operand.vmem [shape: f32[1,8], index: 13, kind: input, shape index: {}]
  %s14 = inlined_call_operand.vmem [shape: f32[32,8], index: 14, kind: output, shape index: {}]
  %s15 = sld [smem:[#allocation0]]
  $region85: #{net_forward.7} parent=0
    _
  %s17 = ssub.s32 1, %s15
  %s18 = scalar_select 0, %s17, %s15
  %s19 = sshll.u32 %s0, 4
  %s20 = int_to_ptr.vmem [resolvable:$true] %s19
  %22 = dma.vmem_to_smem %s20, 16, [#allocation4], [#allocation3]
  %23 = dma.done [#allocation3], 16
  %24 = sfence
  loop: start=0, step=1, limit=4
  $region2: #{net_forward.7} parent=0 // loop_pre_header
    _
  $region3: #{net_forward.7} parent=0 // loop_header
    %s26 = sphi 0, %s30
    %p27 = scmp.ge.s32.totalorder %s26, 4
    %s34 = sphi 0, %s34
    %s36 = sphi 0, %s34
    %s37 = sphi 0, %s36
    %s51 = sphi 0, %s37
    %s57 = sphi 0, %s59
    %s60 = sphi 0, %s57
    %s61 = sphi 0, %s60
    %s77 = sphi 0, %s61
    %s81 = sphi 0, %s81
    %s83 = sphi 0, %s81
    %s84 = sphi 0, %s83
    %s98 = sphi 0, %s84
    %s102 = sphi 0, %s102
    %s104 = sphi 0, %s102
    %s105 = sphi 0, %s104
    %s119 = sphi 0, %s105
    %s123 = sphi 0, %s123
    %s125 = sphi 0, %s123
    %s126 = sphi 0, %s125
    %s140 = sphi 0, %s126
    %s144 = sphi 0, %s144
    %s146 = sphi 0, %s144
    %s147 = sphi 0, %s146
    %s161 = sphi 0, %s147
    %s165 = sphi 0, %s165
    %s167 = sphi 0, %s165
    %s168 = sphi 0, %s167
    %s182 = sphi 0, %s168
    %s186 = sphi 0, %s186
    %s188 = sphi 0, %s186
    %s189 = sphi 0, %s188
    %s203 = sphi 0, %s189
    %s207 = sphi 0, %s207
    %s209 = sphi 0, %s207
    %s210 = sphi 0, %s209
    %s224 = sphi 0, %s210
    %s228 = sphi 0, %s228
    %s230 = sphi 0, %s228
    %s231 = sphi 0, %s230
    %s245 = sphi 0, %s231
    %s249 = sphi 0, %s249
    %s251 = sphi 0, %s249
    %s252 = sphi 0, %s251
    %s266 = sphi 0, %s252
    %s270 = sphi 0, %s270
    %s272 = sphi 0, %s270
    %s273 = sphi 0, %s272
    %s287 = sphi 0, %s273
    %s291 = sphi 0, %s291
    %s293 = sphi 0, %s291
    %s294 = sphi 0, %s293
    %s308 = sphi 0, %s294
    %s314 = sphi 0, %s316
    %s317 = sphi 0, %s314
    %s318 = sphi 0, %s317
    %s334 = sphi 0, %s318
  $region4: #{net_forward.7} parent=0 // loop_header_branch
    %29 = sbr.rel (%p27) target = $region8
  $region5: #{net_forward.7} parent=0 // loop_body
    %s31 = ssub.s32 %s26, 1
    %s32 = ssub.s32 %s26, 2
    %s33 = sadd.s32 %s26, 1
    %s35 = sadd.s32 %s34, 1
    %p38 = scmp.eq.s32.totalorder %s26, 1
    %p39 = scmp.ne.s32.totalorder %s34, %s36
    %p40 = scmp.eq.s32.totalorder %s26, 0
    %p41 = por %p39, %p40
    %p42 = scmp.ne.s32.totalorder %s34, %s36
    %p43 = scmp.eq.s32.totalorder %s31, 1
    %p44 = por %p42, %p43
    %p45 = scmp.ne.s32.totalorder %s36, %s37
    %p46 = scmp.eq.s32.totalorder %s31, 0
    %p47 = por %p45, %p46
    %p48 = scmp.ne.s32.totalorder %s36, %s37
    %p49 = scmp.eq.s32.totalorder %s32, 1
    %p50 = por %p48, %p49
    %p52 = scmp.ne.s32.totalorder %s37, %s51
    %p53 = scmp.eq.s32.totalorder %s32, 0
    %p54 = por %p52, %p53
    %s55 = ssub.s32 %s26, %s33
    %p56 = scmp.eq.s32.totalorder %s55, 0
    %s58 = sadd.s32 %s57, 1
    %s59 = scalar_select %p56, %s57, %s58
    %p62 = pneg %p56
    %p63 = scmp.eq.s32.totalorder %s26, 1
    %p64 = por %p62, %p63
    %p65 = scmp.ne.s32.totalorder %s57, %s60
    %p66 = scmp.eq.s32.totalorder %s26, 0
    %p67 = por %p65, %p66
    %p68 = scmp.ne.s32.totalorder %s57, %s60
    %p69 = scmp.eq.s32.totalorder %s31, 1
    %p70 = por %p68, %p69
    %p71 = scmp.ne.s32.totalorder %s60, %s61
    %p72 = scmp.eq.s32.totalorder %s31, 0
    %p73 = por %p71, %p72
    %p74 = scmp.ne.s32.totalorder %s60, %s61
    %p75 = scmp.eq.s32.totalorder %s32, 1
    %p76 = por %p74, %p75
    %p78 = scmp.ne.s32.totalorder %s61, %s77
    %p79 = scmp.eq.s32.totalorder %s32, 0
    %p80 = por %p78, %p79
    %s82 = sadd.s32 %s81, 1
    %p85 = scmp.eq.s32.totalorder %s26, 1
    %p86 = scmp.ne.s32.totalorder %s81, %s83
    %p87 = scmp.eq.s32.totalorder %s26, 0
    %p88 = por %p86, %p87
    %p89 = scmp.ne.s32.totalorder %s81, %s83
    %p90 = scmp.eq.s32.totalorder %s31, 1
    %p91 = por %p89, %p90
    %p92 = scmp.ne.s32.totalorder %s83, %s84
    %p93 = scmp.eq.s32.totalorder %s31, 0
    %p94 = por %p92, %p93
    %p95 = scmp.ne.s32.totalorder %s83, %s84
    %p96 = scmp.eq.s32.totalorder %s32, 1
    %p97 = por %p95, %p96
    %p99 = scmp.ne.s32.totalorder %s84, %s98
    %p100 = scmp.eq.s32.totalorder %s32, 0
    %p101 = por %p99, %p100
    %s103 = sadd.s32 %s102, 1
    %p106 = scmp.eq.s32.totalorder %s26, 1
    %p107 = scmp.ne.s32.totalorder %s102, %s104
    %p108 = scmp.eq.s32.totalorder %s26, 0
    %p109 = por %p107, %p108
    %p110 = scmp.ne.s32.totalorder %s102, %s104
    %p111 = scmp.eq.s32.totalorder %s31, 1
    %p112 = por %p110, %p111
    %p113 = scmp.ne.s32.totalorder %s104, %s105
    %p114 = scmp.eq.s32.totalorder %s31, 0
    %p115 = por %p113, %p114
    %p116 = scmp.ne.s32.totalorder %s104, %s105
    %p117 = scmp.eq.s32.totalorder %s32, 1
    %p118 = por %p116, %p117
    %p120 = scmp.ne.s32.totalorder %s105, %s119
    %p121 = scmp.eq.s32.totalorder %s32, 0
    %p122 = por %p120, %p121
    %s124 = sadd.s32 %s123, 1
    %p127 = scmp.eq.s32.totalorder %s26, 1
    %p128 = scmp.ne.s32.totalorder %s123, %s125
    %p129 = scmp.eq.s32.totalorder %s26, 0
    %p130 = por %p128, %p129
    %p131 = scmp.ne.s32.totalorder %s123, %s125
    %p132 = scmp.eq.s32.totalorder %s31, 1
    %p133 = por %p131, %p132
    %p134 = scmp.ne.s32.totalorder %s125, %s126
    %p135 = scmp.eq.s32.totalorder %s31, 0
    %p136 = por %p134, %p135
    %p137 = scmp.ne.s32.totalorder %s125, %s126
    %p138 = scmp.eq.s32.totalorder %s32, 1
    %p139 = por %p137, %p138
    %p141 = scmp.ne.s32.totalorder %s126, %s140
    %p142 = scmp.eq.s32.totalorder %s32, 0
    %p143 = por %p141, %p142
    %s145 = sadd.s32 %s144, 1
    %p148 = scmp.eq.s32.totalorder %s26, 1
    %p149 = scmp.ne.s32.totalorder %s144, %s146
    %p150 = scmp.eq.s32.totalorder %s26, 0
    %p151 = por %p149, %p150
    %p152 = scmp.ne.s32.totalorder %s144, %s146
    %p153 = scmp.eq.s32.totalorder %s31, 1
    %p154 = por %p152, %p153
    %p155 = scmp.ne.s32.totalorder %s146, %s147
    %p156 = scmp.eq.s32.totalorder %s31, 0
    %p157 = por %p155, %p156
    %p158 = scmp.ne.s32.totalorder %s146, %s147
    %p159 = scmp.eq.s32.totalorder %s32, 1
    %p160 = por %p158, %p159
    %p162 = scmp.ne.s32.totalorder %s147, %s161
    %p163 = scmp.eq.s32.totalorder %s32, 0
    %p164 = por %p162, %p163
    %s166 = sadd.s32 %s165, 1
    %p169 = scmp.eq.s32.totalorder %s26, 1
    %p170 = scmp.ne.s32.totalorder %s165, %s167
    %p171 = scmp.eq.s32.totalorder %s26, 0
    %p172 = por %p170, %p171
    %p173 = scmp.ne.s32.totalorder %s165, %s167
    %p174 = scmp.eq.s32.totalorder %s31, 1
    %p175 = por %p173, %p174
    %p176 = scmp.ne.s32.totalorder %s167, %s168
    %p177 = scmp.eq.s32.totalorder %s31, 0
    %p178 = por %p176, %p177
    %p179 = scmp.ne.s32.totalorder %s167, %s168
    %p180 = scmp.eq.s32.totalorder %s32, 1
    %p181 = por %p179, %p180
    %p183 = scmp.ne.s32.totalorder %s168, %s182
    %p184 = scmp.eq.s32.totalorder %s32, 0
    %p185 = por %p183, %p184
    %s187 = sadd.s32 %s186, 1
    %p190 = scmp.eq.s32.totalorder %s26, 1
    %p191 = scmp.ne.s32.totalorder %s186, %s188
    %p192 = scmp.eq.s32.totalorder %s26, 0
    %p193 = por %p191, %p192
    %p194 = scmp.ne.s32.totalorder %s186, %s188
    %p195 = scmp.eq.s32.totalorder %s31, 1
    %p196 = por %p194, %p195
    %p197 = scmp.ne.s32.totalorder %s188, %s189
    %p198 = scmp.eq.s32.totalorder %s31, 0
    %p199 = por %p197, %p198
    %p200 = scmp.ne.s32.totalorder %s188, %s189
    %p201 = scmp.eq.s32.totalorder %s32, 1
    %p202 = por %p200, %p201
    %p204 = scmp.ne.s32.totalorder %s189, %s203
    %p205 = scmp.eq.s32.totalorder %s32, 0
    %p206 = por %p204, %p205
    %s208 = sadd.s32 %s207, 1
    %p211 = scmp.eq.s32.totalorder %s26, 1
    %p212 = scmp.ne.s32.totalorder %s207, %s209
    %p213 = scmp.eq.s32.totalorder %s26, 0
    %p214 = por %p212, %p213
    %p215 = scmp.ne.s32.totalorder %s207, %s209
    %p216 = scmp.eq.s32.totalorder %s31, 1
    %p217 = por %p215, %p216
    %p218 = scmp.ne.s32.totalorder %s209, %s210
    %p219 = scmp.eq.s32.totalorder %s31, 0
    %p220 = por %p218, %p219
    %p221 = scmp.ne.s32.totalorder %s209, %s210
    %p222 = scmp.eq.s32.totalorder %s32, 1
    %p223 = por %p221, %p222
    %p225 = scmp.ne.s32.totalorder %s210, %s224
    %p226 = scmp.eq.s32.totalorder %s32, 0
    %p227 = por %p225, %p226
    %s229 = sadd.s32 %s228, 1
    %p232 = scmp.eq.s32.totalorder %s26, 1
    %p233 = scmp.ne.s32.totalorder %s228, %s230
    %p234 = scmp.eq.s32.totalorder %s26, 0
    %p235 = por %p233, %p234
    %p236 = scmp.ne.s32.totalorder %s228, %s230
    %p237 = scmp.eq.s32.totalorder %s31, 1
    %p238 = por %p236, %p237
    %p239 = scmp.ne.s32.totalorder %s230, %s231
    %p240 = scmp.eq.s32.totalorder %s31, 0
    %p241 = por %p239, %p240
    %p242 = scmp.ne.s32.totalorder %s230, %s231
    %p243 = scmp.eq.s32.totalorder %s32, 1
    %p244 = por %p242, %p243
    %p246 = scmp.ne.s32.totalorder %s231, %s245
    %p247 = scmp.eq.s32.totalorder %s32, 0
    %p248 = por %p246, %p247
    %s250 = sadd.s32 %s249, 1
    %p253 = scmp.eq.s32.totalorder %s26, 1
    %p254 = scmp.ne.s32.totalorder %s249, %s251
    %p255 = scmp.eq.s32.totalorder %s26, 0
    %p256 = por %p254, %p255
    %p257 = scmp.ne.s32.totalorder %s249, %s251
    %p258 = scmp.eq.s32.totalorder %s31, 1
    %p259 = por %p257, %p258
    %p260 = scmp.ne.s32.totalorder %s251, %s252
    %p261 = scmp.eq.s32.totalorder %s31, 0
    %p262 = por %p260, %p261
    %p263 = scmp.ne.s32.totalorder %s251, %s252
    %p264 = scmp.eq.s32.totalorder %s32, 1
    %p265 = por %p263, %p264
    %p267 = scmp.ne.s32.totalorder %s252, %s266
    %p268 = scmp.eq.s32.totalorder %s32, 0
    %p269 = por %p267, %p268
    %s271 = sadd.s32 %s270, 1
    %p274 = scmp.eq.s32.totalorder %s26, 1
    %p275 = scmp.ne.s32.totalorder %s270, %s272
    %p276 = scmp.eq.s32.totalorder %s26, 0
    %p277 = por %p275, %p276
    %p278 = scmp.ne.s32.totalorder %s270, %s272
    %p279 = scmp.eq.s32.totalorder %s31, 1
    %p280 = por %p278, %p279
    %p281 = scmp.ne.s32.totalorder %s272, %s273
    %p282 = scmp.eq.s32.totalorder %s31, 0
    %p283 = por %p281, %p282
    %p284 = scmp.ne.s32.totalorder %s272, %s273
    %p285 = scmp.eq.s32.totalorder %s32, 1
    %p286 = por %p284, %p285
    %p288 = scmp.ne.s32.totalorder %s273, %s287
    %p289 = scmp.eq.s32.totalorder %s32, 0
    %p290 = por %p288, %p289
    %s292 = sadd.s32 %s291, 1
    %p295 = scmp.eq.s32.totalorder %s26, 1
    %p296 = scmp.ne.s32.totalorder %s291, %s293
    %p297 = scmp.eq.s32.totalorder %s26, 0
    %p298 = por %p296, %p297
    %p299 = scmp.ne.s32.totalorder %s291, %s293
    %p300 = scmp.eq.s32.totalorder %s31, 1
    %p301 = por %p299, %p300
    %p302 = scmp.ne.s32.totalorder %s293, %s294
    %p303 = scmp.eq.s32.totalorder %s31, 0
    %p304 = por %p302, %p303
    %p305 = scmp.ne.s32.totalorder %s293, %s294
    %p306 = scmp.eq.s32.totalorder %s32, 1
    %p307 = por %p305, %p306
    %p309 = scmp.ne.s32.totalorder %s294, %s308
    %p310 = scmp.eq.s32.totalorder %s32, 0
    %p311 = por %p309, %p310
    %s312 = ssub.s32 %s26, %s33
    %p313 = scmp.eq.s32.totalorder %s312, 0
    %s315 = sadd.s32 %s314, 1
    %s316 = scalar_select %p313, %s314, %s315
    %p319 = pneg %p313
    %p320 = scmp.eq.s32.totalorder %s26, 1
    %p321 = por %p319, %p320
    %p322 = scmp.ne.s32.totalorder %s314, %s317
    %p323 = scmp.eq.s32.totalorder %s26, 0
    %p324 = por %p322, %p323
    %p325 = scmp.ne.s32.totalorder %s314, %s317
    %p326 = scmp.eq.s32.totalorder %s31, 1
    %p327 = por %p325, %p326
    %p328 = scmp.ne.s32.totalorder %s317, %s318
    %p329 = scmp.eq.s32.totalorder %s31, 0
    %p330 = por %p328, %p329
    %p331 = scmp.ne.s32.totalorder %s317, %s318
    %p332 = scmp.eq.s32.totalorder %s32, 1
    %p333 = por %p331, %p332
    %p335 = scmp.ne.s32.totalorder %s318, %s334
    %p336 = scmp.eq.s32.totalorder %s32, 0
    %p337 = por %p335, %p336
    %p338 = scmp.le.s32.totalorder 1, %s26
    %p339 = scmp.lt.s32.totalorder %s26, 3
    %p340 = pnand %p338, %p339
    %p341 = pneg %p340
    // Predicated region
    $region9: #{net_forward.7} parent=5 // pred_check
      _
    $region10: #{net_forward.7} parent=5 // pred_check_branch
      %343 = sbr.rel (%p340) target = $region12
    $region11: #{net_forward.7} parent=5 // pred_region
      %s344 = ssub.s32 %s26, 1
      // Predicated region
      $region13: #{net_forward.7} parent=11 // pred_check
        %p345 = pneg %p47
      $region14: #{net_forward.7} parent=11 // pred_check_branch
        %347 = sbr.rel (%p345) target = $region16
      $region15: #{net_forward.7} parent=11 // pred_region
        _
      $region16: #{net_forward.7} parent=11 // pred_fallthru
        _
      // Predicated region
      $region17: #{net_forward.7} parent=11 // pred_check
        %p348 = pneg %p94
      $region18: #{net_forward.7} parent=11 // pred_check_branch
        %350 = sbr.rel (%p348) target = $region20
      $region19: #{net_forward.7} parent=11 // pred_region
        _
      $region20: #{net_forward.7} parent=11 // pred_fallthru
        _
      // Predicated region
      $region21: #{net_forward.7} parent=11 // pred_check
        %p351 = pneg %p115
      $region22: #{net_forward.7} parent=11 // pred_check_branch
        %353 = sbr.rel (%p351) target = $region24
      $region23: #{net_forward.7} parent=11 // pred_region
        _
      $region24: #{net_forward.7} parent=11 // pred_fallthru
        _
      // Predicated region
      $region25: #{net_forward.7} parent=11 // pred_check
        %p354 = pneg %p136
      $region26: #{net_forward.7} parent=11 // pred_check_branch
        %356 = sbr.rel (%p354) target = $region28
      $region27: #{net_forward.7} parent=11 // pred_region
        _
      $region28: #{net_forward.7} parent=11 // pred_fallthru
        _
      // Predicated region
      $region29: #{net_forward.7} parent=11 // pred_check
        %p357 = pneg %p157
      $region30: #{net_forward.7} parent=11 // pred_check_branch
        %359 = sbr.rel (%p357) target = $region32
      $region31: #{net_forward.7} parent=11 // pred_region
        _
      $region32: #{net_forward.7} parent=11 // pred_fallthru
        _
      // Predicated region
      $region33: #{net_forward.7} parent=11 // pred_check
        %p360 = pneg %p178
      $region34: #{net_forward.7} parent=11 // pred_check_branch
        %362 = sbr.rel (%p360) target = $region36
      $region35: #{net_forward.7} parent=11 // pred_region
        _
      $region36: #{net_forward.7} parent=11 // pred_fallthru
        _
      // Predicated region
      $region37: #{net_forward.7} parent=11 // pred_check
        %p363 = pneg %p199
      $region38: #{net_forward.7} parent=11 // pred_check_branch
        %365 = sbr.rel (%p363) target = $region40
      $region39: #{net_forward.7} parent=11 // pred_region
        _
      $region40: #{net_forward.7} parent=11 // pred_fallthru
        _
      // Predicated region
      $region41: #{net_forward.7} parent=11 // pred_check
        %p366 = pneg %p220
      $region42: #{net_forward.7} parent=11 // pred_check_branch
        %368 = sbr.rel (%p366) target = $region44
      $region43: #{net_forward.7} parent=11 // pred_region
        _
      $region44: #{net_forward.7} parent=11 // pred_fallthru
        _
      // Predicated region
      $region45: #{net_forward.7} parent=11 // pred_check
        %p369 = pneg %p241
      $region46: #{net_forward.7} parent=11 // pred_check_branch
        %371 = sbr.rel (%p369) target = $region48
      $region47: #{net_forward.7} parent=11 // pred_region
        _
      $region48: #{net_forward.7} parent=11 // pred_fallthru
        _
      // Predicated region
      $region49: #{net_forward.7} parent=11 // pred_check
        %p372 = pneg %p262
      $region50: #{net_forward.7} parent=11 // pred_check_branch
        %374 = sbr.rel (%p372) target = $region52
      $region51: #{net_forward.7} parent=11 // pred_region
        _
      $region52: #{net_forward.7} parent=11 // pred_fallthru
        _
      // Predicated region
      $region53: #{net_forward.7} parent=11 // pred_check
        %p375 = pneg %p283
      $region54: #{net_forward.7} parent=11 // pred_check_branch
        %377 = sbr.rel (%p375) target = $region56
      $region55: #{net_forward.7} parent=11 // pred_region
        _
      $region56: #{net_forward.7} parent=11 // pred_fallthru
        _
      // Predicated region
      $region57: #{net_forward.7} parent=11 // pred_check
        %p378 = pneg %p304
      $region58: #{net_forward.7} parent=11 // pred_check_branch
        %380 = sbr.rel (%p378) target = $region60
      $region59: #{net_forward.7} parent=11 // pred_region
        _
      $region60: #{net_forward.7} parent=11 // pred_fallthru
        _
    $region12: #{net_forward.7} parent=5 // pred_fallthru
      _
    %p381 = scmp.lt.s32.totalorder %s26, 2
    // Predicated region
    $region61: #{net_forward.7} parent=5 // pred_check
      %p382 = pneg %p381
    $region62: #{net_forward.7} parent=5 // pred_check_branch
      %384 = sbr.rel (%p382) target = $region64
    $region63: #{net_forward.7} parent=5 // pred_region
      // Predicated region
      $region65: #{net_forward.7} parent=63 // pred_check
        %p385 = pneg %p67
      $region66: #{net_forward.7} parent=63 // pred_check_branch
        %387 = sbr.rel (%p385) target = $region68
      $region67: #{net_forward.7} parent=63 // pred_region
        %s388 = smul.u32 2, %s26
        %p389 = scmp.lt.s32.totalorder %s388, 3
        %s390 = scalar_select %p389, %s388, 3
        %s391 = smul.addr %s390, 8
        %s392 = scalar_lea.vmem %s2, %s391
        %s393 = smul.u32 2, %s26
      $region68: #{net_forward.7} parent=63 // pred_fallthru
        _
    $region64: #{net_forward.7} parent=5 // pred_fallthru
      _
    %p394 = scmp.le.s32.totalorder 1, %s26
    %p395 = scmp.lt.s32.totalorder %s26, 3
    %p396 = pnand %p394, %p395
    %p397 = pneg %p396
    // Predicated region
    $region69: #{net_forward.7} parent=5 // pred_check
      _
    $region70: #{net_forward.7} parent=5 // pred_check_branch
      %399 = sbr.rel (%p396) target = $region72
    $region71: #{net_forward.7} parent=5 // pred_region
      %s400 = ssub.s32 %s26, 1
      %p401 = pneg %p47
      %p402 = pneg %p44
      %s403 = smul.u32 2, %s31
      %p404 = scmp.lt.s32.totalorder %s403, 3
      %s405 = scalar_select %p404, %s403, 3
      %s406 = smul.addr %s405, 8
      %s407 = scalar_lea.vmem %s2, %s406
      %p408 = pneg %p73
      %p409 = pneg %p70
      %p410 = pneg %p94
      %p411 = pneg %p91
      %p412 = pneg %p115
      %p413 = pneg %p112
      %p414 = pneg %p136
      %p415 = pneg %p133
      %p416 = pneg %p157
      %p417 = pneg %p154
      %p418 = pneg %p178
      %p419 = pneg %p175
      %p420 = pneg %p199
      %p421 = pneg %p196
      %p422 = pneg %p220
      %p423 = pneg %p217
      %p424 = pneg %p241
      %p425 = pneg %p238
      %p426 = pneg %p262
      %p427 = pneg %p259
      %p428 = pneg %p283
      %p429 = pneg %p280
      %p430 = pneg %p304
      %p431 = pneg %p301
      %p432 = pneg %p330
      %p433 = pneg %p327
      %s434 = smul.u32 2, %s31
      %p435 = scmp.lt.s32.totalorder %s434, 3
      %s436 = scalar_select %p435, %s434, 3
      %s437 = smul.addr %s436, 8
      %s438 = scalar_lea.vmem %s14, %s437
      %s439 = smul.u32 2, %s31
      %p440 = scmp.lt.s32.totalorder %s439, 3
      %s441 = scalar_select %p440, %s439, 3
      %s442 = smul.addr %s441, 8
      %s443 = scalar_lea.vmem %s2, %s442
      %s444 = smul.u32 2, %s31
      %s445 = smul.u32 2, %s31
      %p446 = scmp.lt.s32.totalorder %s445, 3
      %s447 = scalar_select %p446, %s445, 3
      %s448 = smul.addr %s447, 8
      %s449 = scalar_lea.vmem %s14, %s448
      %s450 = smul.u32 2, %s31
      %s451 = smul.u32 %s31, 16
      %v452 = vld [vmem:[%s443] sm:$0xff]
      %v453 = vld [vmem:[%s443 + $0x8] sm:$0xff]
      %v454 = vld [vmem:[%s3] sm:$0xff]
      %v455 = vld [vmem:[%s3 + $0x8] sm:$0xff]
      %v456 = vld [vmem:[%s3 + $0x10] sm:$0xff]
      %v457 = vld [vmem:[%s3 + $0x18] sm:$0xff]
      %v458 = vld [vmem:[%s3 + $0x20] sm:$0xff]
      %v459 = vld [vmem:[%s3 + $0x28] sm:$0xff]
      %v460 = vld [vmem:[%s3 + $0x30] sm:$0xff]
      %v461 = vld [vmem:[%s3 + $0x38] sm:$0xff]
      %v462 = vld [vmem:[%s5] sm:$0x1]
      %v464 = vlaneseq
      %v465 = vshrl.u32 %v464, 7
      %v466 = vsub.s32 0, %v465
      %v467 = vrot.slane %v462, %v466
      %vm469 = vcmask 523264
      %v471 = vsel %vm469, %v452, 0
      %v474 = vsel %vm469, %v453, 0
      %476 = vmatprep.subr.mxu0 0.0
      %477 = vmatpush1.msra.mxu0 %v454
      %478 = vmatprep.subr.mxu0 0.0
      %479 = vmatpush1.msra.mxu0 %v455
      %480 = vmatprep.subr.mxu0 0.0
      %481 = vmatpush1.msra.mxu0 %v456
      %482 = vmatprep.subr.mxu0 0.0
      %483 = vmatpush1.msra.mxu0 %v457
      %484 = vmatprep.subr.mxu0 0.0
      %485 = vmatpush1.msra.mxu0 %v458
      %486 = vmatprep.subr.mxu0 0.0
      %487 = vmatpush1.msra.mxu0 %v459
      %488 = vmatprep.subr.mxu0 0.0
      %489 = vmatpush1.msra.mxu0 %v460
      %490 = vmatprep.subr.mxu0 0.0
      %491 = vmatpush1.msra.mxu0 %v461
      %492 = vmatprep.subr.mxu0 0.0
      %493 = vmatpush1.msra.mxu0 0.0
      %494 = vmatprep.subr.mxu0 0.0
      %495 = vmatpush1.msra.mxu0 0.0
      %496 = vmatprep.subr.mxu0 0.0
      %497 = vmatpush1.msra.mxu0 0.0
      %498 = vmatprep.subr.mxu0 0.0
      %499 = vmatpush1.msra.mxu0 0.0
      %500 = vmatprep.subr.mxu0 0.0
      %501 = vmatpush1.msra.mxu0 0.0
      %502 = vmatprep.subr.mxu0 0.0
      %503 = vmatpush1.msra.mxu0 0.0
      %504 = vmatprep.subr.mxu0 0.0
      %505 = vmatpush1.msra.mxu0 0.0
      %506 = vmatprep.subr.mxu0 0.0
      %507 = vmatpush1.msra.mxu0 0.0
      %508 = vmatprep.subr.mxu0 0.0
      %509 = vmatpush1.msra.mxu0 0.0
      %510 = vmatprep.subr.mxu0 0.0
      %511 = vmatpush1.msra.mxu0 0.0
      %512 = vmatprep.subr.mxu0 0.0
      %513 = vmatpush1.msra.mxu0 0.0
      %514 = vmatprep.subr.mxu0 0.0
      %515 = vmatpush1.msra.mxu0 0.0
      %516 = vmatprep.subr.mxu0 0.0
      %517 = vmatpush1.msra.mxu0 0.0
      %518 = vmatprep.subr.mxu0 0.0
      %519 = vmatpush1.msra.mxu0 0.0
      %520 = vmatprep.subr.mxu0 0.0
      %521 = vmatpush1.msra.mxu0 0.0
      %522 = vmatprep.subr.mxu0 0.0
      %523 = vmatpush1.msra.mxu0 0.0
      %524 = vmatprep.subr.mxu0 0.0
      %525 = vmatpush1.msra.mxu0 0.0
      %526 = vmatprep.subr.mxu0 0.0
      %527 = vmatpush1.msra.mxu0 0.0
      %528 = vmatprep.subr.mxu0 0.0
      %529 = vmatpush1.msra.mxu0 0.0
      %530 = vmatprep.subr.mxu0 0.0
      %531 = vmatpush1.msra.mxu0 0.0
      %532 = vmatprep.subr.mxu0 0.0
      %533 = vmatpush1.msra.mxu0 0.0
      %534 = vmatprep.subr.mxu0 0.0
      %535 = vmatpush1.msra.mxu0 0.0
      %536 = vmatprep.subr.mxu0 0.0
      %537 = vmatpush1.msra.mxu0 0.0
      %538 = vmatprep.subr.mxu0 0.0
      %539 = vmatpush1.msra.mxu0 0.0
      %540 = vmatprep.mubr.f32.mxu0 0.0
      %541 = vmatmul.mubr.f32.gmra.mrb[0].mxu0 %v471
      %v542 = vpop.f32.mrb[0].mxu0
      %v543 = vadd.f32 %v467, %v542
      %v544 = vpop.f32.mrb[0].mxu0
      %545 = vmatprep.mubr.f32.mxu0 0.0
      %546 = vmatmul.mubr.f32.gmra.mrb[0].mxu0 %v474
      %v547 = vpop.f32.mrb[0].mxu0
      %v548 = vadd.f32 %v467, %v547
      %v549 = vpop.f32.mrb[0].mxu0
      %550 = vdwg.mxu0
      %s551 = smul.u32 %s31, 64
      %s552 = sld [smem:[#allocation4 + %s551]]
      %s553 = scalar_lea.vmem %s1, %s552
      %v554 = vld [vmem:[%s553] sm:$0x1]
      %vm555 = vcmask 516096
      %556 = vst.msk [vmem:[#allocation2] sm:$0x1] %vm555, %v554
      %s557 = sadd.s32 %s451, 1
      %s558 = smul.u32 %s557, 4
      %s559 = sld [smem:[#allocation4 + %s558]]
      %s560 = scalar_lea.vmem %s1, %s559
      %v561 = vld [vmem:[%s560] sm:$0x1]
      %562 = vst.msk [vmem:[#allocation2 + $0x1] sm:$0x1] %vm555, %v561
      %s563 = sadd.s32 %s451, 2
      %s564 = smul.u32 %s563, 4
      %s565 = sld [smem:[#allocation4 + %s564]]
      %s566 = scalar_lea.vmem %s1, %s565
      %v567 = vld [vmem:[%s566] sm:$0x1]
      %568 = vst.msk [vmem:[#allocation2 + $0x2] sm:$0x1] %vm555, %v567
      %s569 = sadd.s32 %s451, 3
      %s570 = smul.u32 %s569, 4
      %s571 = sld [smem:[#allocation4 + %s570]]
      %s572 = scalar_lea.vmem %s1, %s571
      %v573 = vld [vmem:[%s572] sm:$0x1]
      %574 = vst.msk [vmem:[#allocation2 + $0x3] sm:$0x1] %vm555, %v573
      %s575 = sadd.s32 %s451, 4
      %s576 = smul.u32 %s575, 4
      %s577 = sld [smem:[#allocation4 + %s576]]
      %s578 = scalar_lea.vmem %s1, %s577
      %v579 = vld [vmem:[%s578] sm:$0x1]
      %580 = vst.msk [vmem:[#allocation2 + $0x4] sm:$0x1] %vm555, %v579
      %s581 = sadd.s32 %s451, 5
      %s582 = smul.u32 %s581, 4
      %s583 = sld [smem:[#allocation4 + %s582]]
      %s584 = scalar_lea.vmem %s1, %s583
      %v585 = vld [vmem:[%s584] sm:$0x1]
      %586 = vst.msk [vmem:[#allocation2 + $0x5] sm:$0x1] %vm555, %v585
      %s587 = sadd.s32 %s451, 6
      %s588 = smul.u32 %s587, 4
      %s589 = sld [smem:[#allocation4 + %s588]]
      %s590 = scalar_lea.vmem %s1, %s589
      %v591 = vld [vmem:[%s590] sm:$0x1]
      %592 = vst.msk [vmem:[#allocation2 + $0x6] sm:$0x1] %vm555, %v591
      %s593 = sadd.s32 %s451, 7
      %s594 = smul.u32 %s593, 4
      %s595 = sld [smem:[#allocation4 + %s594]]
      %s596 = scalar_lea.vmem %s1, %s595
      %v597 = vld [vmem:[%s596] sm:$0x1]
      %598 = vst.msk [vmem:[#allocation2 + $0x7] sm:$0x1] %vm555, %v597
      %s599 = sadd.s32 %s451, 8
      %s600 = smul.u32 %s599, 4
      %s601 = sld [smem:[#allocation4 + %s600]]
      %s602 = scalar_lea.vmem %s1, %s601
      %v603 = vld [vmem:[%s602] sm:$0x1]
      %604 = vst.msk [vmem:[#allocation2 + $0x8] sm:$0x1] %vm555, %v603
      %s605 = sadd.s32 %s451, 9
      %s606 = smul.u32 %s605, 4
      %s607 = sld [smem:[#allocation4 + %s606]]
      %s608 = scalar_lea.vmem %s1, %s607
      %v609 = vld [vmem:[%s608] sm:$0x1]
      %610 = vst.msk [vmem:[#allocation2 + $0x9] sm:$0x1] %vm555, %v609
      %s611 = sadd.s32 %s451, 10
      %s612 = smul.u32 %s611, 4
      %s613 = sld [smem:[#allocation4 + %s612]]
      %s614 = scalar_lea.vmem %s1, %s613
      %v615 = vld [vmem:[%s614] sm:$0x1]
      %616 = vst.msk [vmem:[#allocation2 + $0xa] sm:$0x1] %vm555, %v615
      %s617 = sadd.s32 %s451, 11
      %s618 = smul.u32 %s617, 4
      %s619 = sld [smem:[#allocation4 + %s618]]
      %s620 = scalar_lea.vmem %s1, %s619
      %v621 = vld [vmem:[%s620] sm:$0x1]
      %622 = vst.msk [vmem:[#allocation2 + $0xb] sm:$0x1] %vm555, %v621
      %s623 = sadd.s32 %s451, 12
      %s624 = smul.u32 %s623, 4
      %s625 = sld [smem:[#allocation4 + %s624]]
      %s626 = scalar_lea.vmem %s1, %s625
      %v627 = vld [vmem:[%s626] sm:$0x1]
      %628 = vst.msk [vmem:[#allocation2 + $0xc] sm:$0x1] %vm555, %v627
      %s629 = sadd.s32 %s451, 13
      %s630 = smul.u32 %s629, 4
      %s631 = sld [smem:[#allocation4 + %s630]]
      %s632 = scalar_lea.vmem %s1, %s631
      %v633 = vld [vmem:[%s632] sm:$0x1]
      %634 = vst.msk [vmem:[#allocation2 + $0xd] sm:$0x1] %vm555, %v633
      %s635 = sadd.s32 %s451, 14
      %s636 = smul.u32 %s635, 4
      %s637 = sld [smem:[#allocation4 + %s636]]
      %s638 = scalar_lea.vmem %s1, %s637
      %v639 = vld [vmem:[%s638] sm:$0x1]
      %640 = vst.msk [vmem:[#allocation2 + $0xe] sm:$0x1] %vm555, %v639
      %s641 = sadd.s32 %s451, 15
      %s642 = smul.u32 %s641, 4
      %s643 = sld [smem:[#allocation4 + %s642]]
      %s644 = scalar_lea.vmem %s1, %s643
      %v645 = vld [vmem:[%s644] sm:$0x1]
      %646 = vst.msk [vmem:[#allocation2 + $0xf] sm:$0x1] %vm555, %v645
      %v647 = vld [vmem:[#allocation2] sm:$0xff]
      %v648 = vld [vmem:[#allocation2 + $0x8] sm:$0xff]
      %v649 = vld [vmem:[%s4] sm:$0xff]
      %v650 = vld [vmem:[%s4 + $0x8] sm:$0xff]
      %v651 = vld [vmem:[%s4 + $0x10] sm:$0xff]
      %v652 = vld [vmem:[%s4 + $0x18] sm:$0xff]
      %v653 = vld [vmem:[%s4 + $0x20] sm:$0xff]
      %v654 = vld [vmem:[%s4 + $0x28] sm:$0xff]
      %v655 = vld [vmem:[%s4 + $0x30] sm:$0xff]
      %v656 = vld [vmem:[%s4 + $0x38] sm:$0xff]
      %v658 = vsel %vm469, %v647, 0
      %v661 = vsel %vm469, %v648, 0
      %663 = vmatprep.subr.mxu0 0.0
      %664 = vmatpush1.msra.mxu0 %v649
      %665 = vmatprep.subr.mxu0 0.0
      %666 = vmatpush1.msra.mxu0 %v650
      %667 = vmatprep.subr.mxu0 0.0
      %668 = vmatpush1.msra.mxu0 %v651
      %669 = vmatprep.subr.mxu0 0.0
      %670 = vmatpush1.msra.mxu0 %v652
      %671 = vmatprep.subr.mxu0 0.0
      %672 = vmatpush1.msra.mxu0 %v653
      %673 = vmatprep.subr.mxu0 0.0
      %674 = vmatpush1.msra.mxu0 %v654
      %675 = vmatprep.subr.mxu0 0.0
      %676 = vmatpush1.msra.mxu0 %v655
      %677 = vmatprep.subr.mxu0 0.0
      %678 = vmatpush1.msra.mxu0 %v656
      %679 = vmatprep.subr.mxu0 0.0
      %680 = vmatpush1.msra.mxu0 0.0
      %681 = vmatprep.subr.mxu0 0.0
      %682 = vmatpush1.msra.mxu0 0.0
      %683 = vmatprep.subr.mxu0 0.0
      %684 = vmatpush1.msra.mxu0 0.0
      %685 = vmatprep.subr.mxu0 0.0
      %686 = vmatpush1.msra.mxu0 0.0
      %687 = vmatprep.subr.mxu0 0.0
      %688 = vmatpush1.msra.mxu0 0.0
      %689 = vmatprep.subr.mxu0 0.0
      %690 = vmatpush1.msra.mxu0 0.0
      %691 = vmatprep.subr.mxu0 0.0
      %692 = vmatpush1.msra.mxu0 0.0
      %693 = vmatprep.subr.mxu0 0.0
      %694 = vmatpush1.msra.mxu0 0.0
      %695 = vmatprep.subr.mxu0 0.0
      %696 = vmatpush1.msra.mxu0 0.0
      %697 = vmatprep.subr.mxu0 0.0
      %698 = vmatpush1.msra.mxu0 0.0
      %699 = vmatprep.subr.mxu0 0.0
      %700 = vmatpush1.msra.mxu0 0.0
      %701 = vmatprep.subr.mxu0 0.0
      %702 = vmatpush1.msra.mxu0 0.0
      %703 = vmatprep.subr.mxu0 0.0
      %704 = vmatpush1.msra.mxu0 0.0
      %705 = vmatprep.subr.mxu0 0.0
      %706 = vmatpush1.msra.mxu0 0.0
      %707 = vmatprep.subr.mxu0 0.0
      %708 = vmatpush1.msra.mxu0 0.0
      %709 = vmatprep.subr.mxu0 0.0
      %710 = vmatpush1.msra.mxu0 0.0
      %711 = vmatprep.subr.mxu0 0.0
      %712 = vmatpush1.msra.mxu0 0.0
      %713 = vmatprep.subr.mxu0 0.0
      %714 = vmatpush1.msra.mxu0 0.0
      %715 = vmatprep.subr.mxu0 0.0
      %716 = vmatpush1.msra.mxu0 0.0
      %717 = vmatprep.subr.mxu0 0.0
      %718 = vmatpush1.msra.mxu0 0.0
      %719 = vmatprep.subr.mxu0 0.0
      %720 = vmatpush1.msra.mxu0 0.0
      %721 = vmatprep.subr.mxu0 0.0
      %722 = vmatpush1.msra.mxu0 0.0
      %723 = vmatprep.subr.mxu0 0.0
      %724 = vmatpush1.msra.mxu0 0.0
      %725 = vmatprep.subr.mxu0 0.0
      %726 = vmatpush1.msra.mxu0 0.0
      %727 = vmatprep.mubr.f32.mxu0 0.0
      %728 = vmatmul.mubr.f32.gmra.mrb[0].mxu0 %v658
      %v729 = vpop.f32.mrb[0].mxu0
      %v730 = vadd.f32 0.0, %v729
      %v731 = vpop.f32.mrb[0].mxu0
      %732 = vmatprep.mubr.f32.mxu0 0.0
      %733 = vmatmul.mubr.f32.gmra.mrb[0].mxu0 %v661
      %v734 = vpop.f32.mrb[0].mxu0
      %v735 = vadd.f32 0.0, %v734
      %v736 = vpop.f32.mrb[0].mxu0
      %737 = vdwg.mxu0
      %v738 = vadd.f32 %v543, %v730
      %v739 = vadd.f32 %v548, %v735
      %vm740 = vcmp.gt.f32.partialorder %v738, 0.0
      %vm741 = vcmp.gt.f32.partialorder %v739, 0.0
      %v742 = vmin.f32 %v738, 0.0
      %v743 = vmin.f32 %v739, 0.0
      %v744 = vmul.f32 %v742, 1.442695
      %v745 = vpow.pop %v744
      %v746 = vmul.f32 %v743, 1.442695
      %v747 = vpow.pop %v746
      %v748 = vsub.f32 %v745, 1.0
      %v749 = vsub.f32 %v747, 1.0
      %v750 = vsel %vm740, %v738, %v748
      %v751 = vsel %vm741, %v739, %v749
      %v752 = vld [vmem:[%s6] sm:$0x1]
      %v754 = vlaneseq
      %v755 = vshrl.u32 %v754, 7
      %v756 = vsub.s32 0, %v755
      %v757 = vrot.slane %v752, %v756
      %v759 = vmul.f32 %v750, %v757
      %v760 = vmul.f32 %v751, %v757
      %v761 = vld [vmem:[%s7] sm:$0x1]
      %v763 = vlaneseq
      %v764 = vshrl.u32 %v763, 7
      %v765 = vsub.s32 0, %v764
      %v766 = vrot.slane %v761, %v765
      %v768 = vadd.f32 %v759, %v766
      %v769 = vadd.f32 %v760, %v766
      %v770 = vadd.f32 %v768, 0.0
      %v771 = vadd.f32 %v769, 0.0
      %s772 = sadd.s32 %s551, 1
      %s773 = sld [smem:[#allocation4 + %s772]]
      %s774 = scalar_lea.vmem %s1, %s773
      %v775 = vld [vmem:[%s774] sm:$0x1]
      %776 = vst.msk [vmem:[#allocation2] sm:$0x1] %vm555, %v775
      %s777 = sadd.s32 %s558, 1
      %s778 = sld [smem:[#allocation4 + %s777]]
      %s779 = scalar_lea.vmem %s1, %s778
      %v780 = vld [vmem:[%s779] sm:$0x1]
      %781 = vst.msk [vmem:[#allocation2 + $0x1] sm:$0x1] %vm555, %v780
      %s782 = sadd.s32 %s564, 1
      %s783 = sld [smem:[#allocation4 + %s782]]
      %s784 = scalar_lea.vmem %s1, %s783
      %v785 = vld [vmem:[%s784] sm:$0x1]
      %786 = vst.msk [vmem:[#allocation2 + $0x2] sm:$0x1] %vm555, %v785
      %s787 = sadd.s32 %s570, 1
      %s788 = sld [smem:[#allocation4 + %s787]]
      %s789 = scalar_lea.vmem %s1, %s788
      %v790 = vld [vmem:[%s789] sm:$0x1]
      %791 = vst.msk [vmem:[#allocation2 + $0x3] sm:$0x1] %vm555, %v790
      %s792 = sadd.s32 %s576, 1
      %s793 = sld [smem:[#allocation4 + %s792]]
      %s794 = scalar_lea.vmem %s1, %s793
      %v795 = vld [vmem:[%s794] sm:$0x1]
      %796 = vst.msk [vmem:[#allocation2 + $0x4] sm:$0x1] %vm555, %v795
      %s797 = sadd.s32 %s582, 1
      %s798 = sld [smem:[#allocation4 + %s797]]
      %s799 = scalar_lea.vmem %s1, %s798
      %v800 = vld [vmem:[%s799] sm:$0x1]
      %801 = vst.msk [vmem:[#allocation2 + $0x5] sm:$0x1] %vm555, %v800
      %s802 = sadd.s32 %s588, 1
      %s803 = sld [smem:[#allocation4 + %s802]]
      %s804 = scalar_lea.vmem %s1, %s803
      %v805 = vld [vmem:[%s804] sm:$0x1]
      %806 = vst.msk [vmem:[#allocation2 + $0x6] sm:$0x1] %vm555, %v805
      %s807 = sadd.s32 %s594, 1
      %s808 = sld [smem:[#allocation4 + %s807]]
      %s809 = scalar_lea.vmem %s1, %s808
      %v810 = vld [vmem:[%s809] sm:$0x1]
      %811 = vst.msk [vmem:[#allocation2 + $0x7] sm:$0x1] %vm555, %v810
      %s812 = sadd.s32 %s600, 1
      %s813 = sld [smem:[#allocation4 + %s812]]
      %s814 = scalar_lea.vmem %s1, %s813
      %v815 = vld [vmem:[%s814] sm:$0x1]
      %816 = vst.msk [vmem:[#allocation2 + $0x8] sm:$0x1] %vm555, %v815
      %s817 = sadd.s32 %s606, 1
      %s818 = sld [smem:[#allocation4 + %s817]]
      %s819 = scalar_lea.vmem %s1, %s818
      %v820 = vld [vmem:[%s819] sm:$0x1]
      %821 = vst.msk [vmem:[#allocation2 + $0x9] sm:$0x1] %vm555, %v820
      %s822 = sadd.s32 %s612, 1
      %s823 = sld [smem:[#allocation4 + %s822]]
      %s824 = scalar_lea.vmem %s1, %s823
      %v825 = vld [vmem:[%s824] sm:$0x1]
      %826 = vst.msk [vmem:[#allocation2 + $0xa] sm:$0x1] %vm555, %v825
      %s827 = sadd.s32 %s618, 1
      %s828 = sld [smem:[#allocation4 + %s827]]
      %s829 = scalar_lea.vmem %s1, %s828
      %v830 = vld [vmem:[%s829] sm:$0x1]
      %831 = vst.msk [vmem:[#allocation2 + $0xb] sm:$0x1] %vm555, %v830
      %s832 = sadd.s32 %s624, 1
      %s833 = sld [smem:[#allocation4 + %s832]]
      %s834 = scalar_lea.vmem %s1, %s833
      %v835 = vld [vmem:[%s834] sm:$0x1]
      %836 = vst.msk [vmem:[#allocation2 + $0xc] sm:$0x1] %vm555, %v835
      %s837 = sadd.s32 %s630, 1
      %s838 = sld [smem:[#allocation4 + %s837]]
      %s839 = scalar_lea.vmem %s1, %s838
      %v840 = vld [vmem:[%s839] sm:$0x1]
      %841 = vst.msk [vmem:[#allocation2 + $0xd] sm:$0x1] %vm555, %v840
      %s842 = sadd.s32 %s636, 1
      %s843 = sld [smem:[#allocation4 + %s842]]
      %s844 = scalar_lea.vmem %s1, %s843
      %v845 = vld [vmem:[%s844] sm:$0x1]
      %846 = vst.msk [vmem:[#allocation2 + $0xe] sm:$0x1] %vm555, %v845
      %s847 = sadd.s32 %s642, 1
      %s848 = sld [smem:[#allocation4 + %s847]]
      %s849 = scalar_lea.vmem %s1, %s848
      %v850 = vld [vmem:[%s849] sm:$0x1]
      %851 = vst.msk [vmem:[#allocation2 + $0xf] sm:$0x1] %vm555, %v850
      %v852 = vld [vmem:[#allocation2] sm:$0xff]
      %v853 = vld [vmem:[#allocation2 + $0x8] sm:$0xff]
      %v854 = vld [vmem:[%s4] sm:$0xff]
      %v855 = vld [vmem:[%s4 + $0x8] sm:$0xff]
      %v856 = vld [vmem:[%s4 + $0x10] sm:$0xff]
      %v857 = vld [vmem:[%s4 + $0x18] sm:$0xff]
      %v858 = vld [vmem:[%s4 + $0x20] sm:$0xff]
      %v859 = vld [vmem:[%s4 + $0x28] sm:$0xff]
      %v860 = vld [vmem:[%s4 + $0x30] sm:$0xff]
      %v861 = vld [vmem:[%s4 + $0x38] sm:$0xff]
      %v863 = vsel %vm469, %v852, 0
      %v866 = vsel %vm469, %v853, 0
      %868 = vmatprep.subr.mxu0 0.0
      %869 = vmatpush1.msra.mxu0 %v854
      %870 = vmatprep.subr.mxu0 0.0
      %871 = vmatpush1.msra.mxu0 %v855
      %872 = vmatprep.subr.mxu0 0.0
      %873 = vmatpush1.msra.mxu0 %v856
      %874 = vmatprep.subr.mxu0 0.0
      %875 = vmatpush1.msra.mxu0 %v857
      %876 = vmatprep.subr.mxu0 0.0
      %877 = vmatpush1.msra.mxu0 %v858
      %878 = vmatprep.subr.mxu0 0.0
      %879 = vmatpush1.msra.mxu0 %v859
      %880 = vmatprep.subr.mxu0 0.0
      %881 = vmatpush1.msra.mxu0 %v860
      %882 = vmatprep.subr.mxu0 0.0
      %883 = vmatpush1.msra.mxu0 %v861
      %884 = vmatprep.subr.mxu0 0.0
      %885 = vmatpush1.msra.mxu0 0.0
      %886 = vmatprep.subr.mxu0 0.0
      %887 = vmatpush1.msra.mxu0 0.0
      %888 = vmatprep.subr.mxu0 0.0
      %889 = vmatpush1.msra.mxu0 0.0
      %890 = vmatprep.subr.mxu0 0.0
      %891 = vmatpush1.msra.mxu0 0.0
      %892 = vmatprep.subr.mxu0 0.0
      %893 = vmatpush1.msra.mxu0 0.0
      %894 = vmatprep.subr.mxu0 0.0
      %895 = vmatpush1.msra.mxu0 0.0
      %896 = vmatprep.subr.mxu0 0.0
      %897 = vmatpush1.msra.mxu0 0.0
      %898 = vmatprep.subr.mxu0 0.0
      %899 = vmatpush1.msra.mxu0 0.0
      %900 = vmatprep.subr.mxu0 0.0
      %901 = vmatpush1.msra.mxu0 0.0
      %902 = vmatprep.subr.mxu0 0.0
      %903 = vmatpush1.msra.mxu0 0.0
      %904 = vmatprep.subr.mxu0 0.0
      %905 = vmatpush1.msra.mxu0 0.0
      %906 = vmatprep.subr.mxu0 0.0
      %907 = vmatpush1.msra.mxu0 0.0
      %908 = vmatprep.subr.mxu0 0.0
      %909 = vmatpush1.msra.mxu0 0.0
      %910 = vmatprep.subr.mxu0 0.0
      %911 = vmatpush1.msra.mxu0 0.0
      %912 = vmatprep.subr.mxu0 0.0
      %913 = vmatpush1.msra.mxu0 0.0
      %914 = vmatprep.subr.mxu0 0.0
      %915 = vmatpush1.msra.mxu0 0.0
      %916 = vmatprep.subr.mxu0 0.0
      %917 = vmatpush1.msra.mxu0 0.0
      %918 = vmatprep.subr.mxu0 0.0
      %919 = vmatpush1.msra.mxu0 0.0
      %920 = vmatprep.subr.mxu0 0.0
      %921 = vmatpush1.msra.mxu0 0.0
      %922 = vmatprep.subr.mxu0 0.0
      %923 = vmatpush1.msra.mxu0 0.0
      %924 = vmatprep.subr.mxu0 0.0
      %925 = vmatpush1.msra.mxu0 0.0
      %926 = vmatprep.subr.mxu0 0.0
      %927 = vmatpush1.msra.mxu0 0.0
      %928 = vmatprep.subr.mxu0 0.0
      %929 = vmatpush1.msra.mxu0 0.0
      %930 = vmatprep.subr.mxu0 0.0
      %931 = vmatpush1.msra.mxu0 0.0
      %932 = vmatprep.mubr.f32.mxu0 0.0
      %933 = vmatmul.mubr.f32.gmra.mrb[0].mxu0 %v863
      %v934 = vpop.f32.mrb[0].mxu0
      %v935 = vadd.f32 0.0, %v934
      %v936 = vpop.f32.mrb[0].mxu0
      %937 = vmatprep.mubr.f32.mxu0 0.0
      %938 = vmatmul.mubr.f32.gmra.mrb[0].mxu0 %v866
      %v939 = vpop.f32.mrb[0].mxu0
      %v940 = vadd.f32 0.0, %v939
      %v941 = vpop.f32.mrb[0].mxu0
      %942 = vdwg.mxu0
      %v943 = vadd.f32 %v543, %v935
      %v944 = vadd.f32 %v548, %v940
      %vm945 = vcmp.gt.f32.partialorder %v943, 0.0
      %vm946 = vcmp.gt.f32.partialorder %v944, 0.0
      %v947 = vmin.f32 %v943, 0.0
      %v948 = vmin.f32 %v944, 0.0
      %v949 = vmul.f32 %v947, 1.442695
      %v950 = vpow.pop %v949
      %v951 = vmul.f32 %v948, 1.442695
      %v952 = vpow.pop %v951
      %v953 = vsub.f32 %v950, 1.0
      %v954 = vsub.f32 %v952, 1.0
      %v955 = vsel %vm945, %v943, %v953
      %v956 = vsel %vm946, %v944, %v954
      %v957 = vld [vmem:[%s6] sm:$0x1]
      %v959 = vlaneseq
      %v960 = vshrl.u32 %v959, 7
      %v961 = vsub.s32 0, %v960
      %v962 = vrot.slane %v957, %v961
      %v964 = vmul.f32 %v955, %v962
      %v965 = vmul.f32 %v956, %v962
      %v966 = vld [vmem:[%s7] sm:$0x1]
      %v968 = vlaneseq
      %v969 = vshrl.u32 %v968, 7
      %v970 = vsub.s32 0, %v969
      %v971 = vrot.slane %v966, %v970
      %v973 = vadd.f32 %v964, %v971
      %v974 = vadd.f32 %v965, %v971
      %v975 = vadd.f32 %v770, %v973
      %v976 = vadd.f32 %v771, %v974
      %s977 = sadd.s32 %s551, 2
      %s978 = sld [smem:[#allocation4 + %s977]]
      %s979 = scalar_lea.vmem %s1, %s978
      %v980 = vld [vmem:[%s979] sm:$0x1]
      %981 = vst.msk [vmem:[#allocation2] sm:$0x1] %vm555, %v980
      %s982 = sadd.s32 %s558, 2
      %s983 = sld [smem:[#allocation4 + %s982]]
      %s984 = scalar_lea.vmem %s1, %s983
      %v985 = vld [vmem:[%s984] sm:$0x1]
      %986 = vst.msk [vmem:[#allocation2 + $0x1] sm:$0x1] %vm555, %v985
      %s987 = sadd.s32 %s564, 2
      %s988 = sld [smem:[#allocation4 + %s987]]
      %s989 = scalar_lea.vmem %s1, %s988
      %v990 = vld [vmem:[%s989] sm:$0x1]
      %991 = vst.msk [vmem:[#allocation2 + $0x2] sm:$0x1] %vm555, %v990
      %s992 = sadd.s32 %s570, 2
      %s993 = sld [smem:[#allocation4 + %s992]]
      %s994 = scalar_lea.vmem %s1, %s993
      %v995 = vld [vmem:[%s994] sm:$0x1]
      %996 = vst.msk [vmem:[#allocation2 + $0x3] sm:$0x1] %vm555, %v995
      %s997 = sadd.s32 %s576, 2
      %s998 = sld [smem:[#allocation4 + %s997]]
      %s999 = scalar_lea.vmem %s1, %s998
      %v1000 = vld [vmem:[%s999] sm:$0x1]
      %1001 = vst.msk [vmem:[#allocation2 + $0x4] sm:$0x1] %vm555, %v1000
      %s1002 = sadd.s32 %s582, 2
      %s1003 = sld [smem:[#allocation4 + %s1002]]
      %s1004 = scalar_lea.vmem %s1, %s1003
      %v1005 = vld [vmem:[%s1004] sm:$0x1]
      %1006 = vst.msk [vmem:[#allocation2 + $0x5] sm:$0x1] %vm555, %v1005
      %s1007 = sadd.s32 %s588, 2
      %s1008 = sld [smem:[#allocation4 + %s1007]]
      %s1009 = scalar_lea.vmem %s1, %s1008
      %v1010 = vld [vmem:[%s1009] sm:$0x1]
      %1011 = vst.msk [vmem:[#allocation2 + $0x6] sm:$0x1] %vm555, %v1010
      %s1012 = sadd.s32 %s594, 2
      %s1013 = sld [smem:[#allocation4 + %s1012]]
      %s1014 = scalar_lea.vmem %s1, %s1013
      %v1015 = vld [vmem:[%s1014] sm:$0x1]
      %1016 = vst.msk [vmem:[#allocation2 + $0x7] sm:$0x1] %vm555, %v1015
      %s1017 = sadd.s32 %s600, 2
      %s1018 = sld [smem:[#allocation4 + %s1017]]
      %s1019 = scalar_lea.vmem %s1, %s1018
      %v1020 = vld [vmem:[%s1019] sm:$0x1]
      %1021 = vst.msk [vmem:[#allocation2 + $0x8] sm:$0x1] %vm555, %v1020
      %s1022 = sadd.s32 %s606, 2
      %s1023 = sld [smem:[#allocation4 + %s1022]]
      %s1024 = scalar_lea.vmem %s1, %s1023
      %v1025 = vld [vmem:[%s1024] sm:$0x1]
      %1026 = vst.msk [vmem:[#allocation2 + $0x9] sm:$0x1] %vm555, %v1025
      %s1027 = sadd.s32 %s612, 2
      %s1028 = sld [smem:[#allocation4 + %s1027]]
      %s1029 = scalar_lea.vmem %s1, %s1028
      %v1030 = vld [vmem:[%s1029] sm:$0x1]
      %1031 = vst.msk [vmem:[#allocation2 + $0xa] sm:$0x1] %vm555, %v1030
      %s1032 = sadd.s32 %s618, 2
      %s1033 = sld [smem:[#allocation4 + %s1032]]
      %s1034 = scalar_lea.vmem %s1, %s1033
      %v1035 = vld [vmem:[%s1034] sm:$0x1]
      %1036 = vst.msk [vmem:[#allocation2 + $0xb] sm:$0x1] %vm555, %v1035
      %s1037 = sadd.s32 %s624, 2
      %s1038 = sld [smem:[#allocation4 + %s1037]]
      %s1039 = scalar_lea.vmem %s1, %s1038
      %v1040 = vld [vmem:[%s1039] sm:$0x1]
      %1041 = vst.msk [vmem:[#allocation2 + $0xc] sm:$0x1] %vm555, %v1040
      %s1042 = sadd.s32 %s630, 2
      %s1043 = sld [smem:[#allocation4 + %s1042]]
      %s1044 = scalar_lea.vmem %s1, %s1043
      %v1045 = vld [vmem:[%s1044] sm:$0x1]
      %1046 = vst.msk [vmem:[#allocation2 + $0xd] sm:$0x1] %vm555, %v1045
      %s1047 = sadd.s32 %s636, 2
      %s1048 = sld [smem:[#allocation4 + %s1047]]
      %s1049 = scalar_lea.vmem %s1, %s1048
      %v1050 = vld [vmem:[%s1049] sm:$0x1]
      %1051 = vst.msk [vmem:[#allocation2 + $0xe] sm:$0x1] %vm555, %v1050
      %s1052 = sadd.s32 %s642, 2
      %s1053 = sld [smem:[#allocation4 + %s1052]]
      %s1054 = scalar_lea.vmem %s1, %s1053
      %v1055 = vld [vmem:[%s1054] sm:$0x1]
      %1056 = vst.msk [vmem:[#allocation2 + $0xf] sm:$0x1] %vm555, %v1055
      %v1057 = vld [vmem:[#allocation2] sm:$0xff]
      %v1058 = vld [vmem:[#allocation2 + $0x8] sm:$0xff]
      %v1059 = vld [vmem:[%s4] sm:$0xff]
      %v1060 = vld [vmem:[%s4 + $0x8] sm:$0xff]
      %v1061 = vld [vmem:[%s4 + $0x10] sm:$0xff]
      %v1062 = vld [vmem:[%s4 + $0x18] sm:$0xff]
      %v1063 = vld [vmem:[%s4 + $0x20] sm:$0xff]
      %v1064 = vld [vmem:[%s4 + $0x28] sm:$0xff]
      %v1065 = vld [vmem:[%s4 + $0x30] sm:$0xff]
      %v1066 = vld [vmem:[%s4 + $0x38] sm:$0xff]
      %v1068 = vsel %vm469, %v1057, 0
      %v1071 = vsel %vm469, %v1058, 0
      %1073 = vmatprep.subr.mxu0 0.0
      %1074 = vmatpush1.msra.mxu0 %v1059
      %1075 = vmatprep.subr.mxu0 0.0
      %1076 = vmatpush1.msra.mxu0 %v1060
      %1077 = vmatprep.subr.mxu0 0.0
      %1078 = vmatpush1.msra.mxu0 %v1061
      %1079 = vmatprep.subr.mxu0 0.0
      %1080 = vmatpush1.msra.mxu0 %v1062
      %1081 = vmatprep.subr.mxu0 0.0
      %1082 = vmatpush1.msra.mxu0 %v1063
      %1083 = vmatprep.subr.mxu0 0.0
      %1084 = vmatpush1.msra.mxu0 %v1064
      %1085 = vmatprep.subr.mxu0 0.0
      %1086 = vmatpush1.msra.mxu0 %v1065
      %1087 = vmatprep.subr.mxu0 0.0
      %1088 = vmatpush1.msra.mxu0 %v1066
      %1089 = vmatprep.subr.mxu0 0.0
      %1090 = vmatpush1.msra.mxu0 0.0
      %1091 = vmatprep.subr.mxu0 0.0
      %1092 = vmatpush1.msra.mxu0 0.0
      %1093 = vmatprep.subr.mxu0 0.0
      %1094 = vmatpush1.msra.mxu0 0.0
      %1095 = vmatprep.subr.mxu0 0.0
      %1096 = vmatpush1.msra.mxu0 0.0
      %1097 = vmatprep.subr.mxu0 0.0
      %1098 = vmatpush1.msra.mxu0 0.0
      %1099 = vmatprep.subr.mxu0 0.0
      %1100 = vmatpush1.msra.mxu0 0.0
      %1101 = vmatprep.subr.mxu0 0.0
      %1102 = vmatpush1.msra.mxu0 0.0
      %1103 = vmatprep.subr.mxu0 0.0
      %1104 = vmatpush1.msra.mxu0 0.0
      %1105 = vmatprep.subr.mxu0 0.0
      %1106 = vmatpush1.msra.mxu0 0.0
      %1107 = vmatprep.subr.mxu0 0.0
      %1108 = vmatpush1.msra.mxu0 0.0
      %1109 = vmatprep.subr.mxu0 0.0
      %1110 = vmatpush1.msra.mxu0 0.0
      %1111 = vmatprep.subr.mxu0 0.0
      %1112 = vmatpush1.msra.mxu0 0.0
      %1113 = vmatprep.subr.mxu0 0.0
      %1114 = vmatpush1.msra.mxu0 0.0
      %1115 = vmatprep.subr.mxu0 0.0
      %1116 = vmatpush1.msra.mxu0 0.0
      %1117 = vmatprep.subr.mxu0 0.0
      %1118 = vmatpush1.msra.mxu0 0.0
      %1119 = vmatprep.subr.mxu0 0.0
      %1120 = vmatpush1.msra.mxu0 0.0
      %1121 = vmatprep.subr.mxu0 0.0
      %1122 = vmatpush1.msra.mxu0 0.0
      %1123 = vmatprep.subr.mxu0 0.0
      %1124 = vmatpush1.msra.mxu0 0.0
      %1125 = vmatprep.subr.mxu0 0.0
      %1126 = vmatpush1.msra.mxu0 0.0
      %1127 = vmatprep.subr.mxu0 0.0
      %1128 = vmatpush1.msra.mxu0 0.0
      %1129 = vmatprep.subr.mxu0 0.0
      %1130 = vmatpush1.msra.mxu0 0.0
      %1131 = vmatprep.subr.mxu0 0.0
      %1132 = vmatpush1.msra.mxu0 0.0
      %1133 = vmatprep.subr.mxu0 0.0
      %1134 = vmatpush1.msra.mxu0 0.0
      %1135 = vmatprep.subr.mxu0 0.0
      %1136 = vmatpush1.msra.mxu0 0.0
      %1137 = vmatprep.mubr.f32.mxu0 0.0
      %1138 = vmatmul.mubr.f32.gmra.mrb[0].mxu0 %v1068
      %v1139 = vpop.f32.mrb[0].mxu0
      %v1140 = vadd.f32 0.0, %v1139
      %v1141 = vpop.f32.mrb[0].mxu0
      %1142 = vmatprep.mubr.f32.mxu0 0.0
      %1143 = vmatmul.mubr.f32.gmra.mrb[0].mxu0 %v1071
      %v1144 = vpop.f32.mrb[0].mxu0
      %v1145 = vadd.f32 0.0, %v1144
      %v1146 = vpop.f32.mrb[0].mxu0
      %1147 = vdwg.mxu0
      %v1148 = vadd.f32 %v543, %v1140
      %v1149 = vadd.f32 %v548, %v1145
      %vm1150 = vcmp.gt.f32.partialorder %v1148, 0.0
      %vm1151 = vcmp.gt.f32.partialorder %v1149, 0.0
      %v1152 = vmin.f32 %v1148, 0.0
      %v1153 = vmin.f32 %v1149, 0.0
      %v1154 = vmul.f32 %v1152, 1.442695
      %v1155 = vpow.pop %v1154
      %v1156 = vmul.f32 %v1153, 1.442695
      %v1157 = vpow.pop %v1156
      %v1158 = vsub.f32 %v1155, 1.0
      %v1159 = vsub.f32 %v1157, 1.0
      %v1160 = vsel %vm1150, %v1148, %v1158
      %v1161 = vsel %vm1151, %v1149, %v1159
      %v1162 = vld [vmem:[%s6] sm:$0x1]
      %v1164 = vlaneseq
      %v1165 = vshrl.u32 %v1164, 7
      %v1166 = vsub.s32 0, %v1165
      %v1167 = vrot.slane %v1162, %v1166
      %v1169 = vmul.f32 %v1160, %v1167
      %v1170 = vmul.f32 %v1161, %v1167
      %v1171 = vld [vmem:[%s7] sm:$0x1]
      %v1173 = vlaneseq
      %v1174 = vshrl.u32 %v1173, 7
      %v1175 = vsub.s32 0, %v1174
      %v1176 = vrot.slane %v1171, %v1175
      %v1178 = vadd.f32 %v1169, %v1176
      %v1179 = vadd.f32 %v1170, %v1176
      %v1180 = vadd.f32 %v975, %v1178
      %v1181 = vadd.f32 %v976, %v1179
      %s1182 = sadd.s32 %s551, 3
      %s1183 = sld [smem:[#allocation4 + %s1182]]
      %s1184 = scalar_lea.vmem %s1, %s1183
      %v1185 = vld [vmem:[%s1184] sm:$0x1]
      %1186 = vst.msk [vmem:[#allocation2] sm:$0x1] %vm555, %v1185
      %s1187 = sadd.s32 %s558, 3
      %s1188 = sld [smem:[#allocation4 + %s1187]]
      %s1189 = scalar_lea.vmem %s1, %s1188
      %v1190 = vld [vmem:[%s1189] sm:$0x1]
      %1191 = vst.msk [vmem:[#allocation2 + $0x1] sm:$0x1] %vm555, %v1190
      %s1192 = sadd.s32 %s564, 3
      %s1193 = sld [smem:[#allocation4 + %s1192]]
      %s1194 = scalar_lea.vmem %s1, %s1193
      %v1195 = vld [vmem:[%s1194] sm:$0x1]
      %1196 = vst.msk [vmem:[#allocation2 + $0x2] sm:$0x1] %vm555, %v1195
      %s1197 = sadd.s32 %s570, 3
      %s1198 = sld [smem:[#allocation4 + %s1197]]
      %s1199 = scalar_lea.vmem %s1, %s1198
      %v1200 = vld [vmem:[%s1199] sm:$0x1]
      %1201 = vst.msk [vmem:[#allocation2 + $0x3] sm:$0x1] %vm555, %v1200
      %s1202 = sadd.s32 %s576, 3
      %s1203 = sld [smem:[#allocation4 + %s1202]]
      %s1204 = scalar_lea.vmem %s1, %s1203
      %v1205 = vld [vmem:[%s1204] sm:$0x1]
      %1206 = vst.msk [vmem:[#allocation2 + $0x4] sm:$0x1] %vm555, %v1205
      %s1207 = sadd.s32 %s582, 3
      %s1208 = sld [smem:[#allocation4 + %s1207]]
      %s1209 = scalar_lea.vmem %s1, %s1208
      %v1210 = vld [vmem:[%s1209] sm:$0x1]
      %1211 = vst.msk [vmem:[#allocation2 + $0x5] sm:$0x1] %vm555, %v1210
      %s1212 = sadd.s32 %s588, 3
      %s1213 = sld [smem:[#allocation4 + %s1212]]
      %s1214 = scalar_lea.vmem %s1, %s1213
      %v1215 = vld [vmem:[%s1214] sm:$0x1]
      %1216 = vst.msk [vmem:[#allocation2 + $0x6] sm:$0x1] %vm555, %v1215
      %s1217 = sadd.s32 %s594, 3
      %s1218 = sld [smem:[#allocation4 + %s1217]]
      %s1219 = scalar_lea.vmem %s1, %s1218
      %v1220 = vld [vmem:[%s1219] sm:$0x1]
      %1221 = vst.msk [vmem:[#allocation2 + $0x7] sm:$0x1] %vm555, %v1220
      %s1222 = sadd.s32 %s600, 3
      %s1223 = sld [smem:[#allocation4 + %s1222]]
      %s1224 = scalar_lea.vmem %s1, %s1223
      %v1225 = vld [vmem:[%s1224] sm:$0x1]
      %1226 = vst.msk [vmem:[#allocation2 + $0x8] sm:$0x1] %vm555, %v1225
      %s1227 = sadd.s32 %s606, 3
      %s1228 = sld [smem:[#allocation4 + %s1227]]
      %s1229 = scalar_lea.vmem %s1, %s1228
      %v1230 = vld [vmem:[%s1229] sm:$0x1]
      %1231 = vst.msk [vmem:[#allocation2 + $0x9] sm:$0x1] %vm555, %v1230
      %s1232 = sadd.s32 %s612, 3
      %s1233 = sld [smem:[#allocation4 + %s1232]]
      %s1234 = scalar_lea.vmem %s1, %s1233
      %v1235 = vld [vmem:[%s1234] sm:$0x1]
      %1236 = vst.msk [vmem:[#allocation2 + $0xa] sm:$0x1] %vm555, %v1235
      %s1237 = sadd.s32 %s618, 3
      %s1238 = sld [smem:[#allocation4 + %s1237]]
      %s1239 = scalar_lea.vmem %s1, %s1238
      %v1240 = vld [vmem:[%s1239] sm:$0x1]
      %1241 = vst.msk [vmem:[#allocation2 + $0xb] sm:$0x1] %vm555, %v1240
      %s1242 = sadd.s32 %s624, 3
      %s1243 = sld [smem:[#allocation4 + %s1242]]
      %s1244 = scalar_lea.vmem %s1, %s1243
      %v1245 = vld [vmem:[%s1244] sm:$0x1]
      %1246 = vst.msk [vmem:[#allocation2 + $0xc] sm:$0x1] %vm555, %v1245
      %s1247 = sadd.s32 %s630, 3
      %s1248 = sld [smem:[#allocation4 + %s1247]]
      %s1249 = scalar_lea.vmem %s1, %s1248
      %v1250 = vld [vmem:[%s1249] sm:$0x1]
      %1251 = vst.msk [vmem:[#allocation2 + $0xd] sm:$0x1] %vm555, %v1250
      %s1252 = sadd.s32 %s636, 3
      %s1253 = sld [smem:[#allocation4 + %s1252]]
      %s1254 = scalar_lea.vmem %s1, %s1253
      %v1255 = vld [vmem:[%s1254] sm:$0x1]
      %1256 = vst.msk [vmem:[#allocation2 + $0xe] sm:$0x1] %vm555, %v1255
      %s1257 = sadd.s32 %s642, 3
      %s1258 = sld [smem:[#allocation4 + %s1257]]
      %s1259 = scalar_lea.vmem %s1, %s1258
      %v1260 = vld [vmem:[%s1259] sm:$0x1]
      %1261 = vst.msk [vmem:[#allocation2 + $0xf] sm:$0x1] %vm555, %v1260
      %v1262 = vld [vmem:[#allocation2] sm:$0xff]
      %v1263 = vld [vmem:[#allocation2 + $0x8] sm:$0xff]
      %v1264 = vld [vmem:[%s4] sm:$0xff]
      %v1265 = vld [vmem:[%s4 + $0x8] sm:$0xff]
      %v1266 = vld [vmem:[%s4 + $0x10] sm:$0xff]
      %v1267 = vld [vmem:[%s4 + $0x18] sm:$0xff]
      %v1268 = vld [vmem:[%s4 + $0x20] sm:$0xff]
      %v1269 = vld [vmem:[%s4 + $0x28] sm:$0xff]
      %v1270 = vld [vmem:[%s4 + $0x30] sm:$0xff]
      %v1271 = vld [vmem:[%s4 + $0x38] sm:$0xff]
      %v1273 = vsel %vm469, %v1262, 0
      %v1276 = vsel %vm469, %v1263, 0
      %1278 = vmatprep.subr.mxu0 0.0
      %1279 = vmatpush1.msra.mxu0 %v1264
      %1280 = vmatprep.subr.mxu0 0.0
      %1281 = vmatpush1.msra.mxu0 %v1265
      %1282 = vmatprep.subr.mxu0 0.0
      %1283 = vmatpush1.msra.mxu0 %v1266
      %1284 = vmatprep.subr.mxu0 0.0
      %1285 = vmatpush1.msra.mxu0 %v1267
      %1286 = vmatprep.subr.mxu0 0.0
      %1287 = vmatpush1.msra.mxu0 %v1268
      %1288 = vmatprep.subr.mxu0 0.0
      %1289 = vmatpush1.msra.mxu0 %v1269
      %1290 = vmatprep.subr.mxu0 0.0
      %1291 = vmatpush1.msra.mxu0 %v1270
      %1292 = vmatprep.subr.mxu0 0.0
      %1293 = vmatpush1.msra.mxu0 %v1271
      %1294 = vmatprep.subr.mxu0 0.0
      %1295 = vmatpush1.msra.mxu0 0.0
      %1296 = vmatprep.subr.mxu0 0.0
      %1297 = vmatpush1.msra.mxu0 0.0
      %1298 = vmatprep.subr.mxu0 0.0
      %1299 = vmatpush1.msra.mxu0 0.0
      %1300 = vmatprep.subr.mxu0 0.0
      %1301 = vmatpush1.msra.mxu0 0.0
      %1302 = vmatprep.subr.mxu0 0.0
      %1303 = vmatpush1.msra.mxu0 0.0
      %1304 = vmatprep.subr.mxu0 0.0
      %1305 = vmatpush1.msra.mxu0 0.0
      %1306 = vmatprep.subr.mxu0 0.0
      %1307 = vmatpush1.msra.mxu0 0.0
      %1308 = vmatprep.subr.mxu0 0.0
      %1309 = vmatpush1.msra.mxu0 0.0
      %1310 = vmatprep.subr.mxu0 0.0
      %1311 = vmatpush1.msra.mxu0 0.0
      %1312 = vmatprep.subr.mxu0 0.0
      %1313 = vmatpush1.msra.mxu0 0.0
      %1314 = vmatprep.subr.mxu0 0.0
      %1315 = vmatpush1.msra.mxu0 0.0
      %1316 = vmatprep.subr.mxu0 0.0
      %1317 = vmatpush1.msra.mxu0 0.0
      %1318 = vmatprep.subr.mxu0 0.0
      %1319 = vmatpush1.msra.mxu0 0.0
      %1320 = vmatprep.subr.mxu0 0.0
      %1321 = vmatpush1.msra.mxu0 0.0
      %1322 = vmatprep.subr.mxu0 0.0
      %1323 = vmatpush1.msra.mxu0 0.0
      %1324 = vmatprep.subr.mxu0 0.0
      %1325 = vmatpush1.msra.mxu0 0.0
      %1326 = vmatprep.subr.mxu0 0.0
      %1327 = vmatpush1.msra.mxu0 0.0
      %1328 = vmatprep.subr.mxu0 0.0
      %1329 = vmatpush1.msra.mxu0 0.0
      %1330 = vmatprep.subr.mxu0 0.0
      %1331 = vmatpush1.msra.mxu0 0.0
      %1332 = vmatprep.subr.mxu0 0.0
      %1333 = vmatpush1.msra.mxu0 0.0
      %1334 = vmatprep.subr.mxu0 0.0
      %1335 = vmatpush1.msra.mxu0 0.0
      %1336 = vmatprep.subr.mxu0 0.0
      %1337 = vmatpush1.msra.mxu0 0.0
      %1338 = vmatprep.subr.mxu0 0.0
      %1339 = vmatpush1.msra.mxu0 0.0
      %1340 = vmatprep.subr.mxu0 0.0
      %1341 = vmatpush1.msra.mxu0 0.0
      %1342 = vmatprep.mubr.f32.mxu0 0.0
      %1343 = vmatmul.mubr.f32.gmra.mrb[0].mxu0 %v1273
      %v1344 = vpop.f32.mrb[0].mxu0
      %v1345 = vadd.f32 0.0, %v1344
      %v1346 = vpop.f32.mrb[0].mxu0
      %1347 = vmatprep.mubr.f32.mxu0 0.0
      %1348 = vmatmul.mubr.f32.gmra.mrb[0].mxu0 %v1276
      %v1349 = vpop.f32.mrb[0].mxu0
      %v1350 = vadd.f32 0.0, %v1349
      %v1351 = vpop.f32.mrb[0].mxu0
      %1352 = vdwg.mxu0
      %v1353 = vadd.f32 %v543, %v1345
      %v1354 = vadd.f32 %v548, %v1350
      %vm1355 = vcmp.gt.f32.partialorder %v1353, 0.0
      %vm1356 = vcmp.gt.f32.partialorder %v1354, 0.0
      %v1357 = vmin.f32 %v1353, 0.0
      %v1358 = vmin.f32 %v1354, 0.0
      %v1359 = vmul.f32 %v1357, 1.442695
      %v1360 = vpow.pop %v1359
      %v1361 = vmul.f32 %v1358, 1.442695
      %v1362 = vpow.pop %v1361
      %v1363 = vsub.f32 %v1360, 1.0
      %v1364 = vsub.f32 %v1362, 1.0
      %v1365 = vsel %vm1355, %v1353, %v1363
      %v1366 = vsel %vm1356, %v1354, %v1364
      %v1367 = vld [vmem:[%s6] sm:$0x1]
      %v1369 = vlaneseq
      %v1370 = vshrl.u32 %v1369, 7
      %v1371 = vsub.s32 0, %v1370
      %v1372 = vrot.slane %v1367, %v1371
      %v1374 = vmul.f32 %v1365, %v1372
      %v1375 = vmul.f32 %v1366, %v1372
      %v1376 = vld [vmem:[%s7] sm:$0x1]
      %v1378 = vlaneseq
      %v1379 = vshrl.u32 %v1378, 7
      %v1380 = vsub.s32 0, %v1379
      %v1381 = vrot.slane %v1376, %v1380
      %v1383 = vadd.f32 %v1374, %v1381
      %v1384 = vadd.f32 %v1375, %v1381
      %v1385 = vadd.f32 %v1180, %v1383
      %v1386 = vadd.f32 %v1181, %v1384
      %v1387 = vmul.f32 %v1385, 0.25
      %v1388 = vmul.f32 %v1386, 0.25
      %v1389 = vadd.f32 %v1387, %v452
      %v1390 = vadd.f32 %v1388, %v453
      %v1391 = vld [vmem:[%s8] sm:$0xff]
      %v1392 = vld [vmem:[%s8 + $0x8] sm:$0xff]
      %v1393 = vld [vmem:[%s8 + $0x10] sm:$0xff]
      %v1394 = vld [vmem:[%s8 + $0x18] sm:$0xff]
      %v1395 = vld [vmem:[%s8 + $0x20] sm:$0xff]
      %v1396 = vld [vmem:[%s8 + $0x28] sm:$0xff]
      %v1397 = vld [vmem:[%s8 + $0x30] sm:$0xff]
      %v1398 = vld [vmem:[%s8 + $0x38] sm:$0xff]
      %v1399 = vld [vmem:[%s9] sm:$0x1]
      %v1401 = vlaneseq
      %v1402 = vshrl.u32 %v1401, 7
      %v1403 = vsub.s32 0, %v1402
      %v1404 = vrot.slane %v1399, %v1403
      %v1407 = vsel %vm469, %v1389, 0
      %v1410 = vsel %vm469, %v1390, 0
      %1412 = vmatprep.subr.mxu0 0.0
      %1413 = vmatpush1.msra.mxu0 %v1391
      %1414 = vmatprep.subr.mxu0 0.0
      %1415 = vmatpush1.msra.mxu0 %v1392
      %1416 = vmatprep.subr.mxu0 0.0
      %1417 = vmatpush1.msra.mxu0 %v1393
      %1418 = vmatprep.subr.mxu0 0.0
      %1419 = vmatpush1.msra.mxu0 %v1394
      %1420 = vmatprep.subr.mxu0 0.0
      %1421 = vmatpush1.msra.mxu0 %v1395
      %1422 = vmatprep.subr.mxu0 0.0
      %1423 = vmatpush1.msra.mxu0 %v1396
      %1424 = vmatprep.subr.mxu0 0.0
      %1425 = vmatpush1.msra.mxu0 %v1397
      %1426 = vmatprep.subr.mxu0 0.0
      %1427 = vmatpush1.msra.mxu0 %v1398
      %1428 = vmatprep.subr.mxu0 0.0
      %1429 = vmatpush1.msra.mxu0 0.0
      %1430 = vmatprep.subr.mxu0 0.0
      %1431 = vmatpush1.msra.mxu0 0.0
      %1432 = vmatprep.subr.mxu0 0.0
      %1433 = vmatpush1.msra.mxu0 0.0
      %1434 = vmatprep.subr.mxu0 0.0
      %1435 = vmatpush1.msra.mxu0 0.0
      %1436 = vmatprep.subr.mxu0 0.0
      %1437 = vmatpush1.msra.mxu0 0.0
      %1438 = vmatprep.subr.mxu0 0.0
      %1439 = vmatpush1.msra.mxu0 0.0
      %1440 = vmatprep.subr.mxu0 0.0
      %1441 = vmatpush1.msra.mxu0 0.0
      %1442 = vmatprep.subr.mxu0 0.0
      %1443 = vmatpush1.msra.mxu0 0.0
      %1444 = vmatprep.subr.mxu0 0.0
      %1445 = vmatpush1.msra.mxu0 0.0
      %1446 = vmatprep.subr.mxu0 0.0
      %1447 = vmatpush1.msra.mxu0 0.0
      %1448 = vmatprep.subr.mxu0 0.0
      %1449 = vmatpush1.msra.mxu0 0.0
      %1450 = vmatprep.subr.mxu0 0.0
      %1451 = vmatpush1.msra.mxu0 0.0
      %1452 = vmatprep.subr.mxu0 0.0
      %1453 = vmatpush1.msra.mxu0 0.0
      %1454 = vmatprep.subr.mxu0 0.0
      %1455 = vmatpush1.msra.mxu0 0.0
      %1456 = vmatprep.subr.mxu0 0.0
      %1457 = vmatpush1.msra.mxu0 0.0
      %1458 = vmatprep.subr.mxu0 0.0
      %1459 = vmatpush1.msra.mxu0 0.0
      %1460 = vmatprep.subr.mxu0 0.0
      %1461 = vmatpush1.msra.mxu0 0.0
      %1462 = vmatprep.subr.mxu0 0.0
      %1463 = vmatpush1.msra.mxu0 0.0
      %1464 = vmatprep.subr.mxu0 0.0
      %1465 = vmatpush1.msra.mxu0 0.0
      %1466 = vmatprep.subr.mxu0 0.0
      %1467 = vmatpush1.msra.mxu0 0.0
      %1468 = vmatprep.subr.mxu0 0.0
      %1469 = vmatpush1.msra.mxu0 0.0
      %1470 = vmatprep.subr.mxu0 0.0
      %1471 = vmatpush1.msra.mxu0 0.0
      %1472 = vmatprep.subr.mxu0 0.0
      %1473 = vmatpush1.msra.mxu0 0.0
      %1474 = vmatprep.subr.mxu0 0.0
      %1475 = vmatpush1.msra.mxu0 0.0
      %1476 = vmatprep.mubr.f32.mxu0 0.0
      %1477 = vmatmul.mubr.f32.gmra.mrb[0].mxu0 %v1407
      %v1478 = vpop.f32.mrb[0].mxu0
      %v1479 = vadd.f32 %v1404, %v1478
      %v1480 = vpop.f32.mrb[0].mxu0
      %1481 = vmatprep.mubr.f32.mxu0 0.0
      %1482 = vmatmul.mubr.f32.gmra.mrb[0].mxu0 %v1410
      %v1483 = vpop.f32.mrb[0].mxu0
      %v1484 = vadd.f32 %v1404, %v1483
      %v1485 = vpop.f32.mrb[0].mxu0
      %1486 = vdwg.mxu0
      %vm1487 = vcmp.gt.f32.partialorder %v1479, 0.0
      %vm1488 = vcmp.gt.f32.partialorder %v1484, 0.0
      %v1489 = vmin.f32 %v1479, 0.0
      %v1490 = vmin.f32 %v1484, 0.0
      %v1491 = vmul.f32 %v1489, 1.442695
      %v1492 = vpow.pop %v1491
      %v1493 = vmul.f32 %v1490, 1.442695
      %v1494 = vpow.pop %v1493
      %v1495 = vsub.f32 %v1492, 1.0
      %v1496 = vsub.f32 %v1494, 1.0
      %v1497 = vsel %vm1487, %v1479, %v1495
      %v1498 = vsel %vm1488, %v1484, %v1496
      %v1499 = vld [vmem:[%s10] sm:$0xff]
      %v1500 = vld [vmem:[%s10 + $0x8] sm:$0xff]
      %v1501 = vld [vmem:[%s10 + $0x10] sm:$0xff]
      %v1502 = vld [vmem:[%s10 + $0x18] sm:$0xff]
      %v1503 = vld [vmem:[%s11] sm:$0x1]
      %v1505 = vlaneseq
      %v1506 = vshrl.u32 %v1505, 7
      %v1507 = vsub.s32 0, %v1506
      %v1508 = vrot.slane %v1503, %v1507
      %vm1510 = vcmask 261120
      %v1512 = vsel %vm1510, %v1497, 0
      %v1515 = vsel %vm1510, %v1498, 0
      %1517 = vmatprep.subr.mxu0 0.0
      %1518 = vmatpush1.msra.mxu0 %v1499
      %1519 = vmatprep.subr.mxu0 0.0
      %1520 = vmatpush1.msra.mxu0 %v1500
      %1521 = vmatprep.subr.mxu0 0.0
      %1522 = vmatpush1.msra.mxu0 %v1501
      %1523 = vmatprep.subr.mxu0 0.0
      %1524 = vmatpush1.msra.mxu0 %v1502
      %1525 = vmatprep.subr.mxu0 0.0
      %1526 = vmatpush1.msra.mxu0 0.0
      %1527 = vmatprep.subr.mxu0 0.0
      %1528 = vmatpush1.msra.mxu0 0.0
      %1529 = vmatprep.subr.mxu0 0.0
      %1530 = vmatpush1.msra.mxu0 0.0
      %1531 = vmatprep.subr.mxu0 0.0
      %1532 = vmatpush1.msra.mxu0 0.0
      %1533 = vmatprep.subr.mxu0 0.0
      %1534 = vmatpush1.msra.mxu0 0.0
      %1535 = vmatprep.subr.mxu0 0.0
      %1536 = vmatpush1.msra.mxu0 0.0
      %1537 = vmatprep.subr.mxu0 0.0
      %1538 = vmatpush1.msra.mxu0 0.0
      %1539 = vmatprep.subr.mxu0 0.0
      %1540 = vmatpush1.msra.mxu0 0.0
      %1541 = vmatprep.subr.mxu0 0.0
      %1542 = vmatpush1.msra.mxu0 0.0
      %1543 = vmatprep.subr.mxu0 0.0
      %1544 = vmatpush1.msra.mxu0 0.0
      %1545 = vmatprep.subr.mxu0 0.0
      %1546 = vmatpush1.msra.mxu0 0.0
      %1547 = vmatprep.subr.mxu0 0.0
      %1548 = vmatpush1.msra.mxu0 0.0
      %1549 = vmatprep.subr.mxu0 0.0
      %1550 = vmatpush1.msra.mxu0 0.0
      %1551 = vmatprep.subr.mxu0 0.0
      %1552 = vmatpush1.msra.mxu0 0.0
      %1553 = vmatprep.subr.mxu0 0.0
      %1554 = vmatpush1.msra.mxu0 0.0
      %1555 = vmatprep.subr.mxu0 0.0
      %1556 = vmatpush1.msra.mxu0 0.0
      %1557 = vmatprep.subr.mxu0 0.0
      %1558 = vmatpush1.msra.mxu0 0.0
      %1559 = vmatprep.subr.mxu0 0.0
      %1560 = vmatpush1.msra.mxu0 0.0
      %1561 = vmatprep.subr.mxu0 0.0
      %1562 = vmatpush1.msra.mxu0 0.0
      %1563 = vmatprep.subr.mxu0 0.0
      %1564 = vmatpush1.msra.mxu0 0.0
      %1565 = vmatprep.subr.mxu0 0.0
      %1566 = vmatpush1.msra.mxu0 0.0
      %1567 = vmatprep.subr.mxu0 0.0
      %1568 = vmatpush1.msra.mxu0 0.0
      %1569 = vmatprep.subr.mxu0 0.0
      %1570 = vmatpush1.msra.mxu0 0.0
      %1571 = vmatprep.subr.mxu0 0.0
      %1572 = vmatpush1.msra.mxu0 0.0
      %1573 = vmatprep.subr.mxu0 0.0
      %1574 = vmatpush1.msra.mxu0 0.0
      %1575 = vmatprep.subr.mxu0 0.0
      %1576 = vmatpush1.msra.mxu0 0.0
      %1577 = vmatprep.subr.mxu0 0.0
      %1578 = vmatpush1.msra.mxu0 0.0
      %1579 = vmatprep.subr.mxu0 0.0
      %1580 = vmatpush1.msra.mxu0 0.0
      %1581 = vmatprep.mubr.f32.mxu0 0.0
      %1582 = vmatmul.mubr.f32.gmra.mrb[0].mxu0 %v1512
      %v1583 = vpop.f32.mrb[0].mxu0
      %v1584 = vadd.f32 %v1508, %v1583
      %v1585 = vpop.f32.mrb[0].mxu0
      %1586 = vmatprep.mubr.f32.mxu0 0.0
      %1587 = vmatmul.mubr.f32.gmra.mrb[0].mxu0 %v1515
      %v1588 = vpop.f32.mrb[0].mxu0
      %v1589 = vadd.f32 %v1508, %v1588
      %v1590 = vpop.f32.mrb[0].mxu0
      %1591 = vdwg.mxu0
      %vm1592 = vcmp.gt.f32.partialorder %v1584, 0.0
      %vm1593 = vcmp.gt.f32.partialorder %v1589, 0.0
      %v1594 = vmin.f32 %v1584, 0.0
      %v1595 = vmin.f32 %v1589, 0.0
      %v1596 = vmul.f32 %v1594, 1.442695
      %v1597 = vpow.pop %v1596
      %v1598 = vmul.f32 %v1595, 1.442695
      %v1599 = vpow.pop %v1598
      %v1600 = vsub.f32 %v1597, 1.0
      %v1601 = vsub.f32 %v1599, 1.0
      %v1602 = vsel %vm1592, %v1584, %v1600
      %v1603 = vsel %vm1593, %v1589, %v1601
      %v1604 = vld [vmem:[%s12] sm:$0xff]
      %v1605 = vld [vmem:[%s12 + $0x8] sm:$0xff]
      %v1606 = vld [vmem:[%s13] sm:$0x1]
      %v1608 = vlaneseq
      %v1609 = vshrl.u32 %v1608, 7
      %v1610 = vsub.s32 0, %v1609
      %v1611 = vrot.slane %v1606, %v1610
      %vm1613 = vcmask 130048
      %v1615 = vsel %vm1613, %v1602, 0
      %v1618 = vsel %vm1613, %v1603, 0
      %1620 = vmatprep.subr.mxu0 0.0
      %1621 = vmatpush1.msra.mxu0 %v1604
      %1622 = vmatprep.subr.mxu0 0.0
      %1623 = vmatpush1.msra.mxu0 %v1605
      %1624 = vmatprep.subr.mxu0 0.0
      %1625 = vmatpush1.msra.mxu0 0.0
      %1626 = vmatprep.subr.mxu0 0.0
      %1627 = vmatpush1.msra.mxu0 0.0
      %1628 = vmatprep.subr.mxu0 0.0
      %1629 = vmatpush1.msra.mxu0 0.0
      %1630 = vmatprep.subr.mxu0 0.0
      %1631 = vmatpush1.msra.mxu0 0.0
      %1632 = vmatprep.subr.mxu0 0.0
      %1633 = vmatpush1.msra.mxu0 0.0
      %1634 = vmatprep.subr.mxu0 0.0
      %1635 = vmatpush1.msra.mxu0 0.0
      %1636 = vmatprep.subr.mxu0 0.0
      %1637 = vmatpush1.msra.mxu0 0.0
      %1638 = vmatprep.subr.mxu0 0.0
      %1639 = vmatpush1.msra.mxu0 0.0
      %1640 = vmatprep.subr.mxu0 0.0
      %1641 = vmatpush1.msra.mxu0 0.0
      %1642 = vmatprep.subr.mxu0 0.0
      %1643 = vmatpush1.msra.mxu0 0.0
      %1644 = vmatprep.subr.mxu0 0.0
      %1645 = vmatpush1.msra.mxu0 0.0
      %1646 = vmatprep.subr.mxu0 0.0
      %1647 = vmatpush1.msra.mxu0 0.0
      %1648 = vmatprep.subr.mxu0 0.0
      %1649 = vmatpush1.msra.mxu0 0.0
      %1650 = vmatprep.subr.mxu0 0.0
      %1651 = vmatpush1.msra.mxu0 0.0
      %1652 = vmatprep.subr.mxu0 0.0
      %1653 = vmatpush1.msra.mxu0 0.0
      %1654 = vmatprep.subr.mxu0 0.0
      %1655 = vmatpush1.msra.mxu0 0.0
      %1656 = vmatprep.subr.mxu0 0.0
      %1657 = vmatpush1.msra.mxu0 0.0
      %1658 = vmatprep.subr.mxu0 0.0
      %1659 = vmatpush1.msra.mxu0 0.0
      %1660 = vmatprep.subr.mxu0 0.0
      %1661 = vmatpush1.msra.mxu0 0.0
      %1662 = vmatprep.subr.mxu0 0.0
      %1663 = vmatpush1.msra.mxu0 0.0
      %1664 = vmatprep.subr.mxu0 0.0
      %1665 = vmatpush1.msra.mxu0 0.0
      %1666 = vmatprep.subr.mxu0 0.0
      %1667 = vmatpush1.msra.mxu0 0.0
      %1668 = vmatprep.subr.mxu0 0.0
      %1669 = vmatpush1.msra.mxu0 0.0
      %1670 = vmatprep.subr.mxu0 0.0
      %1671 = vmatpush1.msra.mxu0 0.0
      %1672 = vmatprep.subr.mxu0 0.0
      %1673 = vmatpush1.msra.mxu0 0.0
      %1674 = vmatprep.subr.mxu0 0.0
      %1675 = vmatpush1.msra.mxu0 0.0
      %1676 = vmatprep.subr.mxu0 0.0
      %1677 = vmatpush1.msra.mxu0 0.0
      %1678 = vmatprep.subr.mxu0 0.0
      %1679 = vmatpush1.msra.mxu0 0.0
      %1680 = vmatprep.subr.mxu0 0.0
      %1681 = vmatpush1.msra.mxu0 0.0
      %1682 = vmatprep.subr.mxu0 0.0
      %1683 = vmatpush1.msra.mxu0 0.0
      %1684 = vmatprep.mubr.f32.mxu0 0.0
      %1685 = vmatmul.mubr.f32.gmra.mrb[0].mxu0 %v1615
      %v1686 = vpop.f32.mrb[0].mxu0
      %v1687 = vadd.f32 %v1611, %v1686
      %v1688 = vpop.f32.mrb[0].mxu0
      %1689 = vmatprep.mubr.f32.mxu0 0.0
      %1690 = vmatmul.mubr.f32.gmra.mrb[0].mxu0 %v1618
      %v1691 = vpop.f32.mrb[0].mxu0
      %v1692 = vadd.f32 %v1611, %v1691
      %v1693 = vpop.f32.mrb[0].mxu0
      %1694 = vdwg.mxu0
      %vm1695 = vcmask 64512
      %1696 = vst.msk [vmem:[%s449] sm:$0xff] %vm1695, %v1687
      %1697 = vst.msk [vmem:[%s449 + $0x8] sm:$0xff] %vm1695, %v1692
      %s1698 = smul.u32 2, %s31
      %p1699 = scmp.lt.s32.totalorder %s1698, 3
      %s1700 = scalar_select %p1699, %s1698, 3
      %s1701 = smul.addr %s1700, 8
      %s1702 = scalar_lea.vmem %s14, %s1701
      // Predicated region
      $region73: #{net_forward.7} parent=71 // pred_check
        %p1703 = pneg %p327
      $region74: #{net_forward.7} parent=71 // pred_check_branch
        %1705 = sbr.rel (%p1703) target = $region76
      $region75: #{net_forward.7} parent=71 // pred_region
        %s1706 = smul.u32 2, %s31
      $region76: #{net_forward.7} parent=71 // pred_fallthru
        _
    $region72: #{net_forward.7} parent=5 // pred_fallthru
      _
    %p1707 = scmp.le.s32.totalorder 2, %s26
    // Predicated region
    $region77: #{net_forward.7} parent=5 // pred_check
      %p1708 = pneg %p1707
    $region78: #{net_forward.7} parent=5 // pred_check_branch
      %1710 = sbr.rel (%p1708) target = $region80
    $region79: #{net_forward.7} parent=5 // pred_region
      %s1711 = ssub.s32 %s26, 2
      // Predicated region
      $region81: #{net_forward.7} parent=79 // pred_check
        %p1712 = pneg %p333
      $region82: #{net_forward.7} parent=79 // pred_check_branch
        %1714 = sbr.rel (%p1712) target = $region84
      $region83: #{net_forward.7} parent=79 // pred_region
        %s1715 = smul.u32 2, %s32
        %p1716 = scmp.lt.s32.totalorder %s1715, 3
        %s1717 = scalar_select %p1716, %s1715, 3
        %s1718 = smul.addr %s1717, 8
        %s1719 = scalar_lea.vmem %s14, %s1718
      $region84: #{net_forward.7} parent=79 // pred_fallthru
        _
    $region80: #{net_forward.7} parent=5 // pred_fallthru
      _
  $region6: #{net_forward.7} parent=0 // loop_footer
    %s30 = sadd.s32 1, %s26
  $region7: #{net_forward.7} parent=0 // loop_footer_branch
    %25 = sbr.rel target = $region3
  $region8: #{net_forward.7} parent=0 // loop_exit
    _

</llo_original>
